<compile_context>
chip_gen: v7x
topology: tpu7x:2x2x1
jax: 0.10.0
libtpu: 0.0.40
codegen_flags: <defaults>
</compile_context>

<pallas_src>
import math

import jax
import jax.numpy as jnp
import numpy as np
from jax.experimental import pallas as pl
from jax.experimental.pallas import tpu as pltpu

# ----------------------------- configuration ------------------------------
IN_SIZE = 2
HIDDEN_SIZE = 32
OUT_SIZE = 3
HIDDEN_LAYERS = 3
FREQUENCY = (16, 16)
QUANT = 2.0 * np.pi
NUM_FILTERS = HIDDEN_LAYERS + 1                    # 4 Fourier filters
OUTPUT_LAYERS = tuple(range(1, NUM_FILTERS))       # default: np.arange(1, len(filters))


def make_params(key):
    """Deterministic JAX re-implementation of MultiscaleBACON's initialization.

    Weights are kept in PyTorch's (out_features, in_features) layout, which is
    exactly what the feature-major kernel needs (y = W @ x + b).
    """
    input_scale = [round(np.pi * f / (HIDDEN_LAYERS + 1) / QUANT) * QUANT for f in FREQUENCY]
    r = 2.0 * input_scale[0] / QUANT
    assert math.isclose(r, round(r)), "weight_scale should be divisible by quantization interval"

    # FourierLayer: quantized integer frequencies, bias ~ U(-pi, pi)
    wf, bf = [], []
    for _ in range(NUM_FILTERS):
        key, kw, kb = jax.random.split(key, 3)
        cols = []
        for d in range(IN_SIZE):
            kw, kd = jax.random.split(kw)
            hi = int(round(2.0 * input_scale[d] / QUANT)) + 1
            col = jax.random.randint(kd, (HIDDEN_SIZE,), 0, hi).astype(jnp.float32)
            cols.append(col * QUANT - input_scale[d])
        wf.append(jnp.stack(cols, axis=1))                                      # (H, in)
        bf.append(jax.random.uniform(kb, (HIDDEN_SIZE, 1), jnp.float32, -np.pi, np.pi))

    mfn_bound = math.sqrt(6.0 / HIDDEN_SIZE)        # mfn_weights_init
    bias_bound = 1.0 / math.sqrt(HIDDEN_SIZE)       # nn.Linear default bias init
    wl, bl = [], []
    for _ in range(HIDDEN_LAYERS):
        key, kw, kb = jax.random.split(key, 3)
        wl.append(jax.random.uniform(kw, (HIDDEN_SIZE, HIDDEN_SIZE), jnp.float32,
                                     -mfn_bound, mfn_bound))
        bl.append(jax.random.uniform(kb, (HIDDEN_SIZE, 1), jnp.float32,
                                     -bias_bound, bias_bound))

    wo, bo = [], []
    for _ in OUTPUT_LAYERS:
        key, kw, kb = jax.random.split(key, 3)
        wo.append(jax.random.uniform(kw, (OUT_SIZE, HIDDEN_SIZE), jnp.float32,
                                     -mfn_bound, mfn_bound))
        bo.append(jax.random.uniform(kb, (OUT_SIZE, 1), jnp.float32,
                                     -bias_bound, bias_bound))

    return {
        "wf": jnp.stack(wf), "bf": jnp.stack(bf),   # (F, H, in), (F, H, 1)
        "wl": jnp.stack(wl), "bl": jnp.stack(bl),   # (L, H, H),  (L, H, 1)
        "wo": jnp.stack(wo), "bo": jnp.stack(bo),   # (O, out, H),(O, out, 1)
    }


# -------------------------------- kernel ----------------------------------
def make_bacon_kernel(num_filters, output_layers):
    output_layers = tuple(int(i) for i in output_layers)

    def kernel(coords_ref, wf_ref, bf_ref, wl_ref, bl_ref, wo_ref, bo_ref, out_ref):
        coords = coords_ref[...]                                    # (in, TN), batch on lanes
        # out = filters[0](coords)
        out = jnp.sin(jnp.dot(wf_ref[0], coords,
                              preferred_element_type=jnp.float32) + bf_ref[0])
        j = 0
        for i in range(1, num_filters):
            # filters[i](coords)
            fi = jnp.sin(jnp.dot(wf_ref[i], coords,
                                 preferred_element_type=jnp.float32) + bf_ref[i])
            # linear[i-1](out)
            lin = jnp.dot(wl_ref[i - 1], out,
                          preferred_element_type=jnp.float32) + bl_ref[i - 1]
            out = fi * lin
            if i in output_layers:
                # output_linear[i](out) — lane-dense (out_size, TN) store
                head = jnp.dot(wo_ref[j], out,
                               preferred_element_type=jnp.float32) + bo_ref[j]
                out_ref[j] = head.astype(out_ref.dtype)
                j += 1

    return kernel


# -------------------------------- wrapper ----------------------------------
def _round_up(x, m):
    return ((x + m - 1) // m) * m


def bacon_forward(model_input, params, tile_n=2048):
    """MultiscaleBACON.forward, default config path (is_sdf=False, reuse_filters=False)."""
    # TODO(synk): reuse_filters / specified_layers / layer_forward partial-eval
    # paths and autograd requires_grad bookkeeping are host-side control flow
    # and are not reproduced inside the kernel.
    coords = model_input["coords"] if "coords" in model_input else model_input["ray_samples"]
    lead = coords.shape[:-1]
    in_size = coords.shape[-1]
    flat = coords.reshape(-1, in_size).astype(jnp.float32)
    n = flat.shape[0]

    tile_n = int(max(128, min(tile_n, _round_up(n, 128))))
    n_pad = _round_up(n, tile_n)
    # feature-major, lane-dense: batch of points on the 128-lane axis
    coords_fm = jnp.zeros((in_size, n_pad), jnp.float32).at[:, :n].set(flat.T)

    wf, bf = params["wf"], params["bf"]
    wl, bl = params["wl"], params["bl"]
    wo, bo = params["wo"], params["bo"]
    num_filters = wf.shape[0]
    num_out, out_size = wo.shape[0], wo.shape[1]

    kernel = make_bacon_kernel(num_filters, OUTPUT_LAYERS)
    const_spec = lambda a: pl.BlockSpec(a.shape, lambda i: (0,) * a.ndim)

    out_fm = pl.pallas_call(
        kernel,
        out_shape=jax.ShapeDtypeStruct((num_out, out_size, n_pad), jnp.float32),
        grid=(n_pad // tile_n,),
        in_specs=[
            pl.BlockSpec((in_size, tile_n), lambda i: (0, i)),
            const_spec(wf), const_spec(bf),
            const_spec(wl), const_spec(bl),
            const_spec(wo), const_spec(bo),
        ],
        out_specs=pl.BlockSpec((num_out, out_size, tile_n), lambda i: (0, 0, i)),
        compiler_params=pltpu.CompilerParams(dimension_semantics=("parallel",)),
    )(coords_fm, wf, bf, wl, bl, wo, bo)

    outputs = [out_fm[k, :, :n].T.reshape(lead + (out_size,)) for k in range(num_out)]
    return {"model_in": model_input, "model_out": {"output": outputs}}


# -------------------------- pure-JAX reference ------------------------------
def bacon_reference(coords, params):
    flat = coords.reshape(-1, coords.shape[-1]).astype(jnp.float32)
    wf, bf = params["wf"], params["bf"]
    wl, bl = params["wl"], params["bl"]
    wo, bo = params["wo"], params["bo"]
    out = jnp.sin(flat @ wf[0].T + bf[0][:, 0])
    outputs, j = [], 0
    for i in range(1, wf.shape[0]):
        fi = jnp.sin(flat @ wf[i].T + bf[i][:, 0])
        out = fi * (out @ wl[i - 1].T + bl[i - 1][:, 0])
        if i in OUTPUT_LAYERS:
            outputs.append(out @ wo[j].T + bo[j][:, 0])
            j += 1
    return [o.reshape(coords.shape[:-1] + (o.shape[-1],)) for o in outputs]


if __name__ == "__main__":
    key = jax.random.PRNGKey(0)
    kp, kx = jax.random.split(key)
    params = make_params(kp)

    # small deterministic batch of 2-D coordinates (~ a 32x32 image grid of points)
    N = 1024
    coords = jax.random.uniform(kx, (N, IN_SIZE), jnp.float32, -0.5, 0.5)

    result = bacon_forward({"coords": coords}, params, tile_n=512)   # grid = (2,)
    outs = [jax.block_until_ready(o) for o in result["model_out"]["output"]]

    refs = bacon_reference(coords, params)
    assert len(outs) == len(OUTPUT_LAYERS)
    for o, r in zip(outs, refs):
        assert o.shape == (N, OUT_SIZE)
        np.testing.assert_allclose(np.asarray(o), np.asarray(r), rtol=2e-5, atol=2e-5)
    print("KERNEL_OK")
</pallas_src>

<mosaic_0001>
module attributes {stable_mosaic.version = 11 : i64} {
  func.func @kernel(%arg0: i32, %arg1: memref<2x512xf32, #tpu.memory_space<vmem>>, %arg2: memref<4x32x2xf32, #tpu.memory_space<vmem>>, %arg3: memref<4x32x1xf32, #tpu.memory_space<vmem>>, %arg4: memref<3x32x32xf32, #tpu.memory_space<vmem>>, %arg5: memref<3x32x1xf32, #tpu.memory_space<vmem>>, %arg6: memref<3x3x32xf32, #tpu.memory_space<vmem>>, %arg7: memref<3x3x1xf32, #tpu.memory_space<vmem>>, %arg8: memref<3x3x512xf32, #tpu.memory_space<vmem>>) attributes {dimension_semantics = [#tpu.dimension_semantics<parallel>], iteration_bounds = array<i64: 2>, scalar_prefetch = 0 : i64, scratch_operands = 0 : i64, tpu.core_type = #tpu.core_type<tc>, window_params = [{transform_indices = @transform_0, window_bounds = array<i64: 2, 512>}, {pipeline_mode = #tpu.pipeline_mode<synchronous>, transform_indices = @transform_1, window_bounds = array<i64: 4, 32, 2>}, {pipeline_mode = #tpu.pipeline_mode<synchronous>, transform_indices = @transform_2, window_bounds = array<i64: 4, 32, 1>}, {pipeline_mode = #tpu.pipeline_mode<synchronous>, transform_indices = @transform_3, window_bounds = array<i64: 3, 32, 32>}, {pipeline_mode = #tpu.pipeline_mode<synchronous>, transform_indices = @transform_4, window_bounds = array<i64: 3, 32, 1>}, {pipeline_mode = #tpu.pipeline_mode<synchronous>, transform_indices = @transform_5, window_bounds = array<i64: 3, 3, 32>}, {pipeline_mode = #tpu.pipeline_mode<synchronous>, transform_indices = @transform_6, window_bounds = array<i64: 3, 3, 1>}, {transform_indices = @transform_7, window_bounds = array<i64: 3, 3, 512>}]} {
    %c0 = arith.constant 0 : index
    %c0_0 = arith.constant 0 : index
    %0 = vector.load %arg1[%c0, %c0_0] : memref<2x512xf32, #tpu.memory_space<vmem>>, vector<2x512xf32>
    %c0_1 = arith.constant 0 : index
    %c0_2 = arith.constant 0 : index
    %c0_3 = arith.constant 0 : index
    %1 = vector.load %arg2[%c0_1, %c0_2, %c0_3] : memref<4x32x2xf32, #tpu.memory_space<vmem>>, vector<1x32x2xf32>
    %2 = vector.shape_cast %1 : vector<1x32x2xf32> to vector<32x2xf32>
    %cst = arith.constant dense<0.000000e+00> : vector<32x512xf32>
    %3 = tpu.matmul %2, %0, %cst {dimension_numbers = #tpu.dot_dimension_numbers<[1], [0], [0], [1], [0, 0, 1, 1], [], []>} : vector<32x2xf32>, vector<2x512xf32>, vector<32x512xf32> -> vector<32x512xf32>
    %c0_4 = arith.constant 0 : index
    %c0_5 = arith.constant 0 : index
    %c0_6 = arith.constant 0 : index
    %4 = vector.load %arg3[%c0_4, %c0_5, %c0_6] : memref<4x32x1xf32, #tpu.memory_space<vmem>>, vector<1x32x1xf32>
    %5 = vector.shape_cast %4 : vector<1x32x1xf32> to vector<32x1xf32>
    %6 = vector.broadcast %5 : vector<32x1xf32> to vector<32x512xf32>
    %7 = arith.addf %3, %6 : vector<32x512xf32>
    %8 = math.sin %7 : vector<32x512xf32>
    %c1 = arith.constant 1 : index
    %c0_7 = arith.constant 0 : index
    %c0_8 = arith.constant 0 : index
    %9 = vector.load %arg2[%c1, %c0_7, %c0_8] : memref<4x32x2xf32, #tpu.memory_space<vmem>>, vector<1x32x2xf32>
    %10 = vector.shape_cast %9 : vector<1x32x2xf32> to vector<32x2xf32>
    %cst_9 = arith.constant dense<0.000000e+00> : vector<32x512xf32>
    %11 = tpu.matmul %10, %0, %cst_9 {dimension_numbers = #tpu.dot_dimension_numbers<[1], [0], [0], [1], [0, 0, 1, 1], [], []>} : vector<32x2xf32>, vector<2x512xf32>, vector<32x512xf32> -> vector<32x512xf32>
    %c1_10 = arith.constant 1 : index
    %c0_11 = arith.constant 0 : index
    %c0_12 = arith.constant 0 : index
    %12 = vector.load %arg3[%c1_10, %c0_11, %c0_12] : memref<4x32x1xf32, #tpu.memory_space<vmem>>, vector<1x32x1xf32>
    %13 = vector.shape_cast %12 : vector<1x32x1xf32> to vector<32x1xf32>
    %14 = vector.broadcast %13 : vector<32x1xf32> to vector<32x512xf32>
    %15 = arith.addf %11, %14 : vector<32x512xf32>
    %16 = math.sin %15 : vector<32x512xf32>
    %c0_13 = arith.constant 0 : index
    %c0_14 = arith.constant 0 : index
    %c0_15 = arith.constant 0 : index
    %17 = vector.load %arg4[%c0_13, %c0_14, %c0_15] : memref<3x32x32xf32, #tpu.memory_space<vmem>>, vector<1x32x32xf32>
    %18 = vector.shape_cast %17 : vector<1x32x32xf32> to vector<32x32xf32>
    %cst_16 = arith.constant dense<0.000000e+00> : vector<32x512xf32>
    %19 = tpu.matmul %18, %8, %cst_16 {dimension_numbers = #tpu.dot_dimension_numbers<[1], [0], [0], [1], [0, 0, 1, 1], [], []>} : vector<32x32xf32>, vector<32x512xf32>, vector<32x512xf32> -> vector<32x512xf32>
    %c0_17 = arith.constant 0 : index
    %c0_18 = arith.constant 0 : index
    %c0_19 = arith.constant 0 : index
    %20 = vector.load %arg5[%c0_17, %c0_18, %c0_19] : memref<3x32x1xf32, #tpu.memory_space<vmem>>, vector<1x32x1xf32>
    %21 = vector.shape_cast %20 : vector<1x32x1xf32> to vector<32x1xf32>
    %22 = vector.broadcast %21 : vector<32x1xf32> to vector<32x512xf32>
    %23 = arith.addf %19, %22 : vector<32x512xf32>
    %24 = arith.mulf %16, %23 : vector<32x512xf32>
    %c0_20 = arith.constant 0 : index
    %c0_21 = arith.constant 0 : index
    %c0_22 = arith.constant 0 : index
    %25 = vector.load %arg6[%c0_20, %c0_21, %c0_22] : memref<3x3x32xf32, #tpu.memory_space<vmem>>, vector<1x3x32xf32>
    %26 = vector.shape_cast %25 : vector<1x3x32xf32> to vector<3x32xf32>
    %cst_23 = arith.constant dense<0.000000e+00> : vector<3x512xf32>
    %27 = tpu.matmul %26, %24, %cst_23 {dimension_numbers = #tpu.dot_dimension_numbers<[1], [0], [0], [1], [0, 0, 1, 1], [], []>} : vector<3x32xf32>, vector<32x512xf32>, vector<3x512xf32> -> vector<3x512xf32>
    %c0_24 = arith.constant 0 : index
    %c0_25 = arith.constant 0 : index
    %c0_26 = arith.constant 0 : index
    %28 = vector.load %arg7[%c0_24, %c0_25, %c0_26] : memref<3x3x1xf32, #tpu.memory_space<vmem>>, vector<1x3x1xf32>
    %29 = vector.shape_cast %28 : vector<1x3x1xf32> to vector<3x1xf32>
    %30 = vector.broadcast %29 : vector<3x1xf32> to vector<3x512xf32>
    %31 = arith.addf %27, %30 : vector<3x512xf32>
    %c0_27 = arith.constant 0 : index
    %c0_28 = arith.constant 0 : index
    %c0_29 = arith.constant 0 : index
    %32 = vector.load %arg8[%c0_27, %c0_28, %c0_29] : memref<3x3x512xf32, #tpu.memory_space<vmem>>, vector<1x3x512xf32>
    %33 = vector.shape_cast %32 : vector<1x3x512xf32> to vector<3x512xf32>
    %34 = vector.shape_cast %31 : vector<3x512xf32> to vector<1x3x512xf32>
    tpu.vector_store %arg8[%c0_27, %c0_28, %c0_29], %34 {strides = array<i32>} : memref<3x3x512xf32, #tpu.memory_space<vmem>>, vector<1x3x512xf32>,
    %c2 = arith.constant 2 : index
    %c0_30 = arith.constant 0 : index
    %c0_31 = arith.constant 0 : index
    %35 = vector.load %arg2[%c2, %c0_30, %c0_31] : memref<4x32x2xf32, #tpu.memory_space<vmem>>, vector<1x32x2xf32>
    %36 = vector.shape_cast %35 : vector<1x32x2xf32> to vector<32x2xf32>
    %cst_32 = arith.constant dense<0.000000e+00> : vector<32x512xf32>
    %37 = tpu.matmul %36, %0, %cst_32 {dimension_numbers = #tpu.dot_dimension_numbers<[1], [0], [0], [1], [0, 0, 1, 1], [], []>} : vector<32x2xf32>, vector<2x512xf32>, vector<32x512xf32> -> vector<32x512xf32>
    %c2_33 = arith.constant 2 : index
    %c0_34 = arith.constant 0 : index
    %c0_35 = arith.constant 0 : index
    %38 = vector.load %arg3[%c2_33, %c0_34, %c0_35] : memref<4x32x1xf32, #tpu.memory_space<vmem>>, vector<1x32x1xf32>
    %39 = vector.shape_cast %38 : vector<1x32x1xf32> to vector<32x1xf32>
    %40 = vector.broadcast %39 : vector<32x1xf32> to vector<32x512xf32>
    %41 = arith.addf %37, %40 : vector<32x512xf32>
    %42 = math.sin %41 : vector<32x512xf32>
    %c1_36 = arith.constant 1 : index
    %c0_37 = arith.constant 0 : index
    %c0_38 = arith.constant 0 : index
    %43 = vector.load %arg4[%c1_36, %c0_37, %c0_38] : memref<3x32x32xf32, #tpu.memory_space<vmem>>, vector<1x32x32xf32>
    %44 = vector.shape_cast %43 : vector<1x32x32xf32> to vector<32x32xf32>
    %cst_39 = arith.constant dense<0.000000e+00> : vector<32x512xf32>
    %45 = tpu.matmul %44, %24, %cst_39 {dimension_numbers = #tpu.dot_dimension_numbers<[1], [0], [0], [1], [0, 0, 1, 1], [], []>} : vector<32x32xf32>, vector<32x512xf32>, vector<32x512xf32> -> vector<32x512xf32>
    %c1_40 = arith.constant 1 : index
    %c0_41 = arith.constant 0 : index
    %c0_42 = arith.constant 0 : index
    %46 = vector.load %arg5[%c1_40, %c0_41, %c0_42] : memref<3x32x1xf32, #tpu.memory_space<vmem>>, vector<1x32x1xf32>
    %47 = vector.shape_cast %46 : vector<1x32x1xf32> to vector<32x1xf32>
    %48 = vector.broadcast %47 : vector<32x1xf32> to vector<32x512xf32>
    %49 = arith.addf %45, %48 : vector<32x512xf32>
    %50 = arith.mulf %42, %49 : vector<32x512xf32>
    %c1_43 = arith.constant 1 : index
    %c0_44 = arith.constant 0 : index
    %c0_45 = arith.constant 0 : index
    %51 = vector.load %arg6[%c1_43, %c0_44, %c0_45] : memref<3x3x32xf32, #tpu.memory_space<vmem>>, vector<1x3x32xf32>
    %52 = vector.shape_cast %51 : vector<1x3x32xf32> to vector<3x32xf32>
    %cst_46 = arith.constant dense<0.000000e+00> : vector<3x512xf32>
    %53 = tpu.matmul %52, %50, %cst_46 {dimension_numbers = #tpu.dot_dimension_numbers<[1], [0], [0], [1], [0, 0, 1, 1], [], []>} : vector<3x32xf32>, vector<32x512xf32>, vector<3x512xf32> -> vector<3x512xf32>
    %c1_47 = arith.constant 1 : index
    %c0_48 = arith.constant 0 : index
    %c0_49 = arith.constant 0 : index
    %54 = vector.load %arg7[%c1_47, %c0_48, %c0_49] : memref<3x3x1xf32, #tpu.memory_space<vmem>>, vector<1x3x1xf32>
    %55 = vector.shape_cast %54 : vector<1x3x1xf32> to vector<3x1xf32>
    %56 = vector.broadcast %55 : vector<3x1xf32> to vector<3x512xf32>
    %57 = arith.addf %53, %56 : vector<3x512xf32>
    %c1_50 = arith.constant 1 : index
    %c0_51 = arith.constant 0 : index
    %c0_52 = arith.constant 0 : index
    %58 = vector.load %arg8[%c1_50, %c0_51, %c0_52] : memref<3x3x512xf32, #tpu.memory_space<vmem>>, vector<1x3x512xf32>
    %59 = vector.shape_cast %58 : vector<1x3x512xf32> to vector<3x512xf32>
    %60 = vector.shape_cast %57 : vector<3x512xf32> to vector<1x3x512xf32>
    tpu.vector_store %arg8[%c1_50, %c0_51, %c0_52], %60 {strides = array<i32>} : memref<3x3x512xf32, #tpu.memory_space<vmem>>, vector<1x3x512xf32>,
    %c3 = arith.constant 3 : index
    %c0_53 = arith.constant 0 : index
    %c0_54 = arith.constant 0 : index
    %61 = vector.load %arg2[%c3, %c0_53, %c0_54] : memref<4x32x2xf32, #tpu.memory_space<vmem>>, vector<1x32x2xf32>
    %62 = vector.shape_cast %61 : vector<1x32x2xf32> to vector<32x2xf32>
    %cst_55 = arith.constant dense<0.000000e+00> : vector<32x512xf32>
    %63 = tpu.matmul %62, %0, %cst_55 {dimension_numbers = #tpu.dot_dimension_numbers<[1], [0], [0], [1], [0, 0, 1, 1], [], []>} : vector<32x2xf32>, vector<2x512xf32>, vector<32x512xf32> -> vector<32x512xf32>
    %c3_56 = arith.constant 3 : index
    %c0_57 = arith.constant 0 : index
    %c0_58 = arith.constant 0 : index
    %64 = vector.load %arg3[%c3_56, %c0_57, %c0_58] : memref<4x32x1xf32, #tpu.memory_space<vmem>>, vector<1x32x1xf32>
    %65 = vector.shape_cast %64 : vector<1x32x1xf32> to vector<32x1xf32>
    %66 = vector.broadcast %65 : vector<32x1xf32> to vector<32x512xf32>
    %67 = arith.addf %63, %66 : vector<32x512xf32>
    %68 = math.sin %67 : vector<32x512xf32>
    %c2_59 = arith.constant 2 : index
    %c0_60 = arith.constant 0 : index
    %c0_61 = arith.constant 0 : index
    %69 = vector.load %arg4[%c2_59, %c0_60, %c0_61] : memref<3x32x32xf32, #tpu.memory_space<vmem>>, vector<1x32x32xf32>
    %70 = vector.shape_cast %69 : vector<1x32x32xf32> to vector<32x32xf32>
    %cst_62 = arith.constant dense<0.000000e+00> : vector<32x512xf32>
    %71 = tpu.matmul %70, %50, %cst_62 {dimension_numbers = #tpu.dot_dimension_numbers<[1], [0], [0], [1], [0, 0, 1, 1], [], []>} : vector<32x32xf32>, vector<32x512xf32>, vector<32x512xf32> -> vector<32x512xf32>
    %c2_63 = arith.constant 2 : index
    %c0_64 = arith.constant 0 : index
    %c0_65 = arith.constant 0 : index
    %72 = vector.load %arg5[%c2_63, %c0_64, %c0_65] : memref<3x32x1xf32, #tpu.memory_space<vmem>>, vector<1x32x1xf32>
    %73 = vector.shape_cast %72 : vector<1x32x1xf32> to vector<32x1xf32>
    %74 = vector.broadcast %73 : vector<32x1xf32> to vector<32x512xf32>
    %75 = arith.addf %71, %74 : vector<32x512xf32>
    %76 = arith.mulf %68, %75 : vector<32x512xf32>
    %c2_66 = arith.constant 2 : index
    %c0_67 = arith.constant 0 : index
    %c0_68 = arith.constant 0 : index
    %77 = vector.load %arg6[%c2_66, %c0_67, %c0_68] : memref<3x3x32xf32, #tpu.memory_space<vmem>>, vector<1x3x32xf32>
    %78 = vector.shape_cast %77 : vector<1x3x32xf32> to vector<3x32xf32>
    %cst_69 = arith.constant dense<0.000000e+00> : vector<3x512xf32>
    %79 = tpu.matmul %78, %76, %cst_69 {dimension_numbers = #tpu.dot_dimension_numbers<[1], [0], [0], [1], [0, 0, 1, 1], [], []>} : vector<3x32xf32>, vector<32x512xf32>, vector<3x512xf32> -> vector<3x512xf32>
    %c2_70 = arith.constant 2 : index
    %c0_71 = arith.constant 0 : index
    %c0_72 = arith.constant 0 : index
    %80 = vector.load %arg7[%c2_70, %c0_71, %c0_72] : memref<3x3x1xf32, #tpu.memory_space<vmem>>, vector<1x3x1xf32>
    %81 = vector.shape_cast %80 : vector<1x3x1xf32> to vector<3x1xf32>
    %82 = vector.broadcast %81 : vector<3x1xf32> to vector<3x512xf32>
    %83 = arith.addf %79, %82 : vector<3x512xf32>
    %c2_73 = arith.constant 2 : index
    %c0_74 = arith.constant 0 : index
    %c0_75 = arith.constant 0 : index
    %84 = vector.load %arg8[%c2_73, %c0_74, %c0_75] : memref<3x3x512xf32, #tpu.memory_space<vmem>>, vector<1x3x512xf32>
    %85 = vector.shape_cast %84 : vector<1x3x512xf32> to vector<3x512xf32>
    %86 = vector.shape_cast %83 : vector<3x512xf32> to vector<1x3x512xf32>
    tpu.vector_store %arg8[%c2_73, %c0_74, %c0_75], %86 {strides = array<i32>} : memref<3x3x512xf32, #tpu.memory_space<vmem>>, vector<1x3x512xf32>,
    return
  }
  func.func @transform_0(%arg0: i32) -> (i32, i32) {
    %c0_i32 = arith.constant 0 : i32
    %c0_i32_0 = arith.constant 0 : i32
    return %c0_i32, %arg0 : i32, i32
  }
  func.func @transform_1(%arg0: i32) -> (i32, i32, i32) {
    %c0_i32 = arith.constant 0 : i32
    %c0_i32_0 = arith.constant 0 : i32
    %c0_i32_1 = arith.constant 0 : i32
    %c0_i32_2 = arith.constant 0 : i32
    return %c0_i32, %c0_i32_0, %c0_i32_1 : i32, i32, i32
  }
  func.func @transform_2(%arg0: i32) -> (i32, i32, i32) {
    %c0_i32 = arith.constant 0 : i32
    %c0_i32_0 = arith.constant 0 : i32
    %c0_i32_1 = arith.constant 0 : i32
    %c0_i32_2 = arith.constant 0 : i32
    return %c0_i32, %c0_i32_0, %c0_i32_1 : i32, i32, i32
  }
  func.func @transform_3(%arg0: i32) -> (i32, i32, i32) {
    %c0_i32 = arith.constant 0 : i32
    %c0_i32_0 = arith.constant 0 : i32
    %c0_i32_1 = arith.constant 0 : i32
    %c0_i32_2 = arith.constant 0 : i32
    return %c0_i32, %c0_i32_0, %c0_i32_1 : i32, i32, i32
  }
  func.func @transform_4(%arg0: i32) -> (i32, i32, i32) {
    %c0_i32 = arith.constant 0 : i32
    %c0_i32_0 = arith.constant 0 : i32
    %c0_i32_1 = arith.constant 0 : i32
    %c0_i32_2 = arith.constant 0 : i32
    return %c0_i32, %c0_i32_0, %c0_i32_1 : i32, i32, i32
  }
  func.func @transform_5(%arg0: i32) -> (i32, i32, i32) {
    %c0_i32 = arith.constant 0 : i32
    %c0_i32_0 = arith.constant 0 : i32
    %c0_i32_1 = arith.constant 0 : i32
    %c0_i32_2 = arith.constant 0 : i32
    return %c0_i32, %c0_i32_0, %c0_i32_1 : i32, i32, i32
  }
  func.func @transform_6(%arg0: i32) -> (i32, i32, i32) {
    %c0_i32 = arith.constant 0 : i32
    %c0_i32_0 = arith.constant 0 : i32
    %c0_i32_1 = arith.constant 0 : i32
    %c0_i32_2 = arith.constant 0 : i32
    return %c0_i32, %c0_i32_0, %c0_i32_1 : i32, i32, i32
  }
  func.func @transform_7(%arg0: i32) -> (i32, i32, i32) {
    %c0_i32 = arith.constant 0 : i32
    %c0_i32_0 = arith.constant 0 : i32
    %c0_i32_1 = arith.constant 0 : i32
    return %c0_i32, %c0_i32_0, %arg0 : i32, i32, i32
  }
}

</mosaic_0001>

<llo_original>
// kernel: tpu_custom_call.1
$region0: #{tpu_custom_call.1}
  #allocation0 [shape = 'u32[]', space=smem, size = 0x4, offset = 0x4, fixed_abs, tag = 'smem constant byte address 0x4 - core index']
  #allocation1 [shape = 'u32[144,128]{1,0:T(1,128)}', space=vmem, size = 0x12000, scoped, tag = 'internal scratch']
  %s0 = inlined_call_operand.vmem [shape: f32[2,1024], index: 0, kind: input, shape index: {}]
  %s1 = inlined_call_operand.vmem [shape: f32[4,32,2], index: 1, kind: input, shape index: {}]
  %s2 = inlined_call_operand.vmem [shape: f32[4,32,1], index: 2, kind: input, shape index: {}]
  %s3 = inlined_call_operand.vmem [shape: f32[3,32,32], index: 3, kind: input, shape index: {}]
  %s4 = inlined_call_operand.vmem [shape: f32[3,32,1], index: 4, kind: input, shape index: {}]
  %s5 = inlined_call_operand.vmem [shape: f32[3,3,32], index: 5, kind: input, shape index: {}]
  %s6 = inlined_call_operand.vmem [shape: f32[3,3,1], index: 6, kind: input, shape index: {}]
  %s7 = inlined_call_operand.hbm [shape: f32[3,3,1024], index: 7, kind: output, shape index: {}]
  %s8 = sld [smem:[#allocation0]]
  $region61: #{tpu_custom_call.1} parent=0
    _
  %s10 = ssub.s32 1, %s8
  %s11 = scalar_select 0, %s10, %s8
  $region1: #{tpu_custom_call.1} parent=0
    #allocation2 [shape = 'u8[49152]{0}', space=vmem, size = 0xc000, scoped, tag = 'output window, operand 0']
    #allocation3 [shape = 's32[2]{0}', space=sflag, size = 0x8, scoped, tag = 'scoped memory for tpu_custom_call.1']
    %12 = vsyncpa [#allocation3], 0
    %s13 = scalar_lea.sflag [#allocation3], 1
    %14 = vsyncpa %s13, 0
    loop: start=0, step=1, limit=4
    $region2: #{tpu_custom_call.1} parent=1 // loop_pre_header
      _
    $region3: #{tpu_custom_call.1} parent=1 // loop_header
      %s16 = sphi 0, %s20
      %p17 = scmp.ge.s32.totalorder %s16, 4
      %s26 = sphi 0, %s28
      %s29 = sphi 0, %s26
      %s30 = sphi 0, %s29
      %s46 = sphi 0, %s30
      %s50 = sphi 0, %s50
      %s52 = sphi 0, %s50
      %s53 = sphi 0, %s52
      %s67 = sphi 0, %s53
      %s71 = sphi 0, %s71
      %s73 = sphi 0, %s71
      %s74 = sphi 0, %s73
      %s88 = sphi 0, %s74
      %s92 = sphi 0, %s92
      %s94 = sphi 0, %s92
      %s95 = sphi 0, %s94
      %s109 = sphi 0, %s95
      %s113 = sphi 0, %s113
      %s115 = sphi 0, %s113
      %s116 = sphi 0, %s115
      %s130 = sphi 0, %s116
      %s134 = sphi 0, %s134
      %s136 = sphi 0, %s134
      %s137 = sphi 0, %s136
      %s151 = sphi 0, %s137
      %s155 = sphi 0, %s155
      %s157 = sphi 0, %s155
      %s158 = sphi 0, %s157
      %s172 = sphi 0, %s158
      %s178 = sphi 0, %s180
      %s181 = sphi 0, %s178
      %s182 = sphi 0, %s181
      %s198 = sphi 0, %s182
    $region4: #{tpu_custom_call.1} parent=1 // loop_header_branch
      %19 = sbr.rel (%p17) target = $region8
    $region5: #{tpu_custom_call.1} parent=1 // loop_body
      %s21 = ssub.s32 %s16, 1
      %s22 = ssub.s32 %s16, 2
      %s23 = sadd.s32 %s16, 1
      %s24 = ssub.s32 %s16, %s23
      %p25 = scmp.eq.s32.totalorder %s24, 0
      %s27 = sadd.s32 %s26, 1
      %s28 = scalar_select %p25, %s26, %s27
      %p31 = pneg %p25
      %p32 = scmp.eq.s32.totalorder %s16, 1
      %p33 = por %p31, %p32
      %p34 = scmp.ne.s32.totalorder %s26, %s29
      %p35 = scmp.eq.s32.totalorder %s16, 0
      %p36 = por %p34, %p35
      %p37 = scmp.ne.s32.totalorder %s26, %s29
      %p38 = scmp.eq.s32.totalorder %s21, 1
      %p39 = por %p37, %p38
      %p40 = scmp.ne.s32.totalorder %s29, %s30
      %p41 = scmp.eq.s32.totalorder %s21, 0
      %p42 = por %p40, %p41
      %p43 = scmp.ne.s32.totalorder %s29, %s30
      %p44 = scmp.eq.s32.totalorder %s22, 1
      %p45 = por %p43, %p44
      %p47 = scmp.ne.s32.totalorder %s30, %s46
      %p48 = scmp.eq.s32.totalorder %s22, 0
      %p49 = por %p47, %p48
      %s51 = sadd.s32 %s50, 1
      %p54 = scmp.eq.s32.totalorder %s16, 1
      %p55 = scmp.ne.s32.totalorder %s50, %s52
      %p56 = scmp.eq.s32.totalorder %s16, 0
      %p57 = por %p55, %p56
      %p58 = scmp.ne.s32.totalorder %s50, %s52
      %p59 = scmp.eq.s32.totalorder %s21, 1
      %p60 = por %p58, %p59
      %p61 = scmp.ne.s32.totalorder %s52, %s53
      %p62 = scmp.eq.s32.totalorder %s21, 0
      %p63 = por %p61, %p62
      %p64 = scmp.ne.s32.totalorder %s52, %s53
      %p65 = scmp.eq.s32.totalorder %s22, 1
      %p66 = por %p64, %p65
      %p68 = scmp.ne.s32.totalorder %s53, %s67
      %p69 = scmp.eq.s32.totalorder %s22, 0
      %p70 = por %p68, %p69
      %s72 = sadd.s32 %s71, 1
      %p75 = scmp.eq.s32.totalorder %s16, 1
      %p76 = scmp.ne.s32.totalorder %s71, %s73
      %p77 = scmp.eq.s32.totalorder %s16, 0
      %p78 = por %p76, %p77
      %p79 = scmp.ne.s32.totalorder %s71, %s73
      %p80 = scmp.eq.s32.totalorder %s21, 1
      %p81 = por %p79, %p80
      %p82 = scmp.ne.s32.totalorder %s73, %s74
      %p83 = scmp.eq.s32.totalorder %s21, 0
      %p84 = por %p82, %p83
      %p85 = scmp.ne.s32.totalorder %s73, %s74
      %p86 = scmp.eq.s32.totalorder %s22, 1
      %p87 = por %p85, %p86
      %p89 = scmp.ne.s32.totalorder %s74, %s88
      %p90 = scmp.eq.s32.totalorder %s22, 0
      %p91 = por %p89, %p90
      %s93 = sadd.s32 %s92, 1
      %p96 = scmp.eq.s32.totalorder %s16, 1
      %p97 = scmp.ne.s32.totalorder %s92, %s94
      %p98 = scmp.eq.s32.totalorder %s16, 0
      %p99 = por %p97, %p98
      %p100 = scmp.ne.s32.totalorder %s92, %s94
      %p101 = scmp.eq.s32.totalorder %s21, 1
      %p102 = por %p100, %p101
      %p103 = scmp.ne.s32.totalorder %s94, %s95
      %p104 = scmp.eq.s32.totalorder %s21, 0
      %p105 = por %p103, %p104
      %p106 = scmp.ne.s32.totalorder %s94, %s95
      %p107 = scmp.eq.s32.totalorder %s22, 1
      %p108 = por %p106, %p107
      %p110 = scmp.ne.s32.totalorder %s95, %s109
      %p111 = scmp.eq.s32.totalorder %s22, 0
      %p112 = por %p110, %p111
      %s114 = sadd.s32 %s113, 1
      %p117 = scmp.eq.s32.totalorder %s16, 1
      %p118 = scmp.ne.s32.totalorder %s113, %s115
      %p119 = scmp.eq.s32.totalorder %s16, 0
      %p120 = por %p118, %p119
      %p121 = scmp.ne.s32.totalorder %s113, %s115
      %p122 = scmp.eq.s32.totalorder %s21, 1
      %p123 = por %p121, %p122
      %p124 = scmp.ne.s32.totalorder %s115, %s116
      %p125 = scmp.eq.s32.totalorder %s21, 0
      %p126 = por %p124, %p125
      %p127 = scmp.ne.s32.totalorder %s115, %s116
      %p128 = scmp.eq.s32.totalorder %s22, 1
      %p129 = por %p127, %p128
      %p131 = scmp.ne.s32.totalorder %s116, %s130
      %p132 = scmp.eq.s32.totalorder %s22, 0
      %p133 = por %p131, %p132
      %s135 = sadd.s32 %s134, 1
      %p138 = scmp.eq.s32.totalorder %s16, 1
      %p139 = scmp.ne.s32.totalorder %s134, %s136
      %p140 = scmp.eq.s32.totalorder %s16, 0
      %p141 = por %p139, %p140
      %p142 = scmp.ne.s32.totalorder %s134, %s136
      %p143 = scmp.eq.s32.totalorder %s21, 1
      %p144 = por %p142, %p143
      %p145 = scmp.ne.s32.totalorder %s136, %s137
      %p146 = scmp.eq.s32.totalorder %s21, 0
      %p147 = por %p145, %p146
      %p148 = scmp.ne.s32.totalorder %s136, %s137
      %p149 = scmp.eq.s32.totalorder %s22, 1
      %p150 = por %p148, %p149
      %p152 = scmp.ne.s32.totalorder %s137, %s151
      %p153 = scmp.eq.s32.totalorder %s22, 0
      %p154 = por %p152, %p153
      %s156 = sadd.s32 %s155, 1
      %p159 = scmp.eq.s32.totalorder %s16, 1
      %p160 = scmp.ne.s32.totalorder %s155, %s157
      %p161 = scmp.eq.s32.totalorder %s16, 0
      %p162 = por %p160, %p161
      %p163 = scmp.ne.s32.totalorder %s155, %s157
      %p164 = scmp.eq.s32.totalorder %s21, 1
      %p165 = por %p163, %p164
      %p166 = scmp.ne.s32.totalorder %s157, %s158
      %p167 = scmp.eq.s32.totalorder %s21, 0
      %p168 = por %p166, %p167
      %p169 = scmp.ne.s32.totalorder %s157, %s158
      %p170 = scmp.eq.s32.totalorder %s22, 1
      %p171 = por %p169, %p170
      %p173 = scmp.ne.s32.totalorder %s158, %s172
      %p174 = scmp.eq.s32.totalorder %s22, 0
      %p175 = por %p173, %p174
      %s176 = ssub.s32 %s16, %s23
      %p177 = scmp.eq.s32.totalorder %s176, 0
      %s179 = sadd.s32 %s178, 1
      %s180 = scalar_select %p177, %s178, %s179
      %p183 = pneg %p177
      %p184 = scmp.eq.s32.totalorder %s16, 1
      %p185 = por %p183, %p184
      %p186 = scmp.ne.s32.totalorder %s178, %s181
      %p187 = scmp.eq.s32.totalorder %s16, 0
      %p188 = por %p186, %p187
      %p189 = scmp.ne.s32.totalorder %s178, %s181
      %p190 = scmp.eq.s32.totalorder %s21, 1
      %p191 = por %p189, %p190
      %p192 = scmp.ne.s32.totalorder %s181, %s182
      %p193 = scmp.eq.s32.totalorder %s21, 0
      %p194 = por %p192, %p193
      %p195 = scmp.ne.s32.totalorder %s181, %s182
      %p196 = scmp.eq.s32.totalorder %s22, 1
      %p197 = por %p195, %p196
      %p199 = scmp.ne.s32.totalorder %s182, %s198
      %p200 = scmp.eq.s32.totalorder %s22, 0
      %p201 = por %p199, %p200
      %p202 = scmp.le.s32.totalorder 1, %s16
      %p203 = scmp.lt.s32.totalorder %s16, 3
      %p204 = pnand %p202, %p203
      %p205 = pneg %p204
      // Predicated region
      $region9: #{tpu_custom_call.1} parent=5 // pred_check
        _
      $region10: #{tpu_custom_call.1} parent=5 // pred_check_branch
        %207 = sbr.rel (%p204) target = $region12
      $region11: #{tpu_custom_call.1} parent=5 // pred_region
        %s208 = ssub.s32 %s16, 1
        // Predicated region
        $region13: #{tpu_custom_call.1} parent=11 // pred_check
          %p209 = pneg %p63
        $region14: #{tpu_custom_call.1} parent=11 // pred_check_branch
          %211 = sbr.rel (%p209) target = $region16
        $region15: #{tpu_custom_call.1} parent=11 // pred_region
          _
        $region16: #{tpu_custom_call.1} parent=11 // pred_fallthru
          _
        // Predicated region
        $region17: #{tpu_custom_call.1} parent=11 // pred_check
          %p212 = pneg %p84
        $region18: #{tpu_custom_call.1} parent=11 // pred_check_branch
          %214 = sbr.rel (%p212) target = $region20
        $region19: #{tpu_custom_call.1} parent=11 // pred_region
          _
        $region20: #{tpu_custom_call.1} parent=11 // pred_fallthru
          _
        // Predicated region
        $region21: #{tpu_custom_call.1} parent=11 // pred_check
          %p215 = pneg %p105
        $region22: #{tpu_custom_call.1} parent=11 // pred_check_branch
          %217 = sbr.rel (%p215) target = $region24
        $region23: #{tpu_custom_call.1} parent=11 // pred_region
          _
        $region24: #{tpu_custom_call.1} parent=11 // pred_fallthru
          _
        // Predicated region
        $region25: #{tpu_custom_call.1} parent=11 // pred_check
          %p218 = pneg %p126
        $region26: #{tpu_custom_call.1} parent=11 // pred_check_branch
          %220 = sbr.rel (%p218) target = $region28
        $region27: #{tpu_custom_call.1} parent=11 // pred_region
          _
        $region28: #{tpu_custom_call.1} parent=11 // pred_fallthru
          _
        // Predicated region
        $region29: #{tpu_custom_call.1} parent=11 // pred_check
          %p221 = pneg %p147
        $region30: #{tpu_custom_call.1} parent=11 // pred_check_branch
          %223 = sbr.rel (%p221) target = $region32
        $region31: #{tpu_custom_call.1} parent=11 // pred_region
          _
        $region32: #{tpu_custom_call.1} parent=11 // pred_fallthru
          _
        // Predicated region
        $region33: #{tpu_custom_call.1} parent=11 // pred_check
          %p224 = pneg %p168
        $region34: #{tpu_custom_call.1} parent=11 // pred_check_branch
          %226 = sbr.rel (%p224) target = $region36
        $region35: #{tpu_custom_call.1} parent=11 // pred_region
          _
        $region36: #{tpu_custom_call.1} parent=11 // pred_fallthru
          _
      $region12: #{tpu_custom_call.1} parent=5 // pred_fallthru
        _
      %p227 = scmp.lt.s32.totalorder %s16, 2
      // Predicated region
      $region37: #{tpu_custom_call.1} parent=5 // pred_check
        %p228 = pneg %p227
      $region38: #{tpu_custom_call.1} parent=5 // pred_check_branch
        %230 = sbr.rel (%p228) target = $region40
      $region39: #{tpu_custom_call.1} parent=5 // pred_region
        // Predicated region
        $region41: #{tpu_custom_call.1} parent=39 // pred_check
          %p231 = pneg %p36
        $region42: #{tpu_custom_call.1} parent=39 // pred_check_branch
          %233 = sbr.rel (%p231) target = $region44
        $region43: #{tpu_custom_call.1} parent=39 // pred_region
          %s234 = smul.u32 4, %s16
          %p235 = scmp.lt.s32.totalorder %s234, 7
          %s236 = scalar_select %p235, %s234, 7
          %s237 = smul.addr %s236, 2
          %s238 = scalar_lea.vmem %s0, %s237
          %s239 = smul.u32 4, %s16
        $region44: #{tpu_custom_call.1} parent=39 // pred_fallthru
          _
      $region40: #{tpu_custom_call.1} parent=5 // pred_fallthru
        _
      %p240 = scmp.le.s32.totalorder 1, %s16
      %p241 = scmp.lt.s32.totalorder %s16, 3
      %p242 = pnand %p240, %p241
      %p243 = pneg %p242
      // Predicated region
      $region45: #{tpu_custom_call.1} parent=5 // pred_check
        _
      $region46: #{tpu_custom_call.1} parent=5 // pred_check_branch
        %245 = sbr.rel (%p242) target = $region48
      $region47: #{tpu_custom_call.1} parent=5 // pred_region
        %s246 = ssub.s32 %s16, 1
        %s247 = smul.u32 4, %s21
        %p248 = scmp.lt.s32.totalorder %s247, 7
        %s249 = scalar_select %p248, %s247, 7
        %s250 = smul.addr %s249, 2
        %s251 = scalar_lea.vmem %s0, %s250
        %p252 = pneg %p42
        %p253 = pneg %p39
        %p254 = pneg %p63
        %p255 = pneg %p60
        %p256 = pneg %p84
        %p257 = pneg %p81
        %p258 = pneg %p105
        %p259 = pneg %p102
        %p260 = pneg %p126
        %p261 = pneg %p123
        %p262 = pneg %p147
        %p263 = pneg %p144
        %p264 = pneg %p168
        %p265 = pneg %p165
        %p266 = pneg %p194
        %p267 = pneg %p191
        %s268 = sand.u32 %s181, 1
        %s269 = scalar_lea.sflag [#allocation3], %s268
        %s270 = sand.u32 %s181, 1
        %s271 = smul.addr %s270, 48
        %s272 = scalar_lea.vmem [#allocation2], %s271
        %s273 = smul.u32 4, %s21
        %p274 = scmp.lt.s32.totalorder %s273, 7
        %s275 = scalar_select %p274, %s273, 7
        %s276 = smul.addr %s275, 2
        %s277 = scalar_lea.vmem %s0, %s276
        %s278 = smul.u32 4, %s21
        %s279 = smul.u32 4, %s21
        %v280 = vld [vmem:[%s277] sm:$0xff]
        %v281 = vld [vmem:[%s1] sm:$0xff]
        %v282 = vld [vmem:[%s1 + $0x8] sm:$0xff]
        %v283 = vld [vmem:[%s1 + $0x10] sm:$0xff]
        %v284 = vld [vmem:[%s1 + $0x18] sm:$0xff]
        %v285 = vld [vmem:[%s2] sm:$0xff]
        %v286 = vld [vmem:[%s2 + $0x8] sm:$0xff]
        %v287 = vld [vmem:[%s2 + $0x10] sm:$0xff]
        %v288 = vld [vmem:[%s2 + $0x18] sm:$0xff]
        %290 = vset.pattern.permute.xlu0 0
        %291 = vperm.xlu0 %290, %v285
        %v292 = vpop.permute.xlu0 %291
        %295 = vset.pattern.permute.xlu0 0
        %296 = vperm.xlu0 %295, %v286
        %v297 = vpop.permute.xlu0 %296
        %300 = vset.pattern.permute.xlu0 0
        %301 = vperm.xlu0 %300, %v287
        %v302 = vpop.permute.xlu0 %301
        %305 = vset.pattern.permute.xlu0 0
        %306 = vperm.xlu0 %305, %v288
        %v307 = vpop.permute.xlu0 %306
        %v310 = vcombine.high %v280, %v280
        %v312 = vunpack.c.l.s4 1983009808
        %v313 = vunpack.c.0.s8 %v312
        %v314 = vlaneseq
        %v315 = vshrl.u32 %v314, 7
        %v316 = vsub.s32 %v313, %v315
        %v317 = vrot.slane %v280, %v316
        %v319 = vunpack.c.l.s4 1983009808
        %v320 = vunpack.c.0.s8 %v319
        %v321 = vlaneseq
        %v322 = vshrl.u32 %v321, 7
        %v323 = vsub.s32 %v320, %v322
        %v324 = vrot.slane %v310, %v323
        %v325 = vcombine.high %v317, %v317
        %v326 = vcombine.high %v324, %v324
        %vm327 = vcmask 15360
        %v329 = vsel %vm327, %v281, 0
        %v332 = vsel %vm327, %v282, 0
        %v335 = vsel %vm327, %v283, 0
        %v338 = vsel %vm327, %v284, 0
        %vm340 = vcmask 1041408
        %v341 = vsel %vm340, %v317, 0
        %v343 = vsel %vm340, %v325, 0
        %v345 = vsel %vm340, %v324, 0
        %v347 = vsel %vm340, %v326, 0
        %349 = vmatprep.subr.mxu0 %v343
        %350 = vmatpush1.msra.mxu0 %v341
        %351 = vmatprep.subr.mxu0 0.0
        %352 = vmatpush1.msra.mxu0 0.0
        %353 = vmatprep.subr.mxu0 0.0
        %354 = vmatpush1.msra.mxu0 0.0
        %355 = vmatprep.subr.mxu0 0.0
        %356 = vmatpush1.msra.mxu0 0.0
        %357 = vmatprep.subr.mxu0 0.0
        %358 = vmatpush1.msra.mxu0 0.0
        %359 = vmatprep.subr.mxu0 0.0
        %360 = vmatpush1.msra.mxu0 0.0
        %361 = vmatprep.subr.mxu0 0.0
        %362 = vmatpush1.msra.mxu0 0.0
        %363 = vmatprep.subr.mxu0 0.0
        %364 = vmatpush1.msra.mxu0 0.0
        %365 = vmatprep.subr.mxu0 0.0
        %366 = vmatpush1.msra.mxu0 0.0
        %367 = vmatprep.subr.mxu0 0.0
        %368 = vmatpush1.msra.mxu0 0.0
        %369 = vmatprep.subr.mxu0 0.0
        %370 = vmatpush1.msra.mxu0 0.0
        %371 = vmatprep.subr.mxu0 0.0
        %372 = vmatpush1.msra.mxu0 0.0
        %373 = vmatprep.subr.mxu0 0.0
        %374 = vmatpush1.msra.mxu0 0.0
        %375 = vmatprep.subr.mxu0 0.0
        %376 = vmatpush1.msra.mxu0 0.0
        %377 = vmatprep.subr.mxu0 0.0
        %378 = vmatpush1.msra.mxu0 0.0
        %379 = vmatprep.subr.mxu0 0.0
        %380 = vmatpush1.msra.mxu0 0.0
        %381 = vmatprep.subr.mxu0 0.0
        %382 = vmatpush1.msra.mxu0 0.0
        %383 = vmatprep.subr.mxu0 0.0
        %384 = vmatpush1.msra.mxu0 0.0
        %385 = vmatprep.subr.mxu0 0.0
        %386 = vmatpush1.msra.mxu0 0.0
        %387 = vmatprep.subr.mxu0 0.0
        %388 = vmatpush1.msra.mxu0 0.0
        %389 = vmatprep.subr.mxu0 0.0
        %390 = vmatpush1.msra.mxu0 0.0
        %391 = vmatprep.subr.mxu0 0.0
        %392 = vmatpush1.msra.mxu0 0.0
        %393 = vmatprep.subr.mxu0 0.0
        %394 = vmatpush1.msra.mxu0 0.0
        %395 = vmatprep.subr.mxu0 0.0
        %396 = vmatpush1.msra.mxu0 0.0
        %397 = vmatprep.subr.mxu0 0.0
        %398 = vmatpush1.msra.mxu0 0.0
        %399 = vmatprep.subr.mxu0 0.0
        %400 = vmatpush1.msra.mxu0 0.0
        %401 = vmatprep.subr.mxu0 0.0
        %402 = vmatpush1.msra.mxu0 0.0
        %403 = vmatprep.subr.mxu0 0.0
        %404 = vmatpush1.msra.mxu0 0.0
        %405 = vmatprep.subr.mxu0 0.0
        %406 = vmatpush1.msra.mxu0 0.0
        %407 = vmatprep.subr.mxu0 0.0
        %408 = vmatpush1.msra.mxu0 0.0
        %409 = vmatprep.subr.mxu0 0.0
        %410 = vmatpush1.msra.mxu0 0.0
        %411 = vmatprep.subr.mxu0 0.0
        %412 = vmatpush1.msra.mxu0 0.0
        %413 = vmatprep.mubr.f32.mxu0 0.0
        %414 = vmatmul.mubr.f32.gmra.mrb[0].mxu0 %v329
        %v415 = vpop.f32.mrb[0].mxu0
        %v416 = vadd.f32 %v292, %v415
        %v417 = vpop.f32.mrb[0].mxu0
        %v418 = vadd.f32 %v292, %v417
        %419 = vmatprep.mubr.f32.mxu0 0.0
        %420 = vmatmul.mubr.f32.gmra.mrb[0].mxu0 %v332
        %v421 = vpop.f32.mrb[0].mxu0
        %v422 = vadd.f32 %v297, %v421
        %v423 = vpop.f32.mrb[0].mxu0
        %v424 = vadd.f32 %v297, %v423
        %425 = vmatprep.mubr.f32.mxu0 0.0
        %426 = vmatmul.mubr.f32.gmra.mrb[0].mxu0 %v335
        %v427 = vpop.f32.mrb[0].mxu0
        %v428 = vadd.f32 %v302, %v427
        %v429 = vpop.f32.mrb[0].mxu0
        %v430 = vadd.f32 %v302, %v429
        %431 = vmatprep.mubr.f32.mxu0 0.0
        %432 = vmatmul.mubr.f32.gmra.mrb[0].mxu0 %v338
        %v433 = vpop.f32.mrb[0].mxu0
        %v434 = vadd.f32 %v307, %v433
        %v435 = vpop.f32.mrb[0].mxu0
        %v436 = vadd.f32 %v307, %v435
        %437 = vdwg.mxu0
        %438 = vmatprep.subr.mxu0 %v347
        %439 = vmatpush1.msra.mxu0 %v345
        %440 = vmatprep.subr.mxu0 0.0
        %441 = vmatpush1.msra.mxu0 0.0
        %442 = vmatprep.subr.mxu0 0.0
        %443 = vmatpush1.msra.mxu0 0.0
        %444 = vmatprep.subr.mxu0 0.0
        %445 = vmatpush1.msra.mxu0 0.0
        %446 = vmatprep.subr.mxu0 0.0
        %447 = vmatpush1.msra.mxu0 0.0
        %448 = vmatprep.subr.mxu0 0.0
        %449 = vmatpush1.msra.mxu0 0.0
        %450 = vmatprep.subr.mxu0 0.0
        %451 = vmatpush1.msra.mxu0 0.0
        %452 = vmatprep.subr.mxu0 0.0
        %453 = vmatpush1.msra.mxu0 0.0
        %454 = vmatprep.subr.mxu0 0.0
        %455 = vmatpush1.msra.mxu0 0.0
        %456 = vmatprep.subr.mxu0 0.0
        %457 = vmatpush1.msra.mxu0 0.0
        %458 = vmatprep.subr.mxu0 0.0
        %459 = vmatpush1.msra.mxu0 0.0
        %460 = vmatprep.subr.mxu0 0.0
        %461 = vmatpush1.msra.mxu0 0.0
        %462 = vmatprep.subr.mxu0 0.0
        %463 = vmatpush1.msra.mxu0 0.0
        %464 = vmatprep.subr.mxu0 0.0
        %465 = vmatpush1.msra.mxu0 0.0
        %466 = vmatprep.subr.mxu0 0.0
        %467 = vmatpush1.msra.mxu0 0.0
        %468 = vmatprep.subr.mxu0 0.0
        %469 = vmatpush1.msra.mxu0 0.0
        %470 = vmatprep.subr.mxu0 0.0
        %471 = vmatpush1.msra.mxu0 0.0
        %472 = vmatprep.subr.mxu0 0.0
        %473 = vmatpush1.msra.mxu0 0.0
        %474 = vmatprep.subr.mxu0 0.0
        %475 = vmatpush1.msra.mxu0 0.0
        %476 = vmatprep.subr.mxu0 0.0
        %477 = vmatpush1.msra.mxu0 0.0
        %478 = vmatprep.subr.mxu0 0.0
        %479 = vmatpush1.msra.mxu0 0.0
        %480 = vmatprep.subr.mxu0 0.0
        %481 = vmatpush1.msra.mxu0 0.0
        %482 = vmatprep.subr.mxu0 0.0
        %483 = vmatpush1.msra.mxu0 0.0
        %484 = vmatprep.subr.mxu0 0.0
        %485 = vmatpush1.msra.mxu0 0.0
        %486 = vmatprep.subr.mxu0 0.0
        %487 = vmatpush1.msra.mxu0 0.0
        %488 = vmatprep.subr.mxu0 0.0
        %489 = vmatpush1.msra.mxu0 0.0
        %490 = vmatprep.subr.mxu0 0.0
        %491 = vmatpush1.msra.mxu0 0.0
        %492 = vmatprep.subr.mxu0 0.0
        %493 = vmatpush1.msra.mxu0 0.0
        %494 = vmatprep.subr.mxu0 0.0
        %495 = vmatpush1.msra.mxu0 0.0
        %496 = vmatprep.subr.mxu0 0.0
        %497 = vmatpush1.msra.mxu0 0.0
        %498 = vmatprep.subr.mxu0 0.0
        %499 = vmatpush1.msra.mxu0 0.0
        %500 = vmatprep.subr.mxu0 0.0
        %501 = vmatpush1.msra.mxu0 0.0
        %502 = vmatprep.mubr.f32.mxu0 0.0
        %503 = vmatmul.mubr.f32.gmra.mrb[0].mxu0 %v329
        %v504 = vpop.f32.mrb[0].mxu0
        %v505 = vadd.f32 %v292, %v504
        %v506 = vpop.f32.mrb[0].mxu0
        %v507 = vadd.f32 %v292, %v506
        %508 = vmatprep.mubr.f32.mxu0 0.0
        %509 = vmatmul.mubr.f32.gmra.mrb[0].mxu0 %v332
        %v510 = vpop.f32.mrb[0].mxu0
        %v511 = vadd.f32 %v297, %v510
        %v512 = vpop.f32.mrb[0].mxu0
        %v513 = vadd.f32 %v297, %v512
        %514 = vmatprep.mubr.f32.mxu0 0.0
        %515 = vmatmul.mubr.f32.gmra.mrb[0].mxu0 %v335
        %v516 = vpop.f32.mrb[0].mxu0
        %v517 = vadd.f32 %v302, %v516
        %v518 = vpop.f32.mrb[0].mxu0
        %v519 = vadd.f32 %v302, %v518
        %520 = vmatprep.mubr.f32.mxu0 0.0
        %521 = vmatmul.mubr.f32.gmra.mrb[0].mxu0 %v338
        %v522 = vpop.f32.mrb[0].mxu0
        %v523 = vadd.f32 %v307, %v522
        %v524 = vpop.f32.mrb[0].mxu0
        %v525 = vadd.f32 %v307, %v524
        %526 = vdwg.mxu0
        %v527 = vand.u32 2147483647, %v416
        %vm528 = vcmp.le.f32.partialorder %v527, 0.7853982
        %vm529 = vcmp.lt.s32.totalorder %v416, 0
        %v530 = vand.u32 %v416, 2139095040
        %v531 = vshrl.u32 %v530, 23
        %v532 = vsub.s32 %v531, 127
        %v533 = vand.u32 2147483647, %v416
        %v534 = vand.u32 %v533, 8388607
        %v535 = vor.u32 %v534, 8388608
        %v536 = vsub.s32 0, %v535
        %v537 = vadd.s32 %v532, 1
        %vm538 = vcmp.gt.s32.totalorder %v537, 0
        %v539 = vsel %vm538, %v537, 0
        %v540 = vshrl.u32 %v539, 5
        %v541 = vand.u32 %v539, 31
        %v542 = vsub.s32 32, %v541
        %v543 = vshrl.u32 683565275, %v542
        %v544 = vshll.u32 683565275, %v541
        %v545 = vshrl.u32 2475754826, %v542
        %v546 = vor.u32 %v544, %v545
        %v547 = vshll.u32 2475754826, %v541
        %v548 = vshrl.u32 2131351028, %v542
        %v549 = vor.u32 %v547, %v548
        %v550 = vshll.u32 2131351028, %v541
        %v551 = vshrl.u32 2102212464, %v542
        %v552 = vor.u32 %v550, %v551
        %v553 = vshll.u32 2102212464, %v541
        %v554 = vshrl.u32 920167782, %v542
        %v555 = vor.u32 %v553, %v554
        %v556 = vshll.u32 920167782, %v541
        %v557 = vshrl.u32 1326507024, %v542
        %v558 = vor.u32 %v556, %v557
        %vm559 = vcmp.lt.s32.totalorder %v540, 1
        %vm560 = vcmp.lt.s32.totalorder %v540, 2
        %vm561 = vcmp.lt.s32.totalorder %v540, 3
        %vm562 = vcmp.lt.s32.totalorder %v540, 4
        %v563 = vsel %vm559, %v543, %v546
        %v564 = vsel %vm562, %v552, 2102212464
        %v565 = vsel %vm561, %v549, %v564
        %v566 = vsel %vm560, %v563, %v565
        %v567 = vsel %vm559, %v546, %v549
        %v568 = vsel %vm562, %v555, 920167782
        %v569 = vsel %vm561, %v552, %v568
        %v570 = vsel %vm560, %v567, %v569
        %v571 = vsel %vm559, %v549, %v552
        %v572 = vsel %vm562, %v558, 1326507024
        %v573 = vsel %vm561, %v555, %v572
        %v574 = vsel %vm560, %v571, %v573
        %v575 = vshll.u32 %v535, 8
        %v576 = vmul.u32.u64.compose %v575, %v574
        %v577 = vextract.low.u32 %v576
        %v578 = vextract.high.u32 %v576
        %v579 = vmul.u32.u64.compose %v575, %v570
        %v580 = vextract.low.u32 %v579
        %v581 = vextract.high.u32 %v579
        %v582 = vmul.u32 %v575, %v566
        %v583 = vadd.s32 %v578, %v580
        %vm584 = vc.u32 %v578, %v580
        %v585 = vadd.s32 %v581, 1
        %v586 = vsel %vm584, %v585, %v581
        %v587 = vadd.s32 %v582, %v586
        %v588 = vadd.s32 %v587, 536870912
        %v589 = vshrl.u32 %v588, 30
        %v590 = vshll.u32 %v589, 30
        %v591 = vsub.s32 %v587, %v590
        %vm592 = vcmp.lt.s32.totalorder %v591, 0
        %v593 = vsub.s32 0, %v591
        %v594 = vsel %vm592, %v593, %v591
        %v595 = vclz %v594
        %v596 = vsub.s32 %v595, 2
        %vm597 = vcmp.gt.s32.totalorder 0, %v596
        %v598 = vsel %vm597, 0, %v596
        %v599 = vsub.s32 32, %v598
        %v600 = vshll.u32 %v591, %v598
        %v601 = vshrl.u32 %v583, %v599
        %v602 = vor.u32 %v600, %v601
        %v603 = vsub.s32 4294967266, %v598
        %v604 = vadd.s32 %v603, 127
        %v605 = vshll.u32 %v604, 23
        %v606 = vor.u32 4788187, %v605
        %v607 = vand.u32 2147483647, %v606
        %v609 = vcvt.s32.f32 %v602
        %v610 = vmul.f32 %v609, %v607
        %v611 = vxor.u32 %v610, 2147483648
        %v612 = vsel %vm529, %v611, %v610
        %v613 = vsub.s32 4, %v589
        %v614 = vsel %vm529, %v613, %v589
        %v615 = vsel %vm528, %v416, %v612
        %v616 = vsel %vm528, 0, %v614
        %v617 = vcosq.f32.pop %v615
        %v618 = vsinq.f32.pop %v615
        %vm619 = vweird.f32 %v416
        %v620 = vadd.s32 %v616, 3
        %v621 = vand.u32 %v620, 3
        %vm622 = vcmp.lt.s32.totalorder %v621, 2
        %vm623 = vcmp.eq.s32.totalorder %v621, 0
        %v624 = vxor.u32 %v618, 2147483648
        %v625 = vsel %vm623, %v617, %v624
        %vm626 = vcmp.eq.s32.totalorder %v621, 2
        %v627 = vxor.u32 %v617, 2147483648
        %v628 = vsel %vm626, %v627, %v618
        %v629 = vsel %vm622, %v625, %v628
        %v630 = vsel %vm619, nan, %v629
        %v631 = vand.u32 2147483647, %v418
        %vm632 = vcmp.le.f32.partialorder %v631, 0.7853982
        %vm633 = vcmp.lt.s32.totalorder %v418, 0
        %v634 = vand.u32 %v418, 2139095040
        %v635 = vshrl.u32 %v634, 23
        %v636 = vsub.s32 %v635, 127
        %v637 = vand.u32 2147483647, %v418
        %v638 = vand.u32 %v637, 8388607
        %v639 = vor.u32 %v638, 8388608
        %v640 = vsub.s32 0, %v639
        %v641 = vadd.s32 %v636, 1
        %vm642 = vcmp.gt.s32.totalorder %v641, 0
        %v643 = vsel %vm642, %v641, 0
        %v644 = vshrl.u32 %v643, 5
        %v645 = vand.u32 %v643, 31
        %v646 = vsub.s32 32, %v645
        %v647 = vshrl.u32 683565275, %v646
        %v648 = vshll.u32 683565275, %v645
        %v649 = vshrl.u32 2475754826, %v646
        %v650 = vor.u32 %v648, %v649
        %v651 = vshll.u32 2475754826, %v645
        %v652 = vshrl.u32 2131351028, %v646
        %v653 = vor.u32 %v651, %v652
        %v654 = vshll.u32 2131351028, %v645
        %v655 = vshrl.u32 2102212464, %v646
        %v656 = vor.u32 %v654, %v655
        %v657 = vshll.u32 2102212464, %v645
        %v658 = vshrl.u32 920167782, %v646
        %v659 = vor.u32 %v657, %v658
        %v660 = vshll.u32 920167782, %v645
        %v661 = vshrl.u32 1326507024, %v646
        %v662 = vor.u32 %v660, %v661
        %vm663 = vcmp.lt.s32.totalorder %v644, 1
        %vm664 = vcmp.lt.s32.totalorder %v644, 2
        %vm665 = vcmp.lt.s32.totalorder %v644, 3
        %vm666 = vcmp.lt.s32.totalorder %v644, 4
        %v667 = vsel %vm663, %v647, %v650
        %v668 = vsel %vm666, %v656, 2102212464
        %v669 = vsel %vm665, %v653, %v668
        %v670 = vsel %vm664, %v667, %v669
        %v671 = vsel %vm663, %v650, %v653
        %v672 = vsel %vm666, %v659, 920167782
        %v673 = vsel %vm665, %v656, %v672
        %v674 = vsel %vm664, %v671, %v673
        %v675 = vsel %vm663, %v653, %v656
        %v676 = vsel %vm666, %v662, 1326507024
        %v677 = vsel %vm665, %v659, %v676
        %v678 = vsel %vm664, %v675, %v677
        %v679 = vshll.u32 %v639, 8
        %v680 = vmul.u32.u64.compose %v679, %v678
        %v681 = vextract.low.u32 %v680
        %v682 = vextract.high.u32 %v680
        %v683 = vmul.u32.u64.compose %v679, %v674
        %v684 = vextract.low.u32 %v683
        %v685 = vextract.high.u32 %v683
        %v686 = vmul.u32 %v679, %v670
        %v687 = vadd.s32 %v682, %v684
        %vm688 = vc.u32 %v682, %v684
        %v689 = vadd.s32 %v685, 1
        %v690 = vsel %vm688, %v689, %v685
        %v691 = vadd.s32 %v686, %v690
        %v692 = vadd.s32 %v691, 536870912
        %v693 = vshrl.u32 %v692, 30
        %v694 = vshll.u32 %v693, 30
        %v695 = vsub.s32 %v691, %v694
        %vm696 = vcmp.lt.s32.totalorder %v695, 0
        %v697 = vsub.s32 0, %v695
        %v698 = vsel %vm696, %v697, %v695
        %v699 = vclz %v698
        %v700 = vsub.s32 %v699, 2
        %vm701 = vcmp.gt.s32.totalorder 0, %v700
        %v702 = vsel %vm701, 0, %v700
        %v703 = vsub.s32 32, %v702
        %v704 = vshll.u32 %v695, %v702
        %v705 = vshrl.u32 %v687, %v703
        %v706 = vor.u32 %v704, %v705
        %v707 = vsub.s32 4294967266, %v702
        %v708 = vadd.s32 %v707, 127
        %v709 = vshll.u32 %v708, 23
        %v710 = vor.u32 4788187, %v709
        %v711 = vand.u32 2147483647, %v710
        %v713 = vcvt.s32.f32 %v706
        %v714 = vmul.f32 %v713, %v711
        %v715 = vxor.u32 %v714, 2147483648
        %v716 = vsel %vm633, %v715, %v714
        %v717 = vsub.s32 4, %v693
        %v718 = vsel %vm633, %v717, %v693
        %v719 = vsel %vm632, %v418, %v716
        %v720 = vsel %vm632, 0, %v718
        %v721 = vcosq.f32.pop %v719
        %v722 = vsinq.f32.pop %v719
        %vm723 = vweird.f32 %v418
        %v724 = vadd.s32 %v720, 3
        %v725 = vand.u32 %v724, 3
        %vm726 = vcmp.lt.s32.totalorder %v725, 2
        %vm727 = vcmp.eq.s32.totalorder %v725, 0
        %v728 = vxor.u32 %v722, 2147483648
        %v729 = vsel %vm727, %v721, %v728
        %vm730 = vcmp.eq.s32.totalorder %v725, 2
        %v731 = vxor.u32 %v721, 2147483648
        %v732 = vsel %vm730, %v731, %v722
        %v733 = vsel %vm726, %v729, %v732
        %v734 = vsel %vm723, nan, %v733
        %v735 = vand.u32 2147483647, %v505
        %vm736 = vcmp.le.f32.partialorder %v735, 0.7853982
        %vm737 = vcmp.lt.s32.totalorder %v505, 0
        %v738 = vand.u32 %v505, 2139095040
        %v739 = vshrl.u32 %v738, 23
        %v740 = vsub.s32 %v739, 127
        %v741 = vand.u32 2147483647, %v505
        %v742 = vand.u32 %v741, 8388607
        %v743 = vor.u32 %v742, 8388608
        %v744 = vsub.s32 0, %v743
        %v745 = vadd.s32 %v740, 1
        %vm746 = vcmp.gt.s32.totalorder %v745, 0
        %v747 = vsel %vm746, %v745, 0
        %v748 = vshrl.u32 %v747, 5
        %v749 = vand.u32 %v747, 31
        %v750 = vsub.s32 32, %v749
        %v751 = vshrl.u32 683565275, %v750
        %v752 = vshll.u32 683565275, %v749
        %v753 = vshrl.u32 2475754826, %v750
        %v754 = vor.u32 %v752, %v753
        %v755 = vshll.u32 2475754826, %v749
        %v756 = vshrl.u32 2131351028, %v750
        %v757 = vor.u32 %v755, %v756
        %v758 = vshll.u32 2131351028, %v749
        %v759 = vshrl.u32 2102212464, %v750
        %v760 = vor.u32 %v758, %v759
        %v761 = vshll.u32 2102212464, %v749
        %v762 = vshrl.u32 920167782, %v750
        %v763 = vor.u32 %v761, %v762
        %v764 = vshll.u32 920167782, %v749
        %v765 = vshrl.u32 1326507024, %v750
        %v766 = vor.u32 %v764, %v765
        %vm767 = vcmp.lt.s32.totalorder %v748, 1
        %vm768 = vcmp.lt.s32.totalorder %v748, 2
        %vm769 = vcmp.lt.s32.totalorder %v748, 3
        %vm770 = vcmp.lt.s32.totalorder %v748, 4
        %v771 = vsel %vm767, %v751, %v754
        %v772 = vsel %vm770, %v760, 2102212464
        %v773 = vsel %vm769, %v757, %v772
        %v774 = vsel %vm768, %v771, %v773
        %v775 = vsel %vm767, %v754, %v757
        %v776 = vsel %vm770, %v763, 920167782
        %v777 = vsel %vm769, %v760, %v776
        %v778 = vsel %vm768, %v775, %v777
        %v779 = vsel %vm767, %v757, %v760
        %v780 = vsel %vm770, %v766, 1326507024
        %v781 = vsel %vm769, %v763, %v780
        %v782 = vsel %vm768, %v779, %v781
        %v783 = vshll.u32 %v743, 8
        %v784 = vmul.u32.u64.compose %v783, %v782
        %v785 = vextract.low.u32 %v784
        %v786 = vextract.high.u32 %v784
        %v787 = vmul.u32.u64.compose %v783, %v778
        %v788 = vextract.low.u32 %v787
        %v789 = vextract.high.u32 %v787
        %v790 = vmul.u32 %v783, %v774
        %v791 = vadd.s32 %v786, %v788
        %vm792 = vc.u32 %v786, %v788
        %v793 = vadd.s32 %v789, 1
        %v794 = vsel %vm792, %v793, %v789
        %v795 = vadd.s32 %v790, %v794
        %v796 = vadd.s32 %v795, 536870912
        %v797 = vshrl.u32 %v796, 30
        %v798 = vshll.u32 %v797, 30
        %v799 = vsub.s32 %v795, %v798
        %vm800 = vcmp.lt.s32.totalorder %v799, 0
        %v801 = vsub.s32 0, %v799
        %v802 = vsel %vm800, %v801, %v799
        %v803 = vclz %v802
        %v804 = vsub.s32 %v803, 2
        %vm805 = vcmp.gt.s32.totalorder 0, %v804
        %v806 = vsel %vm805, 0, %v804
        %v807 = vsub.s32 32, %v806
        %v808 = vshll.u32 %v799, %v806
        %v809 = vshrl.u32 %v791, %v807
        %v810 = vor.u32 %v808, %v809
        %v811 = vsub.s32 4294967266, %v806
        %v812 = vadd.s32 %v811, 127
        %v813 = vshll.u32 %v812, 23
        %v814 = vor.u32 4788187, %v813
        %v815 = vand.u32 2147483647, %v814
        %v817 = vcvt.s32.f32 %v810
        %v818 = vmul.f32 %v817, %v815
        %v819 = vxor.u32 %v818, 2147483648
        %v820 = vsel %vm737, %v819, %v818
        %v821 = vsub.s32 4, %v797
        %v822 = vsel %vm737, %v821, %v797
        %v823 = vsel %vm736, %v505, %v820
        %v824 = vsel %vm736, 0, %v822
        %v825 = vcosq.f32.pop %v823
        %v826 = vsinq.f32.pop %v823
        %vm827 = vweird.f32 %v505
        %v828 = vadd.s32 %v824, 3
        %v829 = vand.u32 %v828, 3
        %vm830 = vcmp.lt.s32.totalorder %v829, 2
        %vm831 = vcmp.eq.s32.totalorder %v829, 0
        %v832 = vxor.u32 %v826, 2147483648
        %v833 = vsel %vm831, %v825, %v832
        %vm834 = vcmp.eq.s32.totalorder %v829, 2
        %v835 = vxor.u32 %v825, 2147483648
        %v836 = vsel %vm834, %v835, %v826
        %v837 = vsel %vm830, %v833, %v836
        %v838 = vsel %vm827, nan, %v837
        %v839 = vand.u32 2147483647, %v507
        %vm840 = vcmp.le.f32.partialorder %v839, 0.7853982
        %vm841 = vcmp.lt.s32.totalorder %v507, 0
        %v842 = vand.u32 %v507, 2139095040
        %v843 = vshrl.u32 %v842, 23
        %v844 = vsub.s32 %v843, 127
        %v845 = vand.u32 2147483647, %v507
        %v846 = vand.u32 %v845, 8388607
        %v847 = vor.u32 %v846, 8388608
        %v848 = vsub.s32 0, %v847
        %v849 = vadd.s32 %v844, 1
        %vm850 = vcmp.gt.s32.totalorder %v849, 0
        %v851 = vsel %vm850, %v849, 0
        %v852 = vshrl.u32 %v851, 5
        %v853 = vand.u32 %v851, 31
        %v854 = vsub.s32 32, %v853
        %v855 = vshrl.u32 683565275, %v854
        %v856 = vshll.u32 683565275, %v853
        %v857 = vshrl.u32 2475754826, %v854
        %v858 = vor.u32 %v856, %v857
        %v859 = vshll.u32 2475754826, %v853
        %v860 = vshrl.u32 2131351028, %v854
        %v861 = vor.u32 %v859, %v860
        %v862 = vshll.u32 2131351028, %v853
        %v863 = vshrl.u32 2102212464, %v854
        %v864 = vor.u32 %v862, %v863
        %v865 = vshll.u32 2102212464, %v853
        %v866 = vshrl.u32 920167782, %v854
        %v867 = vor.u32 %v865, %v866
        %v868 = vshll.u32 920167782, %v853
        %v869 = vshrl.u32 1326507024, %v854
        %v870 = vor.u32 %v868, %v869
        %vm871 = vcmp.lt.s32.totalorder %v852, 1
        %vm872 = vcmp.lt.s32.totalorder %v852, 2
        %vm873 = vcmp.lt.s32.totalorder %v852, 3
        %vm874 = vcmp.lt.s32.totalorder %v852, 4
        %v875 = vsel %vm871, %v855, %v858
        %v876 = vsel %vm874, %v864, 2102212464
        %v877 = vsel %vm873, %v861, %v876
        %v878 = vsel %vm872, %v875, %v877
        %v879 = vsel %vm871, %v858, %v861
        %v880 = vsel %vm874, %v867, 920167782
        %v881 = vsel %vm873, %v864, %v880
        %v882 = vsel %vm872, %v879, %v881
        %v883 = vsel %vm871, %v861, %v864
        %v884 = vsel %vm874, %v870, 1326507024
        %v885 = vsel %vm873, %v867, %v884
        %v886 = vsel %vm872, %v883, %v885
        %v887 = vshll.u32 %v847, 8
        %v888 = vmul.u32.u64.compose %v887, %v886
        %v889 = vextract.low.u32 %v888
        %v890 = vextract.high.u32 %v888
        %v891 = vmul.u32.u64.compose %v887, %v882
        %v892 = vextract.low.u32 %v891
        %v893 = vextract.high.u32 %v891
        %v894 = vmul.u32 %v887, %v878
        %v895 = vadd.s32 %v890, %v892
        %vm896 = vc.u32 %v890, %v892
        %v897 = vadd.s32 %v893, 1
        %v898 = vsel %vm896, %v897, %v893
        %v899 = vadd.s32 %v894, %v898
        %v900 = vadd.s32 %v899, 536870912
        %v901 = vshrl.u32 %v900, 30
        %v902 = vshll.u32 %v901, 30
        %v903 = vsub.s32 %v899, %v902
        %vm904 = vcmp.lt.s32.totalorder %v903, 0
        %v905 = vsub.s32 0, %v903
        %v906 = vsel %vm904, %v905, %v903
        %v907 = vclz %v906
        %v908 = vsub.s32 %v907, 2
        %vm909 = vcmp.gt.s32.totalorder 0, %v908
        %v910 = vsel %vm909, 0, %v908
        %v911 = vsub.s32 32, %v910
        %v912 = vshll.u32 %v903, %v910
        %v913 = vshrl.u32 %v895, %v911
        %v914 = vor.u32 %v912, %v913
        %v915 = vsub.s32 4294967266, %v910
        %v916 = vadd.s32 %v915, 127
        %v917 = vshll.u32 %v916, 23
        %v918 = vor.u32 4788187, %v917
        %v919 = vand.u32 2147483647, %v918
        %v921 = vcvt.s32.f32 %v914
        %v922 = vmul.f32 %v921, %v919
        %v923 = vxor.u32 %v922, 2147483648
        %v924 = vsel %vm841, %v923, %v922
        %v925 = vsub.s32 4, %v901
        %v926 = vsel %vm841, %v925, %v901
        %v927 = vsel %vm840, %v507, %v924
        %v928 = vsel %vm840, 0, %v926
        %v929 = vcosq.f32.pop %v927
        %v930 = vsinq.f32.pop %v927
        %vm931 = vweird.f32 %v507
        %v932 = vadd.s32 %v928, 3
        %v933 = vand.u32 %v932, 3
        %vm934 = vcmp.lt.s32.totalorder %v933, 2
        %vm935 = vcmp.eq.s32.totalorder %v933, 0
        %v936 = vxor.u32 %v930, 2147483648
        %v937 = vsel %vm935, %v929, %v936
        %vm938 = vcmp.eq.s32.totalorder %v933, 2
        %v939 = vxor.u32 %v929, 2147483648
        %v940 = vsel %vm938, %v939, %v930
        %v941 = vsel %vm934, %v937, %v940
        %v942 = vsel %vm931, nan, %v941
        %v943 = vand.u32 2147483647, %v422
        %vm944 = vcmp.le.f32.partialorder %v943, 0.7853982
        %vm945 = vcmp.lt.s32.totalorder %v422, 0
        %v946 = vand.u32 %v422, 2139095040
        %v947 = vshrl.u32 %v946, 23
        %v948 = vsub.s32 %v947, 127
        %v949 = vand.u32 2147483647, %v422
        %v950 = vand.u32 %v949, 8388607
        %v951 = vor.u32 %v950, 8388608
        %v952 = vsub.s32 0, %v951
        %v953 = vadd.s32 %v948, 1
        %vm954 = vcmp.gt.s32.totalorder %v953, 0
        %v955 = vsel %vm954, %v953, 0
        %v956 = vshrl.u32 %v955, 5
        %v957 = vand.u32 %v955, 31
        %v958 = vsub.s32 32, %v957
        %v959 = vshrl.u32 683565275, %v958
        %v960 = vshll.u32 683565275, %v957
        %v961 = vshrl.u32 2475754826, %v958
        %v962 = vor.u32 %v960, %v961
        %v963 = vshll.u32 2475754826, %v957
        %v964 = vshrl.u32 2131351028, %v958
        %v965 = vor.u32 %v963, %v964
        %v966 = vshll.u32 2131351028, %v957
        %v967 = vshrl.u32 2102212464, %v958
        %v968 = vor.u32 %v966, %v967
        %v969 = vshll.u32 2102212464, %v957
        %v970 = vshrl.u32 920167782, %v958
        %v971 = vor.u32 %v969, %v970
        %v972 = vshll.u32 920167782, %v957
        %v973 = vshrl.u32 1326507024, %v958
        %v974 = vor.u32 %v972, %v973
        %vm975 = vcmp.lt.s32.totalorder %v956, 1
        %vm976 = vcmp.lt.s32.totalorder %v956, 2
        %vm977 = vcmp.lt.s32.totalorder %v956, 3
        %vm978 = vcmp.lt.s32.totalorder %v956, 4
        %v979 = vsel %vm975, %v959, %v962
        %v980 = vsel %vm978, %v968, 2102212464
        %v981 = vsel %vm977, %v965, %v980
        %v982 = vsel %vm976, %v979, %v981
        %v983 = vsel %vm975, %v962, %v965
        %v984 = vsel %vm978, %v971, 920167782
        %v985 = vsel %vm977, %v968, %v984
        %v986 = vsel %vm976, %v983, %v985
        %v987 = vsel %vm975, %v965, %v968
        %v988 = vsel %vm978, %v974, 1326507024
        %v989 = vsel %vm977, %v971, %v988
        %v990 = vsel %vm976, %v987, %v989
        %v991 = vshll.u32 %v951, 8
        %v992 = vmul.u32.u64.compose %v991, %v990
        %v993 = vextract.low.u32 %v992
        %v994 = vextract.high.u32 %v992
        %v995 = vmul.u32.u64.compose %v991, %v986
        %v996 = vextract.low.u32 %v995
        %v997 = vextract.high.u32 %v995
        %v998 = vmul.u32 %v991, %v982
        %v999 = vadd.s32 %v994, %v996
        %vm1000 = vc.u32 %v994, %v996
        %v1001 = vadd.s32 %v997, 1
        %v1002 = vsel %vm1000, %v1001, %v997
        %v1003 = vadd.s32 %v998, %v1002
        %v1004 = vadd.s32 %v1003, 536870912
        %v1005 = vshrl.u32 %v1004, 30
        %v1006 = vshll.u32 %v1005, 30
        %v1007 = vsub.s32 %v1003, %v1006
        %vm1008 = vcmp.lt.s32.totalorder %v1007, 0
        %v1009 = vsub.s32 0, %v1007
        %v1010 = vsel %vm1008, %v1009, %v1007
        %v1011 = vclz %v1010
        %v1012 = vsub.s32 %v1011, 2
        %vm1013 = vcmp.gt.s32.totalorder 0, %v1012
        %v1014 = vsel %vm1013, 0, %v1012
        %v1015 = vsub.s32 32, %v1014
        %v1016 = vshll.u32 %v1007, %v1014
        %v1017 = vshrl.u32 %v999, %v1015
        %v1018 = vor.u32 %v1016, %v1017
        %v1019 = vsub.s32 4294967266, %v1014
        %v1020 = vadd.s32 %v1019, 127
        %v1021 = vshll.u32 %v1020, 23
        %v1022 = vor.u32 4788187, %v1021
        %v1023 = vand.u32 2147483647, %v1022
        %v1025 = vcvt.s32.f32 %v1018
        %v1026 = vmul.f32 %v1025, %v1023
        %v1027 = vxor.u32 %v1026, 2147483648
        %v1028 = vsel %vm945, %v1027, %v1026
        %v1029 = vsub.s32 4, %v1005
        %v1030 = vsel %vm945, %v1029, %v1005
        %v1031 = vsel %vm944, %v422, %v1028
        %v1032 = vsel %vm944, 0, %v1030
        %v1033 = vcosq.f32.pop %v1031
        %v1034 = vsinq.f32.pop %v1031
        %vm1035 = vweird.f32 %v422
        %v1036 = vadd.s32 %v1032, 3
        %v1037 = vand.u32 %v1036, 3
        %vm1038 = vcmp.lt.s32.totalorder %v1037, 2
        %vm1039 = vcmp.eq.s32.totalorder %v1037, 0
        %v1040 = vxor.u32 %v1034, 2147483648
        %v1041 = vsel %vm1039, %v1033, %v1040
        %vm1042 = vcmp.eq.s32.totalorder %v1037, 2
        %v1043 = vxor.u32 %v1033, 2147483648
        %v1044 = vsel %vm1042, %v1043, %v1034
        %v1045 = vsel %vm1038, %v1041, %v1044
        %v1046 = vsel %vm1035, nan, %v1045
        %v1047 = vand.u32 2147483647, %v424
        %vm1048 = vcmp.le.f32.partialorder %v1047, 0.7853982
        %vm1049 = vcmp.lt.s32.totalorder %v424, 0
        %v1050 = vand.u32 %v424, 2139095040
        %v1051 = vshrl.u32 %v1050, 23
        %v1052 = vsub.s32 %v1051, 127
        %v1053 = vand.u32 2147483647, %v424
        %v1054 = vand.u32 %v1053, 8388607
        %v1055 = vor.u32 %v1054, 8388608
        %v1056 = vsub.s32 0, %v1055
        %v1057 = vadd.s32 %v1052, 1
        %vm1058 = vcmp.gt.s32.totalorder %v1057, 0
        %v1059 = vsel %vm1058, %v1057, 0
        %v1060 = vshrl.u32 %v1059, 5
        %v1061 = vand.u32 %v1059, 31
        %v1062 = vsub.s32 32, %v1061
        %v1063 = vshrl.u32 683565275, %v1062
        %v1064 = vshll.u32 683565275, %v1061
        %v1065 = vshrl.u32 2475754826, %v1062
        %v1066 = vor.u32 %v1064, %v1065
        %v1067 = vshll.u32 2475754826, %v1061
        %v1068 = vshrl.u32 2131351028, %v1062
        %v1069 = vor.u32 %v1067, %v1068
        %v1070 = vshll.u32 2131351028, %v1061
        %v1071 = vshrl.u32 2102212464, %v1062
        %v1072 = vor.u32 %v1070, %v1071
        %v1073 = vshll.u32 2102212464, %v1061
        %v1074 = vshrl.u32 920167782, %v1062
        %v1075 = vor.u32 %v1073, %v1074
        %v1076 = vshll.u32 920167782, %v1061
        %v1077 = vshrl.u32 1326507024, %v1062
        %v1078 = vor.u32 %v1076, %v1077
        %vm1079 = vcmp.lt.s32.totalorder %v1060, 1
        %vm1080 = vcmp.lt.s32.totalorder %v1060, 2
        %vm1081 = vcmp.lt.s32.totalorder %v1060, 3
        %vm1082 = vcmp.lt.s32.totalorder %v1060, 4
        %v1083 = vsel %vm1079, %v1063, %v1066
        %v1084 = vsel %vm1082, %v1072, 2102212464
        %v1085 = vsel %vm1081, %v1069, %v1084
        %v1086 = vsel %vm1080, %v1083, %v1085
        %v1087 = vsel %vm1079, %v1066, %v1069
        %v1088 = vsel %vm1082, %v1075, 920167782
        %v1089 = vsel %vm1081, %v1072, %v1088
        %v1090 = vsel %vm1080, %v1087, %v1089
        %v1091 = vsel %vm1079, %v1069, %v1072
        %v1092 = vsel %vm1082, %v1078, 1326507024
        %v1093 = vsel %vm1081, %v1075, %v1092
        %v1094 = vsel %vm1080, %v1091, %v1093
        %v1095 = vshll.u32 %v1055, 8
        %v1096 = vmul.u32.u64.compose %v1095, %v1094
        %v1097 = vextract.low.u32 %v1096
        %v1098 = vextract.high.u32 %v1096
        %v1099 = vmul.u32.u64.compose %v1095, %v1090
        %v1100 = vextract.low.u32 %v1099
        %v1101 = vextract.high.u32 %v1099
        %v1102 = vmul.u32 %v1095, %v1086
        %v1103 = vadd.s32 %v1098, %v1100
        %vm1104 = vc.u32 %v1098, %v1100
        %v1105 = vadd.s32 %v1101, 1
        %v1106 = vsel %vm1104, %v1105, %v1101
        %v1107 = vadd.s32 %v1102, %v1106
        %v1108 = vadd.s32 %v1107, 536870912
        %v1109 = vshrl.u32 %v1108, 30
        %v1110 = vshll.u32 %v1109, 30
        %v1111 = vsub.s32 %v1107, %v1110
        %vm1112 = vcmp.lt.s32.totalorder %v1111, 0
        %v1113 = vsub.s32 0, %v1111
        %v1114 = vsel %vm1112, %v1113, %v1111
        %v1115 = vclz %v1114
        %v1116 = vsub.s32 %v1115, 2
        %vm1117 = vcmp.gt.s32.totalorder 0, %v1116
        %v1118 = vsel %vm1117, 0, %v1116
        %v1119 = vsub.s32 32, %v1118
        %v1120 = vshll.u32 %v1111, %v1118
        %v1121 = vshrl.u32 %v1103, %v1119
        %v1122 = vor.u32 %v1120, %v1121
        %v1123 = vsub.s32 4294967266, %v1118
        %v1124 = vadd.s32 %v1123, 127
        %v1125 = vshll.u32 %v1124, 23
        %v1126 = vor.u32 4788187, %v1125
        %v1127 = vand.u32 2147483647, %v1126
        %v1129 = vcvt.s32.f32 %v1122
        %v1130 = vmul.f32 %v1129, %v1127
        %v1131 = vxor.u32 %v1130, 2147483648
        %v1132 = vsel %vm1049, %v1131, %v1130
        %v1133 = vsub.s32 4, %v1109
        %v1134 = vsel %vm1049, %v1133, %v1109
        %v1135 = vsel %vm1048, %v424, %v1132
        %v1136 = vsel %vm1048, 0, %v1134
        %v1137 = vcosq.f32.pop %v1135
        %v1138 = vsinq.f32.pop %v1135
        %vm1139 = vweird.f32 %v424
        %v1140 = vadd.s32 %v1136, 3
        %v1141 = vand.u32 %v1140, 3
        %vm1142 = vcmp.lt.s32.totalorder %v1141, 2
        %vm1143 = vcmp.eq.s32.totalorder %v1141, 0
        %v1144 = vxor.u32 %v1138, 2147483648
        %v1145 = vsel %vm1143, %v1137, %v1144
        %vm1146 = vcmp.eq.s32.totalorder %v1141, 2
        %v1147 = vxor.u32 %v1137, 2147483648
        %v1148 = vsel %vm1146, %v1147, %v1138
        %v1149 = vsel %vm1142, %v1145, %v1148
        %v1150 = vsel %vm1139, nan, %v1149
        %v1151 = vand.u32 2147483647, %v511
        %vm1152 = vcmp.le.f32.partialorder %v1151, 0.7853982
        %vm1153 = vcmp.lt.s32.totalorder %v511, 0
        %v1154 = vand.u32 %v511, 2139095040
        %v1155 = vshrl.u32 %v1154, 23
        %v1156 = vsub.s32 %v1155, 127
        %v1157 = vand.u32 2147483647, %v511
        %v1158 = vand.u32 %v1157, 8388607
        %v1159 = vor.u32 %v1158, 8388608
        %v1160 = vsub.s32 0, %v1159
        %v1161 = vadd.s32 %v1156, 1
        %vm1162 = vcmp.gt.s32.totalorder %v1161, 0
        %v1163 = vsel %vm1162, %v1161, 0
        %v1164 = vshrl.u32 %v1163, 5
        %v1165 = vand.u32 %v1163, 31
        %v1166 = vsub.s32 32, %v1165
        %v1167 = vshrl.u32 683565275, %v1166
        %v1168 = vshll.u32 683565275, %v1165
        %v1169 = vshrl.u32 2475754826, %v1166
        %v1170 = vor.u32 %v1168, %v1169
        %v1171 = vshll.u32 2475754826, %v1165
        %v1172 = vshrl.u32 2131351028, %v1166
        %v1173 = vor.u32 %v1171, %v1172
        %v1174 = vshll.u32 2131351028, %v1165
        %v1175 = vshrl.u32 2102212464, %v1166
        %v1176 = vor.u32 %v1174, %v1175
        %v1177 = vshll.u32 2102212464, %v1165
        %v1178 = vshrl.u32 920167782, %v1166
        %v1179 = vor.u32 %v1177, %v1178
        %v1180 = vshll.u32 920167782, %v1165
        %v1181 = vshrl.u32 1326507024, %v1166
        %v1182 = vor.u32 %v1180, %v1181
        %vm1183 = vcmp.lt.s32.totalorder %v1164, 1
        %vm1184 = vcmp.lt.s32.totalorder %v1164, 2
        %vm1185 = vcmp.lt.s32.totalorder %v1164, 3
        %vm1186 = vcmp.lt.s32.totalorder %v1164, 4
        %v1187 = vsel %vm1183, %v1167, %v1170
        %v1188 = vsel %vm1186, %v1176, 2102212464
        %v1189 = vsel %vm1185, %v1173, %v1188
        %v1190 = vsel %vm1184, %v1187, %v1189
        %v1191 = vsel %vm1183, %v1170, %v1173
        %v1192 = vsel %vm1186, %v1179, 920167782
        %v1193 = vsel %vm1185, %v1176, %v1192
        %v1194 = vsel %vm1184, %v1191, %v1193
        %v1195 = vsel %vm1183, %v1173, %v1176
        %v1196 = vsel %vm1186, %v1182, 1326507024
        %v1197 = vsel %vm1185, %v1179, %v1196
        %v1198 = vsel %vm1184, %v1195, %v1197
        %v1199 = vshll.u32 %v1159, 8
        %v1200 = vmul.u32.u64.compose %v1199, %v1198
        %v1201 = vextract.low.u32 %v1200
        %v1202 = vextract.high.u32 %v1200
        %v1203 = vmul.u32.u64.compose %v1199, %v1194
        %v1204 = vextract.low.u32 %v1203
        %v1205 = vextract.high.u32 %v1203
        %v1206 = vmul.u32 %v1199, %v1190
        %v1207 = vadd.s32 %v1202, %v1204
        %vm1208 = vc.u32 %v1202, %v1204
        %v1209 = vadd.s32 %v1205, 1
        %v1210 = vsel %vm1208, %v1209, %v1205
        %v1211 = vadd.s32 %v1206, %v1210
        %v1212 = vadd.s32 %v1211, 536870912
        %v1213 = vshrl.u32 %v1212, 30
        %v1214 = vshll.u32 %v1213, 30
        %v1215 = vsub.s32 %v1211, %v1214
        %vm1216 = vcmp.lt.s32.totalorder %v1215, 0
        %v1217 = vsub.s32 0, %v1215
        %v1218 = vsel %vm1216, %v1217, %v1215
        %v1219 = vclz %v1218
        %v1220 = vsub.s32 %v1219, 2
        %vm1221 = vcmp.gt.s32.totalorder 0, %v1220
        %v1222 = vsel %vm1221, 0, %v1220
        %v1223 = vsub.s32 32, %v1222
        %v1224 = vshll.u32 %v1215, %v1222
        %v1225 = vshrl.u32 %v1207, %v1223
        %v1226 = vor.u32 %v1224, %v1225
        %v1227 = vsub.s32 4294967266, %v1222
        %v1228 = vadd.s32 %v1227, 127
        %v1229 = vshll.u32 %v1228, 23
        %v1230 = vor.u32 4788187, %v1229
        %v1231 = vand.u32 2147483647, %v1230
        %v1233 = vcvt.s32.f32 %v1226
        %v1234 = vmul.f32 %v1233, %v1231
        %v1235 = vxor.u32 %v1234, 2147483648
        %v1236 = vsel %vm1153, %v1235, %v1234
        %v1237 = vsub.s32 4, %v1213
        %v1238 = vsel %vm1153, %v1237, %v1213
        %v1239 = vsel %vm1152, %v511, %v1236
        %v1240 = vsel %vm1152, 0, %v1238
        %v1241 = vcosq.f32.pop %v1239
        %v1242 = vsinq.f32.pop %v1239
        %vm1243 = vweird.f32 %v511
        %v1244 = vadd.s32 %v1240, 3
        %v1245 = vand.u32 %v1244, 3
        %vm1246 = vcmp.lt.s32.totalorder %v1245, 2
        %vm1247 = vcmp.eq.s32.totalorder %v1245, 0
        %v1248 = vxor.u32 %v1242, 2147483648
        %v1249 = vsel %vm1247, %v1241, %v1248
        %vm1250 = vcmp.eq.s32.totalorder %v1245, 2
        %v1251 = vxor.u32 %v1241, 2147483648
        %v1252 = vsel %vm1250, %v1251, %v1242
        %v1253 = vsel %vm1246, %v1249, %v1252
        %v1254 = vsel %vm1243, nan, %v1253
        %v1255 = vand.u32 2147483647, %v513
        %vm1256 = vcmp.le.f32.partialorder %v1255, 0.7853982
        %vm1257 = vcmp.lt.s32.totalorder %v513, 0
        %v1258 = vand.u32 %v513, 2139095040
        %v1259 = vshrl.u32 %v1258, 23
        %v1260 = vsub.s32 %v1259, 127
        %v1261 = vand.u32 2147483647, %v513
        %v1262 = vand.u32 %v1261, 8388607
        %v1263 = vor.u32 %v1262, 8388608
        %v1264 = vsub.s32 0, %v1263
        %v1265 = vadd.s32 %v1260, 1
        %vm1266 = vcmp.gt.s32.totalorder %v1265, 0
        %v1267 = vsel %vm1266, %v1265, 0
        %v1268 = vshrl.u32 %v1267, 5
        %v1269 = vand.u32 %v1267, 31
        %v1270 = vsub.s32 32, %v1269
        %v1271 = vshrl.u32 683565275, %v1270
        %v1272 = vshll.u32 683565275, %v1269
        %v1273 = vshrl.u32 2475754826, %v1270
        %v1274 = vor.u32 %v1272, %v1273
        %v1275 = vshll.u32 2475754826, %v1269
        %v1276 = vshrl.u32 2131351028, %v1270
        %v1277 = vor.u32 %v1275, %v1276
        %v1278 = vshll.u32 2131351028, %v1269
        %v1279 = vshrl.u32 2102212464, %v1270
        %v1280 = vor.u32 %v1278, %v1279
        %v1281 = vshll.u32 2102212464, %v1269
        %v1282 = vshrl.u32 920167782, %v1270
        %v1283 = vor.u32 %v1281, %v1282
        %v1284 = vshll.u32 920167782, %v1269
        %v1285 = vshrl.u32 1326507024, %v1270
        %v1286 = vor.u32 %v1284, %v1285
        %vm1287 = vcmp.lt.s32.totalorder %v1268, 1
        %vm1288 = vcmp.lt.s32.totalorder %v1268, 2
        %vm1289 = vcmp.lt.s32.totalorder %v1268, 3
        %vm1290 = vcmp.lt.s32.totalorder %v1268, 4
        %v1291 = vsel %vm1287, %v1271, %v1274
        %v1292 = vsel %vm1290, %v1280, 2102212464
        %v1293 = vsel %vm1289, %v1277, %v1292
        %v1294 = vsel %vm1288, %v1291, %v1293
        %v1295 = vsel %vm1287, %v1274, %v1277
        %v1296 = vsel %vm1290, %v1283, 920167782
        %v1297 = vsel %vm1289, %v1280, %v1296
        %v1298 = vsel %vm1288, %v1295, %v1297
        %v1299 = vsel %vm1287, %v1277, %v1280
        %v1300 = vsel %vm1290, %v1286, 1326507024
        %v1301 = vsel %vm1289, %v1283, %v1300
        %v1302 = vsel %vm1288, %v1299, %v1301
        %v1303 = vshll.u32 %v1263, 8
        %v1304 = vmul.u32.u64.compose %v1303, %v1302
        %v1305 = vextract.low.u32 %v1304
        %v1306 = vextract.high.u32 %v1304
        %v1307 = vmul.u32.u64.compose %v1303, %v1298
        %v1308 = vextract.low.u32 %v1307
        %v1309 = vextract.high.u32 %v1307
        %v1310 = vmul.u32 %v1303, %v1294
        %v1311 = vadd.s32 %v1306, %v1308
        %vm1312 = vc.u32 %v1306, %v1308
        %v1313 = vadd.s32 %v1309, 1
        %v1314 = vsel %vm1312, %v1313, %v1309
        %v1315 = vadd.s32 %v1310, %v1314
        %v1316 = vadd.s32 %v1315, 536870912
        %v1317 = vshrl.u32 %v1316, 30
        %v1318 = vshll.u32 %v1317, 30
        %v1319 = vsub.s32 %v1315, %v1318
        %vm1320 = vcmp.lt.s32.totalorder %v1319, 0
        %v1321 = vsub.s32 0, %v1319
        %v1322 = vsel %vm1320, %v1321, %v1319
        %v1323 = vclz %v1322
        %v1324 = vsub.s32 %v1323, 2
        %vm1325 = vcmp.gt.s32.totalorder 0, %v1324
        %v1326 = vsel %vm1325, 0, %v1324
        %v1327 = vsub.s32 32, %v1326
        %v1328 = vshll.u32 %v1319, %v1326
        %v1329 = vshrl.u32 %v1311, %v1327
        %v1330 = vor.u32 %v1328, %v1329
        %v1331 = vsub.s32 4294967266, %v1326
        %v1332 = vadd.s32 %v1331, 127
        %v1333 = vshll.u32 %v1332, 23
        %v1334 = vor.u32 4788187, %v1333
        %v1335 = vand.u32 2147483647, %v1334
        %v1337 = vcvt.s32.f32 %v1330
        %v1338 = vmul.f32 %v1337, %v1335
        %v1339 = vxor.u32 %v1338, 2147483648
        %v1340 = vsel %vm1257, %v1339, %v1338
        %v1341 = vsub.s32 4, %v1317
        %v1342 = vsel %vm1257, %v1341, %v1317
        %v1343 = vsel %vm1256, %v513, %v1340
        %v1344 = vsel %vm1256, 0, %v1342
        %v1345 = vcosq.f32.pop %v1343
        %v1346 = vsinq.f32.pop %v1343
        %vm1347 = vweird.f32 %v513
        %v1348 = vadd.s32 %v1344, 3
        %v1349 = vand.u32 %v1348, 3
        %vm1350 = vcmp.lt.s32.totalorder %v1349, 2
        %vm1351 = vcmp.eq.s32.totalorder %v1349, 0
        %v1352 = vxor.u32 %v1346, 2147483648
        %v1353 = vsel %vm1351, %v1345, %v1352
        %vm1354 = vcmp.eq.s32.totalorder %v1349, 2
        %v1355 = vxor.u32 %v1345, 2147483648
        %v1356 = vsel %vm1354, %v1355, %v1346
        %v1357 = vsel %vm1350, %v1353, %v1356
        %v1358 = vsel %vm1347, nan, %v1357
        %v1359 = vand.u32 2147483647, %v428
        %vm1360 = vcmp.le.f32.partialorder %v1359, 0.7853982
        %vm1361 = vcmp.lt.s32.totalorder %v428, 0
        %v1362 = vand.u32 %v428, 2139095040
        %v1363 = vshrl.u32 %v1362, 23
        %v1364 = vsub.s32 %v1363, 127
        %v1365 = vand.u32 2147483647, %v428
        %v1366 = vand.u32 %v1365, 8388607
        %v1367 = vor.u32 %v1366, 8388608
        %v1368 = vsub.s32 0, %v1367
        %v1369 = vadd.s32 %v1364, 1
        %vm1370 = vcmp.gt.s32.totalorder %v1369, 0
        %v1371 = vsel %vm1370, %v1369, 0
        %v1372 = vshrl.u32 %v1371, 5
        %v1373 = vand.u32 %v1371, 31
        %v1374 = vsub.s32 32, %v1373
        %v1375 = vshrl.u32 683565275, %v1374
        %v1376 = vshll.u32 683565275, %v1373
        %v1377 = vshrl.u32 2475754826, %v1374
        %v1378 = vor.u32 %v1376, %v1377
        %v1379 = vshll.u32 2475754826, %v1373
        %v1380 = vshrl.u32 2131351028, %v1374
        %v1381 = vor.u32 %v1379, %v1380
        %v1382 = vshll.u32 2131351028, %v1373
        %v1383 = vshrl.u32 2102212464, %v1374
        %v1384 = vor.u32 %v1382, %v1383
        %v1385 = vshll.u32 2102212464, %v1373
        %v1386 = vshrl.u32 920167782, %v1374
        %v1387 = vor.u32 %v1385, %v1386
        %v1388 = vshll.u32 920167782, %v1373
        %v1389 = vshrl.u32 1326507024, %v1374
        %v1390 = vor.u32 %v1388, %v1389
        %vm1391 = vcmp.lt.s32.totalorder %v1372, 1
        %vm1392 = vcmp.lt.s32.totalorder %v1372, 2
        %vm1393 = vcmp.lt.s32.totalorder %v1372, 3
        %vm1394 = vcmp.lt.s32.totalorder %v1372, 4
        %v1395 = vsel %vm1391, %v1375, %v1378
        %v1396 = vsel %vm1394, %v1384, 2102212464
        %v1397 = vsel %vm1393, %v1381, %v1396
        %v1398 = vsel %vm1392, %v1395, %v1397
        %v1399 = vsel %vm1391, %v1378, %v1381
        %v1400 = vsel %vm1394, %v1387, 920167782
        %v1401 = vsel %vm1393, %v1384, %v1400
        %v1402 = vsel %vm1392, %v1399, %v1401
        %v1403 = vsel %vm1391, %v1381, %v1384
        %v1404 = vsel %vm1394, %v1390, 1326507024
        %v1405 = vsel %vm1393, %v1387, %v1404
        %v1406 = vsel %vm1392, %v1403, %v1405
        %v1407 = vshll.u32 %v1367, 8
        %v1408 = vmul.u32.u64.compose %v1407, %v1406
        %v1409 = vextract.low.u32 %v1408
        %v1410 = vextract.high.u32 %v1408
        %v1411 = vmul.u32.u64.compose %v1407, %v1402
        %v1412 = vextract.low.u32 %v1411
        %v1413 = vextract.high.u32 %v1411
        %v1414 = vmul.u32 %v1407, %v1398
        %v1415 = vadd.s32 %v1410, %v1412
        %vm1416 = vc.u32 %v1410, %v1412
        %v1417 = vadd.s32 %v1413, 1
        %v1418 = vsel %vm1416, %v1417, %v1413
        %v1419 = vadd.s32 %v1414, %v1418
        %v1420 = vadd.s32 %v1419, 536870912
        %v1421 = vshrl.u32 %v1420, 30
        %v1422 = vshll.u32 %v1421, 30
        %v1423 = vsub.s32 %v1419, %v1422
        %vm1424 = vcmp.lt.s32.totalorder %v1423, 0
        %v1425 = vsub.s32 0, %v1423
        %v1426 = vsel %vm1424, %v1425, %v1423
        %v1427 = vclz %v1426
        %v1428 = vsub.s32 %v1427, 2
        %vm1429 = vcmp.gt.s32.totalorder 0, %v1428
        %v1430 = vsel %vm1429, 0, %v1428
        %v1431 = vsub.s32 32, %v1430
        %v1432 = vshll.u32 %v1423, %v1430
        %v1433 = vshrl.u32 %v1415, %v1431
        %v1434 = vor.u32 %v1432, %v1433
        %v1435 = vsub.s32 4294967266, %v1430
        %v1436 = vadd.s32 %v1435, 127
        %v1437 = vshll.u32 %v1436, 23
        %v1438 = vor.u32 4788187, %v1437
        %v1439 = vand.u32 2147483647, %v1438
        %v1441 = vcvt.s32.f32 %v1434
        %v1442 = vmul.f32 %v1441, %v1439
        %v1443 = vxor.u32 %v1442, 2147483648
        %v1444 = vsel %vm1361, %v1443, %v1442
        %v1445 = vsub.s32 4, %v1421
        %v1446 = vsel %vm1361, %v1445, %v1421
        %v1447 = vsel %vm1360, %v428, %v1444
        %v1448 = vsel %vm1360, 0, %v1446
        %v1449 = vcosq.f32.pop %v1447
        %v1450 = vsinq.f32.pop %v1447
        %vm1451 = vweird.f32 %v428
        %v1452 = vadd.s32 %v1448, 3
        %v1453 = vand.u32 %v1452, 3
        %vm1454 = vcmp.lt.s32.totalorder %v1453, 2
        %vm1455 = vcmp.eq.s32.totalorder %v1453, 0
        %v1456 = vxor.u32 %v1450, 2147483648
        %v1457 = vsel %vm1455, %v1449, %v1456
        %vm1458 = vcmp.eq.s32.totalorder %v1453, 2
        %v1459 = vxor.u32 %v1449, 2147483648
        %v1460 = vsel %vm1458, %v1459, %v1450
        %v1461 = vsel %vm1454, %v1457, %v1460
        %v1462 = vsel %vm1451, nan, %v1461
        %v1463 = vand.u32 2147483647, %v430
        %vm1464 = vcmp.le.f32.partialorder %v1463, 0.7853982
        %vm1465 = vcmp.lt.s32.totalorder %v430, 0
        %v1466 = vand.u32 %v430, 2139095040
        %v1467 = vshrl.u32 %v1466, 23
        %v1468 = vsub.s32 %v1467, 127
        %v1469 = vand.u32 2147483647, %v430
        %v1470 = vand.u32 %v1469, 8388607
        %v1471 = vor.u32 %v1470, 8388608
        %v1472 = vsub.s32 0, %v1471
        %v1473 = vadd.s32 %v1468, 1
        %vm1474 = vcmp.gt.s32.totalorder %v1473, 0
        %v1475 = vsel %vm1474, %v1473, 0
        %v1476 = vshrl.u32 %v1475, 5
        %v1477 = vand.u32 %v1475, 31
        %v1478 = vsub.s32 32, %v1477
        %v1479 = vshrl.u32 683565275, %v1478
        %v1480 = vshll.u32 683565275, %v1477
        %v1481 = vshrl.u32 2475754826, %v1478
        %v1482 = vor.u32 %v1480, %v1481
        %v1483 = vshll.u32 2475754826, %v1477
        %v1484 = vshrl.u32 2131351028, %v1478
        %v1485 = vor.u32 %v1483, %v1484
        %v1486 = vshll.u32 2131351028, %v1477
        %v1487 = vshrl.u32 2102212464, %v1478
        %v1488 = vor.u32 %v1486, %v1487
        %v1489 = vshll.u32 2102212464, %v1477
        %v1490 = vshrl.u32 920167782, %v1478
        %v1491 = vor.u32 %v1489, %v1490
        %v1492 = vshll.u32 920167782, %v1477
        %v1493 = vshrl.u32 1326507024, %v1478
        %v1494 = vor.u32 %v1492, %v1493
        %vm1495 = vcmp.lt.s32.totalorder %v1476, 1
        %vm1496 = vcmp.lt.s32.totalorder %v1476, 2
        %vm1497 = vcmp.lt.s32.totalorder %v1476, 3
        %vm1498 = vcmp.lt.s32.totalorder %v1476, 4
        %v1499 = vsel %vm1495, %v1479, %v1482
        %v1500 = vsel %vm1498, %v1488, 2102212464
        %v1501 = vsel %vm1497, %v1485, %v1500
        %v1502 = vsel %vm1496, %v1499, %v1501
        %v1503 = vsel %vm1495, %v1482, %v1485
        %v1504 = vsel %vm1498, %v1491, 920167782
        %v1505 = vsel %vm1497, %v1488, %v1504
        %v1506 = vsel %vm1496, %v1503, %v1505
        %v1507 = vsel %vm1495, %v1485, %v1488
        %v1508 = vsel %vm1498, %v1494, 1326507024
        %v1509 = vsel %vm1497, %v1491, %v1508
        %v1510 = vsel %vm1496, %v1507, %v1509
        %v1511 = vshll.u32 %v1471, 8
        %v1512 = vmul.u32.u64.compose %v1511, %v1510
        %v1513 = vextract.low.u32 %v1512
        %v1514 = vextract.high.u32 %v1512
        %v1515 = vmul.u32.u64.compose %v1511, %v1506
        %v1516 = vextract.low.u32 %v1515
        %v1517 = vextract.high.u32 %v1515
        %v1518 = vmul.u32 %v1511, %v1502
        %v1519 = vadd.s32 %v1514, %v1516
        %vm1520 = vc.u32 %v1514, %v1516
        %v1521 = vadd.s32 %v1517, 1
        %v1522 = vsel %vm1520, %v1521, %v1517
        %v1523 = vadd.s32 %v1518, %v1522
        %v1524 = vadd.s32 %v1523, 536870912
        %v1525 = vshrl.u32 %v1524, 30
        %v1526 = vshll.u32 %v1525, 30
        %v1527 = vsub.s32 %v1523, %v1526
        %vm1528 = vcmp.lt.s32.totalorder %v1527, 0
        %v1529 = vsub.s32 0, %v1527
        %v1530 = vsel %vm1528, %v1529, %v1527
        %v1531 = vclz %v1530
        %v1532 = vsub.s32 %v1531, 2
        %vm1533 = vcmp.gt.s32.totalorder 0, %v1532
        %v1534 = vsel %vm1533, 0, %v1532
        %v1535 = vsub.s32 32, %v1534
        %v1536 = vshll.u32 %v1527, %v1534
        %v1537 = vshrl.u32 %v1519, %v1535
        %v1538 = vor.u32 %v1536, %v1537
        %v1539 = vsub.s32 4294967266, %v1534
        %v1540 = vadd.s32 %v1539, 127
        %v1541 = vshll.u32 %v1540, 23
        %v1542 = vor.u32 4788187, %v1541
        %v1543 = vand.u32 2147483647, %v1542
        %v1545 = vcvt.s32.f32 %v1538
        %v1546 = vmul.f32 %v1545, %v1543
        %v1547 = vxor.u32 %v1546, 2147483648
        %v1548 = vsel %vm1465, %v1547, %v1546
        %v1549 = vsub.s32 4, %v1525
        %v1550 = vsel %vm1465, %v1549, %v1525
        %v1551 = vsel %vm1464, %v430, %v1548
        %v1552 = vsel %vm1464, 0, %v1550
        %v1553 = vcosq.f32.pop %v1551
        %v1554 = vsinq.f32.pop %v1551
        %vm1555 = vweird.f32 %v430
        %v1556 = vadd.s32 %v1552, 3
        %v1557 = vand.u32 %v1556, 3
        %vm1558 = vcmp.lt.s32.totalorder %v1557, 2
        %vm1559 = vcmp.eq.s32.totalorder %v1557, 0
        %v1560 = vxor.u32 %v1554, 2147483648
        %v1561 = vsel %vm1559, %v1553, %v1560
        %vm1562 = vcmp.eq.s32.totalorder %v1557, 2
        %v1563 = vxor.u32 %v1553, 2147483648
        %v1564 = vsel %vm1562, %v1563, %v1554
        %v1565 = vsel %vm1558, %v1561, %v1564
        %v1566 = vsel %vm1555, nan, %v1565
        %v1567 = vand.u32 2147483647, %v517
        %vm1568 = vcmp.le.f32.partialorder %v1567, 0.7853982
        %vm1569 = vcmp.lt.s32.totalorder %v517, 0
        %v1570 = vand.u32 %v517, 2139095040
        %v1571 = vshrl.u32 %v1570, 23
        %v1572 = vsub.s32 %v1571, 127
        %v1573 = vand.u32 2147483647, %v517
        %v1574 = vand.u32 %v1573, 8388607
        %v1575 = vor.u32 %v1574, 8388608
        %v1576 = vsub.s32 0, %v1575
        %v1577 = vadd.s32 %v1572, 1
        %vm1578 = vcmp.gt.s32.totalorder %v1577, 0
        %v1579 = vsel %vm1578, %v1577, 0
        %v1580 = vshrl.u32 %v1579, 5
        %v1581 = vand.u32 %v1579, 31
        %v1582 = vsub.s32 32, %v1581
        %v1583 = vshrl.u32 683565275, %v1582
        %v1584 = vshll.u32 683565275, %v1581
        %v1585 = vshrl.u32 2475754826, %v1582
        %v1586 = vor.u32 %v1584, %v1585
        %v1587 = vshll.u32 2475754826, %v1581
        %v1588 = vshrl.u32 2131351028, %v1582
        %v1589 = vor.u32 %v1587, %v1588
        %v1590 = vshll.u32 2131351028, %v1581
        %v1591 = vshrl.u32 2102212464, %v1582
        %v1592 = vor.u32 %v1590, %v1591
        %v1593 = vshll.u32 2102212464, %v1581
        %v1594 = vshrl.u32 920167782, %v1582
        %v1595 = vor.u32 %v1593, %v1594
        %v1596 = vshll.u32 920167782, %v1581
        %v1597 = vshrl.u32 1326507024, %v1582
        %v1598 = vor.u32 %v1596, %v1597
        %vm1599 = vcmp.lt.s32.totalorder %v1580, 1
        %vm1600 = vcmp.lt.s32.totalorder %v1580, 2
        %vm1601 = vcmp.lt.s32.totalorder %v1580, 3
        %vm1602 = vcmp.lt.s32.totalorder %v1580, 4
        %v1603 = vsel %vm1599, %v1583, %v1586
        %v1604 = vsel %vm1602, %v1592, 2102212464
        %v1605 = vsel %vm1601, %v1589, %v1604
        %v1606 = vsel %vm1600, %v1603, %v1605
        %v1607 = vsel %vm1599, %v1586, %v1589
        %v1608 = vsel %vm1602, %v1595, 920167782
        %v1609 = vsel %vm1601, %v1592, %v1608
        %v1610 = vsel %vm1600, %v1607, %v1609
        %v1611 = vsel %vm1599, %v1589, %v1592
        %v1612 = vsel %vm1602, %v1598, 1326507024
        %v1613 = vsel %vm1601, %v1595, %v1612
        %v1614 = vsel %vm1600, %v1611, %v1613
        %v1615 = vshll.u32 %v1575, 8
        %v1616 = vmul.u32.u64.compose %v1615, %v1614
        %v1617 = vextract.low.u32 %v1616
        %v1618 = vextract.high.u32 %v1616
        %v1619 = vmul.u32.u64.compose %v1615, %v1610
        %v1620 = vextract.low.u32 %v1619
        %v1621 = vextract.high.u32 %v1619
        %v1622 = vmul.u32 %v1615, %v1606
        %v1623 = vadd.s32 %v1618, %v1620
        %vm1624 = vc.u32 %v1618, %v1620
        %v1625 = vadd.s32 %v1621, 1
        %v1626 = vsel %vm1624, %v1625, %v1621
        %v1627 = vadd.s32 %v1622, %v1626
        %v1628 = vadd.s32 %v1627, 536870912
        %v1629 = vshrl.u32 %v1628, 30
        %v1630 = vshll.u32 %v1629, 30
        %v1631 = vsub.s32 %v1627, %v1630
        %vm1632 = vcmp.lt.s32.totalorder %v1631, 0
        %v1633 = vsub.s32 0, %v1631
        %v1634 = vsel %vm1632, %v1633, %v1631
        %v1635 = vclz %v1634
        %v1636 = vsub.s32 %v1635, 2
        %vm1637 = vcmp.gt.s32.totalorder 0, %v1636
        %v1638 = vsel %vm1637, 0, %v1636
        %v1639 = vsub.s32 32, %v1638
        %v1640 = vshll.u32 %v1631, %v1638
        %v1641 = vshrl.u32 %v1623, %v1639
        %v1642 = vor.u32 %v1640, %v1641
        %v1643 = vsub.s32 4294967266, %v1638
        %v1644 = vadd.s32 %v1643, 127
        %v1645 = vshll.u32 %v1644, 23
        %v1646 = vor.u32 4788187, %v1645
        %v1647 = vand.u32 2147483647, %v1646
        %v1649 = vcvt.s32.f32 %v1642
        %v1650 = vmul.f32 %v1649, %v1647
        %v1651 = vxor.u32 %v1650, 2147483648
        %v1652 = vsel %vm1569, %v1651, %v1650
        %v1653 = vsub.s32 4, %v1629
        %v1654 = vsel %vm1569, %v1653, %v1629
        %v1655 = vsel %vm1568, %v517, %v1652
        %v1656 = vsel %vm1568, 0, %v1654
        %v1657 = vcosq.f32.pop %v1655
        %v1658 = vsinq.f32.pop %v1655
        %vm1659 = vweird.f32 %v517
        %v1660 = vadd.s32 %v1656, 3
        %v1661 = vand.u32 %v1660, 3
        %vm1662 = vcmp.lt.s32.totalorder %v1661, 2
        %vm1663 = vcmp.eq.s32.totalorder %v1661, 0
        %v1664 = vxor.u32 %v1658, 2147483648
        %v1665 = vsel %vm1663, %v1657, %v1664
        %vm1666 = vcmp.eq.s32.totalorder %v1661, 2
        %v1667 = vxor.u32 %v1657, 2147483648
        %v1668 = vsel %vm1666, %v1667, %v1658
        %v1669 = vsel %vm1662, %v1665, %v1668
        %v1670 = vsel %vm1659, nan, %v1669
        %v1671 = vand.u32 2147483647, %v519
        %vm1672 = vcmp.le.f32.partialorder %v1671, 0.7853982
        %vm1673 = vcmp.lt.s32.totalorder %v519, 0
        %v1674 = vand.u32 %v519, 2139095040
        %v1675 = vshrl.u32 %v1674, 23
        %v1676 = vsub.s32 %v1675, 127
        %v1677 = vand.u32 2147483647, %v519
        %v1678 = vand.u32 %v1677, 8388607
        %v1679 = vor.u32 %v1678, 8388608
        %v1680 = vsub.s32 0, %v1679
        %v1681 = vadd.s32 %v1676, 1
        %vm1682 = vcmp.gt.s32.totalorder %v1681, 0
        %v1683 = vsel %vm1682, %v1681, 0
        %v1684 = vshrl.u32 %v1683, 5
        %v1685 = vand.u32 %v1683, 31
        %v1686 = vsub.s32 32, %v1685
        %v1687 = vshrl.u32 683565275, %v1686
        %v1688 = vshll.u32 683565275, %v1685
        %v1689 = vshrl.u32 2475754826, %v1686
        %v1690 = vor.u32 %v1688, %v1689
        %v1691 = vshll.u32 2475754826, %v1685
        %v1692 = vshrl.u32 2131351028, %v1686
        %v1693 = vor.u32 %v1691, %v1692
        %v1694 = vshll.u32 2131351028, %v1685
        %v1695 = vshrl.u32 2102212464, %v1686
        %v1696 = vor.u32 %v1694, %v1695
        %v1697 = vshll.u32 2102212464, %v1685
        %v1698 = vshrl.u32 920167782, %v1686
        %v1699 = vor.u32 %v1697, %v1698
        %v1700 = vshll.u32 920167782, %v1685
        %v1701 = vshrl.u32 1326507024, %v1686
        %v1702 = vor.u32 %v1700, %v1701
        %vm1703 = vcmp.lt.s32.totalorder %v1684, 1
        %vm1704 = vcmp.lt.s32.totalorder %v1684, 2
        %vm1705 = vcmp.lt.s32.totalorder %v1684, 3
        %vm1706 = vcmp.lt.s32.totalorder %v1684, 4
        %v1707 = vsel %vm1703, %v1687, %v1690
        %v1708 = vsel %vm1706, %v1696, 2102212464
        %v1709 = vsel %vm1705, %v1693, %v1708
        %v1710 = vsel %vm1704, %v1707, %v1709
        %v1711 = vsel %vm1703, %v1690, %v1693
        %v1712 = vsel %vm1706, %v1699, 920167782
        %v1713 = vsel %vm1705, %v1696, %v1712
        %v1714 = vsel %vm1704, %v1711, %v1713
        %v1715 = vsel %vm1703, %v1693, %v1696
        %v1716 = vsel %vm1706, %v1702, 1326507024
        %v1717 = vsel %vm1705, %v1699, %v1716
        %v1718 = vsel %vm1704, %v1715, %v1717
        %v1719 = vshll.u32 %v1679, 8
        %v1720 = vmul.u32.u64.compose %v1719, %v1718
        %v1721 = vextract.low.u32 %v1720
        %v1722 = vextract.high.u32 %v1720
        %v1723 = vmul.u32.u64.compose %v1719, %v1714
        %v1724 = vextract.low.u32 %v1723
        %v1725 = vextract.high.u32 %v1723
        %v1726 = vmul.u32 %v1719, %v1710
        %v1727 = vadd.s32 %v1722, %v1724
        %vm1728 = vc.u32 %v1722, %v1724
        %v1729 = vadd.s32 %v1725, 1
        %v1730 = vsel %vm1728, %v1729, %v1725
        %v1731 = vadd.s32 %v1726, %v1730
        %v1732 = vadd.s32 %v1731, 536870912
        %v1733 = vshrl.u32 %v1732, 30
        %v1734 = vshll.u32 %v1733, 30
        %v1735 = vsub.s32 %v1731, %v1734
        %vm1736 = vcmp.lt.s32.totalorder %v1735, 0
        %v1737 = vsub.s32 0, %v1735
        %v1738 = vsel %vm1736, %v1737, %v1735
        %v1739 = vclz %v1738
        %v1740 = vsub.s32 %v1739, 2
        %vm1741 = vcmp.gt.s32.totalorder 0, %v1740
        %v1742 = vsel %vm1741, 0, %v1740
        %v1743 = vsub.s32 32, %v1742
        %v1744 = vshll.u32 %v1735, %v1742
        %v1745 = vshrl.u32 %v1727, %v1743
        %v1746 = vor.u32 %v1744, %v1745
        %v1747 = vsub.s32 4294967266, %v1742
        %v1748 = vadd.s32 %v1747, 127
        %v1749 = vshll.u32 %v1748, 23
        %v1750 = vor.u32 4788187, %v1749
        %v1751 = vand.u32 2147483647, %v1750
        %v1753 = vcvt.s32.f32 %v1746
        %v1754 = vmul.f32 %v1753, %v1751
        %v1755 = vxor.u32 %v1754, 2147483648
        %v1756 = vsel %vm1673, %v1755, %v1754
        %v1757 = vsub.s32 4, %v1733
        %v1758 = vsel %vm1673, %v1757, %v1733
        %v1759 = vsel %vm1672, %v519, %v1756
        %v1760 = vsel %vm1672, 0, %v1758
        %v1761 = vcosq.f32.pop %v1759
        %v1762 = vsinq.f32.pop %v1759
        %vm1763 = vweird.f32 %v519
        %v1764 = vadd.s32 %v1760, 3
        %v1765 = vand.u32 %v1764, 3
        %vm1766 = vcmp.lt.s32.totalorder %v1765, 2
        %vm1767 = vcmp.eq.s32.totalorder %v1765, 0
        %v1768 = vxor.u32 %v1762, 2147483648
        %v1769 = vsel %vm1767, %v1761, %v1768
        %vm1770 = vcmp.eq.s32.totalorder %v1765, 2
        %v1771 = vxor.u32 %v1761, 2147483648
        %v1772 = vsel %vm1770, %v1771, %v1762
        %v1773 = vsel %vm1766, %v1769, %v1772
        %v1774 = vsel %vm1763, nan, %v1773
        %v1775 = vand.u32 2147483647, %v434
        %vm1776 = vcmp.le.f32.partialorder %v1775, 0.7853982
        %vm1777 = vcmp.lt.s32.totalorder %v434, 0
        %v1778 = vand.u32 %v434, 2139095040
        %v1779 = vshrl.u32 %v1778, 23
        %v1780 = vsub.s32 %v1779, 127
        %v1781 = vand.u32 2147483647, %v434
        %v1782 = vand.u32 %v1781, 8388607
        %v1783 = vor.u32 %v1782, 8388608
        %v1784 = vsub.s32 0, %v1783
        %v1785 = vadd.s32 %v1780, 1
        %vm1786 = vcmp.gt.s32.totalorder %v1785, 0
        %v1787 = vsel %vm1786, %v1785, 0
        %v1788 = vshrl.u32 %v1787, 5
        %v1789 = vand.u32 %v1787, 31
        %v1790 = vsub.s32 32, %v1789
        %v1791 = vshrl.u32 683565275, %v1790
        %v1792 = vshll.u32 683565275, %v1789
        %v1793 = vshrl.u32 2475754826, %v1790
        %v1794 = vor.u32 %v1792, %v1793
        %v1795 = vshll.u32 2475754826, %v1789
        %v1796 = vshrl.u32 2131351028, %v1790
        %v1797 = vor.u32 %v1795, %v1796
        %v1798 = vshll.u32 2131351028, %v1789
        %v1799 = vshrl.u32 2102212464, %v1790
        %v1800 = vor.u32 %v1798, %v1799
        %v1801 = vshll.u32 2102212464, %v1789
        %v1802 = vshrl.u32 920167782, %v1790
        %v1803 = vor.u32 %v1801, %v1802
        %v1804 = vshll.u32 920167782, %v1789
        %v1805 = vshrl.u32 1326507024, %v1790
        %v1806 = vor.u32 %v1804, %v1805
        %vm1807 = vcmp.lt.s32.totalorder %v1788, 1
        %vm1808 = vcmp.lt.s32.totalorder %v1788, 2
        %vm1809 = vcmp.lt.s32.totalorder %v1788, 3
        %vm1810 = vcmp.lt.s32.totalorder %v1788, 4
        %v1811 = vsel %vm1807, %v1791, %v1794
        %v1812 = vsel %vm1810, %v1800, 2102212464
        %v1813 = vsel %vm1809, %v1797, %v1812
        %v1814 = vsel %vm1808, %v1811, %v1813
        %v1815 = vsel %vm1807, %v1794, %v1797
        %v1816 = vsel %vm1810, %v1803, 920167782
        %v1817 = vsel %vm1809, %v1800, %v1816
        %v1818 = vsel %vm1808, %v1815, %v1817
        %v1819 = vsel %vm1807, %v1797, %v1800
        %v1820 = vsel %vm1810, %v1806, 1326507024
        %v1821 = vsel %vm1809, %v1803, %v1820
        %v1822 = vsel %vm1808, %v1819, %v1821
        %v1823 = vshll.u32 %v1783, 8
        %v1824 = vmul.u32.u64.compose %v1823, %v1822
        %v1825 = vextract.low.u32 %v1824
        %v1826 = vextract.high.u32 %v1824
        %v1827 = vmul.u32.u64.compose %v1823, %v1818
        %v1828 = vextract.low.u32 %v1827
        %v1829 = vextract.high.u32 %v1827
        %v1830 = vmul.u32 %v1823, %v1814
        %v1831 = vadd.s32 %v1826, %v1828
        %vm1832 = vc.u32 %v1826, %v1828
        %v1833 = vadd.s32 %v1829, 1
        %v1834 = vsel %vm1832, %v1833, %v1829
        %v1835 = vadd.s32 %v1830, %v1834
        %v1836 = vadd.s32 %v1835, 536870912
        %v1837 = vshrl.u32 %v1836, 30
        %v1838 = vshll.u32 %v1837, 30
        %v1839 = vsub.s32 %v1835, %v1838
        %vm1840 = vcmp.lt.s32.totalorder %v1839, 0
        %v1841 = vsub.s32 0, %v1839
        %v1842 = vsel %vm1840, %v1841, %v1839
        %v1843 = vclz %v1842
        %v1844 = vsub.s32 %v1843, 2
        %vm1845 = vcmp.gt.s32.totalorder 0, %v1844
        %v1846 = vsel %vm1845, 0, %v1844
        %v1847 = vsub.s32 32, %v1846
        %v1848 = vshll.u32 %v1839, %v1846
        %v1849 = vshrl.u32 %v1831, %v1847
        %v1850 = vor.u32 %v1848, %v1849
        %v1851 = vsub.s32 4294967266, %v1846
        %v1852 = vadd.s32 %v1851, 127
        %v1853 = vshll.u32 %v1852, 23
        %v1854 = vor.u32 4788187, %v1853
        %v1855 = vand.u32 2147483647, %v1854
        %v1857 = vcvt.s32.f32 %v1850
        %v1858 = vmul.f32 %v1857, %v1855
        %v1859 = vxor.u32 %v1858, 2147483648
        %v1860 = vsel %vm1777, %v1859, %v1858
        %v1861 = vsub.s32 4, %v1837
        %v1862 = vsel %vm1777, %v1861, %v1837
        %v1863 = vsel %vm1776, %v434, %v1860
        %v1864 = vsel %vm1776, 0, %v1862
        %v1865 = vcosq.f32.pop %v1863
        %v1866 = vsinq.f32.pop %v1863
        %vm1867 = vweird.f32 %v434
        %v1868 = vadd.s32 %v1864, 3
        %v1869 = vand.u32 %v1868, 3
        %vm1870 = vcmp.lt.s32.totalorder %v1869, 2
        %vm1871 = vcmp.eq.s32.totalorder %v1869, 0
        %v1872 = vxor.u32 %v1866, 2147483648
        %v1873 = vsel %vm1871, %v1865, %v1872
        %vm1874 = vcmp.eq.s32.totalorder %v1869, 2
        %v1875 = vxor.u32 %v1865, 2147483648
        %v1876 = vsel %vm1874, %v1875, %v1866
        %v1877 = vsel %vm1870, %v1873, %v1876
        %v1878 = vsel %vm1867, nan, %v1877
        %v1879 = vand.u32 2147483647, %v436
        %vm1880 = vcmp.le.f32.partialorder %v1879, 0.7853982
        %vm1881 = vcmp.lt.s32.totalorder %v436, 0
        %v1882 = vand.u32 %v436, 2139095040
        %v1883 = vshrl.u32 %v1882, 23
        %v1884 = vsub.s32 %v1883, 127
        %v1885 = vand.u32 2147483647, %v436
        %v1886 = vand.u32 %v1885, 8388607
        %v1887 = vor.u32 %v1886, 8388608
        %v1888 = vsub.s32 0, %v1887
        %v1889 = vadd.s32 %v1884, 1
        %vm1890 = vcmp.gt.s32.totalorder %v1889, 0
        %v1891 = vsel %vm1890, %v1889, 0
        %v1892 = vshrl.u32 %v1891, 5
        %v1893 = vand.u32 %v1891, 31
        %v1894 = vsub.s32 32, %v1893
        %v1895 = vshrl.u32 683565275, %v1894
        %v1896 = vshll.u32 683565275, %v1893
        %v1897 = vshrl.u32 2475754826, %v1894
        %v1898 = vor.u32 %v1896, %v1897
        %v1899 = vshll.u32 2475754826, %v1893
        %v1900 = vshrl.u32 2131351028, %v1894
        %v1901 = vor.u32 %v1899, %v1900
        %v1902 = vshll.u32 2131351028, %v1893
        %v1903 = vshrl.u32 2102212464, %v1894
        %v1904 = vor.u32 %v1902, %v1903
        %v1905 = vshll.u32 2102212464, %v1893
        %v1906 = vshrl.u32 920167782, %v1894
        %v1907 = vor.u32 %v1905, %v1906
        %v1908 = vshll.u32 920167782, %v1893
        %v1909 = vshrl.u32 1326507024, %v1894
        %v1910 = vor.u32 %v1908, %v1909
        %vm1911 = vcmp.lt.s32.totalorder %v1892, 1
        %vm1912 = vcmp.lt.s32.totalorder %v1892, 2
        %vm1913 = vcmp.lt.s32.totalorder %v1892, 3
        %vm1914 = vcmp.lt.s32.totalorder %v1892, 4
        %v1915 = vsel %vm1911, %v1895, %v1898
        %v1916 = vsel %vm1914, %v1904, 2102212464
        %v1917 = vsel %vm1913, %v1901, %v1916
        %v1918 = vsel %vm1912, %v1915, %v1917
        %v1919 = vsel %vm1911, %v1898, %v1901
        %v1920 = vsel %vm1914, %v1907, 920167782
        %v1921 = vsel %vm1913, %v1904, %v1920
        %v1922 = vsel %vm1912, %v1919, %v1921
        %v1923 = vsel %vm1911, %v1901, %v1904
        %v1924 = vsel %vm1914, %v1910, 1326507024
        %v1925 = vsel %vm1913, %v1907, %v1924
        %v1926 = vsel %vm1912, %v1923, %v1925
        %v1927 = vshll.u32 %v1887, 8
        %v1928 = vmul.u32.u64.compose %v1927, %v1926
        %v1929 = vextract.low.u32 %v1928
        %v1930 = vextract.high.u32 %v1928
        %v1931 = vmul.u32.u64.compose %v1927, %v1922
        %v1932 = vextract.low.u32 %v1931
        %v1933 = vextract.high.u32 %v1931
        %v1934 = vmul.u32 %v1927, %v1918
        %v1935 = vadd.s32 %v1930, %v1932
        %vm1936 = vc.u32 %v1930, %v1932
        %v1937 = vadd.s32 %v1933, 1
        %v1938 = vsel %vm1936, %v1937, %v1933
        %v1939 = vadd.s32 %v1934, %v1938
        %v1940 = vadd.s32 %v1939, 536870912
        %v1941 = vshrl.u32 %v1940, 30
        %v1942 = vshll.u32 %v1941, 30
        %v1943 = vsub.s32 %v1939, %v1942
        %vm1944 = vcmp.lt.s32.totalorder %v1943, 0
        %v1945 = vsub.s32 0, %v1943
        %v1946 = vsel %vm1944, %v1945, %v1943
        %v1947 = vclz %v1946
        %v1948 = vsub.s32 %v1947, 2
        %vm1949 = vcmp.gt.s32.totalorder 0, %v1948
        %v1950 = vsel %vm1949, 0, %v1948
        %v1951 = vsub.s32 32, %v1950
        %v1952 = vshll.u32 %v1943, %v1950
        %v1953 = vshrl.u32 %v1935, %v1951
        %v1954 = vor.u32 %v1952, %v1953
        %v1955 = vsub.s32 4294967266, %v1950
        %v1956 = vadd.s32 %v1955, 127
        %v1957 = vshll.u32 %v1956, 23
        %v1958 = vor.u32 4788187, %v1957
        %v1959 = vand.u32 2147483647, %v1958
        %v1961 = vcvt.s32.f32 %v1954
        %v1962 = vmul.f32 %v1961, %v1959
        %v1963 = vxor.u32 %v1962, 2147483648
        %v1964 = vsel %vm1881, %v1963, %v1962
        %v1965 = vsub.s32 4, %v1941
        %v1966 = vsel %vm1881, %v1965, %v1941
        %v1967 = vsel %vm1880, %v436, %v1964
        %v1968 = vsel %vm1880, 0, %v1966
        %v1969 = vcosq.f32.pop %v1967
        %v1970 = vsinq.f32.pop %v1967
        %vm1971 = vweird.f32 %v436
        %v1972 = vadd.s32 %v1968, 3
        %v1973 = vand.u32 %v1972, 3
        %vm1974 = vcmp.lt.s32.totalorder %v1973, 2
        %vm1975 = vcmp.eq.s32.totalorder %v1973, 0
        %v1976 = vxor.u32 %v1970, 2147483648
        %v1977 = vsel %vm1975, %v1969, %v1976
        %vm1978 = vcmp.eq.s32.totalorder %v1973, 2
        %v1979 = vxor.u32 %v1969, 2147483648
        %v1980 = vsel %vm1978, %v1979, %v1970
        %v1981 = vsel %vm1974, %v1977, %v1980
        %v1982 = vsel %vm1971, nan, %v1981
        %v1983 = vand.u32 2147483647, %v523
        %vm1984 = vcmp.le.f32.partialorder %v1983, 0.7853982
        %vm1985 = vcmp.lt.s32.totalorder %v523, 0
        %v1986 = vand.u32 %v523, 2139095040
        %v1987 = vshrl.u32 %v1986, 23
        %v1988 = vsub.s32 %v1987, 127
        %v1989 = vand.u32 2147483647, %v523
        %v1990 = vand.u32 %v1989, 8388607
        %v1991 = vor.u32 %v1990, 8388608
        %v1992 = vsub.s32 0, %v1991
        %v1993 = vadd.s32 %v1988, 1
        %vm1994 = vcmp.gt.s32.totalorder %v1993, 0
        %v1995 = vsel %vm1994, %v1993, 0
        %v1996 = vshrl.u32 %v1995, 5
        %v1997 = vand.u32 %v1995, 31
        %v1998 = vsub.s32 32, %v1997
        %v1999 = vshrl.u32 683565275, %v1998
        %v2000 = vshll.u32 683565275, %v1997
        %v2001 = vshrl.u32 2475754826, %v1998
        %v2002 = vor.u32 %v2000, %v2001
        %v2003 = vshll.u32 2475754826, %v1997
        %v2004 = vshrl.u32 2131351028, %v1998
        %v2005 = vor.u32 %v2003, %v2004
        %v2006 = vshll.u32 2131351028, %v1997
        %v2007 = vshrl.u32 2102212464, %v1998
        %v2008 = vor.u32 %v2006, %v2007
        %v2009 = vshll.u32 2102212464, %v1997
        %v2010 = vshrl.u32 920167782, %v1998
        %v2011 = vor.u32 %v2009, %v2010
        %v2012 = vshll.u32 920167782, %v1997
        %v2013 = vshrl.u32 1326507024, %v1998
        %v2014 = vor.u32 %v2012, %v2013
        %vm2015 = vcmp.lt.s32.totalorder %v1996, 1
        %vm2016 = vcmp.lt.s32.totalorder %v1996, 2
        %vm2017 = vcmp.lt.s32.totalorder %v1996, 3
        %vm2018 = vcmp.lt.s32.totalorder %v1996, 4
        %v2019 = vsel %vm2015, %v1999, %v2002
        %v2020 = vsel %vm2018, %v2008, 2102212464
        %v2021 = vsel %vm2017, %v2005, %v2020
        %v2022 = vsel %vm2016, %v2019, %v2021
        %v2023 = vsel %vm2015, %v2002, %v2005
        %v2024 = vsel %vm2018, %v2011, 920167782
        %v2025 = vsel %vm2017, %v2008, %v2024
        %v2026 = vsel %vm2016, %v2023, %v2025
        %v2027 = vsel %vm2015, %v2005, %v2008
        %v2028 = vsel %vm2018, %v2014, 1326507024
        %v2029 = vsel %vm2017, %v2011, %v2028
        %v2030 = vsel %vm2016, %v2027, %v2029
        %v2031 = vshll.u32 %v1991, 8
        %v2032 = vmul.u32.u64.compose %v2031, %v2030
        %v2033 = vextract.low.u32 %v2032
        %v2034 = vextract.high.u32 %v2032
        %v2035 = vmul.u32.u64.compose %v2031, %v2026
        %v2036 = vextract.low.u32 %v2035
        %v2037 = vextract.high.u32 %v2035
        %v2038 = vmul.u32 %v2031, %v2022
        %v2039 = vadd.s32 %v2034, %v2036
        %vm2040 = vc.u32 %v2034, %v2036
        %v2041 = vadd.s32 %v2037, 1
        %v2042 = vsel %vm2040, %v2041, %v2037
        %v2043 = vadd.s32 %v2038, %v2042
        %v2044 = vadd.s32 %v2043, 536870912
        %v2045 = vshrl.u32 %v2044, 30
        %v2046 = vshll.u32 %v2045, 30
        %v2047 = vsub.s32 %v2043, %v2046
        %vm2048 = vcmp.lt.s32.totalorder %v2047, 0
        %v2049 = vsub.s32 0, %v2047
        %v2050 = vsel %vm2048, %v2049, %v2047
        %v2051 = vclz %v2050
        %v2052 = vsub.s32 %v2051, 2
        %vm2053 = vcmp.gt.s32.totalorder 0, %v2052
        %v2054 = vsel %vm2053, 0, %v2052
        %v2055 = vsub.s32 32, %v2054
        %v2056 = vshll.u32 %v2047, %v2054
        %v2057 = vshrl.u32 %v2039, %v2055
        %v2058 = vor.u32 %v2056, %v2057
        %v2059 = vsub.s32 4294967266, %v2054
        %v2060 = vadd.s32 %v2059, 127
        %v2061 = vshll.u32 %v2060, 23
        %v2062 = vor.u32 4788187, %v2061
        %v2063 = vand.u32 2147483647, %v2062
        %v2065 = vcvt.s32.f32 %v2058
        %v2066 = vmul.f32 %v2065, %v2063
        %v2067 = vxor.u32 %v2066, 2147483648
        %v2068 = vsel %vm1985, %v2067, %v2066
        %v2069 = vsub.s32 4, %v2045
        %v2070 = vsel %vm1985, %v2069, %v2045
        %v2071 = vsel %vm1984, %v523, %v2068
        %v2072 = vsel %vm1984, 0, %v2070
        %v2073 = vcosq.f32.pop %v2071
        %v2074 = vsinq.f32.pop %v2071
        %vm2075 = vweird.f32 %v523
        %v2076 = vadd.s32 %v2072, 3
        %v2077 = vand.u32 %v2076, 3
        %vm2078 = vcmp.lt.s32.totalorder %v2077, 2
        %vm2079 = vcmp.eq.s32.totalorder %v2077, 0
        %v2080 = vxor.u32 %v2074, 2147483648
        %v2081 = vsel %vm2079, %v2073, %v2080
        %vm2082 = vcmp.eq.s32.totalorder %v2077, 2
        %v2083 = vxor.u32 %v2073, 2147483648
        %v2084 = vsel %vm2082, %v2083, %v2074
        %v2085 = vsel %vm2078, %v2081, %v2084
        %v2086 = vsel %vm2075, nan, %v2085
        %v2087 = vand.u32 2147483647, %v525
        %vm2088 = vcmp.le.f32.partialorder %v2087, 0.7853982
        %vm2089 = vcmp.lt.s32.totalorder %v525, 0
        %v2090 = vand.u32 %v525, 2139095040
        %v2091 = vshrl.u32 %v2090, 23
        %v2092 = vsub.s32 %v2091, 127
        %v2093 = vand.u32 2147483647, %v525
        %v2094 = vand.u32 %v2093, 8388607
        %v2095 = vor.u32 %v2094, 8388608
        %v2096 = vsub.s32 0, %v2095
        %v2097 = vadd.s32 %v2092, 1
        %vm2098 = vcmp.gt.s32.totalorder %v2097, 0
        %v2099 = vsel %vm2098, %v2097, 0
        %v2100 = vshrl.u32 %v2099, 5
        %v2101 = vand.u32 %v2099, 31
        %v2102 = vsub.s32 32, %v2101
        %v2103 = vshrl.u32 683565275, %v2102
        %v2104 = vshll.u32 683565275, %v2101
        %v2105 = vshrl.u32 2475754826, %v2102
        %v2106 = vor.u32 %v2104, %v2105
        %v2107 = vshll.u32 2475754826, %v2101
        %v2108 = vshrl.u32 2131351028, %v2102
        %v2109 = vor.u32 %v2107, %v2108
        %v2110 = vshll.u32 2131351028, %v2101
        %v2111 = vshrl.u32 2102212464, %v2102
        %v2112 = vor.u32 %v2110, %v2111
        %v2113 = vshll.u32 2102212464, %v2101
        %v2114 = vshrl.u32 920167782, %v2102
        %v2115 = vor.u32 %v2113, %v2114
        %v2116 = vshll.u32 920167782, %v2101
        %v2117 = vshrl.u32 1326507024, %v2102
        %v2118 = vor.u32 %v2116, %v2117
        %vm2119 = vcmp.lt.s32.totalorder %v2100, 1
        %vm2120 = vcmp.lt.s32.totalorder %v2100, 2
        %vm2121 = vcmp.lt.s32.totalorder %v2100, 3
        %vm2122 = vcmp.lt.s32.totalorder %v2100, 4
        %v2123 = vsel %vm2119, %v2103, %v2106
        %v2124 = vsel %vm2122, %v2112, 2102212464
        %v2125 = vsel %vm2121, %v2109, %v2124
        %v2126 = vsel %vm2120, %v2123, %v2125
        %v2127 = vsel %vm2119, %v2106, %v2109
        %v2128 = vsel %vm2122, %v2115, 920167782
        %v2129 = vsel %vm2121, %v2112, %v2128
        %v2130 = vsel %vm2120, %v2127, %v2129
        %v2131 = vsel %vm2119, %v2109, %v2112
        %v2132 = vsel %vm2122, %v2118, 1326507024
        %v2133 = vsel %vm2121, %v2115, %v2132
        %v2134 = vsel %vm2120, %v2131, %v2133
        %v2135 = vshll.u32 %v2095, 8
        %v2136 = vmul.u32.u64.compose %v2135, %v2134
        %v2137 = vextract.low.u32 %v2136
        %v2138 = vextract.high.u32 %v2136
        %v2139 = vmul.u32.u64.compose %v2135, %v2130
        %v2140 = vextract.low.u32 %v2139
        %v2141 = vextract.high.u32 %v2139
        %v2142 = vmul.u32 %v2135, %v2126
        %v2143 = vadd.s32 %v2138, %v2140
        %vm2144 = vc.u32 %v2138, %v2140
        %v2145 = vadd.s32 %v2141, 1
        %v2146 = vsel %vm2144, %v2145, %v2141
        %v2147 = vadd.s32 %v2142, %v2146
        %v2148 = vadd.s32 %v2147, 536870912
        %v2149 = vshrl.u32 %v2148, 30
        %v2150 = vshll.u32 %v2149, 30
        %v2151 = vsub.s32 %v2147, %v2150
        %vm2152 = vcmp.lt.s32.totalorder %v2151, 0
        %v2153 = vsub.s32 0, %v2151
        %v2154 = vsel %vm2152, %v2153, %v2151
        %v2155 = vclz %v2154
        %v2156 = vsub.s32 %v2155, 2
        %vm2157 = vcmp.gt.s32.totalorder 0, %v2156
        %v2158 = vsel %vm2157, 0, %v2156
        %v2159 = vsub.s32 32, %v2158
        %v2160 = vshll.u32 %v2151, %v2158
        %v2161 = vshrl.u32 %v2143, %v2159
        %v2162 = vor.u32 %v2160, %v2161
        %v2163 = vsub.s32 4294967266, %v2158
        %v2164 = vadd.s32 %v2163, 127
        %v2165 = vshll.u32 %v2164, 23
        %v2166 = vor.u32 4788187, %v2165
        %v2167 = vand.u32 2147483647, %v2166
        %v2169 = vcvt.s32.f32 %v2162
        %v2170 = vmul.f32 %v2169, %v2167
        %v2171 = vxor.u32 %v2170, 2147483648
        %v2172 = vsel %vm2089, %v2171, %v2170
        %v2173 = vsub.s32 4, %v2149
        %v2174 = vsel %vm2089, %v2173, %v2149
        %v2175 = vsel %vm2088, %v525, %v2172
        %v2176 = vsel %vm2088, 0, %v2174
        %v2177 = vcosq.f32.pop %v2175
        %v2178 = vsinq.f32.pop %v2175
        %vm2179 = vweird.f32 %v525
        %v2180 = vadd.s32 %v2176, 3
        %v2181 = vand.u32 %v2180, 3
        %vm2182 = vcmp.lt.s32.totalorder %v2181, 2
        %vm2183 = vcmp.eq.s32.totalorder %v2181, 0
        %v2184 = vxor.u32 %v2178, 2147483648
        %v2185 = vsel %vm2183, %v2177, %v2184
        %vm2186 = vcmp.eq.s32.totalorder %v2181, 2
        %v2187 = vxor.u32 %v2177, 2147483648
        %v2188 = vsel %vm2186, %v2187, %v2178
        %v2189 = vsel %vm2182, %v2185, %v2188
        %v2190 = vsel %vm2179, nan, %v2189
        %s2191 = scalar_lea.vmem %s1, 32
        %v2192 = vld [vmem:[%s2191] sm:$0xff]
        %v2193 = vld [vmem:[%s2191 + $0x8] sm:$0xff]
        %v2194 = vld [vmem:[%s2191 + $0x10] sm:$0xff]
        %v2195 = vld [vmem:[%s2191 + $0x18] sm:$0xff]
        %s2196 = scalar_lea.vmem %s2, 32
        %v2197 = vld [vmem:[%s2196] sm:$0xff]
        %v2198 = vld [vmem:[%s2196 + $0x8] sm:$0xff]
        %v2199 = vld [vmem:[%s2196 + $0x10] sm:$0xff]
        %v2200 = vld [vmem:[%s2196 + $0x18] sm:$0xff]
        %2202 = vset.pattern.permute.xlu0 0
        %2203 = vperm.xlu0 %2202, %v2197
        %v2204 = vpop.permute.xlu0 %2203
        %2207 = vset.pattern.permute.xlu0 0
        %2208 = vperm.xlu0 %2207, %v2198
        %v2209 = vpop.permute.xlu0 %2208
        %2212 = vset.pattern.permute.xlu0 0
        %2213 = vperm.xlu0 %2212, %v2199
        %v2214 = vpop.permute.xlu0 %2213
        %2217 = vset.pattern.permute.xlu0 0
        %2218 = vperm.xlu0 %2217, %v2200
        %v2219 = vpop.permute.xlu0 %2218
        %v2222 = vsel %vm327, %v2192, 0
        %v2225 = vsel %vm327, %v2193, 0
        %v2228 = vsel %vm327, %v2194, 0
        %v2231 = vsel %vm327, %v2195, 0
        %2233 = vmatprep.subr.mxu0 %v343
        %2234 = vmatpush1.msra.mxu0 %v341
        %2235 = vmatprep.subr.mxu0 0.0
        %2236 = vmatpush1.msra.mxu0 0.0
        %2237 = vmatprep.subr.mxu0 0.0
        %2238 = vmatpush1.msra.mxu0 0.0
        %2239 = vmatprep.subr.mxu0 0.0
        %2240 = vmatpush1.msra.mxu0 0.0
        %2241 = vmatprep.subr.mxu0 0.0
        %2242 = vmatpush1.msra.mxu0 0.0
        %2243 = vmatprep.subr.mxu0 0.0
        %2244 = vmatpush1.msra.mxu0 0.0
        %2245 = vmatprep.subr.mxu0 0.0
        %2246 = vmatpush1.msra.mxu0 0.0
        %2247 = vmatprep.subr.mxu0 0.0
        %2248 = vmatpush1.msra.mxu0 0.0
        %2249 = vmatprep.subr.mxu0 0.0
        %2250 = vmatpush1.msra.mxu0 0.0
        %2251 = vmatprep.subr.mxu0 0.0
        %2252 = vmatpush1.msra.mxu0 0.0
        %2253 = vmatprep.subr.mxu0 0.0
        %2254 = vmatpush1.msra.mxu0 0.0
        %2255 = vmatprep.subr.mxu0 0.0
        %2256 = vmatpush1.msra.mxu0 0.0
        %2257 = vmatprep.subr.mxu0 0.0
        %2258 = vmatpush1.msra.mxu0 0.0
        %2259 = vmatprep.subr.mxu0 0.0
        %2260 = vmatpush1.msra.mxu0 0.0
        %2261 = vmatprep.subr.mxu0 0.0
        %2262 = vmatpush1.msra.mxu0 0.0
        %2263 = vmatprep.subr.mxu0 0.0
        %2264 = vmatpush1.msra.mxu0 0.0
        %2265 = vmatprep.subr.mxu0 0.0
        %2266 = vmatpush1.msra.mxu0 0.0
        %2267 = vmatprep.subr.mxu0 0.0
        %2268 = vmatpush1.msra.mxu0 0.0
        %2269 = vmatprep.subr.mxu0 0.0
        %2270 = vmatpush1.msra.mxu0 0.0
        %2271 = vmatprep.subr.mxu0 0.0
        %2272 = vmatpush1.msra.mxu0 0.0
        %2273 = vmatprep.subr.mxu0 0.0
        %2274 = vmatpush1.msra.mxu0 0.0
        %2275 = vmatprep.subr.mxu0 0.0
        %2276 = vmatpush1.msra.mxu0 0.0
        %2277 = vmatprep.subr.mxu0 0.0
        %2278 = vmatpush1.msra.mxu0 0.0
        %2279 = vmatprep.subr.mxu0 0.0
        %2280 = vmatpush1.msra.mxu0 0.0
        %2281 = vmatprep.subr.mxu0 0.0
        %2282 = vmatpush1.msra.mxu0 0.0
        %2283 = vmatprep.subr.mxu0 0.0
        %2284 = vmatpush1.msra.mxu0 0.0
        %2285 = vmatprep.subr.mxu0 0.0
        %2286 = vmatpush1.msra.mxu0 0.0
        %2287 = vmatprep.subr.mxu0 0.0
        %2288 = vmatpush1.msra.mxu0 0.0
        %2289 = vmatprep.subr.mxu0 0.0
        %2290 = vmatpush1.msra.mxu0 0.0
        %2291 = vmatprep.subr.mxu0 0.0
        %2292 = vmatpush1.msra.mxu0 0.0
        %2293 = vmatprep.subr.mxu0 0.0
        %2294 = vmatpush1.msra.mxu0 0.0
        %2295 = vmatprep.subr.mxu0 0.0
        %2296 = vmatpush1.msra.mxu0 0.0
        %2297 = vmatprep.mubr.f32.mxu0 0.0
        %2298 = vmatmul.mubr.f32.gmra.mrb[0].mxu0 %v2222
        %v2299 = vpop.f32.mrb[0].mxu0
        %v2300 = vadd.f32 %v2204, %v2299
        %v2301 = vpop.f32.mrb[0].mxu0
        %v2302 = vadd.f32 %v2204, %v2301
        %2303 = vmatprep.mubr.f32.mxu0 0.0
        %2304 = vmatmul.mubr.f32.gmra.mrb[0].mxu0 %v2225
        %v2305 = vpop.f32.mrb[0].mxu0
        %v2306 = vadd.f32 %v2209, %v2305
        %v2307 = vpop.f32.mrb[0].mxu0
        %v2308 = vadd.f32 %v2209, %v2307
        %2309 = vmatprep.mubr.f32.mxu0 0.0
        %2310 = vmatmul.mubr.f32.gmra.mrb[0].mxu0 %v2228
        %v2311 = vpop.f32.mrb[0].mxu0
        %v2312 = vadd.f32 %v2214, %v2311
        %v2313 = vpop.f32.mrb[0].mxu0
        %v2314 = vadd.f32 %v2214, %v2313
        %2315 = vmatprep.mubr.f32.mxu0 0.0
        %2316 = vmatmul.mubr.f32.gmra.mrb[0].mxu0 %v2231
        %v2317 = vpop.f32.mrb[0].mxu0
        %v2318 = vadd.f32 %v2219, %v2317
        %v2319 = vpop.f32.mrb[0].mxu0
        %v2320 = vadd.f32 %v2219, %v2319
        %2321 = vdwg.mxu0
        %2322 = vmatprep.subr.mxu0 %v347
        %2323 = vmatpush1.msra.mxu0 %v345
        %2324 = vmatprep.subr.mxu0 0.0
        %2325 = vmatpush1.msra.mxu0 0.0
        %2326 = vmatprep.subr.mxu0 0.0
        %2327 = vmatpush1.msra.mxu0 0.0
        %2328 = vmatprep.subr.mxu0 0.0
        %2329 = vmatpush1.msra.mxu0 0.0
        %2330 = vmatprep.subr.mxu0 0.0
        %2331 = vmatpush1.msra.mxu0 0.0
        %2332 = vmatprep.subr.mxu0 0.0
        %2333 = vmatpush1.msra.mxu0 0.0
        %2334 = vmatprep.subr.mxu0 0.0
        %2335 = vmatpush1.msra.mxu0 0.0
        %2336 = vmatprep.subr.mxu0 0.0
        %2337 = vmatpush1.msra.mxu0 0.0
        %2338 = vmatprep.subr.mxu0 0.0
        %2339 = vmatpush1.msra.mxu0 0.0
        %2340 = vmatprep.subr.mxu0 0.0
        %2341 = vmatpush1.msra.mxu0 0.0
        %2342 = vmatprep.subr.mxu0 0.0
        %2343 = vmatpush1.msra.mxu0 0.0
        %2344 = vmatprep.subr.mxu0 0.0
        %2345 = vmatpush1.msra.mxu0 0.0
        %2346 = vmatprep.subr.mxu0 0.0
        %2347 = vmatpush1.msra.mxu0 0.0
        %2348 = vmatprep.subr.mxu0 0.0
        %2349 = vmatpush1.msra.mxu0 0.0
        %2350 = vmatprep.subr.mxu0 0.0
        %2351 = vmatpush1.msra.mxu0 0.0
        %2352 = vmatprep.subr.mxu0 0.0
        %2353 = vmatpush1.msra.mxu0 0.0
        %2354 = vmatprep.subr.mxu0 0.0
        %2355 = vmatpush1.msra.mxu0 0.0
        %2356 = vmatprep.subr.mxu0 0.0
        %2357 = vmatpush1.msra.mxu0 0.0
        %2358 = vmatprep.subr.mxu0 0.0
        %2359 = vmatpush1.msra.mxu0 0.0
        %2360 = vmatprep.subr.mxu0 0.0
        %2361 = vmatpush1.msra.mxu0 0.0
        %2362 = vmatprep.subr.mxu0 0.0
        %2363 = vmatpush1.msra.mxu0 0.0
        %2364 = vmatprep.subr.mxu0 0.0
        %2365 = vmatpush1.msra.mxu0 0.0
        %2366 = vmatprep.subr.mxu0 0.0
        %2367 = vmatpush1.msra.mxu0 0.0
        %2368 = vmatprep.subr.mxu0 0.0
        %2369 = vmatpush1.msra.mxu0 0.0
        %2370 = vmatprep.subr.mxu0 0.0
        %2371 = vmatpush1.msra.mxu0 0.0
        %2372 = vmatprep.subr.mxu0 0.0
        %2373 = vmatpush1.msra.mxu0 0.0
        %2374 = vmatprep.subr.mxu0 0.0
        %2375 = vmatpush1.msra.mxu0 0.0
        %2376 = vmatprep.subr.mxu0 0.0
        %2377 = vmatpush1.msra.mxu0 0.0
        %2378 = vmatprep.subr.mxu0 0.0
        %2379 = vmatpush1.msra.mxu0 0.0
        %2380 = vmatprep.subr.mxu0 0.0
        %2381 = vmatpush1.msra.mxu0 0.0
        %2382 = vmatprep.subr.mxu0 0.0
        %2383 = vmatpush1.msra.mxu0 0.0
        %2384 = vmatprep.subr.mxu0 0.0
        %2385 = vmatpush1.msra.mxu0 0.0
        %2386 = vmatprep.mubr.f32.mxu0 0.0
        %2387 = vmatmul.mubr.f32.gmra.mrb[0].mxu0 %v2222
        %v2388 = vpop.f32.mrb[0].mxu0
        %v2389 = vadd.f32 %v2204, %v2388
        %v2390 = vpop.f32.mrb[0].mxu0
        %v2391 = vadd.f32 %v2204, %v2390
        %2392 = vmatprep.mubr.f32.mxu0 0.0
        %2393 = vmatmul.mubr.f32.gmra.mrb[0].mxu0 %v2225
        %v2394 = vpop.f32.mrb[0].mxu0
        %v2395 = vadd.f32 %v2209, %v2394
        %v2396 = vpop.f32.mrb[0].mxu0
        %v2397 = vadd.f32 %v2209, %v2396
        %2398 = vmatprep.mubr.f32.mxu0 0.0
        %2399 = vmatmul.mubr.f32.gmra.mrb[0].mxu0 %v2228
        %v2400 = vpop.f32.mrb[0].mxu0
        %v2401 = vadd.f32 %v2214, %v2400
        %v2402 = vpop.f32.mrb[0].mxu0
        %v2403 = vadd.f32 %v2214, %v2402
        %2404 = vmatprep.mubr.f32.mxu0 0.0
        %2405 = vmatmul.mubr.f32.gmra.mrb[0].mxu0 %v2231
        %v2406 = vpop.f32.mrb[0].mxu0
        %v2407 = vadd.f32 %v2219, %v2406
        %v2408 = vpop.f32.mrb[0].mxu0
        %v2409 = vadd.f32 %v2219, %v2408
        %2410 = vdwg.mxu0
        %v2411 = vand.u32 2147483647, %v2300
        %vm2412 = vcmp.le.f32.partialorder %v2411, 0.7853982
        %vm2413 = vcmp.lt.s32.totalorder %v2300, 0
        %v2414 = vand.u32 %v2300, 2139095040
        %v2415 = vshrl.u32 %v2414, 23
        %v2416 = vsub.s32 %v2415, 127
        %v2417 = vand.u32 2147483647, %v2300
        %v2418 = vand.u32 %v2417, 8388607
        %v2419 = vor.u32 %v2418, 8388608
        %v2420 = vsub.s32 0, %v2419
        %v2421 = vadd.s32 %v2416, 1
        %vm2422 = vcmp.gt.s32.totalorder %v2421, 0
        %v2423 = vsel %vm2422, %v2421, 0
        %v2424 = vshrl.u32 %v2423, 5
        %v2425 = vand.u32 %v2423, 31
        %v2426 = vsub.s32 32, %v2425
        %v2427 = vshrl.u32 683565275, %v2426
        %v2428 = vshll.u32 683565275, %v2425
        %v2429 = vshrl.u32 2475754826, %v2426
        %v2430 = vor.u32 %v2428, %v2429
        %v2431 = vshll.u32 2475754826, %v2425
        %v2432 = vshrl.u32 2131351028, %v2426
        %v2433 = vor.u32 %v2431, %v2432
        %v2434 = vshll.u32 2131351028, %v2425
        %v2435 = vshrl.u32 2102212464, %v2426
        %v2436 = vor.u32 %v2434, %v2435
        %v2437 = vshll.u32 2102212464, %v2425
        %v2438 = vshrl.u32 920167782, %v2426
        %v2439 = vor.u32 %v2437, %v2438
        %v2440 = vshll.u32 920167782, %v2425
        %v2441 = vshrl.u32 1326507024, %v2426
        %v2442 = vor.u32 %v2440, %v2441
        %vm2443 = vcmp.lt.s32.totalorder %v2424, 1
        %vm2444 = vcmp.lt.s32.totalorder %v2424, 2
        %vm2445 = vcmp.lt.s32.totalorder %v2424, 3
        %vm2446 = vcmp.lt.s32.totalorder %v2424, 4
        %v2447 = vsel %vm2443, %v2427, %v2430
        %v2448 = vsel %vm2446, %v2436, 2102212464
        %v2449 = vsel %vm2445, %v2433, %v2448
        %v2450 = vsel %vm2444, %v2447, %v2449
        %v2451 = vsel %vm2443, %v2430, %v2433
        %v2452 = vsel %vm2446, %v2439, 920167782
        %v2453 = vsel %vm2445, %v2436, %v2452
        %v2454 = vsel %vm2444, %v2451, %v2453
        %v2455 = vsel %vm2443, %v2433, %v2436
        %v2456 = vsel %vm2446, %v2442, 1326507024
        %v2457 = vsel %vm2445, %v2439, %v2456
        %v2458 = vsel %vm2444, %v2455, %v2457
        %v2459 = vshll.u32 %v2419, 8
        %v2460 = vmul.u32.u64.compose %v2459, %v2458
        %v2461 = vextract.low.u32 %v2460
        %v2462 = vextract.high.u32 %v2460
        %v2463 = vmul.u32.u64.compose %v2459, %v2454
        %v2464 = vextract.low.u32 %v2463
        %v2465 = vextract.high.u32 %v2463
        %v2466 = vmul.u32 %v2459, %v2450
        %v2467 = vadd.s32 %v2462, %v2464
        %vm2468 = vc.u32 %v2462, %v2464
        %v2469 = vadd.s32 %v2465, 1
        %v2470 = vsel %vm2468, %v2469, %v2465
        %v2471 = vadd.s32 %v2466, %v2470
        %v2472 = vadd.s32 %v2471, 536870912
        %v2473 = vshrl.u32 %v2472, 30
        %v2474 = vshll.u32 %v2473, 30
        %v2475 = vsub.s32 %v2471, %v2474
        %vm2476 = vcmp.lt.s32.totalorder %v2475, 0
        %v2477 = vsub.s32 0, %v2475
        %v2478 = vsel %vm2476, %v2477, %v2475
        %v2479 = vclz %v2478
        %v2480 = vsub.s32 %v2479, 2
        %vm2481 = vcmp.gt.s32.totalorder 0, %v2480
        %v2482 = vsel %vm2481, 0, %v2480
        %v2483 = vsub.s32 32, %v2482
        %v2484 = vshll.u32 %v2475, %v2482
        %v2485 = vshrl.u32 %v2467, %v2483
        %v2486 = vor.u32 %v2484, %v2485
        %v2487 = vsub.s32 4294967266, %v2482
        %v2488 = vadd.s32 %v2487, 127
        %v2489 = vshll.u32 %v2488, 23
        %v2490 = vor.u32 4788187, %v2489
        %v2491 = vand.u32 2147483647, %v2490
        %v2493 = vcvt.s32.f32 %v2486
        %v2494 = vmul.f32 %v2493, %v2491
        %v2495 = vxor.u32 %v2494, 2147483648
        %v2496 = vsel %vm2413, %v2495, %v2494
        %v2497 = vsub.s32 4, %v2473
        %v2498 = vsel %vm2413, %v2497, %v2473
        %v2499 = vsel %vm2412, %v2300, %v2496
        %v2500 = vsel %vm2412, 0, %v2498
        %v2501 = vcosq.f32.pop %v2499
        %v2502 = vsinq.f32.pop %v2499
        %vm2503 = vweird.f32 %v2300
        %v2504 = vadd.s32 %v2500, 3
        %v2505 = vand.u32 %v2504, 3
        %vm2506 = vcmp.lt.s32.totalorder %v2505, 2
        %vm2507 = vcmp.eq.s32.totalorder %v2505, 0
        %v2508 = vxor.u32 %v2502, 2147483648
        %v2509 = vsel %vm2507, %v2501, %v2508
        %vm2510 = vcmp.eq.s32.totalorder %v2505, 2
        %v2511 = vxor.u32 %v2501, 2147483648
        %v2512 = vsel %vm2510, %v2511, %v2502
        %v2513 = vsel %vm2506, %v2509, %v2512
        %v2514 = vsel %vm2503, nan, %v2513
        %v2515 = vand.u32 2147483647, %v2302
        %vm2516 = vcmp.le.f32.partialorder %v2515, 0.7853982
        %vm2517 = vcmp.lt.s32.totalorder %v2302, 0
        %v2518 = vand.u32 %v2302, 2139095040
        %v2519 = vshrl.u32 %v2518, 23
        %v2520 = vsub.s32 %v2519, 127
        %v2521 = vand.u32 2147483647, %v2302
        %v2522 = vand.u32 %v2521, 8388607
        %v2523 = vor.u32 %v2522, 8388608
        %v2524 = vsub.s32 0, %v2523
        %v2525 = vadd.s32 %v2520, 1
        %vm2526 = vcmp.gt.s32.totalorder %v2525, 0
        %v2527 = vsel %vm2526, %v2525, 0
        %v2528 = vshrl.u32 %v2527, 5
        %v2529 = vand.u32 %v2527, 31
        %v2530 = vsub.s32 32, %v2529
        %v2531 = vshrl.u32 683565275, %v2530
        %v2532 = vshll.u32 683565275, %v2529
        %v2533 = vshrl.u32 2475754826, %v2530
        %v2534 = vor.u32 %v2532, %v2533
        %v2535 = vshll.u32 2475754826, %v2529
        %v2536 = vshrl.u32 2131351028, %v2530
        %v2537 = vor.u32 %v2535, %v2536
        %v2538 = vshll.u32 2131351028, %v2529
        %v2539 = vshrl.u32 2102212464, %v2530
        %v2540 = vor.u32 %v2538, %v2539
        %v2541 = vshll.u32 2102212464, %v2529
        %v2542 = vshrl.u32 920167782, %v2530
        %v2543 = vor.u32 %v2541, %v2542
        %v2544 = vshll.u32 920167782, %v2529
        %v2545 = vshrl.u32 1326507024, %v2530
        %v2546 = vor.u32 %v2544, %v2545
        %vm2547 = vcmp.lt.s32.totalorder %v2528, 1
        %vm2548 = vcmp.lt.s32.totalorder %v2528, 2
        %vm2549 = vcmp.lt.s32.totalorder %v2528, 3
        %vm2550 = vcmp.lt.s32.totalorder %v2528, 4
        %v2551 = vsel %vm2547, %v2531, %v2534
        %v2552 = vsel %vm2550, %v2540, 2102212464
        %v2553 = vsel %vm2549, %v2537, %v2552
        %v2554 = vsel %vm2548, %v2551, %v2553
        %v2555 = vsel %vm2547, %v2534, %v2537
        %v2556 = vsel %vm2550, %v2543, 920167782
        %v2557 = vsel %vm2549, %v2540, %v2556
        %v2558 = vsel %vm2548, %v2555, %v2557
        %v2559 = vsel %vm2547, %v2537, %v2540
        %v2560 = vsel %vm2550, %v2546, 1326507024
        %v2561 = vsel %vm2549, %v2543, %v2560
        %v2562 = vsel %vm2548, %v2559, %v2561
        %v2563 = vshll.u32 %v2523, 8
        %v2564 = vmul.u32.u64.compose %v2563, %v2562
        %v2565 = vextract.low.u32 %v2564
        %v2566 = vextract.high.u32 %v2564
        %v2567 = vmul.u32.u64.compose %v2563, %v2558
        %v2568 = vextract.low.u32 %v2567
        %v2569 = vextract.high.u32 %v2567
        %v2570 = vmul.u32 %v2563, %v2554
        %v2571 = vadd.s32 %v2566, %v2568
        %vm2572 = vc.u32 %v2566, %v2568
        %v2573 = vadd.s32 %v2569, 1
        %v2574 = vsel %vm2572, %v2573, %v2569
        %v2575 = vadd.s32 %v2570, %v2574
        %v2576 = vadd.s32 %v2575, 536870912
        %v2577 = vshrl.u32 %v2576, 30
        %v2578 = vshll.u32 %v2577, 30
        %v2579 = vsub.s32 %v2575, %v2578
        %vm2580 = vcmp.lt.s32.totalorder %v2579, 0
        %v2581 = vsub.s32 0, %v2579
        %v2582 = vsel %vm2580, %v2581, %v2579
        %v2583 = vclz %v2582
        %v2584 = vsub.s32 %v2583, 2
        %vm2585 = vcmp.gt.s32.totalorder 0, %v2584
        %v2586 = vsel %vm2585, 0, %v2584
        %v2587 = vsub.s32 32, %v2586
        %v2588 = vshll.u32 %v2579, %v2586
        %v2589 = vshrl.u32 %v2571, %v2587
        %v2590 = vor.u32 %v2588, %v2589
        %v2591 = vsub.s32 4294967266, %v2586
        %v2592 = vadd.s32 %v2591, 127
        %v2593 = vshll.u32 %v2592, 23
        %v2594 = vor.u32 4788187, %v2593
        %v2595 = vand.u32 2147483647, %v2594
        %v2597 = vcvt.s32.f32 %v2590
        %v2598 = vmul.f32 %v2597, %v2595
        %v2599 = vxor.u32 %v2598, 2147483648
        %v2600 = vsel %vm2517, %v2599, %v2598
        %v2601 = vsub.s32 4, %v2577
        %v2602 = vsel %vm2517, %v2601, %v2577
        %v2603 = vsel %vm2516, %v2302, %v2600
        %v2604 = vsel %vm2516, 0, %v2602
        %v2605 = vcosq.f32.pop %v2603
        %v2606 = vsinq.f32.pop %v2603
        %vm2607 = vweird.f32 %v2302
        %v2608 = vadd.s32 %v2604, 3
        %v2609 = vand.u32 %v2608, 3
        %vm2610 = vcmp.lt.s32.totalorder %v2609, 2
        %vm2611 = vcmp.eq.s32.totalorder %v2609, 0
        %v2612 = vxor.u32 %v2606, 2147483648
        %v2613 = vsel %vm2611, %v2605, %v2612
        %vm2614 = vcmp.eq.s32.totalorder %v2609, 2
        %v2615 = vxor.u32 %v2605, 2147483648
        %v2616 = vsel %vm2614, %v2615, %v2606
        %v2617 = vsel %vm2610, %v2613, %v2616
        %v2618 = vsel %vm2607, nan, %v2617
        %v2619 = vand.u32 2147483647, %v2389
        %vm2620 = vcmp.le.f32.partialorder %v2619, 0.7853982
        %vm2621 = vcmp.lt.s32.totalorder %v2389, 0
        %v2622 = vand.u32 %v2389, 2139095040
        %v2623 = vshrl.u32 %v2622, 23
        %v2624 = vsub.s32 %v2623, 127
        %v2625 = vand.u32 2147483647, %v2389
        %v2626 = vand.u32 %v2625, 8388607
        %v2627 = vor.u32 %v2626, 8388608
        %v2628 = vsub.s32 0, %v2627
        %v2629 = vadd.s32 %v2624, 1
        %vm2630 = vcmp.gt.s32.totalorder %v2629, 0
        %v2631 = vsel %vm2630, %v2629, 0
        %v2632 = vshrl.u32 %v2631, 5
        %v2633 = vand.u32 %v2631, 31
        %v2634 = vsub.s32 32, %v2633
        %v2635 = vshrl.u32 683565275, %v2634
        %v2636 = vshll.u32 683565275, %v2633
        %v2637 = vshrl.u32 2475754826, %v2634
        %v2638 = vor.u32 %v2636, %v2637
        %v2639 = vshll.u32 2475754826, %v2633
        %v2640 = vshrl.u32 2131351028, %v2634
        %v2641 = vor.u32 %v2639, %v2640
        %v2642 = vshll.u32 2131351028, %v2633
        %v2643 = vshrl.u32 2102212464, %v2634
        %v2644 = vor.u32 %v2642, %v2643
        %v2645 = vshll.u32 2102212464, %v2633
        %v2646 = vshrl.u32 920167782, %v2634
        %v2647 = vor.u32 %v2645, %v2646
        %v2648 = vshll.u32 920167782, %v2633
        %v2649 = vshrl.u32 1326507024, %v2634
        %v2650 = vor.u32 %v2648, %v2649
        %vm2651 = vcmp.lt.s32.totalorder %v2632, 1
        %vm2652 = vcmp.lt.s32.totalorder %v2632, 2
        %vm2653 = vcmp.lt.s32.totalorder %v2632, 3
        %vm2654 = vcmp.lt.s32.totalorder %v2632, 4
        %v2655 = vsel %vm2651, %v2635, %v2638
        %v2656 = vsel %vm2654, %v2644, 2102212464
        %v2657 = vsel %vm2653, %v2641, %v2656
        %v2658 = vsel %vm2652, %v2655, %v2657
        %v2659 = vsel %vm2651, %v2638, %v2641
        %v2660 = vsel %vm2654, %v2647, 920167782
        %v2661 = vsel %vm2653, %v2644, %v2660
        %v2662 = vsel %vm2652, %v2659, %v2661
        %v2663 = vsel %vm2651, %v2641, %v2644
        %v2664 = vsel %vm2654, %v2650, 1326507024
        %v2665 = vsel %vm2653, %v2647, %v2664
        %v2666 = vsel %vm2652, %v2663, %v2665
        %v2667 = vshll.u32 %v2627, 8
        %v2668 = vmul.u32.u64.compose %v2667, %v2666
        %v2669 = vextract.low.u32 %v2668
        %v2670 = vextract.high.u32 %v2668
        %v2671 = vmul.u32.u64.compose %v2667, %v2662
        %v2672 = vextract.low.u32 %v2671
        %v2673 = vextract.high.u32 %v2671
        %v2674 = vmul.u32 %v2667, %v2658
        %v2675 = vadd.s32 %v2670, %v2672
        %vm2676 = vc.u32 %v2670, %v2672
        %v2677 = vadd.s32 %v2673, 1
        %v2678 = vsel %vm2676, %v2677, %v2673
        %v2679 = vadd.s32 %v2674, %v2678
        %v2680 = vadd.s32 %v2679, 536870912
        %v2681 = vshrl.u32 %v2680, 30
        %v2682 = vshll.u32 %v2681, 30
        %v2683 = vsub.s32 %v2679, %v2682
        %vm2684 = vcmp.lt.s32.totalorder %v2683, 0
        %v2685 = vsub.s32 0, %v2683
        %v2686 = vsel %vm2684, %v2685, %v2683
        %v2687 = vclz %v2686
        %v2688 = vsub.s32 %v2687, 2
        %vm2689 = vcmp.gt.s32.totalorder 0, %v2688
        %v2690 = vsel %vm2689, 0, %v2688
        %v2691 = vsub.s32 32, %v2690
        %v2692 = vshll.u32 %v2683, %v2690
        %v2693 = vshrl.u32 %v2675, %v2691
        %v2694 = vor.u32 %v2692, %v2693
        %v2695 = vsub.s32 4294967266, %v2690
        %v2696 = vadd.s32 %v2695, 127
        %v2697 = vshll.u32 %v2696, 23
        %v2698 = vor.u32 4788187, %v2697
        %v2699 = vand.u32 2147483647, %v2698
        %v2701 = vcvt.s32.f32 %v2694
        %v2702 = vmul.f32 %v2701, %v2699
        %v2703 = vxor.u32 %v2702, 2147483648
        %v2704 = vsel %vm2621, %v2703, %v2702
        %v2705 = vsub.s32 4, %v2681
        %v2706 = vsel %vm2621, %v2705, %v2681
        %v2707 = vsel %vm2620, %v2389, %v2704
        %v2708 = vsel %vm2620, 0, %v2706
        %v2709 = vcosq.f32.pop %v2707
        %v2710 = vsinq.f32.pop %v2707
        %vm2711 = vweird.f32 %v2389
        %v2712 = vadd.s32 %v2708, 3
        %v2713 = vand.u32 %v2712, 3
        %vm2714 = vcmp.lt.s32.totalorder %v2713, 2
        %vm2715 = vcmp.eq.s32.totalorder %v2713, 0
        %v2716 = vxor.u32 %v2710, 2147483648
        %v2717 = vsel %vm2715, %v2709, %v2716
        %vm2718 = vcmp.eq.s32.totalorder %v2713, 2
        %v2719 = vxor.u32 %v2709, 2147483648
        %v2720 = vsel %vm2718, %v2719, %v2710
        %v2721 = vsel %vm2714, %v2717, %v2720
        %v2722 = vsel %vm2711, nan, %v2721
        %v2723 = vand.u32 2147483647, %v2391
        %vm2724 = vcmp.le.f32.partialorder %v2723, 0.7853982
        %vm2725 = vcmp.lt.s32.totalorder %v2391, 0
        %v2726 = vand.u32 %v2391, 2139095040
        %v2727 = vshrl.u32 %v2726, 23
        %v2728 = vsub.s32 %v2727, 127
        %v2729 = vand.u32 2147483647, %v2391
        %v2730 = vand.u32 %v2729, 8388607
        %v2731 = vor.u32 %v2730, 8388608
        %v2732 = vsub.s32 0, %v2731
        %v2733 = vadd.s32 %v2728, 1
        %vm2734 = vcmp.gt.s32.totalorder %v2733, 0
        %v2735 = vsel %vm2734, %v2733, 0
        %v2736 = vshrl.u32 %v2735, 5
        %v2737 = vand.u32 %v2735, 31
        %v2738 = vsub.s32 32, %v2737
        %v2739 = vshrl.u32 683565275, %v2738
        %v2740 = vshll.u32 683565275, %v2737
        %v2741 = vshrl.u32 2475754826, %v2738
        %v2742 = vor.u32 %v2740, %v2741
        %v2743 = vshll.u32 2475754826, %v2737
        %v2744 = vshrl.u32 2131351028, %v2738
        %v2745 = vor.u32 %v2743, %v2744
        %v2746 = vshll.u32 2131351028, %v2737
        %v2747 = vshrl.u32 2102212464, %v2738
        %v2748 = vor.u32 %v2746, %v2747
        %v2749 = vshll.u32 2102212464, %v2737
        %v2750 = vshrl.u32 920167782, %v2738
        %v2751 = vor.u32 %v2749, %v2750
        %v2752 = vshll.u32 920167782, %v2737
        %v2753 = vshrl.u32 1326507024, %v2738
        %v2754 = vor.u32 %v2752, %v2753
        %vm2755 = vcmp.lt.s32.totalorder %v2736, 1
        %vm2756 = vcmp.lt.s32.totalorder %v2736, 2
        %vm2757 = vcmp.lt.s32.totalorder %v2736, 3
        %vm2758 = vcmp.lt.s32.totalorder %v2736, 4
        %v2759 = vsel %vm2755, %v2739, %v2742
        %v2760 = vsel %vm2758, %v2748, 2102212464
        %v2761 = vsel %vm2757, %v2745, %v2760
        %v2762 = vsel %vm2756, %v2759, %v2761
        %v2763 = vsel %vm2755, %v2742, %v2745
        %v2764 = vsel %vm2758, %v2751, 920167782
        %v2765 = vsel %vm2757, %v2748, %v2764
        %v2766 = vsel %vm2756, %v2763, %v2765
        %v2767 = vsel %vm2755, %v2745, %v2748
        %v2768 = vsel %vm2758, %v2754, 1326507024
        %v2769 = vsel %vm2757, %v2751, %v2768
        %v2770 = vsel %vm2756, %v2767, %v2769
        %v2771 = vshll.u32 %v2731, 8
        %v2772 = vmul.u32.u64.compose %v2771, %v2770
        %v2773 = vextract.low.u32 %v2772
        %v2774 = vextract.high.u32 %v2772
        %v2775 = vmul.u32.u64.compose %v2771, %v2766
        %v2776 = vextract.low.u32 %v2775
        %v2777 = vextract.high.u32 %v2775
        %v2778 = vmul.u32 %v2771, %v2762
        %v2779 = vadd.s32 %v2774, %v2776
        %vm2780 = vc.u32 %v2774, %v2776
        %v2781 = vadd.s32 %v2777, 1
        %v2782 = vsel %vm2780, %v2781, %v2777
        %v2783 = vadd.s32 %v2778, %v2782
        %v2784 = vadd.s32 %v2783, 536870912
        %v2785 = vshrl.u32 %v2784, 30
        %v2786 = vshll.u32 %v2785, 30
        %v2787 = vsub.s32 %v2783, %v2786
        %vm2788 = vcmp.lt.s32.totalorder %v2787, 0
        %v2789 = vsub.s32 0, %v2787
        %v2790 = vsel %vm2788, %v2789, %v2787
        %v2791 = vclz %v2790
        %v2792 = vsub.s32 %v2791, 2
        %vm2793 = vcmp.gt.s32.totalorder 0, %v2792
        %v2794 = vsel %vm2793, 0, %v2792
        %v2795 = vsub.s32 32, %v2794
        %v2796 = vshll.u32 %v2787, %v2794
        %v2797 = vshrl.u32 %v2779, %v2795
        %v2798 = vor.u32 %v2796, %v2797
        %v2799 = vsub.s32 4294967266, %v2794
        %v2800 = vadd.s32 %v2799, 127
        %v2801 = vshll.u32 %v2800, 23
        %v2802 = vor.u32 4788187, %v2801
        %v2803 = vand.u32 2147483647, %v2802
        %v2805 = vcvt.s32.f32 %v2798
        %v2806 = vmul.f32 %v2805, %v2803
        %v2807 = vxor.u32 %v2806, 2147483648
        %v2808 = vsel %vm2725, %v2807, %v2806
        %v2809 = vsub.s32 4, %v2785
        %v2810 = vsel %vm2725, %v2809, %v2785
        %v2811 = vsel %vm2724, %v2391, %v2808
        %v2812 = vsel %vm2724, 0, %v2810
        %v2813 = vcosq.f32.pop %v2811
        %v2814 = vsinq.f32.pop %v2811
        %vm2815 = vweird.f32 %v2391
        %v2816 = vadd.s32 %v2812, 3
        %v2817 = vand.u32 %v2816, 3
        %vm2818 = vcmp.lt.s32.totalorder %v2817, 2
        %vm2819 = vcmp.eq.s32.totalorder %v2817, 0
        %v2820 = vxor.u32 %v2814, 2147483648
        %v2821 = vsel %vm2819, %v2813, %v2820
        %vm2822 = vcmp.eq.s32.totalorder %v2817, 2
        %v2823 = vxor.u32 %v2813, 2147483648
        %v2824 = vsel %vm2822, %v2823, %v2814
        %v2825 = vsel %vm2818, %v2821, %v2824
        %v2826 = vsel %vm2815, nan, %v2825
        %v2827 = vand.u32 2147483647, %v2306
        %vm2828 = vcmp.le.f32.partialorder %v2827, 0.7853982
        %vm2829 = vcmp.lt.s32.totalorder %v2306, 0
        %v2830 = vand.u32 %v2306, 2139095040
        %v2831 = vshrl.u32 %v2830, 23
        %v2832 = vsub.s32 %v2831, 127
        %v2833 = vand.u32 2147483647, %v2306
        %v2834 = vand.u32 %v2833, 8388607
        %v2835 = vor.u32 %v2834, 8388608
        %v2836 = vsub.s32 0, %v2835
        %v2837 = vadd.s32 %v2832, 1
        %vm2838 = vcmp.gt.s32.totalorder %v2837, 0
        %v2839 = vsel %vm2838, %v2837, 0
        %v2840 = vshrl.u32 %v2839, 5
        %v2841 = vand.u32 %v2839, 31
        %v2842 = vsub.s32 32, %v2841
        %v2843 = vshrl.u32 683565275, %v2842
        %v2844 = vshll.u32 683565275, %v2841
        %v2845 = vshrl.u32 2475754826, %v2842
        %v2846 = vor.u32 %v2844, %v2845
        %v2847 = vshll.u32 2475754826, %v2841
        %v2848 = vshrl.u32 2131351028, %v2842
        %v2849 = vor.u32 %v2847, %v2848
        %v2850 = vshll.u32 2131351028, %v2841
        %v2851 = vshrl.u32 2102212464, %v2842
        %v2852 = vor.u32 %v2850, %v2851
        %v2853 = vshll.u32 2102212464, %v2841
        %v2854 = vshrl.u32 920167782, %v2842
        %v2855 = vor.u32 %v2853, %v2854
        %v2856 = vshll.u32 920167782, %v2841
        %v2857 = vshrl.u32 1326507024, %v2842
        %v2858 = vor.u32 %v2856, %v2857
        %vm2859 = vcmp.lt.s32.totalorder %v2840, 1
        %vm2860 = vcmp.lt.s32.totalorder %v2840, 2
        %vm2861 = vcmp.lt.s32.totalorder %v2840, 3
        %vm2862 = vcmp.lt.s32.totalorder %v2840, 4
        %v2863 = vsel %vm2859, %v2843, %v2846
        %v2864 = vsel %vm2862, %v2852, 2102212464
        %v2865 = vsel %vm2861, %v2849, %v2864
        %v2866 = vsel %vm2860, %v2863, %v2865
        %v2867 = vsel %vm2859, %v2846, %v2849
        %v2868 = vsel %vm2862, %v2855, 920167782
        %v2869 = vsel %vm2861, %v2852, %v2868
        %v2870 = vsel %vm2860, %v2867, %v2869
        %v2871 = vsel %vm2859, %v2849, %v2852
        %v2872 = vsel %vm2862, %v2858, 1326507024
        %v2873 = vsel %vm2861, %v2855, %v2872
        %v2874 = vsel %vm2860, %v2871, %v2873
        %v2875 = vshll.u32 %v2835, 8
        %v2876 = vmul.u32.u64.compose %v2875, %v2874
        %v2877 = vextract.low.u32 %v2876
        %v2878 = vextract.high.u32 %v2876
        %v2879 = vmul.u32.u64.compose %v2875, %v2870
        %v2880 = vextract.low.u32 %v2879
        %v2881 = vextract.high.u32 %v2879
        %v2882 = vmul.u32 %v2875, %v2866
        %v2883 = vadd.s32 %v2878, %v2880
        %vm2884 = vc.u32 %v2878, %v2880
        %v2885 = vadd.s32 %v2881, 1
        %v2886 = vsel %vm2884, %v2885, %v2881
        %v2887 = vadd.s32 %v2882, %v2886
        %v2888 = vadd.s32 %v2887, 536870912
        %v2889 = vshrl.u32 %v2888, 30
        %v2890 = vshll.u32 %v2889, 30
        %v2891 = vsub.s32 %v2887, %v2890
        %vm2892 = vcmp.lt.s32.totalorder %v2891, 0
        %v2893 = vsub.s32 0, %v2891
        %v2894 = vsel %vm2892, %v2893, %v2891
        %v2895 = vclz %v2894
        %v2896 = vsub.s32 %v2895, 2
        %vm2897 = vcmp.gt.s32.totalorder 0, %v2896
        %v2898 = vsel %vm2897, 0, %v2896
        %v2899 = vsub.s32 32, %v2898
        %v2900 = vshll.u32 %v2891, %v2898
        %v2901 = vshrl.u32 %v2883, %v2899
        %v2902 = vor.u32 %v2900, %v2901
        %v2903 = vsub.s32 4294967266, %v2898
        %v2904 = vadd.s32 %v2903, 127
        %v2905 = vshll.u32 %v2904, 23
        %v2906 = vor.u32 4788187, %v2905
        %v2907 = vand.u32 2147483647, %v2906
        %v2909 = vcvt.s32.f32 %v2902
        %v2910 = vmul.f32 %v2909, %v2907
        %v2911 = vxor.u32 %v2910, 2147483648
        %v2912 = vsel %vm2829, %v2911, %v2910
        %v2913 = vsub.s32 4, %v2889
        %v2914 = vsel %vm2829, %v2913, %v2889
        %v2915 = vsel %vm2828, %v2306, %v2912
        %v2916 = vsel %vm2828, 0, %v2914
        %v2917 = vcosq.f32.pop %v2915
        %v2918 = vsinq.f32.pop %v2915
        %vm2919 = vweird.f32 %v2306
        %v2920 = vadd.s32 %v2916, 3
        %v2921 = vand.u32 %v2920, 3
        %vm2922 = vcmp.lt.s32.totalorder %v2921, 2
        %vm2923 = vcmp.eq.s32.totalorder %v2921, 0
        %v2924 = vxor.u32 %v2918, 2147483648
        %v2925 = vsel %vm2923, %v2917, %v2924
        %vm2926 = vcmp.eq.s32.totalorder %v2921, 2
        %v2927 = vxor.u32 %v2917, 2147483648
        %v2928 = vsel %vm2926, %v2927, %v2918
        %v2929 = vsel %vm2922, %v2925, %v2928
        %v2930 = vsel %vm2919, nan, %v2929
        %v2931 = vand.u32 2147483647, %v2308
        %vm2932 = vcmp.le.f32.partialorder %v2931, 0.7853982
        %vm2933 = vcmp.lt.s32.totalorder %v2308, 0
        %v2934 = vand.u32 %v2308, 2139095040
        %v2935 = vshrl.u32 %v2934, 23
        %v2936 = vsub.s32 %v2935, 127
        %v2937 = vand.u32 2147483647, %v2308
        %v2938 = vand.u32 %v2937, 8388607
        %v2939 = vor.u32 %v2938, 8388608
        %v2940 = vsub.s32 0, %v2939
        %v2941 = vadd.s32 %v2936, 1
        %vm2942 = vcmp.gt.s32.totalorder %v2941, 0
        %v2943 = vsel %vm2942, %v2941, 0
        %v2944 = vshrl.u32 %v2943, 5
        %v2945 = vand.u32 %v2943, 31
        %v2946 = vsub.s32 32, %v2945
        %v2947 = vshrl.u32 683565275, %v2946
        %v2948 = vshll.u32 683565275, %v2945
        %v2949 = vshrl.u32 2475754826, %v2946
        %v2950 = vor.u32 %v2948, %v2949
        %v2951 = vshll.u32 2475754826, %v2945
        %v2952 = vshrl.u32 2131351028, %v2946
        %v2953 = vor.u32 %v2951, %v2952
        %v2954 = vshll.u32 2131351028, %v2945
        %v2955 = vshrl.u32 2102212464, %v2946
        %v2956 = vor.u32 %v2954, %v2955
        %v2957 = vshll.u32 2102212464, %v2945
        %v2958 = vshrl.u32 920167782, %v2946
        %v2959 = vor.u32 %v2957, %v2958
        %v2960 = vshll.u32 920167782, %v2945
        %v2961 = vshrl.u32 1326507024, %v2946
        %v2962 = vor.u32 %v2960, %v2961
        %vm2963 = vcmp.lt.s32.totalorder %v2944, 1
        %vm2964 = vcmp.lt.s32.totalorder %v2944, 2
        %vm2965 = vcmp.lt.s32.totalorder %v2944, 3
        %vm2966 = vcmp.lt.s32.totalorder %v2944, 4
        %v2967 = vsel %vm2963, %v2947, %v2950
        %v2968 = vsel %vm2966, %v2956, 2102212464
        %v2969 = vsel %vm2965, %v2953, %v2968
        %v2970 = vsel %vm2964, %v2967, %v2969
        %v2971 = vsel %vm2963, %v2950, %v2953
        %v2972 = vsel %vm2966, %v2959, 920167782
        %v2973 = vsel %vm2965, %v2956, %v2972
        %v2974 = vsel %vm2964, %v2971, %v2973
        %v2975 = vsel %vm2963, %v2953, %v2956
        %v2976 = vsel %vm2966, %v2962, 1326507024
        %v2977 = vsel %vm2965, %v2959, %v2976
        %v2978 = vsel %vm2964, %v2975, %v2977
        %v2979 = vshll.u32 %v2939, 8
        %v2980 = vmul.u32.u64.compose %v2979, %v2978
        %v2981 = vextract.low.u32 %v2980
        %v2982 = vextract.high.u32 %v2980
        %v2983 = vmul.u32.u64.compose %v2979, %v2974
        %v2984 = vextract.low.u32 %v2983
        %v2985 = vextract.high.u32 %v2983
        %v2986 = vmul.u32 %v2979, %v2970
        %v2987 = vadd.s32 %v2982, %v2984
        %vm2988 = vc.u32 %v2982, %v2984
        %v2989 = vadd.s32 %v2985, 1
        %v2990 = vsel %vm2988, %v2989, %v2985
        %v2991 = vadd.s32 %v2986, %v2990
        %v2992 = vadd.s32 %v2991, 536870912
        %v2993 = vshrl.u32 %v2992, 30
        %v2994 = vshll.u32 %v2993, 30
        %v2995 = vsub.s32 %v2991, %v2994
        %vm2996 = vcmp.lt.s32.totalorder %v2995, 0
        %v2997 = vsub.s32 0, %v2995
        %v2998 = vsel %vm2996, %v2997, %v2995
        %v2999 = vclz %v2998
        %v3000 = vsub.s32 %v2999, 2
        %vm3001 = vcmp.gt.s32.totalorder 0, %v3000
        %v3002 = vsel %vm3001, 0, %v3000
        %v3003 = vsub.s32 32, %v3002
        %v3004 = vshll.u32 %v2995, %v3002
        %v3005 = vshrl.u32 %v2987, %v3003
        %v3006 = vor.u32 %v3004, %v3005
        %v3007 = vsub.s32 4294967266, %v3002
        %v3008 = vadd.s32 %v3007, 127
        %v3009 = vshll.u32 %v3008, 23
        %v3010 = vor.u32 4788187, %v3009
        %v3011 = vand.u32 2147483647, %v3010
        %v3013 = vcvt.s32.f32 %v3006
        %v3014 = vmul.f32 %v3013, %v3011
        %v3015 = vxor.u32 %v3014, 2147483648
        %v3016 = vsel %vm2933, %v3015, %v3014
        %v3017 = vsub.s32 4, %v2993
        %v3018 = vsel %vm2933, %v3017, %v2993
        %v3019 = vsel %vm2932, %v2308, %v3016
        %v3020 = vsel %vm2932, 0, %v3018
        %v3021 = vcosq.f32.pop %v3019
        %v3022 = vsinq.f32.pop %v3019
        %vm3023 = vweird.f32 %v2308
        %v3024 = vadd.s32 %v3020, 3
        %v3025 = vand.u32 %v3024, 3
        %vm3026 = vcmp.lt.s32.totalorder %v3025, 2
        %vm3027 = vcmp.eq.s32.totalorder %v3025, 0
        %v3028 = vxor.u32 %v3022, 2147483648
        %v3029 = vsel %vm3027, %v3021, %v3028
        %vm3030 = vcmp.eq.s32.totalorder %v3025, 2
        %v3031 = vxor.u32 %v3021, 2147483648
        %v3032 = vsel %vm3030, %v3031, %v3022
        %v3033 = vsel %vm3026, %v3029, %v3032
        %v3034 = vsel %vm3023, nan, %v3033
        %v3035 = vand.u32 2147483647, %v2395
        %vm3036 = vcmp.le.f32.partialorder %v3035, 0.7853982
        %vm3037 = vcmp.lt.s32.totalorder %v2395, 0
        %v3038 = vand.u32 %v2395, 2139095040
        %v3039 = vshrl.u32 %v3038, 23
        %v3040 = vsub.s32 %v3039, 127
        %v3041 = vand.u32 2147483647, %v2395
        %v3042 = vand.u32 %v3041, 8388607
        %v3043 = vor.u32 %v3042, 8388608
        %v3044 = vsub.s32 0, %v3043
        %v3045 = vadd.s32 %v3040, 1
        %vm3046 = vcmp.gt.s32.totalorder %v3045, 0
        %v3047 = vsel %vm3046, %v3045, 0
        %v3048 = vshrl.u32 %v3047, 5
        %v3049 = vand.u32 %v3047, 31
        %v3050 = vsub.s32 32, %v3049
        %v3051 = vshrl.u32 683565275, %v3050
        %v3052 = vshll.u32 683565275, %v3049
        %v3053 = vshrl.u32 2475754826, %v3050
        %v3054 = vor.u32 %v3052, %v3053
        %v3055 = vshll.u32 2475754826, %v3049
        %v3056 = vshrl.u32 2131351028, %v3050
        %v3057 = vor.u32 %v3055, %v3056
        %v3058 = vshll.u32 2131351028, %v3049
        %v3059 = vshrl.u32 2102212464, %v3050
        %v3060 = vor.u32 %v3058, %v3059
        %v3061 = vshll.u32 2102212464, %v3049
        %v3062 = vshrl.u32 920167782, %v3050
        %v3063 = vor.u32 %v3061, %v3062
        %v3064 = vshll.u32 920167782, %v3049
        %v3065 = vshrl.u32 1326507024, %v3050
        %v3066 = vor.u32 %v3064, %v3065
        %vm3067 = vcmp.lt.s32.totalorder %v3048, 1
        %vm3068 = vcmp.lt.s32.totalorder %v3048, 2
        %vm3069 = vcmp.lt.s32.totalorder %v3048, 3
        %vm3070 = vcmp.lt.s32.totalorder %v3048, 4
        %v3071 = vsel %vm3067, %v3051, %v3054
        %v3072 = vsel %vm3070, %v3060, 2102212464
        %v3073 = vsel %vm3069, %v3057, %v3072
        %v3074 = vsel %vm3068, %v3071, %v3073
        %v3075 = vsel %vm3067, %v3054, %v3057
        %v3076 = vsel %vm3070, %v3063, 920167782
        %v3077 = vsel %vm3069, %v3060, %v3076
        %v3078 = vsel %vm3068, %v3075, %v3077
        %v3079 = vsel %vm3067, %v3057, %v3060
        %v3080 = vsel %vm3070, %v3066, 1326507024
        %v3081 = vsel %vm3069, %v3063, %v3080
        %v3082 = vsel %vm3068, %v3079, %v3081
        %v3083 = vshll.u32 %v3043, 8
        %v3084 = vmul.u32.u64.compose %v3083, %v3082
        %v3085 = vextract.low.u32 %v3084
        %v3086 = vextract.high.u32 %v3084
        %v3087 = vmul.u32.u64.compose %v3083, %v3078
        %v3088 = vextract.low.u32 %v3087
        %v3089 = vextract.high.u32 %v3087
        %v3090 = vmul.u32 %v3083, %v3074
        %v3091 = vadd.s32 %v3086, %v3088
        %vm3092 = vc.u32 %v3086, %v3088
        %v3093 = vadd.s32 %v3089, 1
        %v3094 = vsel %vm3092, %v3093, %v3089
        %v3095 = vadd.s32 %v3090, %v3094
        %v3096 = vadd.s32 %v3095, 536870912
        %v3097 = vshrl.u32 %v3096, 30
        %v3098 = vshll.u32 %v3097, 30
        %v3099 = vsub.s32 %v3095, %v3098
        %vm3100 = vcmp.lt.s32.totalorder %v3099, 0
        %v3101 = vsub.s32 0, %v3099
        %v3102 = vsel %vm3100, %v3101, %v3099
        %v3103 = vclz %v3102
        %v3104 = vsub.s32 %v3103, 2
        %vm3105 = vcmp.gt.s32.totalorder 0, %v3104
        %v3106 = vsel %vm3105, 0, %v3104
        %v3107 = vsub.s32 32, %v3106
        %v3108 = vshll.u32 %v3099, %v3106
        %v3109 = vshrl.u32 %v3091, %v3107
        %v3110 = vor.u32 %v3108, %v3109
        %v3111 = vsub.s32 4294967266, %v3106
        %v3112 = vadd.s32 %v3111, 127
        %v3113 = vshll.u32 %v3112, 23
        %v3114 = vor.u32 4788187, %v3113
        %v3115 = vand.u32 2147483647, %v3114
        %v3117 = vcvt.s32.f32 %v3110
        %v3118 = vmul.f32 %v3117, %v3115
        %v3119 = vxor.u32 %v3118, 2147483648
        %v3120 = vsel %vm3037, %v3119, %v3118
        %v3121 = vsub.s32 4, %v3097
        %v3122 = vsel %vm3037, %v3121, %v3097
        %v3123 = vsel %vm3036, %v2395, %v3120
        %v3124 = vsel %vm3036, 0, %v3122
        %v3125 = vcosq.f32.pop %v3123
        %v3126 = vsinq.f32.pop %v3123
        %vm3127 = vweird.f32 %v2395
        %v3128 = vadd.s32 %v3124, 3
        %v3129 = vand.u32 %v3128, 3
        %vm3130 = vcmp.lt.s32.totalorder %v3129, 2
        %vm3131 = vcmp.eq.s32.totalorder %v3129, 0
        %v3132 = vxor.u32 %v3126, 2147483648
        %v3133 = vsel %vm3131, %v3125, %v3132
        %vm3134 = vcmp.eq.s32.totalorder %v3129, 2
        %v3135 = vxor.u32 %v3125, 2147483648
        %v3136 = vsel %vm3134, %v3135, %v3126
        %v3137 = vsel %vm3130, %v3133, %v3136
        %v3138 = vsel %vm3127, nan, %v3137
        %v3139 = vand.u32 2147483647, %v2397
        %vm3140 = vcmp.le.f32.partialorder %v3139, 0.7853982
        %vm3141 = vcmp.lt.s32.totalorder %v2397, 0
        %v3142 = vand.u32 %v2397, 2139095040
        %v3143 = vshrl.u32 %v3142, 23
        %v3144 = vsub.s32 %v3143, 127
        %v3145 = vand.u32 2147483647, %v2397
        %v3146 = vand.u32 %v3145, 8388607
        %v3147 = vor.u32 %v3146, 8388608
        %v3148 = vsub.s32 0, %v3147
        %v3149 = vadd.s32 %v3144, 1
        %vm3150 = vcmp.gt.s32.totalorder %v3149, 0
        %v3151 = vsel %vm3150, %v3149, 0
        %v3152 = vshrl.u32 %v3151, 5
        %v3153 = vand.u32 %v3151, 31
        %v3154 = vsub.s32 32, %v3153
        %v3155 = vshrl.u32 683565275, %v3154
        %v3156 = vshll.u32 683565275, %v3153
        %v3157 = vshrl.u32 2475754826, %v3154
        %v3158 = vor.u32 %v3156, %v3157
        %v3159 = vshll.u32 2475754826, %v3153
        %v3160 = vshrl.u32 2131351028, %v3154
        %v3161 = vor.u32 %v3159, %v3160
        %v3162 = vshll.u32 2131351028, %v3153
        %v3163 = vshrl.u32 2102212464, %v3154
        %v3164 = vor.u32 %v3162, %v3163
        %v3165 = vshll.u32 2102212464, %v3153
        %v3166 = vshrl.u32 920167782, %v3154
        %v3167 = vor.u32 %v3165, %v3166
        %v3168 = vshll.u32 920167782, %v3153
        %v3169 = vshrl.u32 1326507024, %v3154
        %v3170 = vor.u32 %v3168, %v3169
        %vm3171 = vcmp.lt.s32.totalorder %v3152, 1
        %vm3172 = vcmp.lt.s32.totalorder %v3152, 2
        %vm3173 = vcmp.lt.s32.totalorder %v3152, 3
        %vm3174 = vcmp.lt.s32.totalorder %v3152, 4
        %v3175 = vsel %vm3171, %v3155, %v3158
        %v3176 = vsel %vm3174, %v3164, 2102212464
        %v3177 = vsel %vm3173, %v3161, %v3176
        %v3178 = vsel %vm3172, %v3175, %v3177
        %v3179 = vsel %vm3171, %v3158, %v3161
        %v3180 = vsel %vm3174, %v3167, 920167782
        %v3181 = vsel %vm3173, %v3164, %v3180
        %v3182 = vsel %vm3172, %v3179, %v3181
        %v3183 = vsel %vm3171, %v3161, %v3164
        %v3184 = vsel %vm3174, %v3170, 1326507024
        %v3185 = vsel %vm3173, %v3167, %v3184
        %v3186 = vsel %vm3172, %v3183, %v3185
        %v3187 = vshll.u32 %v3147, 8
        %v3188 = vmul.u32.u64.compose %v3187, %v3186
        %v3189 = vextract.low.u32 %v3188
        %v3190 = vextract.high.u32 %v3188
        %v3191 = vmul.u32.u64.compose %v3187, %v3182
        %v3192 = vextract.low.u32 %v3191
        %v3193 = vextract.high.u32 %v3191
        %v3194 = vmul.u32 %v3187, %v3178
        %v3195 = vadd.s32 %v3190, %v3192
        %vm3196 = vc.u32 %v3190, %v3192
        %v3197 = vadd.s32 %v3193, 1
        %v3198 = vsel %vm3196, %v3197, %v3193
        %v3199 = vadd.s32 %v3194, %v3198
        %v3200 = vadd.s32 %v3199, 536870912
        %v3201 = vshrl.u32 %v3200, 30
        %v3202 = vshll.u32 %v3201, 30
        %v3203 = vsub.s32 %v3199, %v3202
        %vm3204 = vcmp.lt.s32.totalorder %v3203, 0
        %v3205 = vsub.s32 0, %v3203
        %v3206 = vsel %vm3204, %v3205, %v3203
        %v3207 = vclz %v3206
        %v3208 = vsub.s32 %v3207, 2
        %vm3209 = vcmp.gt.s32.totalorder 0, %v3208
        %v3210 = vsel %vm3209, 0, %v3208
        %v3211 = vsub.s32 32, %v3210
        %v3212 = vshll.u32 %v3203, %v3210
        %v3213 = vshrl.u32 %v3195, %v3211
        %v3214 = vor.u32 %v3212, %v3213
        %v3215 = vsub.s32 4294967266, %v3210
        %v3216 = vadd.s32 %v3215, 127
        %v3217 = vshll.u32 %v3216, 23
        %v3218 = vor.u32 4788187, %v3217
        %v3219 = vand.u32 2147483647, %v3218
        %v3221 = vcvt.s32.f32 %v3214
        %v3222 = vmul.f32 %v3221, %v3219
        %v3223 = vxor.u32 %v3222, 2147483648
        %v3224 = vsel %vm3141, %v3223, %v3222
        %v3225 = vsub.s32 4, %v3201
        %v3226 = vsel %vm3141, %v3225, %v3201
        %v3227 = vsel %vm3140, %v2397, %v3224
        %v3228 = vsel %vm3140, 0, %v3226
        %v3229 = vcosq.f32.pop %v3227
        %v3230 = vsinq.f32.pop %v3227
        %vm3231 = vweird.f32 %v2397
        %v3232 = vadd.s32 %v3228, 3
        %v3233 = vand.u32 %v3232, 3
        %vm3234 = vcmp.lt.s32.totalorder %v3233, 2
        %vm3235 = vcmp.eq.s32.totalorder %v3233, 0
        %v3236 = vxor.u32 %v3230, 2147483648
        %v3237 = vsel %vm3235, %v3229, %v3236
        %vm3238 = vcmp.eq.s32.totalorder %v3233, 2
        %v3239 = vxor.u32 %v3229, 2147483648
        %v3240 = vsel %vm3238, %v3239, %v3230
        %v3241 = vsel %vm3234, %v3237, %v3240
        %v3242 = vsel %vm3231, nan, %v3241
        %v3243 = vand.u32 2147483647, %v2312
        %vm3244 = vcmp.le.f32.partialorder %v3243, 0.7853982
        %vm3245 = vcmp.lt.s32.totalorder %v2312, 0
        %v3246 = vand.u32 %v2312, 2139095040
        %v3247 = vshrl.u32 %v3246, 23
        %v3248 = vsub.s32 %v3247, 127
        %v3249 = vand.u32 2147483647, %v2312
        %v3250 = vand.u32 %v3249, 8388607
        %v3251 = vor.u32 %v3250, 8388608
        %v3252 = vsub.s32 0, %v3251
        %v3253 = vadd.s32 %v3248, 1
        %vm3254 = vcmp.gt.s32.totalorder %v3253, 0
        %v3255 = vsel %vm3254, %v3253, 0
        %v3256 = vshrl.u32 %v3255, 5
        %v3257 = vand.u32 %v3255, 31
        %v3258 = vsub.s32 32, %v3257
        %v3259 = vshrl.u32 683565275, %v3258
        %v3260 = vshll.u32 683565275, %v3257
        %v3261 = vshrl.u32 2475754826, %v3258
        %v3262 = vor.u32 %v3260, %v3261
        %v3263 = vshll.u32 2475754826, %v3257
        %v3264 = vshrl.u32 2131351028, %v3258
        %v3265 = vor.u32 %v3263, %v3264
        %v3266 = vshll.u32 2131351028, %v3257
        %v3267 = vshrl.u32 2102212464, %v3258
        %v3268 = vor.u32 %v3266, %v3267
        %v3269 = vshll.u32 2102212464, %v3257
        %v3270 = vshrl.u32 920167782, %v3258
        %v3271 = vor.u32 %v3269, %v3270
        %v3272 = vshll.u32 920167782, %v3257
        %v3273 = vshrl.u32 1326507024, %v3258
        %v3274 = vor.u32 %v3272, %v3273
        %vm3275 = vcmp.lt.s32.totalorder %v3256, 1
        %vm3276 = vcmp.lt.s32.totalorder %v3256, 2
        %vm3277 = vcmp.lt.s32.totalorder %v3256, 3
        %vm3278 = vcmp.lt.s32.totalorder %v3256, 4
        %v3279 = vsel %vm3275, %v3259, %v3262
        %v3280 = vsel %vm3278, %v3268, 2102212464
        %v3281 = vsel %vm3277, %v3265, %v3280
        %v3282 = vsel %vm3276, %v3279, %v3281
        %v3283 = vsel %vm3275, %v3262, %v3265
        %v3284 = vsel %vm3278, %v3271, 920167782
        %v3285 = vsel %vm3277, %v3268, %v3284
        %v3286 = vsel %vm3276, %v3283, %v3285
        %v3287 = vsel %vm3275, %v3265, %v3268
        %v3288 = vsel %vm3278, %v3274, 1326507024
        %v3289 = vsel %vm3277, %v3271, %v3288
        %v3290 = vsel %vm3276, %v3287, %v3289
        %v3291 = vshll.u32 %v3251, 8
        %v3292 = vmul.u32.u64.compose %v3291, %v3290
        %v3293 = vextract.low.u32 %v3292
        %v3294 = vextract.high.u32 %v3292
        %v3295 = vmul.u32.u64.compose %v3291, %v3286
        %v3296 = vextract.low.u32 %v3295
        %v3297 = vextract.high.u32 %v3295
        %v3298 = vmul.u32 %v3291, %v3282
        %v3299 = vadd.s32 %v3294, %v3296
        %vm3300 = vc.u32 %v3294, %v3296
        %v3301 = vadd.s32 %v3297, 1
        %v3302 = vsel %vm3300, %v3301, %v3297
        %v3303 = vadd.s32 %v3298, %v3302
        %v3304 = vadd.s32 %v3303, 536870912
        %v3305 = vshrl.u32 %v3304, 30
        %v3306 = vshll.u32 %v3305, 30
        %v3307 = vsub.s32 %v3303, %v3306
        %vm3308 = vcmp.lt.s32.totalorder %v3307, 0
        %v3309 = vsub.s32 0, %v3307
        %v3310 = vsel %vm3308, %v3309, %v3307
        %v3311 = vclz %v3310
        %v3312 = vsub.s32 %v3311, 2
        %vm3313 = vcmp.gt.s32.totalorder 0, %v3312
        %v3314 = vsel %vm3313, 0, %v3312
        %v3315 = vsub.s32 32, %v3314
        %v3316 = vshll.u32 %v3307, %v3314
        %v3317 = vshrl.u32 %v3299, %v3315
        %v3318 = vor.u32 %v3316, %v3317
        %v3319 = vsub.s32 4294967266, %v3314
        %v3320 = vadd.s32 %v3319, 127
        %v3321 = vshll.u32 %v3320, 23
        %v3322 = vor.u32 4788187, %v3321
        %v3323 = vand.u32 2147483647, %v3322
        %v3325 = vcvt.s32.f32 %v3318
        %v3326 = vmul.f32 %v3325, %v3323
        %v3327 = vxor.u32 %v3326, 2147483648
        %v3328 = vsel %vm3245, %v3327, %v3326
        %v3329 = vsub.s32 4, %v3305
        %v3330 = vsel %vm3245, %v3329, %v3305
        %v3331 = vsel %vm3244, %v2312, %v3328
        %v3332 = vsel %vm3244, 0, %v3330
        %v3333 = vcosq.f32.pop %v3331
        %v3334 = vsinq.f32.pop %v3331
        %vm3335 = vweird.f32 %v2312
        %v3336 = vadd.s32 %v3332, 3
        %v3337 = vand.u32 %v3336, 3
        %vm3338 = vcmp.lt.s32.totalorder %v3337, 2
        %vm3339 = vcmp.eq.s32.totalorder %v3337, 0
        %v3340 = vxor.u32 %v3334, 2147483648
        %v3341 = vsel %vm3339, %v3333, %v3340
        %vm3342 = vcmp.eq.s32.totalorder %v3337, 2
        %v3343 = vxor.u32 %v3333, 2147483648
        %v3344 = vsel %vm3342, %v3343, %v3334
        %v3345 = vsel %vm3338, %v3341, %v3344
        %v3346 = vsel %vm3335, nan, %v3345
        %v3347 = vand.u32 2147483647, %v2314
        %vm3348 = vcmp.le.f32.partialorder %v3347, 0.7853982
        %vm3349 = vcmp.lt.s32.totalorder %v2314, 0
        %v3350 = vand.u32 %v2314, 2139095040
        %v3351 = vshrl.u32 %v3350, 23
        %v3352 = vsub.s32 %v3351, 127
        %v3353 = vand.u32 2147483647, %v2314
        %v3354 = vand.u32 %v3353, 8388607
        %v3355 = vor.u32 %v3354, 8388608
        %v3356 = vsub.s32 0, %v3355
        %v3357 = vadd.s32 %v3352, 1
        %vm3358 = vcmp.gt.s32.totalorder %v3357, 0
        %v3359 = vsel %vm3358, %v3357, 0
        %v3360 = vshrl.u32 %v3359, 5
        %v3361 = vand.u32 %v3359, 31
        %v3362 = vsub.s32 32, %v3361
        %v3363 = vshrl.u32 683565275, %v3362
        %v3364 = vshll.u32 683565275, %v3361
        %v3365 = vshrl.u32 2475754826, %v3362
        %v3366 = vor.u32 %v3364, %v3365
        %v3367 = vshll.u32 2475754826, %v3361
        %v3368 = vshrl.u32 2131351028, %v3362
        %v3369 = vor.u32 %v3367, %v3368
        %v3370 = vshll.u32 2131351028, %v3361
        %v3371 = vshrl.u32 2102212464, %v3362
        %v3372 = vor.u32 %v3370, %v3371
        %v3373 = vshll.u32 2102212464, %v3361
        %v3374 = vshrl.u32 920167782, %v3362
        %v3375 = vor.u32 %v3373, %v3374
        %v3376 = vshll.u32 920167782, %v3361
        %v3377 = vshrl.u32 1326507024, %v3362
        %v3378 = vor.u32 %v3376, %v3377
        %vm3379 = vcmp.lt.s32.totalorder %v3360, 1
        %vm3380 = vcmp.lt.s32.totalorder %v3360, 2
        %vm3381 = vcmp.lt.s32.totalorder %v3360, 3
        %vm3382 = vcmp.lt.s32.totalorder %v3360, 4
        %v3383 = vsel %vm3379, %v3363, %v3366
        %v3384 = vsel %vm3382, %v3372, 2102212464
        %v3385 = vsel %vm3381, %v3369, %v3384
        %v3386 = vsel %vm3380, %v3383, %v3385
        %v3387 = vsel %vm3379, %v3366, %v3369
        %v3388 = vsel %vm3382, %v3375, 920167782
        %v3389 = vsel %vm3381, %v3372, %v3388
        %v3390 = vsel %vm3380, %v3387, %v3389
        %v3391 = vsel %vm3379, %v3369, %v3372
        %v3392 = vsel %vm3382, %v3378, 1326507024
        %v3393 = vsel %vm3381, %v3375, %v3392
        %v3394 = vsel %vm3380, %v3391, %v3393
        %v3395 = vshll.u32 %v3355, 8
        %v3396 = vmul.u32.u64.compose %v3395, %v3394
        %v3397 = vextract.low.u32 %v3396
        %v3398 = vextract.high.u32 %v3396
        %v3399 = vmul.u32.u64.compose %v3395, %v3390
        %v3400 = vextract.low.u32 %v3399
        %v3401 = vextract.high.u32 %v3399
        %v3402 = vmul.u32 %v3395, %v3386
        %v3403 = vadd.s32 %v3398, %v3400
        %vm3404 = vc.u32 %v3398, %v3400
        %v3405 = vadd.s32 %v3401, 1
        %v3406 = vsel %vm3404, %v3405, %v3401
        %v3407 = vadd.s32 %v3402, %v3406
        %v3408 = vadd.s32 %v3407, 536870912
        %v3409 = vshrl.u32 %v3408, 30
        %v3410 = vshll.u32 %v3409, 30
        %v3411 = vsub.s32 %v3407, %v3410
        %vm3412 = vcmp.lt.s32.totalorder %v3411, 0
        %v3413 = vsub.s32 0, %v3411
        %v3414 = vsel %vm3412, %v3413, %v3411
        %v3415 = vclz %v3414
        %v3416 = vsub.s32 %v3415, 2
        %vm3417 = vcmp.gt.s32.totalorder 0, %v3416
        %v3418 = vsel %vm3417, 0, %v3416
        %v3419 = vsub.s32 32, %v3418
        %v3420 = vshll.u32 %v3411, %v3418
        %v3421 = vshrl.u32 %v3403, %v3419
        %v3422 = vor.u32 %v3420, %v3421
        %v3423 = vsub.s32 4294967266, %v3418
        %v3424 = vadd.s32 %v3423, 127
        %v3425 = vshll.u32 %v3424, 23
        %v3426 = vor.u32 4788187, %v3425
        %v3427 = vand.u32 2147483647, %v3426
        %v3429 = vcvt.s32.f32 %v3422
        %v3430 = vmul.f32 %v3429, %v3427
        %v3431 = vxor.u32 %v3430, 2147483648
        %v3432 = vsel %vm3349, %v3431, %v3430
        %v3433 = vsub.s32 4, %v3409
        %v3434 = vsel %vm3349, %v3433, %v3409
        %v3435 = vsel %vm3348, %v2314, %v3432
        %v3436 = vsel %vm3348, 0, %v3434
        %v3437 = vcosq.f32.pop %v3435
        %v3438 = vsinq.f32.pop %v3435
        %vm3439 = vweird.f32 %v2314
        %v3440 = vadd.s32 %v3436, 3
        %v3441 = vand.u32 %v3440, 3
        %vm3442 = vcmp.lt.s32.totalorder %v3441, 2
        %vm3443 = vcmp.eq.s32.totalorder %v3441, 0
        %v3444 = vxor.u32 %v3438, 2147483648
        %v3445 = vsel %vm3443, %v3437, %v3444
        %vm3446 = vcmp.eq.s32.totalorder %v3441, 2
        %v3447 = vxor.u32 %v3437, 2147483648
        %v3448 = vsel %vm3446, %v3447, %v3438
        %v3449 = vsel %vm3442, %v3445, %v3448
        %v3450 = vsel %vm3439, nan, %v3449
        %v3451 = vand.u32 2147483647, %v2401
        %vm3452 = vcmp.le.f32.partialorder %v3451, 0.7853982
        %vm3453 = vcmp.lt.s32.totalorder %v2401, 0
        %v3454 = vand.u32 %v2401, 2139095040
        %v3455 = vshrl.u32 %v3454, 23
        %v3456 = vsub.s32 %v3455, 127
        %v3457 = vand.u32 2147483647, %v2401
        %v3458 = vand.u32 %v3457, 8388607
        %v3459 = vor.u32 %v3458, 8388608
        %v3460 = vsub.s32 0, %v3459
        %v3461 = vadd.s32 %v3456, 1
        %vm3462 = vcmp.gt.s32.totalorder %v3461, 0
        %v3463 = vsel %vm3462, %v3461, 0
        %v3464 = vshrl.u32 %v3463, 5
        %v3465 = vand.u32 %v3463, 31
        %v3466 = vsub.s32 32, %v3465
        %v3467 = vshrl.u32 683565275, %v3466
        %v3468 = vshll.u32 683565275, %v3465
        %v3469 = vshrl.u32 2475754826, %v3466
        %v3470 = vor.u32 %v3468, %v3469
        %v3471 = vshll.u32 2475754826, %v3465
        %v3472 = vshrl.u32 2131351028, %v3466
        %v3473 = vor.u32 %v3471, %v3472
        %v3474 = vshll.u32 2131351028, %v3465
        %v3475 = vshrl.u32 2102212464, %v3466
        %v3476 = vor.u32 %v3474, %v3475
        %v3477 = vshll.u32 2102212464, %v3465
        %v3478 = vshrl.u32 920167782, %v3466
        %v3479 = vor.u32 %v3477, %v3478
        %v3480 = vshll.u32 920167782, %v3465
        %v3481 = vshrl.u32 1326507024, %v3466
        %v3482 = vor.u32 %v3480, %v3481
        %vm3483 = vcmp.lt.s32.totalorder %v3464, 1
        %vm3484 = vcmp.lt.s32.totalorder %v3464, 2
        %vm3485 = vcmp.lt.s32.totalorder %v3464, 3
        %vm3486 = vcmp.lt.s32.totalorder %v3464, 4
        %v3487 = vsel %vm3483, %v3467, %v3470
        %v3488 = vsel %vm3486, %v3476, 2102212464
        %v3489 = vsel %vm3485, %v3473, %v3488
        %v3490 = vsel %vm3484, %v3487, %v3489
        %v3491 = vsel %vm3483, %v3470, %v3473
        %v3492 = vsel %vm3486, %v3479, 920167782
        %v3493 = vsel %vm3485, %v3476, %v3492
        %v3494 = vsel %vm3484, %v3491, %v3493
        %v3495 = vsel %vm3483, %v3473, %v3476
        %v3496 = vsel %vm3486, %v3482, 1326507024
        %v3497 = vsel %vm3485, %v3479, %v3496
        %v3498 = vsel %vm3484, %v3495, %v3497
        %v3499 = vshll.u32 %v3459, 8
        %v3500 = vmul.u32.u64.compose %v3499, %v3498
        %v3501 = vextract.low.u32 %v3500
        %v3502 = vextract.high.u32 %v3500
        %v3503 = vmul.u32.u64.compose %v3499, %v3494
        %v3504 = vextract.low.u32 %v3503
        %v3505 = vextract.high.u32 %v3503
        %v3506 = vmul.u32 %v3499, %v3490
        %v3507 = vadd.s32 %v3502, %v3504
        %vm3508 = vc.u32 %v3502, %v3504
        %v3509 = vadd.s32 %v3505, 1
        %v3510 = vsel %vm3508, %v3509, %v3505
        %v3511 = vadd.s32 %v3506, %v3510
        %v3512 = vadd.s32 %v3511, 536870912
        %v3513 = vshrl.u32 %v3512, 30
        %v3514 = vshll.u32 %v3513, 30
        %v3515 = vsub.s32 %v3511, %v3514
        %vm3516 = vcmp.lt.s32.totalorder %v3515, 0
        %v3517 = vsub.s32 0, %v3515
        %v3518 = vsel %vm3516, %v3517, %v3515
        %v3519 = vclz %v3518
        %v3520 = vsub.s32 %v3519, 2
        %vm3521 = vcmp.gt.s32.totalorder 0, %v3520
        %v3522 = vsel %vm3521, 0, %v3520
        %v3523 = vsub.s32 32, %v3522
        %v3524 = vshll.u32 %v3515, %v3522
        %v3525 = vshrl.u32 %v3507, %v3523
        %v3526 = vor.u32 %v3524, %v3525
        %v3527 = vsub.s32 4294967266, %v3522
        %v3528 = vadd.s32 %v3527, 127
        %v3529 = vshll.u32 %v3528, 23
        %v3530 = vor.u32 4788187, %v3529
        %v3531 = vand.u32 2147483647, %v3530
        %v3533 = vcvt.s32.f32 %v3526
        %v3534 = vmul.f32 %v3533, %v3531
        %v3535 = vxor.u32 %v3534, 2147483648
        %v3536 = vsel %vm3453, %v3535, %v3534
        %v3537 = vsub.s32 4, %v3513
        %v3538 = vsel %vm3453, %v3537, %v3513
        %v3539 = vsel %vm3452, %v2401, %v3536
        %v3540 = vsel %vm3452, 0, %v3538
        %v3541 = vcosq.f32.pop %v3539
        %v3542 = vsinq.f32.pop %v3539
        %vm3543 = vweird.f32 %v2401
        %v3544 = vadd.s32 %v3540, 3
        %v3545 = vand.u32 %v3544, 3
        %vm3546 = vcmp.lt.s32.totalorder %v3545, 2
        %vm3547 = vcmp.eq.s32.totalorder %v3545, 0
        %v3548 = vxor.u32 %v3542, 2147483648
        %v3549 = vsel %vm3547, %v3541, %v3548
        %vm3550 = vcmp.eq.s32.totalorder %v3545, 2
        %v3551 = vxor.u32 %v3541, 2147483648
        %v3552 = vsel %vm3550, %v3551, %v3542
        %v3553 = vsel %vm3546, %v3549, %v3552
        %v3554 = vsel %vm3543, nan, %v3553
        %v3555 = vand.u32 2147483647, %v2403
        %vm3556 = vcmp.le.f32.partialorder %v3555, 0.7853982
        %vm3557 = vcmp.lt.s32.totalorder %v2403, 0
        %v3558 = vand.u32 %v2403, 2139095040
        %v3559 = vshrl.u32 %v3558, 23
        %v3560 = vsub.s32 %v3559, 127
        %v3561 = vand.u32 2147483647, %v2403
        %v3562 = vand.u32 %v3561, 8388607
        %v3563 = vor.u32 %v3562, 8388608
        %v3564 = vsub.s32 0, %v3563
        %v3565 = vadd.s32 %v3560, 1
        %vm3566 = vcmp.gt.s32.totalorder %v3565, 0
        %v3567 = vsel %vm3566, %v3565, 0
        %v3568 = vshrl.u32 %v3567, 5
        %v3569 = vand.u32 %v3567, 31
        %v3570 = vsub.s32 32, %v3569
        %v3571 = vshrl.u32 683565275, %v3570
        %v3572 = vshll.u32 683565275, %v3569
        %v3573 = vshrl.u32 2475754826, %v3570
        %v3574 = vor.u32 %v3572, %v3573
        %v3575 = vshll.u32 2475754826, %v3569
        %v3576 = vshrl.u32 2131351028, %v3570
        %v3577 = vor.u32 %v3575, %v3576
        %v3578 = vshll.u32 2131351028, %v3569
        %v3579 = vshrl.u32 2102212464, %v3570
        %v3580 = vor.u32 %v3578, %v3579
        %v3581 = vshll.u32 2102212464, %v3569
        %v3582 = vshrl.u32 920167782, %v3570
        %v3583 = vor.u32 %v3581, %v3582
        %v3584 = vshll.u32 920167782, %v3569
        %v3585 = vshrl.u32 1326507024, %v3570
        %v3586 = vor.u32 %v3584, %v3585
        %vm3587 = vcmp.lt.s32.totalorder %v3568, 1
        %vm3588 = vcmp.lt.s32.totalorder %v3568, 2
        %vm3589 = vcmp.lt.s32.totalorder %v3568, 3
        %vm3590 = vcmp.lt.s32.totalorder %v3568, 4
        %v3591 = vsel %vm3587, %v3571, %v3574
        %v3592 = vsel %vm3590, %v3580, 2102212464
        %v3593 = vsel %vm3589, %v3577, %v3592
        %v3594 = vsel %vm3588, %v3591, %v3593
        %v3595 = vsel %vm3587, %v3574, %v3577
        %v3596 = vsel %vm3590, %v3583, 920167782
        %v3597 = vsel %vm3589, %v3580, %v3596
        %v3598 = vsel %vm3588, %v3595, %v3597
        %v3599 = vsel %vm3587, %v3577, %v3580
        %v3600 = vsel %vm3590, %v3586, 1326507024
        %v3601 = vsel %vm3589, %v3583, %v3600
        %v3602 = vsel %vm3588, %v3599, %v3601
        %v3603 = vshll.u32 %v3563, 8
        %v3604 = vmul.u32.u64.compose %v3603, %v3602
        %v3605 = vextract.low.u32 %v3604
        %v3606 = vextract.high.u32 %v3604
        %v3607 = vmul.u32.u64.compose %v3603, %v3598
        %v3608 = vextract.low.u32 %v3607
        %v3609 = vextract.high.u32 %v3607
        %v3610 = vmul.u32 %v3603, %v3594
        %v3611 = vadd.s32 %v3606, %v3608
        %vm3612 = vc.u32 %v3606, %v3608
        %v3613 = vadd.s32 %v3609, 1
        %v3614 = vsel %vm3612, %v3613, %v3609
        %v3615 = vadd.s32 %v3610, %v3614
        %v3616 = vadd.s32 %v3615, 536870912
        %v3617 = vshrl.u32 %v3616, 30
        %v3618 = vshll.u32 %v3617, 30
        %v3619 = vsub.s32 %v3615, %v3618
        %vm3620 = vcmp.lt.s32.totalorder %v3619, 0
        %v3621 = vsub.s32 0, %v3619
        %v3622 = vsel %vm3620, %v3621, %v3619
        %v3623 = vclz %v3622
        %v3624 = vsub.s32 %v3623, 2
        %vm3625 = vcmp.gt.s32.totalorder 0, %v3624
        %v3626 = vsel %vm3625, 0, %v3624
        %v3627 = vsub.s32 32, %v3626
        %v3628 = vshll.u32 %v3619, %v3626
        %v3629 = vshrl.u32 %v3611, %v3627
        %v3630 = vor.u32 %v3628, %v3629
        %v3631 = vsub.s32 4294967266, %v3626
        %v3632 = vadd.s32 %v3631, 127
        %v3633 = vshll.u32 %v3632, 23
        %v3634 = vor.u32 4788187, %v3633
        %v3635 = vand.u32 2147483647, %v3634
        %v3637 = vcvt.s32.f32 %v3630
        %v3638 = vmul.f32 %v3637, %v3635
        %v3639 = vxor.u32 %v3638, 2147483648
        %v3640 = vsel %vm3557, %v3639, %v3638
        %v3641 = vsub.s32 4, %v3617
        %v3642 = vsel %vm3557, %v3641, %v3617
        %v3643 = vsel %vm3556, %v2403, %v3640
        %v3644 = vsel %vm3556, 0, %v3642
        %v3645 = vcosq.f32.pop %v3643
        %v3646 = vsinq.f32.pop %v3643
        %vm3647 = vweird.f32 %v2403
        %v3648 = vadd.s32 %v3644, 3
        %v3649 = vand.u32 %v3648, 3
        %vm3650 = vcmp.lt.s32.totalorder %v3649, 2
        %vm3651 = vcmp.eq.s32.totalorder %v3649, 0
        %v3652 = vxor.u32 %v3646, 2147483648
        %v3653 = vsel %vm3651, %v3645, %v3652
        %vm3654 = vcmp.eq.s32.totalorder %v3649, 2
        %v3655 = vxor.u32 %v3645, 2147483648
        %v3656 = vsel %vm3654, %v3655, %v3646
        %v3657 = vsel %vm3650, %v3653, %v3656
        %v3658 = vsel %vm3647, nan, %v3657
        %v3659 = vand.u32 2147483647, %v2318
        %vm3660 = vcmp.le.f32.partialorder %v3659, 0.7853982
        %vm3661 = vcmp.lt.s32.totalorder %v2318, 0
        %v3662 = vand.u32 %v2318, 2139095040
        %v3663 = vshrl.u32 %v3662, 23
        %v3664 = vsub.s32 %v3663, 127
        %v3665 = vand.u32 2147483647, %v2318
        %v3666 = vand.u32 %v3665, 8388607
        %v3667 = vor.u32 %v3666, 8388608
        %v3668 = vsub.s32 0, %v3667
        %v3669 = vadd.s32 %v3664, 1
        %vm3670 = vcmp.gt.s32.totalorder %v3669, 0
        %v3671 = vsel %vm3670, %v3669, 0
        %v3672 = vshrl.u32 %v3671, 5
        %v3673 = vand.u32 %v3671, 31
        %v3674 = vsub.s32 32, %v3673
        %v3675 = vshrl.u32 683565275, %v3674
        %v3676 = vshll.u32 683565275, %v3673
        %v3677 = vshrl.u32 2475754826, %v3674
        %v3678 = vor.u32 %v3676, %v3677
        %v3679 = vshll.u32 2475754826, %v3673
        %v3680 = vshrl.u32 2131351028, %v3674
        %v3681 = vor.u32 %v3679, %v3680
        %v3682 = vshll.u32 2131351028, %v3673
        %v3683 = vshrl.u32 2102212464, %v3674
        %v3684 = vor.u32 %v3682, %v3683
        %v3685 = vshll.u32 2102212464, %v3673
        %v3686 = vshrl.u32 920167782, %v3674
        %v3687 = vor.u32 %v3685, %v3686
        %v3688 = vshll.u32 920167782, %v3673
        %v3689 = vshrl.u32 1326507024, %v3674
        %v3690 = vor.u32 %v3688, %v3689
        %vm3691 = vcmp.lt.s32.totalorder %v3672, 1
        %vm3692 = vcmp.lt.s32.totalorder %v3672, 2
        %vm3693 = vcmp.lt.s32.totalorder %v3672, 3
        %vm3694 = vcmp.lt.s32.totalorder %v3672, 4
        %v3695 = vsel %vm3691, %v3675, %v3678
        %v3696 = vsel %vm3694, %v3684, 2102212464
        %v3697 = vsel %vm3693, %v3681, %v3696
        %v3698 = vsel %vm3692, %v3695, %v3697
        %v3699 = vsel %vm3691, %v3678, %v3681
        %v3700 = vsel %vm3694, %v3687, 920167782
        %v3701 = vsel %vm3693, %v3684, %v3700
        %v3702 = vsel %vm3692, %v3699, %v3701
        %v3703 = vsel %vm3691, %v3681, %v3684
        %v3704 = vsel %vm3694, %v3690, 1326507024
        %v3705 = vsel %vm3693, %v3687, %v3704
        %v3706 = vsel %vm3692, %v3703, %v3705
        %v3707 = vshll.u32 %v3667, 8
        %v3708 = vmul.u32.u64.compose %v3707, %v3706
        %v3709 = vextract.low.u32 %v3708
        %v3710 = vextract.high.u32 %v3708
        %v3711 = vmul.u32.u64.compose %v3707, %v3702
        %v3712 = vextract.low.u32 %v3711
        %v3713 = vextract.high.u32 %v3711
        %v3714 = vmul.u32 %v3707, %v3698
        %v3715 = vadd.s32 %v3710, %v3712
        %vm3716 = vc.u32 %v3710, %v3712
        %v3717 = vadd.s32 %v3713, 1
        %v3718 = vsel %vm3716, %v3717, %v3713
        %v3719 = vadd.s32 %v3714, %v3718
        %v3720 = vadd.s32 %v3719, 536870912
        %v3721 = vshrl.u32 %v3720, 30
        %v3722 = vshll.u32 %v3721, 30
        %v3723 = vsub.s32 %v3719, %v3722
        %vm3724 = vcmp.lt.s32.totalorder %v3723, 0
        %v3725 = vsub.s32 0, %v3723
        %v3726 = vsel %vm3724, %v3725, %v3723
        %v3727 = vclz %v3726
        %v3728 = vsub.s32 %v3727, 2
        %vm3729 = vcmp.gt.s32.totalorder 0, %v3728
        %v3730 = vsel %vm3729, 0, %v3728
        %v3731 = vsub.s32 32, %v3730
        %v3732 = vshll.u32 %v3723, %v3730
        %v3733 = vshrl.u32 %v3715, %v3731
        %v3734 = vor.u32 %v3732, %v3733
        %v3735 = vsub.s32 4294967266, %v3730
        %v3736 = vadd.s32 %v3735, 127
        %v3737 = vshll.u32 %v3736, 23
        %v3738 = vor.u32 4788187, %v3737
        %v3739 = vand.u32 2147483647, %v3738
        %v3741 = vcvt.s32.f32 %v3734
        %v3742 = vmul.f32 %v3741, %v3739
        %v3743 = vxor.u32 %v3742, 2147483648
        %v3744 = vsel %vm3661, %v3743, %v3742
        %v3745 = vsub.s32 4, %v3721
        %v3746 = vsel %vm3661, %v3745, %v3721
        %v3747 = vsel %vm3660, %v2318, %v3744
        %v3748 = vsel %vm3660, 0, %v3746
        %v3749 = vcosq.f32.pop %v3747
        %v3750 = vsinq.f32.pop %v3747
        %vm3751 = vweird.f32 %v2318
        %v3752 = vadd.s32 %v3748, 3
        %v3753 = vand.u32 %v3752, 3
        %vm3754 = vcmp.lt.s32.totalorder %v3753, 2
        %vm3755 = vcmp.eq.s32.totalorder %v3753, 0
        %v3756 = vxor.u32 %v3750, 2147483648
        %v3757 = vsel %vm3755, %v3749, %v3756
        %vm3758 = vcmp.eq.s32.totalorder %v3753, 2
        %v3759 = vxor.u32 %v3749, 2147483648
        %v3760 = vsel %vm3758, %v3759, %v3750
        %v3761 = vsel %vm3754, %v3757, %v3760
        %v3762 = vsel %vm3751, nan, %v3761
        %v3763 = vand.u32 2147483647, %v2320
        %vm3764 = vcmp.le.f32.partialorder %v3763, 0.7853982
        %vm3765 = vcmp.lt.s32.totalorder %v2320, 0
        %v3766 = vand.u32 %v2320, 2139095040
        %v3767 = vshrl.u32 %v3766, 23
        %v3768 = vsub.s32 %v3767, 127
        %v3769 = vand.u32 2147483647, %v2320
        %v3770 = vand.u32 %v3769, 8388607
        %v3771 = vor.u32 %v3770, 8388608
        %v3772 = vsub.s32 0, %v3771
        %v3773 = vadd.s32 %v3768, 1
        %vm3774 = vcmp.gt.s32.totalorder %v3773, 0
        %v3775 = vsel %vm3774, %v3773, 0
        %v3776 = vshrl.u32 %v3775, 5
        %v3777 = vand.u32 %v3775, 31
        %v3778 = vsub.s32 32, %v3777
        %v3779 = vshrl.u32 683565275, %v3778
        %v3780 = vshll.u32 683565275, %v3777
        %v3781 = vshrl.u32 2475754826, %v3778
        %v3782 = vor.u32 %v3780, %v3781
        %v3783 = vshll.u32 2475754826, %v3777
        %v3784 = vshrl.u32 2131351028, %v3778
        %v3785 = vor.u32 %v3783, %v3784
        %v3786 = vshll.u32 2131351028, %v3777
        %v3787 = vshrl.u32 2102212464, %v3778
        %v3788 = vor.u32 %v3786, %v3787
        %v3789 = vshll.u32 2102212464, %v3777
        %v3790 = vshrl.u32 920167782, %v3778
        %v3791 = vor.u32 %v3789, %v3790
        %v3792 = vshll.u32 920167782, %v3777
        %v3793 = vshrl.u32 1326507024, %v3778
        %v3794 = vor.u32 %v3792, %v3793
        %vm3795 = vcmp.lt.s32.totalorder %v3776, 1
        %vm3796 = vcmp.lt.s32.totalorder %v3776, 2
        %vm3797 = vcmp.lt.s32.totalorder %v3776, 3
        %vm3798 = vcmp.lt.s32.totalorder %v3776, 4
        %v3799 = vsel %vm3795, %v3779, %v3782
        %v3800 = vsel %vm3798, %v3788, 2102212464
        %v3801 = vsel %vm3797, %v3785, %v3800
        %v3802 = vsel %vm3796, %v3799, %v3801
        %v3803 = vsel %vm3795, %v3782, %v3785
        %v3804 = vsel %vm3798, %v3791, 920167782
        %v3805 = vsel %vm3797, %v3788, %v3804
        %v3806 = vsel %vm3796, %v3803, %v3805
        %v3807 = vsel %vm3795, %v3785, %v3788
        %v3808 = vsel %vm3798, %v3794, 1326507024
        %v3809 = vsel %vm3797, %v3791, %v3808
        %v3810 = vsel %vm3796, %v3807, %v3809
        %v3811 = vshll.u32 %v3771, 8
        %v3812 = vmul.u32.u64.compose %v3811, %v3810
        %v3813 = vextract.low.u32 %v3812
        %v3814 = vextract.high.u32 %v3812
        %v3815 = vmul.u32.u64.compose %v3811, %v3806
        %v3816 = vextract.low.u32 %v3815
        %v3817 = vextract.high.u32 %v3815
        %v3818 = vmul.u32 %v3811, %v3802
        %v3819 = vadd.s32 %v3814, %v3816
        %vm3820 = vc.u32 %v3814, %v3816
        %v3821 = vadd.s32 %v3817, 1
        %v3822 = vsel %vm3820, %v3821, %v3817
        %v3823 = vadd.s32 %v3818, %v3822
        %v3824 = vadd.s32 %v3823, 536870912
        %v3825 = vshrl.u32 %v3824, 30
        %v3826 = vshll.u32 %v3825, 30
        %v3827 = vsub.s32 %v3823, %v3826
        %vm3828 = vcmp.lt.s32.totalorder %v3827, 0
        %v3829 = vsub.s32 0, %v3827
        %v3830 = vsel %vm3828, %v3829, %v3827
        %v3831 = vclz %v3830
        %v3832 = vsub.s32 %v3831, 2
        %vm3833 = vcmp.gt.s32.totalorder 0, %v3832
        %v3834 = vsel %vm3833, 0, %v3832
        %v3835 = vsub.s32 32, %v3834
        %v3836 = vshll.u32 %v3827, %v3834
        %v3837 = vshrl.u32 %v3819, %v3835
        %v3838 = vor.u32 %v3836, %v3837
        %v3839 = vsub.s32 4294967266, %v3834
        %v3840 = vadd.s32 %v3839, 127
        %v3841 = vshll.u32 %v3840, 23
        %v3842 = vor.u32 4788187, %v3841
        %v3843 = vand.u32 2147483647, %v3842
        %v3845 = vcvt.s32.f32 %v3838
        %v3846 = vmul.f32 %v3845, %v3843
        %v3847 = vxor.u32 %v3846, 2147483648
        %v3848 = vsel %vm3765, %v3847, %v3846
        %v3849 = vsub.s32 4, %v3825
        %v3850 = vsel %vm3765, %v3849, %v3825
        %v3851 = vsel %vm3764, %v2320, %v3848
        %v3852 = vsel %vm3764, 0, %v3850
        %v3853 = vcosq.f32.pop %v3851
        %v3854 = vsinq.f32.pop %v3851
        %vm3855 = vweird.f32 %v2320
        %v3856 = vadd.s32 %v3852, 3
        %v3857 = vand.u32 %v3856, 3
        %vm3858 = vcmp.lt.s32.totalorder %v3857, 2
        %vm3859 = vcmp.eq.s32.totalorder %v3857, 0
        %v3860 = vxor.u32 %v3854, 2147483648
        %v3861 = vsel %vm3859, %v3853, %v3860
        %vm3862 = vcmp.eq.s32.totalorder %v3857, 2
        %v3863 = vxor.u32 %v3853, 2147483648
        %v3864 = vsel %vm3862, %v3863, %v3854
        %v3865 = vsel %vm3858, %v3861, %v3864
        %v3866 = vsel %vm3855, nan, %v3865
        %v3867 = vand.u32 2147483647, %v2407
        %vm3868 = vcmp.le.f32.partialorder %v3867, 0.7853982
        %vm3869 = vcmp.lt.s32.totalorder %v2407, 0
        %v3870 = vand.u32 %v2407, 2139095040
        %v3871 = vshrl.u32 %v3870, 23
        %v3872 = vsub.s32 %v3871, 127
        %v3873 = vand.u32 2147483647, %v2407
        %v3874 = vand.u32 %v3873, 8388607
        %v3875 = vor.u32 %v3874, 8388608
        %v3876 = vsub.s32 0, %v3875
        %v3877 = vadd.s32 %v3872, 1
        %vm3878 = vcmp.gt.s32.totalorder %v3877, 0
        %v3879 = vsel %vm3878, %v3877, 0
        %v3880 = vshrl.u32 %v3879, 5
        %v3881 = vand.u32 %v3879, 31
        %v3882 = vsub.s32 32, %v3881
        %v3883 = vshrl.u32 683565275, %v3882
        %v3884 = vshll.u32 683565275, %v3881
        %v3885 = vshrl.u32 2475754826, %v3882
        %v3886 = vor.u32 %v3884, %v3885
        %v3887 = vshll.u32 2475754826, %v3881
        %v3888 = vshrl.u32 2131351028, %v3882
        %v3889 = vor.u32 %v3887, %v3888
        %v3890 = vshll.u32 2131351028, %v3881
        %v3891 = vshrl.u32 2102212464, %v3882
        %v3892 = vor.u32 %v3890, %v3891
        %v3893 = vshll.u32 2102212464, %v3881
        %v3894 = vshrl.u32 920167782, %v3882
        %v3895 = vor.u32 %v3893, %v3894
        %v3896 = vshll.u32 920167782, %v3881
        %v3897 = vshrl.u32 1326507024, %v3882
        %v3898 = vor.u32 %v3896, %v3897
        %vm3899 = vcmp.lt.s32.totalorder %v3880, 1
        %vm3900 = vcmp.lt.s32.totalorder %v3880, 2
        %vm3901 = vcmp.lt.s32.totalorder %v3880, 3
        %vm3902 = vcmp.lt.s32.totalorder %v3880, 4
        %v3903 = vsel %vm3899, %v3883, %v3886
        %v3904 = vsel %vm3902, %v3892, 2102212464
        %v3905 = vsel %vm3901, %v3889, %v3904
        %v3906 = vsel %vm3900, %v3903, %v3905
        %v3907 = vsel %vm3899, %v3886, %v3889
        %v3908 = vsel %vm3902, %v3895, 920167782
        %v3909 = vsel %vm3901, %v3892, %v3908
        %v3910 = vsel %vm3900, %v3907, %v3909
        %v3911 = vsel %vm3899, %v3889, %v3892
        %v3912 = vsel %vm3902, %v3898, 1326507024
        %v3913 = vsel %vm3901, %v3895, %v3912
        %v3914 = vsel %vm3900, %v3911, %v3913
        %v3915 = vshll.u32 %v3875, 8
        %v3916 = vmul.u32.u64.compose %v3915, %v3914
        %v3917 = vextract.low.u32 %v3916
        %v3918 = vextract.high.u32 %v3916
        %v3919 = vmul.u32.u64.compose %v3915, %v3910
        %v3920 = vextract.low.u32 %v3919
        %v3921 = vextract.high.u32 %v3919
        %v3922 = vmul.u32 %v3915, %v3906
        %v3923 = vadd.s32 %v3918, %v3920
        %vm3924 = vc.u32 %v3918, %v3920
        %v3925 = vadd.s32 %v3921, 1
        %v3926 = vsel %vm3924, %v3925, %v3921
        %v3927 = vadd.s32 %v3922, %v3926
        %v3928 = vadd.s32 %v3927, 536870912
        %v3929 = vshrl.u32 %v3928, 30
        %v3930 = vshll.u32 %v3929, 30
        %v3931 = vsub.s32 %v3927, %v3930
        %vm3932 = vcmp.lt.s32.totalorder %v3931, 0
        %v3933 = vsub.s32 0, %v3931
        %v3934 = vsel %vm3932, %v3933, %v3931
        %v3935 = vclz %v3934
        %v3936 = vsub.s32 %v3935, 2
        %vm3937 = vcmp.gt.s32.totalorder 0, %v3936
        %v3938 = vsel %vm3937, 0, %v3936
        %v3939 = vsub.s32 32, %v3938
        %v3940 = vshll.u32 %v3931, %v3938
        %v3941 = vshrl.u32 %v3923, %v3939
        %v3942 = vor.u32 %v3940, %v3941
        %v3943 = vsub.s32 4294967266, %v3938
        %v3944 = vadd.s32 %v3943, 127
        %v3945 = vshll.u32 %v3944, 23
        %v3946 = vor.u32 4788187, %v3945
        %v3947 = vand.u32 2147483647, %v3946
        %v3949 = vcvt.s32.f32 %v3942
        %v3950 = vmul.f32 %v3949, %v3947
        %v3951 = vxor.u32 %v3950, 2147483648
        %v3952 = vsel %vm3869, %v3951, %v3950
        %v3953 = vsub.s32 4, %v3929
        %v3954 = vsel %vm3869, %v3953, %v3929
        %v3955 = vsel %vm3868, %v2407, %v3952
        %v3956 = vsel %vm3868, 0, %v3954
        %v3957 = vcosq.f32.pop %v3955
        %v3958 = vsinq.f32.pop %v3955
        %vm3959 = vweird.f32 %v2407
        %v3960 = vadd.s32 %v3956, 3
        %v3961 = vand.u32 %v3960, 3
        %vm3962 = vcmp.lt.s32.totalorder %v3961, 2
        %vm3963 = vcmp.eq.s32.totalorder %v3961, 0
        %v3964 = vxor.u32 %v3958, 2147483648
        %v3965 = vsel %vm3963, %v3957, %v3964
        %vm3966 = vcmp.eq.s32.totalorder %v3961, 2
        %v3967 = vxor.u32 %v3957, 2147483648
        %v3968 = vsel %vm3966, %v3967, %v3958
        %v3969 = vsel %vm3962, %v3965, %v3968
        %v3970 = vsel %vm3959, nan, %v3969
        %v3971 = vand.u32 2147483647, %v2409
        %vm3972 = vcmp.le.f32.partialorder %v3971, 0.7853982
        %vm3973 = vcmp.lt.s32.totalorder %v2409, 0
        %v3974 = vand.u32 %v2409, 2139095040
        %v3975 = vshrl.u32 %v3974, 23
        %v3976 = vsub.s32 %v3975, 127
        %v3977 = vand.u32 2147483647, %v2409
        %v3978 = vand.u32 %v3977, 8388607
        %v3979 = vor.u32 %v3978, 8388608
        %v3980 = vsub.s32 0, %v3979
        %v3981 = vadd.s32 %v3976, 1
        %vm3982 = vcmp.gt.s32.totalorder %v3981, 0
        %v3983 = vsel %vm3982, %v3981, 0
        %v3984 = vshrl.u32 %v3983, 5
        %v3985 = vand.u32 %v3983, 31
        %v3986 = vsub.s32 32, %v3985
        %v3987 = vshrl.u32 683565275, %v3986
        %v3988 = vshll.u32 683565275, %v3985
        %v3989 = vshrl.u32 2475754826, %v3986
        %v3990 = vor.u32 %v3988, %v3989
        %v3991 = vshll.u32 2475754826, %v3985
        %v3992 = vshrl.u32 2131351028, %v3986
        %v3993 = vor.u32 %v3991, %v3992
        %v3994 = vshll.u32 2131351028, %v3985
        %v3995 = vshrl.u32 2102212464, %v3986
        %v3996 = vor.u32 %v3994, %v3995
        %v3997 = vshll.u32 2102212464, %v3985
        %v3998 = vshrl.u32 920167782, %v3986
        %v3999 = vor.u32 %v3997, %v3998
        %v4000 = vshll.u32 920167782, %v3985
        %v4001 = vshrl.u32 1326507024, %v3986
        %v4002 = vor.u32 %v4000, %v4001
        %vm4003 = vcmp.lt.s32.totalorder %v3984, 1
        %vm4004 = vcmp.lt.s32.totalorder %v3984, 2
        %vm4005 = vcmp.lt.s32.totalorder %v3984, 3
        %vm4006 = vcmp.lt.s32.totalorder %v3984, 4
        %v4007 = vsel %vm4003, %v3987, %v3990
        %v4008 = vsel %vm4006, %v3996, 2102212464
        %v4009 = vsel %vm4005, %v3993, %v4008
        %v4010 = vsel %vm4004, %v4007, %v4009
        %v4011 = vsel %vm4003, %v3990, %v3993
        %v4012 = vsel %vm4006, %v3999, 920167782
        %v4013 = vsel %vm4005, %v3996, %v4012
        %v4014 = vsel %vm4004, %v4011, %v4013
        %v4015 = vsel %vm4003, %v3993, %v3996
        %v4016 = vsel %vm4006, %v4002, 1326507024
        %v4017 = vsel %vm4005, %v3999, %v4016
        %v4018 = vsel %vm4004, %v4015, %v4017
        %v4019 = vshll.u32 %v3979, 8
        %v4020 = vmul.u32.u64.compose %v4019, %v4018
        %v4021 = vextract.low.u32 %v4020
        %v4022 = vextract.high.u32 %v4020
        %v4023 = vmul.u32.u64.compose %v4019, %v4014
        %v4024 = vextract.low.u32 %v4023
        %v4025 = vextract.high.u32 %v4023
        %v4026 = vmul.u32 %v4019, %v4010
        %v4027 = vadd.s32 %v4022, %v4024
        %vm4028 = vc.u32 %v4022, %v4024
        %v4029 = vadd.s32 %v4025, 1
        %v4030 = vsel %vm4028, %v4029, %v4025
        %v4031 = vadd.s32 %v4026, %v4030
        %v4032 = vadd.s32 %v4031, 536870912
        %v4033 = vshrl.u32 %v4032, 30
        %v4034 = vshll.u32 %v4033, 30
        %v4035 = vsub.s32 %v4031, %v4034
        %vm4036 = vcmp.lt.s32.totalorder %v4035, 0
        %v4037 = vsub.s32 0, %v4035
        %v4038 = vsel %vm4036, %v4037, %v4035
        %v4039 = vclz %v4038
        %v4040 = vsub.s32 %v4039, 2
        %vm4041 = vcmp.gt.s32.totalorder 0, %v4040
        %v4042 = vsel %vm4041, 0, %v4040
        %v4043 = vsub.s32 32, %v4042
        %v4044 = vshll.u32 %v4035, %v4042
        %v4045 = vshrl.u32 %v4027, %v4043
        %v4046 = vor.u32 %v4044, %v4045
        %v4047 = vsub.s32 4294967266, %v4042
        %v4048 = vadd.s32 %v4047, 127
        %v4049 = vshll.u32 %v4048, 23
        %v4050 = vor.u32 4788187, %v4049
        %v4051 = vand.u32 2147483647, %v4050
        %v4053 = vcvt.s32.f32 %v4046
        %v4054 = vmul.f32 %v4053, %v4051
        %v4055 = vxor.u32 %v4054, 2147483648
        %v4056 = vsel %vm3973, %v4055, %v4054
        %v4057 = vsub.s32 4, %v4033
        %v4058 = vsel %vm3973, %v4057, %v4033
        %v4059 = vsel %vm3972, %v2409, %v4056
        %v4060 = vsel %vm3972, 0, %v4058
        %v4061 = vcosq.f32.pop %v4059
        %v4062 = vsinq.f32.pop %v4059
        %vm4063 = vweird.f32 %v2409
        %v4064 = vadd.s32 %v4060, 3
        %v4065 = vand.u32 %v4064, 3
        %vm4066 = vcmp.lt.s32.totalorder %v4065, 2
        %vm4067 = vcmp.eq.s32.totalorder %v4065, 0
        %v4068 = vxor.u32 %v4062, 2147483648
        %v4069 = vsel %vm4067, %v4061, %v4068
        %vm4070 = vcmp.eq.s32.totalorder %v4065, 2
        %v4071 = vxor.u32 %v4061, 2147483648
        %v4072 = vsel %vm4070, %v4071, %v4062
        %v4073 = vsel %vm4066, %v4069, %v4072
        %v4074 = vsel %vm4063, nan, %v4073
        %v4075 = vld [vmem:[%s3] sm:$0xff]
        %v4076 = vld [vmem:[%s3 + $0x8] sm:$0xff]
        %v4077 = vld [vmem:[%s3 + $0x10] sm:$0xff]
        %v4078 = vld [vmem:[%s3 + $0x18] sm:$0xff]
        %v4079 = vld [vmem:[%s4] sm:$0xff]
        %v4080 = vld [vmem:[%s4 + $0x8] sm:$0xff]
        %v4081 = vld [vmem:[%s4 + $0x10] sm:$0xff]
        %v4082 = vld [vmem:[%s4 + $0x18] sm:$0xff]
        %4084 = vset.pattern.permute.xlu0 0
        %4085 = vperm.xlu0 %4084, %v4079
        %v4086 = vpop.permute.xlu0 %4085
        %4089 = vset.pattern.permute.xlu0 0
        %4090 = vperm.xlu0 %4089, %v4080
        %v4091 = vpop.permute.xlu0 %4090
        %4094 = vset.pattern.permute.xlu0 0
        %4095 = vperm.xlu0 %4094, %v4081
        %v4096 = vpop.permute.xlu0 %4095
        %4099 = vset.pattern.permute.xlu0 0
        %4100 = vperm.xlu0 %4099, %v4082
        %v4101 = vpop.permute.xlu0 %4100
        %vm4103 = vcmask 261120
        %v4105 = vsel %vm4103, %v4075, 0
        %v4108 = vsel %vm4103, %v4076, 0
        %v4111 = vsel %vm4103, %v4077, 0
        %v4114 = vsel %vm4103, %v4078, 0
        %4116 = vmatprep.subr.mxu0 %v734
        %4117 = vmatpush1.msra.mxu0 %v630
        %4118 = vmatprep.subr.mxu0 %v1150
        %4119 = vmatpush1.msra.mxu0 %v1046
        %4120 = vmatprep.subr.mxu0 %v1566
        %4121 = vmatpush1.msra.mxu0 %v1462
        %4122 = vmatprep.subr.mxu0 %v1982
        %4123 = vmatpush1.msra.mxu0 %v1878
        %4124 = vmatprep.subr.mxu0 0.0
        %4125 = vmatpush1.msra.mxu0 0.0
        %4126 = vmatprep.subr.mxu0 0.0
        %4127 = vmatpush1.msra.mxu0 0.0
        %4128 = vmatprep.subr.mxu0 0.0
        %4129 = vmatpush1.msra.mxu0 0.0
        %4130 = vmatprep.subr.mxu0 0.0
        %4131 = vmatpush1.msra.mxu0 0.0
        %4132 = vmatprep.subr.mxu0 0.0
        %4133 = vmatpush1.msra.mxu0 0.0
        %4134 = vmatprep.subr.mxu0 0.0
        %4135 = vmatpush1.msra.mxu0 0.0
        %4136 = vmatprep.subr.mxu0 0.0
        %4137 = vmatpush1.msra.mxu0 0.0
        %4138 = vmatprep.subr.mxu0 0.0
        %4139 = vmatpush1.msra.mxu0 0.0
        %4140 = vmatprep.subr.mxu0 0.0
        %4141 = vmatpush1.msra.mxu0 0.0
        %4142 = vmatprep.subr.mxu0 0.0
        %4143 = vmatpush1.msra.mxu0 0.0
        %4144 = vmatprep.subr.mxu0 0.0
        %4145 = vmatpush1.msra.mxu0 0.0
        %4146 = vmatprep.subr.mxu0 0.0
        %4147 = vmatpush1.msra.mxu0 0.0
        %4148 = vmatprep.subr.mxu0 0.0
        %4149 = vmatpush1.msra.mxu0 0.0
        %4150 = vmatprep.subr.mxu0 0.0
        %4151 = vmatpush1.msra.mxu0 0.0
        %4152 = vmatprep.subr.mxu0 0.0
        %4153 = vmatpush1.msra.mxu0 0.0
        %4154 = vmatprep.subr.mxu0 0.0
        %4155 = vmatpush1.msra.mxu0 0.0
        %4156 = vmatprep.subr.mxu0 0.0
        %4157 = vmatpush1.msra.mxu0 0.0
        %4158 = vmatprep.subr.mxu0 0.0
        %4159 = vmatpush1.msra.mxu0 0.0
        %4160 = vmatprep.subr.mxu0 0.0
        %4161 = vmatpush1.msra.mxu0 0.0
        %4162 = vmatprep.subr.mxu0 0.0
        %4163 = vmatpush1.msra.mxu0 0.0
        %4164 = vmatprep.subr.mxu0 0.0
        %4165 = vmatpush1.msra.mxu0 0.0
        %4166 = vmatprep.subr.mxu0 0.0
        %4167 = vmatpush1.msra.mxu0 0.0
        %4168 = vmatprep.subr.mxu0 0.0
        %4169 = vmatpush1.msra.mxu0 0.0
        %4170 = vmatprep.subr.mxu0 0.0
        %4171 = vmatpush1.msra.mxu0 0.0
        %4172 = vmatprep.subr.mxu0 0.0
        %4173 = vmatpush1.msra.mxu0 0.0
        %4174 = vmatprep.subr.mxu0 0.0
        %4175 = vmatpush1.msra.mxu0 0.0
        %4176 = vmatprep.subr.mxu0 0.0
        %4177 = vmatpush1.msra.mxu0 0.0
        %4178 = vmatprep.subr.mxu0 0.0
        %4179 = vmatpush1.msra.mxu0 0.0
        %4180 = vmatprep.mubr.f32.mxu0 0.0
        %4181 = vmatmul.mubr.f32.gmra.mrb[0].mxu0 %v4105
        %v4182 = vpop.f32.mrb[0].mxu0
        %v4183 = vadd.f32 %v4086, %v4182
        %v4184 = vpop.f32.mrb[0].mxu0
        %v4185 = vadd.f32 %v4086, %v4184
        %4186 = vmatprep.mubr.f32.mxu0 0.0
        %4187 = vmatmul.mubr.f32.gmra.mrb[0].mxu0 %v4108
        %v4188 = vpop.f32.mrb[0].mxu0
        %v4189 = vadd.f32 %v4091, %v4188
        %v4190 = vpop.f32.mrb[0].mxu0
        %v4191 = vadd.f32 %v4091, %v4190
        %4192 = vmatprep.mubr.f32.mxu0 0.0
        %4193 = vmatmul.mubr.f32.gmra.mrb[0].mxu0 %v4111
        %v4194 = vpop.f32.mrb[0].mxu0
        %v4195 = vadd.f32 %v4096, %v4194
        %v4196 = vpop.f32.mrb[0].mxu0
        %v4197 = vadd.f32 %v4096, %v4196
        %4198 = vmatprep.mubr.f32.mxu0 0.0
        %4199 = vmatmul.mubr.f32.gmra.mrb[0].mxu0 %v4114
        %v4200 = vpop.f32.mrb[0].mxu0
        %v4201 = vadd.f32 %v4101, %v4200
        %v4202 = vpop.f32.mrb[0].mxu0
        %v4203 = vadd.f32 %v4101, %v4202
        %4204 = vdwg.mxu0
        %4205 = vmatprep.subr.mxu0 %v942
        %4206 = vmatpush1.msra.mxu0 %v838
        %4207 = vmatprep.subr.mxu0 %v1358
        %4208 = vmatpush1.msra.mxu0 %v1254
        %4209 = vmatprep.subr.mxu0 %v1774
        %4210 = vmatpush1.msra.mxu0 %v1670
        %4211 = vmatprep.subr.mxu0 %v2190
        %4212 = vmatpush1.msra.mxu0 %v2086
        %4213 = vmatprep.subr.mxu0 0.0
        %4214 = vmatpush1.msra.mxu0 0.0
        %4215 = vmatprep.subr.mxu0 0.0
        %4216 = vmatpush1.msra.mxu0 0.0
        %4217 = vmatprep.subr.mxu0 0.0
        %4218 = vmatpush1.msra.mxu0 0.0
        %4219 = vmatprep.subr.mxu0 0.0
        %4220 = vmatpush1.msra.mxu0 0.0
        %4221 = vmatprep.subr.mxu0 0.0
        %4222 = vmatpush1.msra.mxu0 0.0
        %4223 = vmatprep.subr.mxu0 0.0
        %4224 = vmatpush1.msra.mxu0 0.0
        %4225 = vmatprep.subr.mxu0 0.0
        %4226 = vmatpush1.msra.mxu0 0.0
        %4227 = vmatprep.subr.mxu0 0.0
        %4228 = vmatpush1.msra.mxu0 0.0
        %4229 = vmatprep.subr.mxu0 0.0
        %4230 = vmatpush1.msra.mxu0 0.0
        %4231 = vmatprep.subr.mxu0 0.0
        %4232 = vmatpush1.msra.mxu0 0.0
        %4233 = vmatprep.subr.mxu0 0.0
        %4234 = vmatpush1.msra.mxu0 0.0
        %4235 = vmatprep.subr.mxu0 0.0
        %4236 = vmatpush1.msra.mxu0 0.0
        %4237 = vmatprep.subr.mxu0 0.0
        %4238 = vmatpush1.msra.mxu0 0.0
        %4239 = vmatprep.subr.mxu0 0.0
        %4240 = vmatpush1.msra.mxu0 0.0
        %4241 = vmatprep.subr.mxu0 0.0
        %4242 = vmatpush1.msra.mxu0 0.0
        %4243 = vmatprep.subr.mxu0 0.0
        %4244 = vmatpush1.msra.mxu0 0.0
        %4245 = vmatprep.subr.mxu0 0.0
        %4246 = vmatpush1.msra.mxu0 0.0
        %4247 = vmatprep.subr.mxu0 0.0
        %4248 = vmatpush1.msra.mxu0 0.0
        %4249 = vmatprep.subr.mxu0 0.0
        %4250 = vmatpush1.msra.mxu0 0.0
        %4251 = vmatprep.subr.mxu0 0.0
        %4252 = vmatpush1.msra.mxu0 0.0
        %4253 = vmatprep.subr.mxu0 0.0
        %4254 = vmatpush1.msra.mxu0 0.0
        %4255 = vmatprep.subr.mxu0 0.0
        %4256 = vmatpush1.msra.mxu0 0.0
        %4257 = vmatprep.subr.mxu0 0.0
        %4258 = vmatpush1.msra.mxu0 0.0
        %4259 = vmatprep.subr.mxu0 0.0
        %4260 = vmatpush1.msra.mxu0 0.0
        %4261 = vmatprep.subr.mxu0 0.0
        %4262 = vmatpush1.msra.mxu0 0.0
        %4263 = vmatprep.subr.mxu0 0.0
        %4264 = vmatpush1.msra.mxu0 0.0
        %4265 = vmatprep.subr.mxu0 0.0
        %4266 = vmatpush1.msra.mxu0 0.0
        %4267 = vmatprep.subr.mxu0 0.0
        %4268 = vmatpush1.msra.mxu0 0.0
        %4269 = vmatprep.mubr.f32.mxu0 0.0
        %4270 = vmatmul.mubr.f32.gmra.mrb[0].mxu0 %v4105
        %v4271 = vpop.f32.mrb[0].mxu0
        %v4272 = vadd.f32 %v4086, %v4271
        %v4273 = vpop.f32.mrb[0].mxu0
        %v4274 = vadd.f32 %v4086, %v4273
        %4275 = vmatprep.mubr.f32.mxu0 0.0
        %4276 = vmatmul.mubr.f32.gmra.mrb[0].mxu0 %v4108
        %v4277 = vpop.f32.mrb[0].mxu0
        %v4278 = vadd.f32 %v4091, %v4277
        %v4279 = vpop.f32.mrb[0].mxu0
        %v4280 = vadd.f32 %v4091, %v4279
        %4281 = vmatprep.mubr.f32.mxu0 0.0
        %4282 = vmatmul.mubr.f32.gmra.mrb[0].mxu0 %v4111
        %v4283 = vpop.f32.mrb[0].mxu0
        %v4284 = vadd.f32 %v4096, %v4283
        %v4285 = vpop.f32.mrb[0].mxu0
        %v4286 = vadd.f32 %v4096, %v4285
        %4287 = vmatprep.mubr.f32.mxu0 0.0
        %4288 = vmatmul.mubr.f32.gmra.mrb[0].mxu0 %v4114
        %v4289 = vpop.f32.mrb[0].mxu0
        %v4290 = vadd.f32 %v4101, %v4289
        %v4291 = vpop.f32.mrb[0].mxu0
        %v4292 = vadd.f32 %v4101, %v4291
        %4293 = vdwg.mxu0
        %v4294 = vmul.f32 %v2514, %v4183
        %v4295 = vmul.f32 %v2618, %v4185
        %v4296 = vmul.f32 %v2722, %v4272
        %v4297 = vmul.f32 %v2826, %v4274
        %v4298 = vmul.f32 %v2930, %v4189
        %v4299 = vmul.f32 %v3034, %v4191
        %v4300 = vmul.f32 %v3138, %v4278
        %v4301 = vmul.f32 %v3242, %v4280
        %v4302 = vmul.f32 %v3346, %v4195
        %v4303 = vmul.f32 %v3450, %v4197
        %v4304 = vmul.f32 %v3554, %v4284
        %v4305 = vmul.f32 %v3658, %v4286
        %v4306 = vmul.f32 %v3762, %v4201
        %v4307 = vmul.f32 %v3866, %v4203
        %v4308 = vmul.f32 %v3970, %v4290
        %v4309 = vmul.f32 %v4074, %v4292
        %v4310 = vld [vmem:[%s5] sm:$0x7]
        %v4311 = vld [vmem:[%s6] sm:$0x7]
        %4313 = vset.pattern.permute.xlu0 0
        %4314 = vperm.xlu0 %4313, %v4311
        %v4315 = vpop.permute.xlu0 %4314
        %v4318 = vsel %vm4103, %v4310, 0
        %4320 = vmatprep.subr.mxu0 %v4295
        %4321 = vmatpush1.msra.mxu0 %v4294
        %4322 = vmatprep.subr.mxu0 %v4299
        %4323 = vmatpush1.msra.mxu0 %v4298
        %4324 = vmatprep.subr.mxu0 %v4303
        %4325 = vmatpush1.msra.mxu0 %v4302
        %4326 = vmatprep.subr.mxu0 %v4307
        %4327 = vmatpush1.msra.mxu0 %v4306
        %4328 = vmatprep.subr.mxu0 0.0
        %4329 = vmatpush1.msra.mxu0 0.0
        %4330 = vmatprep.subr.mxu0 0.0
        %4331 = vmatpush1.msra.mxu0 0.0
        %4332 = vmatprep.subr.mxu0 0.0
        %4333 = vmatpush1.msra.mxu0 0.0
        %4334 = vmatprep.subr.mxu0 0.0
        %4335 = vmatpush1.msra.mxu0 0.0
        %4336 = vmatprep.subr.mxu0 0.0
        %4337 = vmatpush1.msra.mxu0 0.0
        %4338 = vmatprep.subr.mxu0 0.0
        %4339 = vmatpush1.msra.mxu0 0.0
        %4340 = vmatprep.subr.mxu0 0.0
        %4341 = vmatpush1.msra.mxu0 0.0
        %4342 = vmatprep.subr.mxu0 0.0
        %4343 = vmatpush1.msra.mxu0 0.0
        %4344 = vmatprep.subr.mxu0 0.0
        %4345 = vmatpush1.msra.mxu0 0.0
        %4346 = vmatprep.subr.mxu0 0.0
        %4347 = vmatpush1.msra.mxu0 0.0
        %4348 = vmatprep.subr.mxu0 0.0
        %4349 = vmatpush1.msra.mxu0 0.0
        %4350 = vmatprep.subr.mxu0 0.0
        %4351 = vmatpush1.msra.mxu0 0.0
        %4352 = vmatprep.subr.mxu0 0.0
        %4353 = vmatpush1.msra.mxu0 0.0
        %4354 = vmatprep.subr.mxu0 0.0
        %4355 = vmatpush1.msra.mxu0 0.0
        %4356 = vmatprep.subr.mxu0 0.0
        %4357 = vmatpush1.msra.mxu0 0.0
        %4358 = vmatprep.subr.mxu0 0.0
        %4359 = vmatpush1.msra.mxu0 0.0
        %4360 = vmatprep.subr.mxu0 0.0
        %4361 = vmatpush1.msra.mxu0 0.0
        %4362 = vmatprep.subr.mxu0 0.0
        %4363 = vmatpush1.msra.mxu0 0.0
        %4364 = vmatprep.subr.mxu0 0.0
        %4365 = vmatpush1.msra.mxu0 0.0
        %4366 = vmatprep.subr.mxu0 0.0
        %4367 = vmatpush1.msra.mxu0 0.0
        %4368 = vmatprep.subr.mxu0 0.0
        %4369 = vmatpush1.msra.mxu0 0.0
        %4370 = vmatprep.subr.mxu0 0.0
        %4371 = vmatpush1.msra.mxu0 0.0
        %4372 = vmatprep.subr.mxu0 0.0
        %4373 = vmatpush1.msra.mxu0 0.0
        %4374 = vmatprep.subr.mxu0 0.0
        %4375 = vmatpush1.msra.mxu0 0.0
        %4376 = vmatprep.subr.mxu0 0.0
        %4377 = vmatpush1.msra.mxu0 0.0
        %4378 = vmatprep.subr.mxu0 0.0
        %4379 = vmatpush1.msra.mxu0 0.0
        %4380 = vmatprep.subr.mxu0 0.0
        %4381 = vmatpush1.msra.mxu0 0.0
        %4382 = vmatprep.subr.mxu0 0.0
        %4383 = vmatpush1.msra.mxu0 0.0
        %4384 = vmatprep.mubr.f32.mxu0 0.0
        %4385 = vmatmul.mubr.f32.gmra.mrb[0].mxu0 %v4318
        %v4386 = vpop.f32.mrb[0].mxu0
        %v4387 = vadd.f32 %v4315, %v4386
        %v4388 = vpop.f32.mrb[0].mxu0
        %v4389 = vadd.f32 %v4315, %v4388
        %4390 = vdwg.mxu0
        %4391 = vmatprep.subr.mxu0 %v4297
        %4392 = vmatpush1.msra.mxu0 %v4296
        %4393 = vmatprep.subr.mxu0 %v4301
        %4394 = vmatpush1.msra.mxu0 %v4300
        %4395 = vmatprep.subr.mxu0 %v4305
        %4396 = vmatpush1.msra.mxu0 %v4304
        %4397 = vmatprep.subr.mxu0 %v4309
        %4398 = vmatpush1.msra.mxu0 %v4308
        %4399 = vmatprep.subr.mxu0 0.0
        %4400 = vmatpush1.msra.mxu0 0.0
        %4401 = vmatprep.subr.mxu0 0.0
        %4402 = vmatpush1.msra.mxu0 0.0
        %4403 = vmatprep.subr.mxu0 0.0
        %4404 = vmatpush1.msra.mxu0 0.0
        %4405 = vmatprep.subr.mxu0 0.0
        %4406 = vmatpush1.msra.mxu0 0.0
        %4407 = vmatprep.subr.mxu0 0.0
        %4408 = vmatpush1.msra.mxu0 0.0
        %4409 = vmatprep.subr.mxu0 0.0
        %4410 = vmatpush1.msra.mxu0 0.0
        %4411 = vmatprep.subr.mxu0 0.0
        %4412 = vmatpush1.msra.mxu0 0.0
        %4413 = vmatprep.subr.mxu0 0.0
        %4414 = vmatpush1.msra.mxu0 0.0
        %4415 = vmatprep.subr.mxu0 0.0
        %4416 = vmatpush1.msra.mxu0 0.0
        %4417 = vmatprep.subr.mxu0 0.0
        %4418 = vmatpush1.msra.mxu0 0.0
        %4419 = vmatprep.subr.mxu0 0.0
        %4420 = vmatpush1.msra.mxu0 0.0
        %4421 = vmatprep.subr.mxu0 0.0
        %4422 = vmatpush1.msra.mxu0 0.0
        %4423 = vmatprep.subr.mxu0 0.0
        %4424 = vmatpush1.msra.mxu0 0.0
        %4425 = vmatprep.subr.mxu0 0.0
        %4426 = vmatpush1.msra.mxu0 0.0
        %4427 = vmatprep.subr.mxu0 0.0
        %4428 = vmatpush1.msra.mxu0 0.0
        %4429 = vmatprep.subr.mxu0 0.0
        %4430 = vmatpush1.msra.mxu0 0.0
        %4431 = vmatprep.subr.mxu0 0.0
        %4432 = vmatpush1.msra.mxu0 0.0
        %4433 = vmatprep.subr.mxu0 0.0
        %4434 = vmatpush1.msra.mxu0 0.0
        %4435 = vmatprep.subr.mxu0 0.0
        %4436 = vmatpush1.msra.mxu0 0.0
        %4437 = vmatprep.subr.mxu0 0.0
        %4438 = vmatpush1.msra.mxu0 0.0
        %4439 = vmatprep.subr.mxu0 0.0
        %4440 = vmatpush1.msra.mxu0 0.0
        %4441 = vmatprep.subr.mxu0 0.0
        %4442 = vmatpush1.msra.mxu0 0.0
        %4443 = vmatprep.subr.mxu0 0.0
        %4444 = vmatpush1.msra.mxu0 0.0
        %4445 = vmatprep.subr.mxu0 0.0
        %4446 = vmatpush1.msra.mxu0 0.0
        %4447 = vmatprep.subr.mxu0 0.0
        %4448 = vmatpush1.msra.mxu0 0.0
        %4449 = vmatprep.subr.mxu0 0.0
        %4450 = vmatpush1.msra.mxu0 0.0
        %4451 = vmatprep.subr.mxu0 0.0
        %4452 = vmatpush1.msra.mxu0 0.0
        %4453 = vmatprep.subr.mxu0 0.0
        %4454 = vmatpush1.msra.mxu0 0.0
        %4455 = vmatprep.mubr.f32.mxu0 0.0
        %4456 = vmatmul.mubr.f32.gmra.mrb[0].mxu0 %v4318
        %v4457 = vpop.f32.mrb[0].mxu0
        %v4458 = vadd.f32 %v4315, %v4457
        %v4459 = vpop.f32.mrb[0].mxu0
        %v4460 = vadd.f32 %v4315, %v4459
        %4461 = vdwg.mxu0
        %v4466 = vcombine.low %v4387, %v4389
        %v4467 = vcombine.low %v4458, %v4460
        %4470 = vst [vmem:[%s272] sm:$0x77] %v4466
        %4471 = vst [vmem:[%s272 + $0x8] sm:$0x77] %v4467
        %s4472 = scalar_lea.vmem %s1, 64
        %v4473 = vld [vmem:[%s4472] sm:$0xff]
        %v4474 = vld [vmem:[%s4472 + $0x8] sm:$0xff]
        %v4475 = vld [vmem:[%s4472 + $0x10] sm:$0xff]
        %v4476 = vld [vmem:[%s4472 + $0x18] sm:$0xff]
        %s4477 = scalar_lea.vmem %s2, 64
        %v4478 = vld [vmem:[%s4477] sm:$0xff]
        %v4479 = vld [vmem:[%s4477 + $0x8] sm:$0xff]
        %v4480 = vld [vmem:[%s4477 + $0x10] sm:$0xff]
        %v4481 = vld [vmem:[%s4477 + $0x18] sm:$0xff]
        %4483 = vset.pattern.permute.xlu0 0
        %4484 = vperm.xlu0 %4483, %v4478
        %v4485 = vpop.permute.xlu0 %4484
        %4488 = vset.pattern.permute.xlu0 0
        %4489 = vperm.xlu0 %4488, %v4479
        %v4490 = vpop.permute.xlu0 %4489
        %4493 = vset.pattern.permute.xlu0 0
        %4494 = vperm.xlu0 %4493, %v4480
        %v4495 = vpop.permute.xlu0 %4494
        %4498 = vset.pattern.permute.xlu0 0
        %4499 = vperm.xlu0 %4498, %v4481
        %v4500 = vpop.permute.xlu0 %4499
        %v4503 = vsel %vm327, %v4473, 0
        %v4506 = vsel %vm327, %v4474, 0
        %v4509 = vsel %vm327, %v4475, 0
        %v4512 = vsel %vm327, %v4476, 0
        %4514 = vmatprep.subr.mxu0 %v343
        %4515 = vmatpush1.msra.mxu0 %v341
        %4516 = vmatprep.subr.mxu0 0.0
        %4517 = vmatpush1.msra.mxu0 0.0
        %4518 = vmatprep.subr.mxu0 0.0
        %4519 = vmatpush1.msra.mxu0 0.0
        %4520 = vmatprep.subr.mxu0 0.0
        %4521 = vmatpush1.msra.mxu0 0.0
        %4522 = vmatprep.subr.mxu0 0.0
        %4523 = vmatpush1.msra.mxu0 0.0
        %4524 = vmatprep.subr.mxu0 0.0
        %4525 = vmatpush1.msra.mxu0 0.0
        %4526 = vmatprep.subr.mxu0 0.0
        %4527 = vmatpush1.msra.mxu0 0.0
        %4528 = vmatprep.subr.mxu0 0.0
        %4529 = vmatpush1.msra.mxu0 0.0
        %4530 = vmatprep.subr.mxu0 0.0
        %4531 = vmatpush1.msra.mxu0 0.0
        %4532 = vmatprep.subr.mxu0 0.0
        %4533 = vmatpush1.msra.mxu0 0.0
        %4534 = vmatprep.subr.mxu0 0.0
        %4535 = vmatpush1.msra.mxu0 0.0
        %4536 = vmatprep.subr.mxu0 0.0
        %4537 = vmatpush1.msra.mxu0 0.0
        %4538 = vmatprep.subr.mxu0 0.0
        %4539 = vmatpush1.msra.mxu0 0.0
        %4540 = vmatprep.subr.mxu0 0.0
        %4541 = vmatpush1.msra.mxu0 0.0
        %4542 = vmatprep.subr.mxu0 0.0
        %4543 = vmatpush1.msra.mxu0 0.0
        %4544 = vmatprep.subr.mxu0 0.0
        %4545 = vmatpush1.msra.mxu0 0.0
        %4546 = vmatprep.subr.mxu0 0.0
        %4547 = vmatpush1.msra.mxu0 0.0
        %4548 = vmatprep.subr.mxu0 0.0
        %4549 = vmatpush1.msra.mxu0 0.0
        %4550 = vmatprep.subr.mxu0 0.0
        %4551 = vmatpush1.msra.mxu0 0.0
        %4552 = vmatprep.subr.mxu0 0.0
        %4553 = vmatpush1.msra.mxu0 0.0
        %4554 = vmatprep.subr.mxu0 0.0
        %4555 = vmatpush1.msra.mxu0 0.0
        %4556 = vmatprep.subr.mxu0 0.0
        %4557 = vmatpush1.msra.mxu0 0.0
        %4558 = vmatprep.subr.mxu0 0.0
        %4559 = vmatpush1.msra.mxu0 0.0
        %4560 = vmatprep.subr.mxu0 0.0
        %4561 = vmatpush1.msra.mxu0 0.0
        %4562 = vmatprep.subr.mxu0 0.0
        %4563 = vmatpush1.msra.mxu0 0.0
        %4564 = vmatprep.subr.mxu0 0.0
        %4565 = vmatpush1.msra.mxu0 0.0
        %4566 = vmatprep.subr.mxu0 0.0
        %4567 = vmatpush1.msra.mxu0 0.0
        %4568 = vmatprep.subr.mxu0 0.0
        %4569 = vmatpush1.msra.mxu0 0.0
        %4570 = vmatprep.subr.mxu0 0.0
        %4571 = vmatpush1.msra.mxu0 0.0
        %4572 = vmatprep.subr.mxu0 0.0
        %4573 = vmatpush1.msra.mxu0 0.0
        %4574 = vmatprep.subr.mxu0 0.0
        %4575 = vmatpush1.msra.mxu0 0.0
        %4576 = vmatprep.subr.mxu0 0.0
        %4577 = vmatpush1.msra.mxu0 0.0
        %4578 = vmatprep.mubr.f32.mxu0 0.0
        %4579 = vmatmul.mubr.f32.gmra.mrb[0].mxu0 %v4503
        %v4580 = vpop.f32.mrb[0].mxu0
        %v4581 = vadd.f32 %v4485, %v4580
        %v4582 = vpop.f32.mrb[0].mxu0
        %v4583 = vadd.f32 %v4485, %v4582
        %4584 = vmatprep.mubr.f32.mxu0 0.0
        %4585 = vmatmul.mubr.f32.gmra.mrb[0].mxu0 %v4506
        %v4586 = vpop.f32.mrb[0].mxu0
        %v4587 = vadd.f32 %v4490, %v4586
        %v4588 = vpop.f32.mrb[0].mxu0
        %v4589 = vadd.f32 %v4490, %v4588
        %4590 = vmatprep.mubr.f32.mxu0 0.0
        %4591 = vmatmul.mubr.f32.gmra.mrb[0].mxu0 %v4509
        %v4592 = vpop.f32.mrb[0].mxu0
        %v4593 = vadd.f32 %v4495, %v4592
        %v4594 = vpop.f32.mrb[0].mxu0
        %v4595 = vadd.f32 %v4495, %v4594
        %4596 = vmatprep.mubr.f32.mxu0 0.0
        %4597 = vmatmul.mubr.f32.gmra.mrb[0].mxu0 %v4512
        %v4598 = vpop.f32.mrb[0].mxu0
        %v4599 = vadd.f32 %v4500, %v4598
        %v4600 = vpop.f32.mrb[0].mxu0
        %v4601 = vadd.f32 %v4500, %v4600
        %4602 = vdwg.mxu0
        %4603 = vmatprep.subr.mxu0 %v347
        %4604 = vmatpush1.msra.mxu0 %v345
        %4605 = vmatprep.subr.mxu0 0.0
        %4606 = vmatpush1.msra.mxu0 0.0
        %4607 = vmatprep.subr.mxu0 0.0
        %4608 = vmatpush1.msra.mxu0 0.0
        %4609 = vmatprep.subr.mxu0 0.0
        %4610 = vmatpush1.msra.mxu0 0.0
        %4611 = vmatprep.subr.mxu0 0.0
        %4612 = vmatpush1.msra.mxu0 0.0
        %4613 = vmatprep.subr.mxu0 0.0
        %4614 = vmatpush1.msra.mxu0 0.0
        %4615 = vmatprep.subr.mxu0 0.0
        %4616 = vmatpush1.msra.mxu0 0.0
        %4617 = vmatprep.subr.mxu0 0.0
        %4618 = vmatpush1.msra.mxu0 0.0
        %4619 = vmatprep.subr.mxu0 0.0
        %4620 = vmatpush1.msra.mxu0 0.0
        %4621 = vmatprep.subr.mxu0 0.0
        %4622 = vmatpush1.msra.mxu0 0.0
        %4623 = vmatprep.subr.mxu0 0.0
        %4624 = vmatpush1.msra.mxu0 0.0
        %4625 = vmatprep.subr.mxu0 0.0
        %4626 = vmatpush1.msra.mxu0 0.0
        %4627 = vmatprep.subr.mxu0 0.0
        %4628 = vmatpush1.msra.mxu0 0.0
        %4629 = vmatprep.subr.mxu0 0.0
        %4630 = vmatpush1.msra.mxu0 0.0
        %4631 = vmatprep.subr.mxu0 0.0
        %4632 = vmatpush1.msra.mxu0 0.0
        %4633 = vmatprep.subr.mxu0 0.0
        %4634 = vmatpush1.msra.mxu0 0.0
        %4635 = vmatprep.subr.mxu0 0.0
        %4636 = vmatpush1.msra.mxu0 0.0
        %4637 = vmatprep.subr.mxu0 0.0
        %4638 = vmatpush1.msra.mxu0 0.0
        %4639 = vmatprep.subr.mxu0 0.0
        %4640 = vmatpush1.msra.mxu0 0.0
        %4641 = vmatprep.subr.mxu0 0.0
        %4642 = vmatpush1.msra.mxu0 0.0
        %4643 = vmatprep.subr.mxu0 0.0
        %4644 = vmatpush1.msra.mxu0 0.0
        %4645 = vmatprep.subr.mxu0 0.0
        %4646 = vmatpush1.msra.mxu0 0.0
        %4647 = vmatprep.subr.mxu0 0.0
        %4648 = vmatpush1.msra.mxu0 0.0
        %4649 = vmatprep.subr.mxu0 0.0
        %4650 = vmatpush1.msra.mxu0 0.0
        %4651 = vmatprep.subr.mxu0 0.0
        %4652 = vmatpush1.msra.mxu0 0.0
        %4653 = vmatprep.subr.mxu0 0.0
        %4654 = vmatpush1.msra.mxu0 0.0
        %4655 = vmatprep.subr.mxu0 0.0
        %4656 = vmatpush1.msra.mxu0 0.0
        %4657 = vmatprep.subr.mxu0 0.0
        %4658 = vmatpush1.msra.mxu0 0.0
        %4659 = vmatprep.subr.mxu0 0.0
        %4660 = vmatpush1.msra.mxu0 0.0
        %4661 = vmatprep.subr.mxu0 0.0
        %4662 = vmatpush1.msra.mxu0 0.0
        %4663 = vmatprep.subr.mxu0 0.0
        %4664 = vmatpush1.msra.mxu0 0.0
        %4665 = vmatprep.subr.mxu0 0.0
        %4666 = vmatpush1.msra.mxu0 0.0
        %4667 = vmatprep.mubr.f32.mxu0 0.0
        %4668 = vmatmul.mubr.f32.gmra.mrb[0].mxu0 %v4503
        %v4669 = vpop.f32.mrb[0].mxu0
        %v4670 = vadd.f32 %v4485, %v4669
        %v4671 = vpop.f32.mrb[0].mxu0
        %v4672 = vadd.f32 %v4485, %v4671
        %4673 = vmatprep.mubr.f32.mxu0 0.0
        %4674 = vmatmul.mubr.f32.gmra.mrb[0].mxu0 %v4506
        %v4675 = vpop.f32.mrb[0].mxu0
        %v4676 = vadd.f32 %v4490, %v4675
        %v4677 = vpop.f32.mrb[0].mxu0
        %v4678 = vadd.f32 %v4490, %v4677
        %4679 = vmatprep.mubr.f32.mxu0 0.0
        %4680 = vmatmul.mubr.f32.gmra.mrb[0].mxu0 %v4509
        %v4681 = vpop.f32.mrb[0].mxu0
        %v4682 = vadd.f32 %v4495, %v4681
        %v4683 = vpop.f32.mrb[0].mxu0
        %v4684 = vadd.f32 %v4495, %v4683
        %4685 = vmatprep.mubr.f32.mxu0 0.0
        %4686 = vmatmul.mubr.f32.gmra.mrb[0].mxu0 %v4512
        %v4687 = vpop.f32.mrb[0].mxu0
        %v4688 = vadd.f32 %v4500, %v4687
        %v4689 = vpop.f32.mrb[0].mxu0
        %v4690 = vadd.f32 %v4500, %v4689
        %4691 = vdwg.mxu0
        %v4692 = vand.u32 2147483647, %v4581
        %vm4693 = vcmp.le.f32.partialorder %v4692, 0.7853982
        %vm4694 = vcmp.lt.s32.totalorder %v4581, 0
        %v4695 = vand.u32 %v4581, 2139095040
        %v4696 = vshrl.u32 %v4695, 23
        %v4697 = vsub.s32 %v4696, 127
        %v4698 = vand.u32 2147483647, %v4581
        %v4699 = vand.u32 %v4698, 8388607
        %v4700 = vor.u32 %v4699, 8388608
        %v4701 = vsub.s32 0, %v4700
        %v4702 = vadd.s32 %v4697, 1
        %vm4703 = vcmp.gt.s32.totalorder %v4702, 0
        %v4704 = vsel %vm4703, %v4702, 0
        %v4705 = vshrl.u32 %v4704, 5
        %v4706 = vand.u32 %v4704, 31
        %v4707 = vsub.s32 32, %v4706
        %v4708 = vshrl.u32 683565275, %v4707
        %v4709 = vshll.u32 683565275, %v4706
        %v4710 = vshrl.u32 2475754826, %v4707
        %v4711 = vor.u32 %v4709, %v4710
        %v4712 = vshll.u32 2475754826, %v4706
        %v4713 = vshrl.u32 2131351028, %v4707
        %v4714 = vor.u32 %v4712, %v4713
        %v4715 = vshll.u32 2131351028, %v4706
        %v4716 = vshrl.u32 2102212464, %v4707
        %v4717 = vor.u32 %v4715, %v4716
        %v4718 = vshll.u32 2102212464, %v4706
        %v4719 = vshrl.u32 920167782, %v4707
        %v4720 = vor.u32 %v4718, %v4719
        %v4721 = vshll.u32 920167782, %v4706
        %v4722 = vshrl.u32 1326507024, %v4707
        %v4723 = vor.u32 %v4721, %v4722
        %vm4724 = vcmp.lt.s32.totalorder %v4705, 1
        %vm4725 = vcmp.lt.s32.totalorder %v4705, 2
        %vm4726 = vcmp.lt.s32.totalorder %v4705, 3
        %vm4727 = vcmp.lt.s32.totalorder %v4705, 4
        %v4728 = vsel %vm4724, %v4708, %v4711
        %v4729 = vsel %vm4727, %v4717, 2102212464
        %v4730 = vsel %vm4726, %v4714, %v4729
        %v4731 = vsel %vm4725, %v4728, %v4730
        %v4732 = vsel %vm4724, %v4711, %v4714
        %v4733 = vsel %vm4727, %v4720, 920167782
        %v4734 = vsel %vm4726, %v4717, %v4733
        %v4735 = vsel %vm4725, %v4732, %v4734
        %v4736 = vsel %vm4724, %v4714, %v4717
        %v4737 = vsel %vm4727, %v4723, 1326507024
        %v4738 = vsel %vm4726, %v4720, %v4737
        %v4739 = vsel %vm4725, %v4736, %v4738
        %v4740 = vshll.u32 %v4700, 8
        %v4741 = vmul.u32.u64.compose %v4740, %v4739
        %v4742 = vextract.low.u32 %v4741
        %v4743 = vextract.high.u32 %v4741
        %v4744 = vmul.u32.u64.compose %v4740, %v4735
        %v4745 = vextract.low.u32 %v4744
        %v4746 = vextract.high.u32 %v4744
        %v4747 = vmul.u32 %v4740, %v4731
        %v4748 = vadd.s32 %v4743, %v4745
        %vm4749 = vc.u32 %v4743, %v4745
        %v4750 = vadd.s32 %v4746, 1
        %v4751 = vsel %vm4749, %v4750, %v4746
        %v4752 = vadd.s32 %v4747, %v4751
        %v4753 = vadd.s32 %v4752, 536870912
        %v4754 = vshrl.u32 %v4753, 30
        %v4755 = vshll.u32 %v4754, 30
        %v4756 = vsub.s32 %v4752, %v4755
        %vm4757 = vcmp.lt.s32.totalorder %v4756, 0
        %v4758 = vsub.s32 0, %v4756
        %v4759 = vsel %vm4757, %v4758, %v4756
        %v4760 = vclz %v4759
        %v4761 = vsub.s32 %v4760, 2
        %vm4762 = vcmp.gt.s32.totalorder 0, %v4761
        %v4763 = vsel %vm4762, 0, %v4761
        %v4764 = vsub.s32 32, %v4763
        %v4765 = vshll.u32 %v4756, %v4763
        %v4766 = vshrl.u32 %v4748, %v4764
        %v4767 = vor.u32 %v4765, %v4766
        %v4768 = vsub.s32 4294967266, %v4763
        %v4769 = vadd.s32 %v4768, 127
        %v4770 = vshll.u32 %v4769, 23
        %v4771 = vor.u32 4788187, %v4770
        %v4772 = vand.u32 2147483647, %v4771
        %v4774 = vcvt.s32.f32 %v4767
        %v4775 = vmul.f32 %v4774, %v4772
        %v4776 = vxor.u32 %v4775, 2147483648
        %v4777 = vsel %vm4694, %v4776, %v4775
        %v4778 = vsub.s32 4, %v4754
        %v4779 = vsel %vm4694, %v4778, %v4754
        %v4780 = vsel %vm4693, %v4581, %v4777
        %v4781 = vsel %vm4693, 0, %v4779
        %v4782 = vcosq.f32.pop %v4780
        %v4783 = vsinq.f32.pop %v4780
        %vm4784 = vweird.f32 %v4581
        %v4785 = vadd.s32 %v4781, 3
        %v4786 = vand.u32 %v4785, 3
        %vm4787 = vcmp.lt.s32.totalorder %v4786, 2
        %vm4788 = vcmp.eq.s32.totalorder %v4786, 0
        %v4789 = vxor.u32 %v4783, 2147483648
        %v4790 = vsel %vm4788, %v4782, %v4789
        %vm4791 = vcmp.eq.s32.totalorder %v4786, 2
        %v4792 = vxor.u32 %v4782, 2147483648
        %v4793 = vsel %vm4791, %v4792, %v4783
        %v4794 = vsel %vm4787, %v4790, %v4793
        %v4795 = vsel %vm4784, nan, %v4794
        %v4796 = vand.u32 2147483647, %v4583
        %vm4797 = vcmp.le.f32.partialorder %v4796, 0.7853982
        %vm4798 = vcmp.lt.s32.totalorder %v4583, 0
        %v4799 = vand.u32 %v4583, 2139095040
        %v4800 = vshrl.u32 %v4799, 23
        %v4801 = vsub.s32 %v4800, 127
        %v4802 = vand.u32 2147483647, %v4583
        %v4803 = vand.u32 %v4802, 8388607
        %v4804 = vor.u32 %v4803, 8388608
        %v4805 = vsub.s32 0, %v4804
        %v4806 = vadd.s32 %v4801, 1
        %vm4807 = vcmp.gt.s32.totalorder %v4806, 0
        %v4808 = vsel %vm4807, %v4806, 0
        %v4809 = vshrl.u32 %v4808, 5
        %v4810 = vand.u32 %v4808, 31
        %v4811 = vsub.s32 32, %v4810
        %v4812 = vshrl.u32 683565275, %v4811
        %v4813 = vshll.u32 683565275, %v4810
        %v4814 = vshrl.u32 2475754826, %v4811
        %v4815 = vor.u32 %v4813, %v4814
        %v4816 = vshll.u32 2475754826, %v4810
        %v4817 = vshrl.u32 2131351028, %v4811
        %v4818 = vor.u32 %v4816, %v4817
        %v4819 = vshll.u32 2131351028, %v4810
        %v4820 = vshrl.u32 2102212464, %v4811
        %v4821 = vor.u32 %v4819, %v4820
        %v4822 = vshll.u32 2102212464, %v4810
        %v4823 = vshrl.u32 920167782, %v4811
        %v4824 = vor.u32 %v4822, %v4823
        %v4825 = vshll.u32 920167782, %v4810
        %v4826 = vshrl.u32 1326507024, %v4811
        %v4827 = vor.u32 %v4825, %v4826
        %vm4828 = vcmp.lt.s32.totalorder %v4809, 1
        %vm4829 = vcmp.lt.s32.totalorder %v4809, 2
        %vm4830 = vcmp.lt.s32.totalorder %v4809, 3
        %vm4831 = vcmp.lt.s32.totalorder %v4809, 4
        %v4832 = vsel %vm4828, %v4812, %v4815
        %v4833 = vsel %vm4831, %v4821, 2102212464
        %v4834 = vsel %vm4830, %v4818, %v4833
        %v4835 = vsel %vm4829, %v4832, %v4834
        %v4836 = vsel %vm4828, %v4815, %v4818
        %v4837 = vsel %vm4831, %v4824, 920167782
        %v4838 = vsel %vm4830, %v4821, %v4837
        %v4839 = vsel %vm4829, %v4836, %v4838
        %v4840 = vsel %vm4828, %v4818, %v4821
        %v4841 = vsel %vm4831, %v4827, 1326507024
        %v4842 = vsel %vm4830, %v4824, %v4841
        %v4843 = vsel %vm4829, %v4840, %v4842
        %v4844 = vshll.u32 %v4804, 8
        %v4845 = vmul.u32.u64.compose %v4844, %v4843
        %v4846 = vextract.low.u32 %v4845
        %v4847 = vextract.high.u32 %v4845
        %v4848 = vmul.u32.u64.compose %v4844, %v4839
        %v4849 = vextract.low.u32 %v4848
        %v4850 = vextract.high.u32 %v4848
        %v4851 = vmul.u32 %v4844, %v4835
        %v4852 = vadd.s32 %v4847, %v4849
        %vm4853 = vc.u32 %v4847, %v4849
        %v4854 = vadd.s32 %v4850, 1
        %v4855 = vsel %vm4853, %v4854, %v4850
        %v4856 = vadd.s32 %v4851, %v4855
        %v4857 = vadd.s32 %v4856, 536870912
        %v4858 = vshrl.u32 %v4857, 30
        %v4859 = vshll.u32 %v4858, 30
        %v4860 = vsub.s32 %v4856, %v4859
        %vm4861 = vcmp.lt.s32.totalorder %v4860, 0
        %v4862 = vsub.s32 0, %v4860
        %v4863 = vsel %vm4861, %v4862, %v4860
        %v4864 = vclz %v4863
        %v4865 = vsub.s32 %v4864, 2
        %vm4866 = vcmp.gt.s32.totalorder 0, %v4865
        %v4867 = vsel %vm4866, 0, %v4865
        %v4868 = vsub.s32 32, %v4867
        %v4869 = vshll.u32 %v4860, %v4867
        %v4870 = vshrl.u32 %v4852, %v4868
        %v4871 = vor.u32 %v4869, %v4870
        %v4872 = vsub.s32 4294967266, %v4867
        %v4873 = vadd.s32 %v4872, 127
        %v4874 = vshll.u32 %v4873, 23
        %v4875 = vor.u32 4788187, %v4874
        %v4876 = vand.u32 2147483647, %v4875
        %v4878 = vcvt.s32.f32 %v4871
        %v4879 = vmul.f32 %v4878, %v4876
        %v4880 = vxor.u32 %v4879, 2147483648
        %v4881 = vsel %vm4798, %v4880, %v4879
        %v4882 = vsub.s32 4, %v4858
        %v4883 = vsel %vm4798, %v4882, %v4858
        %v4884 = vsel %vm4797, %v4583, %v4881
        %v4885 = vsel %vm4797, 0, %v4883
        %v4886 = vcosq.f32.pop %v4884
        %v4887 = vsinq.f32.pop %v4884
        %vm4888 = vweird.f32 %v4583
        %v4889 = vadd.s32 %v4885, 3
        %v4890 = vand.u32 %v4889, 3
        %vm4891 = vcmp.lt.s32.totalorder %v4890, 2
        %vm4892 = vcmp.eq.s32.totalorder %v4890, 0
        %v4893 = vxor.u32 %v4887, 2147483648
        %v4894 = vsel %vm4892, %v4886, %v4893
        %vm4895 = vcmp.eq.s32.totalorder %v4890, 2
        %v4896 = vxor.u32 %v4886, 2147483648
        %v4897 = vsel %vm4895, %v4896, %v4887
        %v4898 = vsel %vm4891, %v4894, %v4897
        %v4899 = vsel %vm4888, nan, %v4898
        %v4900 = vand.u32 2147483647, %v4670
        %vm4901 = vcmp.le.f32.partialorder %v4900, 0.7853982
        %vm4902 = vcmp.lt.s32.totalorder %v4670, 0
        %v4903 = vand.u32 %v4670, 2139095040
        %v4904 = vshrl.u32 %v4903, 23
        %v4905 = vsub.s32 %v4904, 127
        %v4906 = vand.u32 2147483647, %v4670
        %v4907 = vand.u32 %v4906, 8388607
        %v4908 = vor.u32 %v4907, 8388608
        %v4909 = vsub.s32 0, %v4908
        %v4910 = vadd.s32 %v4905, 1
        %vm4911 = vcmp.gt.s32.totalorder %v4910, 0
        %v4912 = vsel %vm4911, %v4910, 0
        %v4913 = vshrl.u32 %v4912, 5
        %v4914 = vand.u32 %v4912, 31
        %v4915 = vsub.s32 32, %v4914
        %v4916 = vshrl.u32 683565275, %v4915
        %v4917 = vshll.u32 683565275, %v4914
        %v4918 = vshrl.u32 2475754826, %v4915
        %v4919 = vor.u32 %v4917, %v4918
        %v4920 = vshll.u32 2475754826, %v4914
        %v4921 = vshrl.u32 2131351028, %v4915
        %v4922 = vor.u32 %v4920, %v4921
        %v4923 = vshll.u32 2131351028, %v4914
        %v4924 = vshrl.u32 2102212464, %v4915
        %v4925 = vor.u32 %v4923, %v4924
        %v4926 = vshll.u32 2102212464, %v4914
        %v4927 = vshrl.u32 920167782, %v4915
        %v4928 = vor.u32 %v4926, %v4927
        %v4929 = vshll.u32 920167782, %v4914
        %v4930 = vshrl.u32 1326507024, %v4915
        %v4931 = vor.u32 %v4929, %v4930
        %vm4932 = vcmp.lt.s32.totalorder %v4913, 1
        %vm4933 = vcmp.lt.s32.totalorder %v4913, 2
        %vm4934 = vcmp.lt.s32.totalorder %v4913, 3
        %vm4935 = vcmp.lt.s32.totalorder %v4913, 4
        %v4936 = vsel %vm4932, %v4916, %v4919
        %v4937 = vsel %vm4935, %v4925, 2102212464
        %v4938 = vsel %vm4934, %v4922, %v4937
        %v4939 = vsel %vm4933, %v4936, %v4938
        %v4940 = vsel %vm4932, %v4919, %v4922
        %v4941 = vsel %vm4935, %v4928, 920167782
        %v4942 = vsel %vm4934, %v4925, %v4941
        %v4943 = vsel %vm4933, %v4940, %v4942
        %v4944 = vsel %vm4932, %v4922, %v4925
        %v4945 = vsel %vm4935, %v4931, 1326507024
        %v4946 = vsel %vm4934, %v4928, %v4945
        %v4947 = vsel %vm4933, %v4944, %v4946
        %v4948 = vshll.u32 %v4908, 8
        %v4949 = vmul.u32.u64.compose %v4948, %v4947
        %v4950 = vextract.low.u32 %v4949
        %v4951 = vextract.high.u32 %v4949
        %v4952 = vmul.u32.u64.compose %v4948, %v4943
        %v4953 = vextract.low.u32 %v4952
        %v4954 = vextract.high.u32 %v4952
        %v4955 = vmul.u32 %v4948, %v4939
        %v4956 = vadd.s32 %v4951, %v4953
        %vm4957 = vc.u32 %v4951, %v4953
        %v4958 = vadd.s32 %v4954, 1
        %v4959 = vsel %vm4957, %v4958, %v4954
        %v4960 = vadd.s32 %v4955, %v4959
        %v4961 = vadd.s32 %v4960, 536870912
        %v4962 = vshrl.u32 %v4961, 30
        %v4963 = vshll.u32 %v4962, 30
        %v4964 = vsub.s32 %v4960, %v4963
        %vm4965 = vcmp.lt.s32.totalorder %v4964, 0
        %v4966 = vsub.s32 0, %v4964
        %v4967 = vsel %vm4965, %v4966, %v4964
        %v4968 = vclz %v4967
        %v4969 = vsub.s32 %v4968, 2
        %vm4970 = vcmp.gt.s32.totalorder 0, %v4969
        %v4971 = vsel %vm4970, 0, %v4969
        %v4972 = vsub.s32 32, %v4971
        %v4973 = vshll.u32 %v4964, %v4971
        %v4974 = vshrl.u32 %v4956, %v4972
        %v4975 = vor.u32 %v4973, %v4974
        %v4976 = vsub.s32 4294967266, %v4971
        %v4977 = vadd.s32 %v4976, 127
        %v4978 = vshll.u32 %v4977, 23
        %v4979 = vor.u32 4788187, %v4978
        %v4980 = vand.u32 2147483647, %v4979
        %v4982 = vcvt.s32.f32 %v4975
        %v4983 = vmul.f32 %v4982, %v4980
        %v4984 = vxor.u32 %v4983, 2147483648
        %v4985 = vsel %vm4902, %v4984, %v4983
        %v4986 = vsub.s32 4, %v4962
        %v4987 = vsel %vm4902, %v4986, %v4962
        %v4988 = vsel %vm4901, %v4670, %v4985
        %v4989 = vsel %vm4901, 0, %v4987
        %v4990 = vcosq.f32.pop %v4988
        %v4991 = vsinq.f32.pop %v4988
        %vm4992 = vweird.f32 %v4670
        %v4993 = vadd.s32 %v4989, 3
        %v4994 = vand.u32 %v4993, 3
        %vm4995 = vcmp.lt.s32.totalorder %v4994, 2
        %vm4996 = vcmp.eq.s32.totalorder %v4994, 0
        %v4997 = vxor.u32 %v4991, 2147483648
        %v4998 = vsel %vm4996, %v4990, %v4997
        %vm4999 = vcmp.eq.s32.totalorder %v4994, 2
        %v5000 = vxor.u32 %v4990, 2147483648
        %v5001 = vsel %vm4999, %v5000, %v4991
        %v5002 = vsel %vm4995, %v4998, %v5001
        %v5003 = vsel %vm4992, nan, %v5002
        %v5004 = vand.u32 2147483647, %v4672
        %vm5005 = vcmp.le.f32.partialorder %v5004, 0.7853982
        %vm5006 = vcmp.lt.s32.totalorder %v4672, 0
        %v5007 = vand.u32 %v4672, 2139095040
        %v5008 = vshrl.u32 %v5007, 23
        %v5009 = vsub.s32 %v5008, 127
        %v5010 = vand.u32 2147483647, %v4672
        %v5011 = vand.u32 %v5010, 8388607
        %v5012 = vor.u32 %v5011, 8388608
        %v5013 = vsub.s32 0, %v5012
        %v5014 = vadd.s32 %v5009, 1
        %vm5015 = vcmp.gt.s32.totalorder %v5014, 0
        %v5016 = vsel %vm5015, %v5014, 0
        %v5017 = vshrl.u32 %v5016, 5
        %v5018 = vand.u32 %v5016, 31
        %v5019 = vsub.s32 32, %v5018
        %v5020 = vshrl.u32 683565275, %v5019
        %v5021 = vshll.u32 683565275, %v5018
        %v5022 = vshrl.u32 2475754826, %v5019
        %v5023 = vor.u32 %v5021, %v5022
        %v5024 = vshll.u32 2475754826, %v5018
        %v5025 = vshrl.u32 2131351028, %v5019
        %v5026 = vor.u32 %v5024, %v5025
        %v5027 = vshll.u32 2131351028, %v5018
        %v5028 = vshrl.u32 2102212464, %v5019
        %v5029 = vor.u32 %v5027, %v5028
        %v5030 = vshll.u32 2102212464, %v5018
        %v5031 = vshrl.u32 920167782, %v5019
        %v5032 = vor.u32 %v5030, %v5031
        %v5033 = vshll.u32 920167782, %v5018
        %v5034 = vshrl.u32 1326507024, %v5019
        %v5035 = vor.u32 %v5033, %v5034
        %vm5036 = vcmp.lt.s32.totalorder %v5017, 1
        %vm5037 = vcmp.lt.s32.totalorder %v5017, 2
        %vm5038 = vcmp.lt.s32.totalorder %v5017, 3
        %vm5039 = vcmp.lt.s32.totalorder %v5017, 4
        %v5040 = vsel %vm5036, %v5020, %v5023
        %v5041 = vsel %vm5039, %v5029, 2102212464
        %v5042 = vsel %vm5038, %v5026, %v5041
        %v5043 = vsel %vm5037, %v5040, %v5042
        %v5044 = vsel %vm5036, %v5023, %v5026
        %v5045 = vsel %vm5039, %v5032, 920167782
        %v5046 = vsel %vm5038, %v5029, %v5045
        %v5047 = vsel %vm5037, %v5044, %v5046
        %v5048 = vsel %vm5036, %v5026, %v5029
        %v5049 = vsel %vm5039, %v5035, 1326507024
        %v5050 = vsel %vm5038, %v5032, %v5049
        %v5051 = vsel %vm5037, %v5048, %v5050
        %v5052 = vshll.u32 %v5012, 8
        %v5053 = vmul.u32.u64.compose %v5052, %v5051
        %v5054 = vextract.low.u32 %v5053
        %v5055 = vextract.high.u32 %v5053
        %v5056 = vmul.u32.u64.compose %v5052, %v5047
        %v5057 = vextract.low.u32 %v5056
        %v5058 = vextract.high.u32 %v5056
        %v5059 = vmul.u32 %v5052, %v5043
        %v5060 = vadd.s32 %v5055, %v5057
        %vm5061 = vc.u32 %v5055, %v5057
        %v5062 = vadd.s32 %v5058, 1
        %v5063 = vsel %vm5061, %v5062, %v5058
        %v5064 = vadd.s32 %v5059, %v5063
        %v5065 = vadd.s32 %v5064, 536870912
        %v5066 = vshrl.u32 %v5065, 30
        %v5067 = vshll.u32 %v5066, 30
        %v5068 = vsub.s32 %v5064, %v5067
        %vm5069 = vcmp.lt.s32.totalorder %v5068, 0
        %v5070 = vsub.s32 0, %v5068
        %v5071 = vsel %vm5069, %v5070, %v5068
        %v5072 = vclz %v5071
        %v5073 = vsub.s32 %v5072, 2
        %vm5074 = vcmp.gt.s32.totalorder 0, %v5073
        %v5075 = vsel %vm5074, 0, %v5073
        %v5076 = vsub.s32 32, %v5075
        %v5077 = vshll.u32 %v5068, %v5075
        %v5078 = vshrl.u32 %v5060, %v5076
        %v5079 = vor.u32 %v5077, %v5078
        %v5080 = vsub.s32 4294967266, %v5075
        %v5081 = vadd.s32 %v5080, 127
        %v5082 = vshll.u32 %v5081, 23
        %v5083 = vor.u32 4788187, %v5082
        %v5084 = vand.u32 2147483647, %v5083
        %v5086 = vcvt.s32.f32 %v5079
        %v5087 = vmul.f32 %v5086, %v5084
        %v5088 = vxor.u32 %v5087, 2147483648
        %v5089 = vsel %vm5006, %v5088, %v5087
        %v5090 = vsub.s32 4, %v5066
        %v5091 = vsel %vm5006, %v5090, %v5066
        %v5092 = vsel %vm5005, %v4672, %v5089
        %v5093 = vsel %vm5005, 0, %v5091
        %v5094 = vcosq.f32.pop %v5092
        %v5095 = vsinq.f32.pop %v5092
        %vm5096 = vweird.f32 %v4672
        %v5097 = vadd.s32 %v5093, 3
        %v5098 = vand.u32 %v5097, 3
        %vm5099 = vcmp.lt.s32.totalorder %v5098, 2
        %vm5100 = vcmp.eq.s32.totalorder %v5098, 0
        %v5101 = vxor.u32 %v5095, 2147483648
        %v5102 = vsel %vm5100, %v5094, %v5101
        %vm5103 = vcmp.eq.s32.totalorder %v5098, 2
        %v5104 = vxor.u32 %v5094, 2147483648
        %v5105 = vsel %vm5103, %v5104, %v5095
        %v5106 = vsel %vm5099, %v5102, %v5105
        %v5107 = vsel %vm5096, nan, %v5106
        %v5108 = vand.u32 2147483647, %v4587
        %vm5109 = vcmp.le.f32.partialorder %v5108, 0.7853982
        %vm5110 = vcmp.lt.s32.totalorder %v4587, 0
        %v5111 = vand.u32 %v4587, 2139095040
        %v5112 = vshrl.u32 %v5111, 23
        %v5113 = vsub.s32 %v5112, 127
        %v5114 = vand.u32 2147483647, %v4587
        %v5115 = vand.u32 %v5114, 8388607
        %v5116 = vor.u32 %v5115, 8388608
        %v5117 = vsub.s32 0, %v5116
        %v5118 = vadd.s32 %v5113, 1
        %vm5119 = vcmp.gt.s32.totalorder %v5118, 0
        %v5120 = vsel %vm5119, %v5118, 0
        %v5121 = vshrl.u32 %v5120, 5
        %v5122 = vand.u32 %v5120, 31
        %v5123 = vsub.s32 32, %v5122
        %v5124 = vshrl.u32 683565275, %v5123
        %v5125 = vshll.u32 683565275, %v5122
        %v5126 = vshrl.u32 2475754826, %v5123
        %v5127 = vor.u32 %v5125, %v5126
        %v5128 = vshll.u32 2475754826, %v5122
        %v5129 = vshrl.u32 2131351028, %v5123
        %v5130 = vor.u32 %v5128, %v5129
        %v5131 = vshll.u32 2131351028, %v5122
        %v5132 = vshrl.u32 2102212464, %v5123
        %v5133 = vor.u32 %v5131, %v5132
        %v5134 = vshll.u32 2102212464, %v5122
        %v5135 = vshrl.u32 920167782, %v5123
        %v5136 = vor.u32 %v5134, %v5135
        %v5137 = vshll.u32 920167782, %v5122
        %v5138 = vshrl.u32 1326507024, %v5123
        %v5139 = vor.u32 %v5137, %v5138
        %vm5140 = vcmp.lt.s32.totalorder %v5121, 1
        %vm5141 = vcmp.lt.s32.totalorder %v5121, 2
        %vm5142 = vcmp.lt.s32.totalorder %v5121, 3
        %vm5143 = vcmp.lt.s32.totalorder %v5121, 4
        %v5144 = vsel %vm5140, %v5124, %v5127
        %v5145 = vsel %vm5143, %v5133, 2102212464
        %v5146 = vsel %vm5142, %v5130, %v5145
        %v5147 = vsel %vm5141, %v5144, %v5146
        %v5148 = vsel %vm5140, %v5127, %v5130
        %v5149 = vsel %vm5143, %v5136, 920167782
        %v5150 = vsel %vm5142, %v5133, %v5149
        %v5151 = vsel %vm5141, %v5148, %v5150
        %v5152 = vsel %vm5140, %v5130, %v5133
        %v5153 = vsel %vm5143, %v5139, 1326507024
        %v5154 = vsel %vm5142, %v5136, %v5153
        %v5155 = vsel %vm5141, %v5152, %v5154
        %v5156 = vshll.u32 %v5116, 8
        %v5157 = vmul.u32.u64.compose %v5156, %v5155
        %v5158 = vextract.low.u32 %v5157
        %v5159 = vextract.high.u32 %v5157
        %v5160 = vmul.u32.u64.compose %v5156, %v5151
        %v5161 = vextract.low.u32 %v5160
        %v5162 = vextract.high.u32 %v5160
        %v5163 = vmul.u32 %v5156, %v5147
        %v5164 = vadd.s32 %v5159, %v5161
        %vm5165 = vc.u32 %v5159, %v5161
        %v5166 = vadd.s32 %v5162, 1
        %v5167 = vsel %vm5165, %v5166, %v5162
        %v5168 = vadd.s32 %v5163, %v5167
        %v5169 = vadd.s32 %v5168, 536870912
        %v5170 = vshrl.u32 %v5169, 30
        %v5171 = vshll.u32 %v5170, 30
        %v5172 = vsub.s32 %v5168, %v5171
        %vm5173 = vcmp.lt.s32.totalorder %v5172, 0
        %v5174 = vsub.s32 0, %v5172
        %v5175 = vsel %vm5173, %v5174, %v5172
        %v5176 = vclz %v5175
        %v5177 = vsub.s32 %v5176, 2
        %vm5178 = vcmp.gt.s32.totalorder 0, %v5177
        %v5179 = vsel %vm5178, 0, %v5177
        %v5180 = vsub.s32 32, %v5179
        %v5181 = vshll.u32 %v5172, %v5179
        %v5182 = vshrl.u32 %v5164, %v5180
        %v5183 = vor.u32 %v5181, %v5182
        %v5184 = vsub.s32 4294967266, %v5179
        %v5185 = vadd.s32 %v5184, 127
        %v5186 = vshll.u32 %v5185, 23
        %v5187 = vor.u32 4788187, %v5186
        %v5188 = vand.u32 2147483647, %v5187
        %v5190 = vcvt.s32.f32 %v5183
        %v5191 = vmul.f32 %v5190, %v5188
        %v5192 = vxor.u32 %v5191, 2147483648
        %v5193 = vsel %vm5110, %v5192, %v5191
        %v5194 = vsub.s32 4, %v5170
        %v5195 = vsel %vm5110, %v5194, %v5170
        %v5196 = vsel %vm5109, %v4587, %v5193
        %v5197 = vsel %vm5109, 0, %v5195
        %v5198 = vcosq.f32.pop %v5196
        %v5199 = vsinq.f32.pop %v5196
        %vm5200 = vweird.f32 %v4587
        %v5201 = vadd.s32 %v5197, 3
        %v5202 = vand.u32 %v5201, 3
        %vm5203 = vcmp.lt.s32.totalorder %v5202, 2
        %vm5204 = vcmp.eq.s32.totalorder %v5202, 0
        %v5205 = vxor.u32 %v5199, 2147483648
        %v5206 = vsel %vm5204, %v5198, %v5205
        %vm5207 = vcmp.eq.s32.totalorder %v5202, 2
        %v5208 = vxor.u32 %v5198, 2147483648
        %v5209 = vsel %vm5207, %v5208, %v5199
        %v5210 = vsel %vm5203, %v5206, %v5209
        %v5211 = vsel %vm5200, nan, %v5210
        %v5212 = vand.u32 2147483647, %v4589
        %vm5213 = vcmp.le.f32.partialorder %v5212, 0.7853982
        %vm5214 = vcmp.lt.s32.totalorder %v4589, 0
        %v5215 = vand.u32 %v4589, 2139095040
        %v5216 = vshrl.u32 %v5215, 23
        %v5217 = vsub.s32 %v5216, 127
        %v5218 = vand.u32 2147483647, %v4589
        %v5219 = vand.u32 %v5218, 8388607
        %v5220 = vor.u32 %v5219, 8388608
        %v5221 = vsub.s32 0, %v5220
        %v5222 = vadd.s32 %v5217, 1
        %vm5223 = vcmp.gt.s32.totalorder %v5222, 0
        %v5224 = vsel %vm5223, %v5222, 0
        %v5225 = vshrl.u32 %v5224, 5
        %v5226 = vand.u32 %v5224, 31
        %v5227 = vsub.s32 32, %v5226
        %v5228 = vshrl.u32 683565275, %v5227
        %v5229 = vshll.u32 683565275, %v5226
        %v5230 = vshrl.u32 2475754826, %v5227
        %v5231 = vor.u32 %v5229, %v5230
        %v5232 = vshll.u32 2475754826, %v5226
        %v5233 = vshrl.u32 2131351028, %v5227
        %v5234 = vor.u32 %v5232, %v5233
        %v5235 = vshll.u32 2131351028, %v5226
        %v5236 = vshrl.u32 2102212464, %v5227
        %v5237 = vor.u32 %v5235, %v5236
        %v5238 = vshll.u32 2102212464, %v5226
        %v5239 = vshrl.u32 920167782, %v5227
        %v5240 = vor.u32 %v5238, %v5239
        %v5241 = vshll.u32 920167782, %v5226
        %v5242 = vshrl.u32 1326507024, %v5227
        %v5243 = vor.u32 %v5241, %v5242
        %vm5244 = vcmp.lt.s32.totalorder %v5225, 1
        %vm5245 = vcmp.lt.s32.totalorder %v5225, 2
        %vm5246 = vcmp.lt.s32.totalorder %v5225, 3
        %vm5247 = vcmp.lt.s32.totalorder %v5225, 4
        %v5248 = vsel %vm5244, %v5228, %v5231
        %v5249 = vsel %vm5247, %v5237, 2102212464
        %v5250 = vsel %vm5246, %v5234, %v5249
        %v5251 = vsel %vm5245, %v5248, %v5250
        %v5252 = vsel %vm5244, %v5231, %v5234
        %v5253 = vsel %vm5247, %v5240, 920167782
        %v5254 = vsel %vm5246, %v5237, %v5253
        %v5255 = vsel %vm5245, %v5252, %v5254
        %v5256 = vsel %vm5244, %v5234, %v5237
        %v5257 = vsel %vm5247, %v5243, 1326507024
        %v5258 = vsel %vm5246, %v5240, %v5257
        %v5259 = vsel %vm5245, %v5256, %v5258
        %v5260 = vshll.u32 %v5220, 8
        %v5261 = vmul.u32.u64.compose %v5260, %v5259
        %v5262 = vextract.low.u32 %v5261
        %v5263 = vextract.high.u32 %v5261
        %v5264 = vmul.u32.u64.compose %v5260, %v5255
        %v5265 = vextract.low.u32 %v5264
        %v5266 = vextract.high.u32 %v5264
        %v5267 = vmul.u32 %v5260, %v5251
        %v5268 = vadd.s32 %v5263, %v5265
        %vm5269 = vc.u32 %v5263, %v5265
        %v5270 = vadd.s32 %v5266, 1
        %v5271 = vsel %vm5269, %v5270, %v5266
        %v5272 = vadd.s32 %v5267, %v5271
        %v5273 = vadd.s32 %v5272, 536870912
        %v5274 = vshrl.u32 %v5273, 30
        %v5275 = vshll.u32 %v5274, 30
        %v5276 = vsub.s32 %v5272, %v5275
        %vm5277 = vcmp.lt.s32.totalorder %v5276, 0
        %v5278 = vsub.s32 0, %v5276
        %v5279 = vsel %vm5277, %v5278, %v5276
        %v5280 = vclz %v5279
        %v5281 = vsub.s32 %v5280, 2
        %vm5282 = vcmp.gt.s32.totalorder 0, %v5281
        %v5283 = vsel %vm5282, 0, %v5281
        %v5284 = vsub.s32 32, %v5283
        %v5285 = vshll.u32 %v5276, %v5283
        %v5286 = vshrl.u32 %v5268, %v5284
        %v5287 = vor.u32 %v5285, %v5286
        %v5288 = vsub.s32 4294967266, %v5283
        %v5289 = vadd.s32 %v5288, 127
        %v5290 = vshll.u32 %v5289, 23
        %v5291 = vor.u32 4788187, %v5290
        %v5292 = vand.u32 2147483647, %v5291
        %v5294 = vcvt.s32.f32 %v5287
        %v5295 = vmul.f32 %v5294, %v5292
        %v5296 = vxor.u32 %v5295, 2147483648
        %v5297 = vsel %vm5214, %v5296, %v5295
        %v5298 = vsub.s32 4, %v5274
        %v5299 = vsel %vm5214, %v5298, %v5274
        %v5300 = vsel %vm5213, %v4589, %v5297
        %v5301 = vsel %vm5213, 0, %v5299
        %v5302 = vcosq.f32.pop %v5300
        %v5303 = vsinq.f32.pop %v5300
        %vm5304 = vweird.f32 %v4589
        %v5305 = vadd.s32 %v5301, 3
        %v5306 = vand.u32 %v5305, 3
        %vm5307 = vcmp.lt.s32.totalorder %v5306, 2
        %vm5308 = vcmp.eq.s32.totalorder %v5306, 0
        %v5309 = vxor.u32 %v5303, 2147483648
        %v5310 = vsel %vm5308, %v5302, %v5309
        %vm5311 = vcmp.eq.s32.totalorder %v5306, 2
        %v5312 = vxor.u32 %v5302, 2147483648
        %v5313 = vsel %vm5311, %v5312, %v5303
        %v5314 = vsel %vm5307, %v5310, %v5313
        %v5315 = vsel %vm5304, nan, %v5314
        %v5316 = vand.u32 2147483647, %v4676
        %vm5317 = vcmp.le.f32.partialorder %v5316, 0.7853982
        %vm5318 = vcmp.lt.s32.totalorder %v4676, 0
        %v5319 = vand.u32 %v4676, 2139095040
        %v5320 = vshrl.u32 %v5319, 23
        %v5321 = vsub.s32 %v5320, 127
        %v5322 = vand.u32 2147483647, %v4676
        %v5323 = vand.u32 %v5322, 8388607
        %v5324 = vor.u32 %v5323, 8388608
        %v5325 = vsub.s32 0, %v5324
        %v5326 = vadd.s32 %v5321, 1
        %vm5327 = vcmp.gt.s32.totalorder %v5326, 0
        %v5328 = vsel %vm5327, %v5326, 0
        %v5329 = vshrl.u32 %v5328, 5
        %v5330 = vand.u32 %v5328, 31
        %v5331 = vsub.s32 32, %v5330
        %v5332 = vshrl.u32 683565275, %v5331
        %v5333 = vshll.u32 683565275, %v5330
        %v5334 = vshrl.u32 2475754826, %v5331
        %v5335 = vor.u32 %v5333, %v5334
        %v5336 = vshll.u32 2475754826, %v5330
        %v5337 = vshrl.u32 2131351028, %v5331
        %v5338 = vor.u32 %v5336, %v5337
        %v5339 = vshll.u32 2131351028, %v5330
        %v5340 = vshrl.u32 2102212464, %v5331
        %v5341 = vor.u32 %v5339, %v5340
        %v5342 = vshll.u32 2102212464, %v5330
        %v5343 = vshrl.u32 920167782, %v5331
        %v5344 = vor.u32 %v5342, %v5343
        %v5345 = vshll.u32 920167782, %v5330
        %v5346 = vshrl.u32 1326507024, %v5331
        %v5347 = vor.u32 %v5345, %v5346
        %vm5348 = vcmp.lt.s32.totalorder %v5329, 1
        %vm5349 = vcmp.lt.s32.totalorder %v5329, 2
        %vm5350 = vcmp.lt.s32.totalorder %v5329, 3
        %vm5351 = vcmp.lt.s32.totalorder %v5329, 4
        %v5352 = vsel %vm5348, %v5332, %v5335
        %v5353 = vsel %vm5351, %v5341, 2102212464
        %v5354 = vsel %vm5350, %v5338, %v5353
        %v5355 = vsel %vm5349, %v5352, %v5354
        %v5356 = vsel %vm5348, %v5335, %v5338
        %v5357 = vsel %vm5351, %v5344, 920167782
        %v5358 = vsel %vm5350, %v5341, %v5357
        %v5359 = vsel %vm5349, %v5356, %v5358
        %v5360 = vsel %vm5348, %v5338, %v5341
        %v5361 = vsel %vm5351, %v5347, 1326507024
        %v5362 = vsel %vm5350, %v5344, %v5361
        %v5363 = vsel %vm5349, %v5360, %v5362
        %v5364 = vshll.u32 %v5324, 8
        %v5365 = vmul.u32.u64.compose %v5364, %v5363
        %v5366 = vextract.low.u32 %v5365
        %v5367 = vextract.high.u32 %v5365
        %v5368 = vmul.u32.u64.compose %v5364, %v5359
        %v5369 = vextract.low.u32 %v5368
        %v5370 = vextract.high.u32 %v5368
        %v5371 = vmul.u32 %v5364, %v5355
        %v5372 = vadd.s32 %v5367, %v5369
        %vm5373 = vc.u32 %v5367, %v5369
        %v5374 = vadd.s32 %v5370, 1
        %v5375 = vsel %vm5373, %v5374, %v5370
        %v5376 = vadd.s32 %v5371, %v5375
        %v5377 = vadd.s32 %v5376, 536870912
        %v5378 = vshrl.u32 %v5377, 30
        %v5379 = vshll.u32 %v5378, 30
        %v5380 = vsub.s32 %v5376, %v5379
        %vm5381 = vcmp.lt.s32.totalorder %v5380, 0
        %v5382 = vsub.s32 0, %v5380
        %v5383 = vsel %vm5381, %v5382, %v5380
        %v5384 = vclz %v5383
        %v5385 = vsub.s32 %v5384, 2
        %vm5386 = vcmp.gt.s32.totalorder 0, %v5385
        %v5387 = vsel %vm5386, 0, %v5385
        %v5388 = vsub.s32 32, %v5387
        %v5389 = vshll.u32 %v5380, %v5387
        %v5390 = vshrl.u32 %v5372, %v5388
        %v5391 = vor.u32 %v5389, %v5390
        %v5392 = vsub.s32 4294967266, %v5387
        %v5393 = vadd.s32 %v5392, 127
        %v5394 = vshll.u32 %v5393, 23
        %v5395 = vor.u32 4788187, %v5394
        %v5396 = vand.u32 2147483647, %v5395
        %v5398 = vcvt.s32.f32 %v5391
        %v5399 = vmul.f32 %v5398, %v5396
        %v5400 = vxor.u32 %v5399, 2147483648
        %v5401 = vsel %vm5318, %v5400, %v5399
        %v5402 = vsub.s32 4, %v5378
        %v5403 = vsel %vm5318, %v5402, %v5378
        %v5404 = vsel %vm5317, %v4676, %v5401
        %v5405 = vsel %vm5317, 0, %v5403
        %v5406 = vcosq.f32.pop %v5404
        %v5407 = vsinq.f32.pop %v5404
        %vm5408 = vweird.f32 %v4676
        %v5409 = vadd.s32 %v5405, 3
        %v5410 = vand.u32 %v5409, 3
        %vm5411 = vcmp.lt.s32.totalorder %v5410, 2
        %vm5412 = vcmp.eq.s32.totalorder %v5410, 0
        %v5413 = vxor.u32 %v5407, 2147483648
        %v5414 = vsel %vm5412, %v5406, %v5413
        %vm5415 = vcmp.eq.s32.totalorder %v5410, 2
        %v5416 = vxor.u32 %v5406, 2147483648
        %v5417 = vsel %vm5415, %v5416, %v5407
        %v5418 = vsel %vm5411, %v5414, %v5417
        %v5419 = vsel %vm5408, nan, %v5418
        %v5420 = vand.u32 2147483647, %v4678
        %vm5421 = vcmp.le.f32.partialorder %v5420, 0.7853982
        %vm5422 = vcmp.lt.s32.totalorder %v4678, 0
        %v5423 = vand.u32 %v4678, 2139095040
        %v5424 = vshrl.u32 %v5423, 23
        %v5425 = vsub.s32 %v5424, 127
        %v5426 = vand.u32 2147483647, %v4678
        %v5427 = vand.u32 %v5426, 8388607
        %v5428 = vor.u32 %v5427, 8388608
        %v5429 = vsub.s32 0, %v5428
        %v5430 = vadd.s32 %v5425, 1
        %vm5431 = vcmp.gt.s32.totalorder %v5430, 0
        %v5432 = vsel %vm5431, %v5430, 0
        %v5433 = vshrl.u32 %v5432, 5
        %v5434 = vand.u32 %v5432, 31
        %v5435 = vsub.s32 32, %v5434
        %v5436 = vshrl.u32 683565275, %v5435
        %v5437 = vshll.u32 683565275, %v5434
        %v5438 = vshrl.u32 2475754826, %v5435
        %v5439 = vor.u32 %v5437, %v5438
        %v5440 = vshll.u32 2475754826, %v5434
        %v5441 = vshrl.u32 2131351028, %v5435
        %v5442 = vor.u32 %v5440, %v5441
        %v5443 = vshll.u32 2131351028, %v5434
        %v5444 = vshrl.u32 2102212464, %v5435
        %v5445 = vor.u32 %v5443, %v5444
        %v5446 = vshll.u32 2102212464, %v5434
        %v5447 = vshrl.u32 920167782, %v5435
        %v5448 = vor.u32 %v5446, %v5447
        %v5449 = vshll.u32 920167782, %v5434
        %v5450 = vshrl.u32 1326507024, %v5435
        %v5451 = vor.u32 %v5449, %v5450
        %vm5452 = vcmp.lt.s32.totalorder %v5433, 1
        %vm5453 = vcmp.lt.s32.totalorder %v5433, 2
        %vm5454 = vcmp.lt.s32.totalorder %v5433, 3
        %vm5455 = vcmp.lt.s32.totalorder %v5433, 4
        %v5456 = vsel %vm5452, %v5436, %v5439
        %v5457 = vsel %vm5455, %v5445, 2102212464
        %v5458 = vsel %vm5454, %v5442, %v5457
        %v5459 = vsel %vm5453, %v5456, %v5458
        %v5460 = vsel %vm5452, %v5439, %v5442
        %v5461 = vsel %vm5455, %v5448, 920167782
        %v5462 = vsel %vm5454, %v5445, %v5461
        %v5463 = vsel %vm5453, %v5460, %v5462
        %v5464 = vsel %vm5452, %v5442, %v5445
        %v5465 = vsel %vm5455, %v5451, 1326507024
        %v5466 = vsel %vm5454, %v5448, %v5465
        %v5467 = vsel %vm5453, %v5464, %v5466
        %v5468 = vshll.u32 %v5428, 8
        %v5469 = vmul.u32.u64.compose %v5468, %v5467
        %v5470 = vextract.low.u32 %v5469
        %v5471 = vextract.high.u32 %v5469
        %v5472 = vmul.u32.u64.compose %v5468, %v5463
        %v5473 = vextract.low.u32 %v5472
        %v5474 = vextract.high.u32 %v5472
        %v5475 = vmul.u32 %v5468, %v5459
        %v5476 = vadd.s32 %v5471, %v5473
        %vm5477 = vc.u32 %v5471, %v5473
        %v5478 = vadd.s32 %v5474, 1
        %v5479 = vsel %vm5477, %v5478, %v5474
        %v5480 = vadd.s32 %v5475, %v5479
        %v5481 = vadd.s32 %v5480, 536870912
        %v5482 = vshrl.u32 %v5481, 30
        %v5483 = vshll.u32 %v5482, 30
        %v5484 = vsub.s32 %v5480, %v5483
        %vm5485 = vcmp.lt.s32.totalorder %v5484, 0
        %v5486 = vsub.s32 0, %v5484
        %v5487 = vsel %vm5485, %v5486, %v5484
        %v5488 = vclz %v5487
        %v5489 = vsub.s32 %v5488, 2
        %vm5490 = vcmp.gt.s32.totalorder 0, %v5489
        %v5491 = vsel %vm5490, 0, %v5489
        %v5492 = vsub.s32 32, %v5491
        %v5493 = vshll.u32 %v5484, %v5491
        %v5494 = vshrl.u32 %v5476, %v5492
        %v5495 = vor.u32 %v5493, %v5494
        %v5496 = vsub.s32 4294967266, %v5491
        %v5497 = vadd.s32 %v5496, 127
        %v5498 = vshll.u32 %v5497, 23
        %v5499 = vor.u32 4788187, %v5498
        %v5500 = vand.u32 2147483647, %v5499
        %v5502 = vcvt.s32.f32 %v5495
        %v5503 = vmul.f32 %v5502, %v5500
        %v5504 = vxor.u32 %v5503, 2147483648
        %v5505 = vsel %vm5422, %v5504, %v5503
        %v5506 = vsub.s32 4, %v5482
        %v5507 = vsel %vm5422, %v5506, %v5482
        %v5508 = vsel %vm5421, %v4678, %v5505
        %v5509 = vsel %vm5421, 0, %v5507
        %v5510 = vcosq.f32.pop %v5508
        %v5511 = vsinq.f32.pop %v5508
        %vm5512 = vweird.f32 %v4678
        %v5513 = vadd.s32 %v5509, 3
        %v5514 = vand.u32 %v5513, 3
        %vm5515 = vcmp.lt.s32.totalorder %v5514, 2
        %vm5516 = vcmp.eq.s32.totalorder %v5514, 0
        %v5517 = vxor.u32 %v5511, 2147483648
        %v5518 = vsel %vm5516, %v5510, %v5517
        %vm5519 = vcmp.eq.s32.totalorder %v5514, 2
        %v5520 = vxor.u32 %v5510, 2147483648
        %v5521 = vsel %vm5519, %v5520, %v5511
        %v5522 = vsel %vm5515, %v5518, %v5521
        %v5523 = vsel %vm5512, nan, %v5522
        %v5524 = vand.u32 2147483647, %v4593
        %vm5525 = vcmp.le.f32.partialorder %v5524, 0.7853982
        %vm5526 = vcmp.lt.s32.totalorder %v4593, 0
        %v5527 = vand.u32 %v4593, 2139095040
        %v5528 = vshrl.u32 %v5527, 23
        %v5529 = vsub.s32 %v5528, 127
        %v5530 = vand.u32 2147483647, %v4593
        %v5531 = vand.u32 %v5530, 8388607
        %v5532 = vor.u32 %v5531, 8388608
        %v5533 = vsub.s32 0, %v5532
        %v5534 = vadd.s32 %v5529, 1
        %vm5535 = vcmp.gt.s32.totalorder %v5534, 0
        %v5536 = vsel %vm5535, %v5534, 0
        %v5537 = vshrl.u32 %v5536, 5
        %v5538 = vand.u32 %v5536, 31
        %v5539 = vsub.s32 32, %v5538
        %v5540 = vshrl.u32 683565275, %v5539
        %v5541 = vshll.u32 683565275, %v5538
        %v5542 = vshrl.u32 2475754826, %v5539
        %v5543 = vor.u32 %v5541, %v5542
        %v5544 = vshll.u32 2475754826, %v5538
        %v5545 = vshrl.u32 2131351028, %v5539
        %v5546 = vor.u32 %v5544, %v5545
        %v5547 = vshll.u32 2131351028, %v5538
        %v5548 = vshrl.u32 2102212464, %v5539
        %v5549 = vor.u32 %v5547, %v5548
        %v5550 = vshll.u32 2102212464, %v5538
        %v5551 = vshrl.u32 920167782, %v5539
        %v5552 = vor.u32 %v5550, %v5551
        %v5553 = vshll.u32 920167782, %v5538
        %v5554 = vshrl.u32 1326507024, %v5539
        %v5555 = vor.u32 %v5553, %v5554
        %vm5556 = vcmp.lt.s32.totalorder %v5537, 1
        %vm5557 = vcmp.lt.s32.totalorder %v5537, 2
        %vm5558 = vcmp.lt.s32.totalorder %v5537, 3
        %vm5559 = vcmp.lt.s32.totalorder %v5537, 4
        %v5560 = vsel %vm5556, %v5540, %v5543
        %v5561 = vsel %vm5559, %v5549, 2102212464
        %v5562 = vsel %vm5558, %v5546, %v5561
        %v5563 = vsel %vm5557, %v5560, %v5562
        %v5564 = vsel %vm5556, %v5543, %v5546
        %v5565 = vsel %vm5559, %v5552, 920167782
        %v5566 = vsel %vm5558, %v5549, %v5565
        %v5567 = vsel %vm5557, %v5564, %v5566
        %v5568 = vsel %vm5556, %v5546, %v5549
        %v5569 = vsel %vm5559, %v5555, 1326507024
        %v5570 = vsel %vm5558, %v5552, %v5569
        %v5571 = vsel %vm5557, %v5568, %v5570
        %v5572 = vshll.u32 %v5532, 8
        %v5573 = vmul.u32.u64.compose %v5572, %v5571
        %v5574 = vextract.low.u32 %v5573
        %v5575 = vextract.high.u32 %v5573
        %v5576 = vmul.u32.u64.compose %v5572, %v5567
        %v5577 = vextract.low.u32 %v5576
        %v5578 = vextract.high.u32 %v5576
        %v5579 = vmul.u32 %v5572, %v5563
        %v5580 = vadd.s32 %v5575, %v5577
        %vm5581 = vc.u32 %v5575, %v5577
        %v5582 = vadd.s32 %v5578, 1
        %v5583 = vsel %vm5581, %v5582, %v5578
        %v5584 = vadd.s32 %v5579, %v5583
        %v5585 = vadd.s32 %v5584, 536870912
        %v5586 = vshrl.u32 %v5585, 30
        %v5587 = vshll.u32 %v5586, 30
        %v5588 = vsub.s32 %v5584, %v5587
        %vm5589 = vcmp.lt.s32.totalorder %v5588, 0
        %v5590 = vsub.s32 0, %v5588
        %v5591 = vsel %vm5589, %v5590, %v5588
        %v5592 = vclz %v5591
        %v5593 = vsub.s32 %v5592, 2
        %vm5594 = vcmp.gt.s32.totalorder 0, %v5593
        %v5595 = vsel %vm5594, 0, %v5593
        %v5596 = vsub.s32 32, %v5595
        %v5597 = vshll.u32 %v5588, %v5595
        %v5598 = vshrl.u32 %v5580, %v5596
        %v5599 = vor.u32 %v5597, %v5598
        %v5600 = vsub.s32 4294967266, %v5595
        %v5601 = vadd.s32 %v5600, 127
        %v5602 = vshll.u32 %v5601, 23
        %v5603 = vor.u32 4788187, %v5602
        %v5604 = vand.u32 2147483647, %v5603
        %v5606 = vcvt.s32.f32 %v5599
        %v5607 = vmul.f32 %v5606, %v5604
        %v5608 = vxor.u32 %v5607, 2147483648
        %v5609 = vsel %vm5526, %v5608, %v5607
        %v5610 = vsub.s32 4, %v5586
        %v5611 = vsel %vm5526, %v5610, %v5586
        %v5612 = vsel %vm5525, %v4593, %v5609
        %v5613 = vsel %vm5525, 0, %v5611
        %v5614 = vcosq.f32.pop %v5612
        %v5615 = vsinq.f32.pop %v5612
        %vm5616 = vweird.f32 %v4593
        %v5617 = vadd.s32 %v5613, 3
        %v5618 = vand.u32 %v5617, 3
        %vm5619 = vcmp.lt.s32.totalorder %v5618, 2
        %vm5620 = vcmp.eq.s32.totalorder %v5618, 0
        %v5621 = vxor.u32 %v5615, 2147483648
        %v5622 = vsel %vm5620, %v5614, %v5621
        %vm5623 = vcmp.eq.s32.totalorder %v5618, 2
        %v5624 = vxor.u32 %v5614, 2147483648
        %v5625 = vsel %vm5623, %v5624, %v5615
        %v5626 = vsel %vm5619, %v5622, %v5625
        %v5627 = vsel %vm5616, nan, %v5626
        %v5628 = vand.u32 2147483647, %v4595
        %vm5629 = vcmp.le.f32.partialorder %v5628, 0.7853982
        %vm5630 = vcmp.lt.s32.totalorder %v4595, 0
        %v5631 = vand.u32 %v4595, 2139095040
        %v5632 = vshrl.u32 %v5631, 23
        %v5633 = vsub.s32 %v5632, 127
        %v5634 = vand.u32 2147483647, %v4595
        %v5635 = vand.u32 %v5634, 8388607
        %v5636 = vor.u32 %v5635, 8388608
        %v5637 = vsub.s32 0, %v5636
        %v5638 = vadd.s32 %v5633, 1
        %vm5639 = vcmp.gt.s32.totalorder %v5638, 0
        %v5640 = vsel %vm5639, %v5638, 0
        %v5641 = vshrl.u32 %v5640, 5
        %v5642 = vand.u32 %v5640, 31
        %v5643 = vsub.s32 32, %v5642
        %v5644 = vshrl.u32 683565275, %v5643
        %v5645 = vshll.u32 683565275, %v5642
        %v5646 = vshrl.u32 2475754826, %v5643
        %v5647 = vor.u32 %v5645, %v5646
        %v5648 = vshll.u32 2475754826, %v5642
        %v5649 = vshrl.u32 2131351028, %v5643
        %v5650 = vor.u32 %v5648, %v5649
        %v5651 = vshll.u32 2131351028, %v5642
        %v5652 = vshrl.u32 2102212464, %v5643
        %v5653 = vor.u32 %v5651, %v5652
        %v5654 = vshll.u32 2102212464, %v5642
        %v5655 = vshrl.u32 920167782, %v5643
        %v5656 = vor.u32 %v5654, %v5655
        %v5657 = vshll.u32 920167782, %v5642
        %v5658 = vshrl.u32 1326507024, %v5643
        %v5659 = vor.u32 %v5657, %v5658
        %vm5660 = vcmp.lt.s32.totalorder %v5641, 1
        %vm5661 = vcmp.lt.s32.totalorder %v5641, 2
        %vm5662 = vcmp.lt.s32.totalorder %v5641, 3
        %vm5663 = vcmp.lt.s32.totalorder %v5641, 4
        %v5664 = vsel %vm5660, %v5644, %v5647
        %v5665 = vsel %vm5663, %v5653, 2102212464
        %v5666 = vsel %vm5662, %v5650, %v5665
        %v5667 = vsel %vm5661, %v5664, %v5666
        %v5668 = vsel %vm5660, %v5647, %v5650
        %v5669 = vsel %vm5663, %v5656, 920167782
        %v5670 = vsel %vm5662, %v5653, %v5669
        %v5671 = vsel %vm5661, %v5668, %v5670
        %v5672 = vsel %vm5660, %v5650, %v5653
        %v5673 = vsel %vm5663, %v5659, 1326507024
        %v5674 = vsel %vm5662, %v5656, %v5673
        %v5675 = vsel %vm5661, %v5672, %v5674
        %v5676 = vshll.u32 %v5636, 8
        %v5677 = vmul.u32.u64.compose %v5676, %v5675
        %v5678 = vextract.low.u32 %v5677
        %v5679 = vextract.high.u32 %v5677
        %v5680 = vmul.u32.u64.compose %v5676, %v5671
        %v5681 = vextract.low.u32 %v5680
        %v5682 = vextract.high.u32 %v5680
        %v5683 = vmul.u32 %v5676, %v5667
        %v5684 = vadd.s32 %v5679, %v5681
        %vm5685 = vc.u32 %v5679, %v5681
        %v5686 = vadd.s32 %v5682, 1
        %v5687 = vsel %vm5685, %v5686, %v5682
        %v5688 = vadd.s32 %v5683, %v5687
        %v5689 = vadd.s32 %v5688, 536870912
        %v5690 = vshrl.u32 %v5689, 30
        %v5691 = vshll.u32 %v5690, 30
        %v5692 = vsub.s32 %v5688, %v5691
        %vm5693 = vcmp.lt.s32.totalorder %v5692, 0
        %v5694 = vsub.s32 0, %v5692
        %v5695 = vsel %vm5693, %v5694, %v5692
        %v5696 = vclz %v5695
        %v5697 = vsub.s32 %v5696, 2
        %vm5698 = vcmp.gt.s32.totalorder 0, %v5697
        %v5699 = vsel %vm5698, 0, %v5697
        %v5700 = vsub.s32 32, %v5699
        %v5701 = vshll.u32 %v5692, %v5699
        %v5702 = vshrl.u32 %v5684, %v5700
        %v5703 = vor.u32 %v5701, %v5702
        %v5704 = vsub.s32 4294967266, %v5699
        %v5705 = vadd.s32 %v5704, 127
        %v5706 = vshll.u32 %v5705, 23
        %v5707 = vor.u32 4788187, %v5706
        %v5708 = vand.u32 2147483647, %v5707
        %v5710 = vcvt.s32.f32 %v5703
        %v5711 = vmul.f32 %v5710, %v5708
        %v5712 = vxor.u32 %v5711, 2147483648
        %v5713 = vsel %vm5630, %v5712, %v5711
        %v5714 = vsub.s32 4, %v5690
        %v5715 = vsel %vm5630, %v5714, %v5690
        %v5716 = vsel %vm5629, %v4595, %v5713
        %v5717 = vsel %vm5629, 0, %v5715
        %v5718 = vcosq.f32.pop %v5716
        %v5719 = vsinq.f32.pop %v5716
        %vm5720 = vweird.f32 %v4595
        %v5721 = vadd.s32 %v5717, 3
        %v5722 = vand.u32 %v5721, 3
        %vm5723 = vcmp.lt.s32.totalorder %v5722, 2
        %vm5724 = vcmp.eq.s32.totalorder %v5722, 0
        %v5725 = vxor.u32 %v5719, 2147483648
        %v5726 = vsel %vm5724, %v5718, %v5725
        %vm5727 = vcmp.eq.s32.totalorder %v5722, 2
        %v5728 = vxor.u32 %v5718, 2147483648
        %v5729 = vsel %vm5727, %v5728, %v5719
        %v5730 = vsel %vm5723, %v5726, %v5729
        %v5731 = vsel %vm5720, nan, %v5730
        %v5732 = vand.u32 2147483647, %v4682
        %vm5733 = vcmp.le.f32.partialorder %v5732, 0.7853982
        %vm5734 = vcmp.lt.s32.totalorder %v4682, 0
        %v5735 = vand.u32 %v4682, 2139095040
        %v5736 = vshrl.u32 %v5735, 23
        %v5737 = vsub.s32 %v5736, 127
        %v5738 = vand.u32 2147483647, %v4682
        %v5739 = vand.u32 %v5738, 8388607
        %v5740 = vor.u32 %v5739, 8388608
        %v5741 = vsub.s32 0, %v5740
        %v5742 = vadd.s32 %v5737, 1
        %vm5743 = vcmp.gt.s32.totalorder %v5742, 0
        %v5744 = vsel %vm5743, %v5742, 0
        %v5745 = vshrl.u32 %v5744, 5
        %v5746 = vand.u32 %v5744, 31
        %v5747 = vsub.s32 32, %v5746
        %v5748 = vshrl.u32 683565275, %v5747
        %v5749 = vshll.u32 683565275, %v5746
        %v5750 = vshrl.u32 2475754826, %v5747
        %v5751 = vor.u32 %v5749, %v5750
        %v5752 = vshll.u32 2475754826, %v5746
        %v5753 = vshrl.u32 2131351028, %v5747
        %v5754 = vor.u32 %v5752, %v5753
        %v5755 = vshll.u32 2131351028, %v5746
        %v5756 = vshrl.u32 2102212464, %v5747
        %v5757 = vor.u32 %v5755, %v5756
        %v5758 = vshll.u32 2102212464, %v5746
        %v5759 = vshrl.u32 920167782, %v5747
        %v5760 = vor.u32 %v5758, %v5759
        %v5761 = vshll.u32 920167782, %v5746
        %v5762 = vshrl.u32 1326507024, %v5747
        %v5763 = vor.u32 %v5761, %v5762
        %vm5764 = vcmp.lt.s32.totalorder %v5745, 1
        %vm5765 = vcmp.lt.s32.totalorder %v5745, 2
        %vm5766 = vcmp.lt.s32.totalorder %v5745, 3
        %vm5767 = vcmp.lt.s32.totalorder %v5745, 4
        %v5768 = vsel %vm5764, %v5748, %v5751
        %v5769 = vsel %vm5767, %v5757, 2102212464
        %v5770 = vsel %vm5766, %v5754, %v5769
        %v5771 = vsel %vm5765, %v5768, %v5770
        %v5772 = vsel %vm5764, %v5751, %v5754
        %v5773 = vsel %vm5767, %v5760, 920167782
        %v5774 = vsel %vm5766, %v5757, %v5773
        %v5775 = vsel %vm5765, %v5772, %v5774
        %v5776 = vsel %vm5764, %v5754, %v5757
        %v5777 = vsel %vm5767, %v5763, 1326507024
        %v5778 = vsel %vm5766, %v5760, %v5777
        %v5779 = vsel %vm5765, %v5776, %v5778
        %v5780 = vshll.u32 %v5740, 8
        %v5781 = vmul.u32.u64.compose %v5780, %v5779
        %v5782 = vextract.low.u32 %v5781
        %v5783 = vextract.high.u32 %v5781
        %v5784 = vmul.u32.u64.compose %v5780, %v5775
        %v5785 = vextract.low.u32 %v5784
        %v5786 = vextract.high.u32 %v5784
        %v5787 = vmul.u32 %v5780, %v5771
        %v5788 = vadd.s32 %v5783, %v5785
        %vm5789 = vc.u32 %v5783, %v5785
        %v5790 = vadd.s32 %v5786, 1
        %v5791 = vsel %vm5789, %v5790, %v5786
        %v5792 = vadd.s32 %v5787, %v5791
        %v5793 = vadd.s32 %v5792, 536870912
        %v5794 = vshrl.u32 %v5793, 30
        %v5795 = vshll.u32 %v5794, 30
        %v5796 = vsub.s32 %v5792, %v5795
        %vm5797 = vcmp.lt.s32.totalorder %v5796, 0
        %v5798 = vsub.s32 0, %v5796
        %v5799 = vsel %vm5797, %v5798, %v5796
        %v5800 = vclz %v5799
        %v5801 = vsub.s32 %v5800, 2
        %vm5802 = vcmp.gt.s32.totalorder 0, %v5801
        %v5803 = vsel %vm5802, 0, %v5801
        %v5804 = vsub.s32 32, %v5803
        %v5805 = vshll.u32 %v5796, %v5803
        %v5806 = vshrl.u32 %v5788, %v5804
        %v5807 = vor.u32 %v5805, %v5806
        %v5808 = vsub.s32 4294967266, %v5803
        %v5809 = vadd.s32 %v5808, 127
        %v5810 = vshll.u32 %v5809, 23
        %v5811 = vor.u32 4788187, %v5810
        %v5812 = vand.u32 2147483647, %v5811
        %v5814 = vcvt.s32.f32 %v5807
        %v5815 = vmul.f32 %v5814, %v5812
        %v5816 = vxor.u32 %v5815, 2147483648
        %v5817 = vsel %vm5734, %v5816, %v5815
        %v5818 = vsub.s32 4, %v5794
        %v5819 = vsel %vm5734, %v5818, %v5794
        %v5820 = vsel %vm5733, %v4682, %v5817
        %v5821 = vsel %vm5733, 0, %v5819
        %v5822 = vcosq.f32.pop %v5820
        %v5823 = vsinq.f32.pop %v5820
        %vm5824 = vweird.f32 %v4682
        %v5825 = vadd.s32 %v5821, 3
        %v5826 = vand.u32 %v5825, 3
        %vm5827 = vcmp.lt.s32.totalorder %v5826, 2
        %vm5828 = vcmp.eq.s32.totalorder %v5826, 0
        %v5829 = vxor.u32 %v5823, 2147483648
        %v5830 = vsel %vm5828, %v5822, %v5829
        %vm5831 = vcmp.eq.s32.totalorder %v5826, 2
        %v5832 = vxor.u32 %v5822, 2147483648
        %v5833 = vsel %vm5831, %v5832, %v5823
        %v5834 = vsel %vm5827, %v5830, %v5833
        %v5835 = vsel %vm5824, nan, %v5834
        %v5836 = vand.u32 2147483647, %v4684
        %vm5837 = vcmp.le.f32.partialorder %v5836, 0.7853982
        %vm5838 = vcmp.lt.s32.totalorder %v4684, 0
        %v5839 = vand.u32 %v4684, 2139095040
        %v5840 = vshrl.u32 %v5839, 23
        %v5841 = vsub.s32 %v5840, 127
        %v5842 = vand.u32 2147483647, %v4684
        %v5843 = vand.u32 %v5842, 8388607
        %v5844 = vor.u32 %v5843, 8388608
        %v5845 = vsub.s32 0, %v5844
        %v5846 = vadd.s32 %v5841, 1
        %vm5847 = vcmp.gt.s32.totalorder %v5846, 0
        %v5848 = vsel %vm5847, %v5846, 0
        %v5849 = vshrl.u32 %v5848, 5
        %v5850 = vand.u32 %v5848, 31
        %v5851 = vsub.s32 32, %v5850
        %v5852 = vshrl.u32 683565275, %v5851
        %v5853 = vshll.u32 683565275, %v5850
        %v5854 = vshrl.u32 2475754826, %v5851
        %v5855 = vor.u32 %v5853, %v5854
        %v5856 = vshll.u32 2475754826, %v5850
        %v5857 = vshrl.u32 2131351028, %v5851
        %v5858 = vor.u32 %v5856, %v5857
        %v5859 = vshll.u32 2131351028, %v5850
        %v5860 = vshrl.u32 2102212464, %v5851
        %v5861 = vor.u32 %v5859, %v5860
        %v5862 = vshll.u32 2102212464, %v5850
        %v5863 = vshrl.u32 920167782, %v5851
        %v5864 = vor.u32 %v5862, %v5863
        %v5865 = vshll.u32 920167782, %v5850
        %v5866 = vshrl.u32 1326507024, %v5851
        %v5867 = vor.u32 %v5865, %v5866
        %vm5868 = vcmp.lt.s32.totalorder %v5849, 1
        %vm5869 = vcmp.lt.s32.totalorder %v5849, 2
        %vm5870 = vcmp.lt.s32.totalorder %v5849, 3
        %vm5871 = vcmp.lt.s32.totalorder %v5849, 4
        %v5872 = vsel %vm5868, %v5852, %v5855
        %v5873 = vsel %vm5871, %v5861, 2102212464
        %v5874 = vsel %vm5870, %v5858, %v5873
        %v5875 = vsel %vm5869, %v5872, %v5874
        %v5876 = vsel %vm5868, %v5855, %v5858
        %v5877 = vsel %vm5871, %v5864, 920167782
        %v5878 = vsel %vm5870, %v5861, %v5877
        %v5879 = vsel %vm5869, %v5876, %v5878
        %v5880 = vsel %vm5868, %v5858, %v5861
        %v5881 = vsel %vm5871, %v5867, 1326507024
        %v5882 = vsel %vm5870, %v5864, %v5881
        %v5883 = vsel %vm5869, %v5880, %v5882
        %v5884 = vshll.u32 %v5844, 8
        %v5885 = vmul.u32.u64.compose %v5884, %v5883
        %v5886 = vextract.low.u32 %v5885
        %v5887 = vextract.high.u32 %v5885
        %v5888 = vmul.u32.u64.compose %v5884, %v5879
        %v5889 = vextract.low.u32 %v5888
        %v5890 = vextract.high.u32 %v5888
        %v5891 = vmul.u32 %v5884, %v5875
        %v5892 = vadd.s32 %v5887, %v5889
        %vm5893 = vc.u32 %v5887, %v5889
        %v5894 = vadd.s32 %v5890, 1
        %v5895 = vsel %vm5893, %v5894, %v5890
        %v5896 = vadd.s32 %v5891, %v5895
        %v5897 = vadd.s32 %v5896, 536870912
        %v5898 = vshrl.u32 %v5897, 30
        %v5899 = vshll.u32 %v5898, 30
        %v5900 = vsub.s32 %v5896, %v5899
        %vm5901 = vcmp.lt.s32.totalorder %v5900, 0
        %v5902 = vsub.s32 0, %v5900
        %v5903 = vsel %vm5901, %v5902, %v5900
        %v5904 = vclz %v5903
        %v5905 = vsub.s32 %v5904, 2
        %vm5906 = vcmp.gt.s32.totalorder 0, %v5905
        %v5907 = vsel %vm5906, 0, %v5905
        %v5908 = vsub.s32 32, %v5907
        %v5909 = vshll.u32 %v5900, %v5907
        %v5910 = vshrl.u32 %v5892, %v5908
        %v5911 = vor.u32 %v5909, %v5910
        %v5912 = vsub.s32 4294967266, %v5907
        %v5913 = vadd.s32 %v5912, 127
        %v5914 = vshll.u32 %v5913, 23
        %v5915 = vor.u32 4788187, %v5914
        %v5916 = vand.u32 2147483647, %v5915
        %v5918 = vcvt.s32.f32 %v5911
        %v5919 = vmul.f32 %v5918, %v5916
        %v5920 = vxor.u32 %v5919, 2147483648
        %v5921 = vsel %vm5838, %v5920, %v5919
        %v5922 = vsub.s32 4, %v5898
        %v5923 = vsel %vm5838, %v5922, %v5898
        %v5924 = vsel %vm5837, %v4684, %v5921
        %v5925 = vsel %vm5837, 0, %v5923
        %v5926 = vcosq.f32.pop %v5924
        %v5927 = vsinq.f32.pop %v5924
        %vm5928 = vweird.f32 %v4684
        %v5929 = vadd.s32 %v5925, 3
        %v5930 = vand.u32 %v5929, 3
        %vm5931 = vcmp.lt.s32.totalorder %v5930, 2
        %vm5932 = vcmp.eq.s32.totalorder %v5930, 0
        %v5933 = vxor.u32 %v5927, 2147483648
        %v5934 = vsel %vm5932, %v5926, %v5933
        %vm5935 = vcmp.eq.s32.totalorder %v5930, 2
        %v5936 = vxor.u32 %v5926, 2147483648
        %v5937 = vsel %vm5935, %v5936, %v5927
        %v5938 = vsel %vm5931, %v5934, %v5937
        %v5939 = vsel %vm5928, nan, %v5938
        %v5940 = vand.u32 2147483647, %v4599
        %vm5941 = vcmp.le.f32.partialorder %v5940, 0.7853982
        %vm5942 = vcmp.lt.s32.totalorder %v4599, 0
        %v5943 = vand.u32 %v4599, 2139095040
        %v5944 = vshrl.u32 %v5943, 23
        %v5945 = vsub.s32 %v5944, 127
        %v5946 = vand.u32 2147483647, %v4599
        %v5947 = vand.u32 %v5946, 8388607
        %v5948 = vor.u32 %v5947, 8388608
        %v5949 = vsub.s32 0, %v5948
        %v5950 = vadd.s32 %v5945, 1
        %vm5951 = vcmp.gt.s32.totalorder %v5950, 0
        %v5952 = vsel %vm5951, %v5950, 0
        %v5953 = vshrl.u32 %v5952, 5
        %v5954 = vand.u32 %v5952, 31
        %v5955 = vsub.s32 32, %v5954
        %v5956 = vshrl.u32 683565275, %v5955
        %v5957 = vshll.u32 683565275, %v5954
        %v5958 = vshrl.u32 2475754826, %v5955
        %v5959 = vor.u32 %v5957, %v5958
        %v5960 = vshll.u32 2475754826, %v5954
        %v5961 = vshrl.u32 2131351028, %v5955
        %v5962 = vor.u32 %v5960, %v5961
        %v5963 = vshll.u32 2131351028, %v5954
        %v5964 = vshrl.u32 2102212464, %v5955
        %v5965 = vor.u32 %v5963, %v5964
        %v5966 = vshll.u32 2102212464, %v5954
        %v5967 = vshrl.u32 920167782, %v5955
        %v5968 = vor.u32 %v5966, %v5967
        %v5969 = vshll.u32 920167782, %v5954
        %v5970 = vshrl.u32 1326507024, %v5955
        %v5971 = vor.u32 %v5969, %v5970
        %vm5972 = vcmp.lt.s32.totalorder %v5953, 1
        %vm5973 = vcmp.lt.s32.totalorder %v5953, 2
        %vm5974 = vcmp.lt.s32.totalorder %v5953, 3
        %vm5975 = vcmp.lt.s32.totalorder %v5953, 4
        %v5976 = vsel %vm5972, %v5956, %v5959
        %v5977 = vsel %vm5975, %v5965, 2102212464
        %v5978 = vsel %vm5974, %v5962, %v5977
        %v5979 = vsel %vm5973, %v5976, %v5978
        %v5980 = vsel %vm5972, %v5959, %v5962
        %v5981 = vsel %vm5975, %v5968, 920167782
        %v5982 = vsel %vm5974, %v5965, %v5981
        %v5983 = vsel %vm5973, %v5980, %v5982
        %v5984 = vsel %vm5972, %v5962, %v5965
        %v5985 = vsel %vm5975, %v5971, 1326507024
        %v5986 = vsel %vm5974, %v5968, %v5985
        %v5987 = vsel %vm5973, %v5984, %v5986
        %v5988 = vshll.u32 %v5948, 8
        %v5989 = vmul.u32.u64.compose %v5988, %v5987
        %v5990 = vextract.low.u32 %v5989
        %v5991 = vextract.high.u32 %v5989
        %v5992 = vmul.u32.u64.compose %v5988, %v5983
        %v5993 = vextract.low.u32 %v5992
        %v5994 = vextract.high.u32 %v5992
        %v5995 = vmul.u32 %v5988, %v5979
        %v5996 = vadd.s32 %v5991, %v5993
        %vm5997 = vc.u32 %v5991, %v5993
        %v5998 = vadd.s32 %v5994, 1
        %v5999 = vsel %vm5997, %v5998, %v5994
        %v6000 = vadd.s32 %v5995, %v5999
        %v6001 = vadd.s32 %v6000, 536870912
        %v6002 = vshrl.u32 %v6001, 30
        %v6003 = vshll.u32 %v6002, 30
        %v6004 = vsub.s32 %v6000, %v6003
        %vm6005 = vcmp.lt.s32.totalorder %v6004, 0
        %v6006 = vsub.s32 0, %v6004
        %v6007 = vsel %vm6005, %v6006, %v6004
        %v6008 = vclz %v6007
        %v6009 = vsub.s32 %v6008, 2
        %vm6010 = vcmp.gt.s32.totalorder 0, %v6009
        %v6011 = vsel %vm6010, 0, %v6009
        %v6012 = vsub.s32 32, %v6011
        %v6013 = vshll.u32 %v6004, %v6011
        %v6014 = vshrl.u32 %v5996, %v6012
        %v6015 = vor.u32 %v6013, %v6014
        %v6016 = vsub.s32 4294967266, %v6011
        %v6017 = vadd.s32 %v6016, 127
        %v6018 = vshll.u32 %v6017, 23
        %v6019 = vor.u32 4788187, %v6018
        %v6020 = vand.u32 2147483647, %v6019
        %v6022 = vcvt.s32.f32 %v6015
        %v6023 = vmul.f32 %v6022, %v6020
        %v6024 = vxor.u32 %v6023, 2147483648
        %v6025 = vsel %vm5942, %v6024, %v6023
        %v6026 = vsub.s32 4, %v6002
        %v6027 = vsel %vm5942, %v6026, %v6002
        %v6028 = vsel %vm5941, %v4599, %v6025
        %v6029 = vsel %vm5941, 0, %v6027
        %v6030 = vcosq.f32.pop %v6028
        %v6031 = vsinq.f32.pop %v6028
        %vm6032 = vweird.f32 %v4599
        %v6033 = vadd.s32 %v6029, 3
        %v6034 = vand.u32 %v6033, 3
        %vm6035 = vcmp.lt.s32.totalorder %v6034, 2
        %vm6036 = vcmp.eq.s32.totalorder %v6034, 0
        %v6037 = vxor.u32 %v6031, 2147483648
        %v6038 = vsel %vm6036, %v6030, %v6037
        %vm6039 = vcmp.eq.s32.totalorder %v6034, 2
        %v6040 = vxor.u32 %v6030, 2147483648
        %v6041 = vsel %vm6039, %v6040, %v6031
        %v6042 = vsel %vm6035, %v6038, %v6041
        %v6043 = vsel %vm6032, nan, %v6042
        %v6044 = vand.u32 2147483647, %v4601
        %vm6045 = vcmp.le.f32.partialorder %v6044, 0.7853982
        %vm6046 = vcmp.lt.s32.totalorder %v4601, 0
        %v6047 = vand.u32 %v4601, 2139095040
        %v6048 = vshrl.u32 %v6047, 23
        %v6049 = vsub.s32 %v6048, 127
        %v6050 = vand.u32 2147483647, %v4601
        %v6051 = vand.u32 %v6050, 8388607
        %v6052 = vor.u32 %v6051, 8388608
        %v6053 = vsub.s32 0, %v6052
        %v6054 = vadd.s32 %v6049, 1
        %vm6055 = vcmp.gt.s32.totalorder %v6054, 0
        %v6056 = vsel %vm6055, %v6054, 0
        %v6057 = vshrl.u32 %v6056, 5
        %v6058 = vand.u32 %v6056, 31
        %v6059 = vsub.s32 32, %v6058
        %v6060 = vshrl.u32 683565275, %v6059
        %v6061 = vshll.u32 683565275, %v6058
        %v6062 = vshrl.u32 2475754826, %v6059
        %v6063 = vor.u32 %v6061, %v6062
        %v6064 = vshll.u32 2475754826, %v6058
        %v6065 = vshrl.u32 2131351028, %v6059
        %v6066 = vor.u32 %v6064, %v6065
        %v6067 = vshll.u32 2131351028, %v6058
        %v6068 = vshrl.u32 2102212464, %v6059
        %v6069 = vor.u32 %v6067, %v6068
        %v6070 = vshll.u32 2102212464, %v6058
        %v6071 = vshrl.u32 920167782, %v6059
        %v6072 = vor.u32 %v6070, %v6071
        %v6073 = vshll.u32 920167782, %v6058
        %v6074 = vshrl.u32 1326507024, %v6059
        %v6075 = vor.u32 %v6073, %v6074
        %vm6076 = vcmp.lt.s32.totalorder %v6057, 1
        %vm6077 = vcmp.lt.s32.totalorder %v6057, 2
        %vm6078 = vcmp.lt.s32.totalorder %v6057, 3
        %vm6079 = vcmp.lt.s32.totalorder %v6057, 4
        %v6080 = vsel %vm6076, %v6060, %v6063
        %v6081 = vsel %vm6079, %v6069, 2102212464
        %v6082 = vsel %vm6078, %v6066, %v6081
        %v6083 = vsel %vm6077, %v6080, %v6082
        %v6084 = vsel %vm6076, %v6063, %v6066
        %v6085 = vsel %vm6079, %v6072, 920167782
        %v6086 = vsel %vm6078, %v6069, %v6085
        %v6087 = vsel %vm6077, %v6084, %v6086
        %v6088 = vsel %vm6076, %v6066, %v6069
        %v6089 = vsel %vm6079, %v6075, 1326507024
        %v6090 = vsel %vm6078, %v6072, %v6089
        %v6091 = vsel %vm6077, %v6088, %v6090
        %v6092 = vshll.u32 %v6052, 8
        %v6093 = vmul.u32.u64.compose %v6092, %v6091
        %v6094 = vextract.low.u32 %v6093
        %v6095 = vextract.high.u32 %v6093
        %v6096 = vmul.u32.u64.compose %v6092, %v6087
        %v6097 = vextract.low.u32 %v6096
        %v6098 = vextract.high.u32 %v6096
        %v6099 = vmul.u32 %v6092, %v6083
        %v6100 = vadd.s32 %v6095, %v6097
        %vm6101 = vc.u32 %v6095, %v6097
        %v6102 = vadd.s32 %v6098, 1
        %v6103 = vsel %vm6101, %v6102, %v6098
        %v6104 = vadd.s32 %v6099, %v6103
        %v6105 = vadd.s32 %v6104, 536870912
        %v6106 = vshrl.u32 %v6105, 30
        %v6107 = vshll.u32 %v6106, 30
        %v6108 = vsub.s32 %v6104, %v6107
        %vm6109 = vcmp.lt.s32.totalorder %v6108, 0
        %v6110 = vsub.s32 0, %v6108
        %v6111 = vsel %vm6109, %v6110, %v6108
        %v6112 = vclz %v6111
        %v6113 = vsub.s32 %v6112, 2
        %vm6114 = vcmp.gt.s32.totalorder 0, %v6113
        %v6115 = vsel %vm6114, 0, %v6113
        %v6116 = vsub.s32 32, %v6115
        %v6117 = vshll.u32 %v6108, %v6115
        %v6118 = vshrl.u32 %v6100, %v6116
        %v6119 = vor.u32 %v6117, %v6118
        %v6120 = vsub.s32 4294967266, %v6115
        %v6121 = vadd.s32 %v6120, 127
        %v6122 = vshll.u32 %v6121, 23
        %v6123 = vor.u32 4788187, %v6122
        %v6124 = vand.u32 2147483647, %v6123
        %v6126 = vcvt.s32.f32 %v6119
        %v6127 = vmul.f32 %v6126, %v6124
        %v6128 = vxor.u32 %v6127, 2147483648
        %v6129 = vsel %vm6046, %v6128, %v6127
        %v6130 = vsub.s32 4, %v6106
        %v6131 = vsel %vm6046, %v6130, %v6106
        %v6132 = vsel %vm6045, %v4601, %v6129
        %v6133 = vsel %vm6045, 0, %v6131
        %v6134 = vcosq.f32.pop %v6132
        %v6135 = vsinq.f32.pop %v6132
        %vm6136 = vweird.f32 %v4601
        %v6137 = vadd.s32 %v6133, 3
        %v6138 = vand.u32 %v6137, 3
        %vm6139 = vcmp.lt.s32.totalorder %v6138, 2
        %vm6140 = vcmp.eq.s32.totalorder %v6138, 0
        %v6141 = vxor.u32 %v6135, 2147483648
        %v6142 = vsel %vm6140, %v6134, %v6141
        %vm6143 = vcmp.eq.s32.totalorder %v6138, 2
        %v6144 = vxor.u32 %v6134, 2147483648
        %v6145 = vsel %vm6143, %v6144, %v6135
        %v6146 = vsel %vm6139, %v6142, %v6145
        %v6147 = vsel %vm6136, nan, %v6146
        %v6148 = vand.u32 2147483647, %v4688
        %vm6149 = vcmp.le.f32.partialorder %v6148, 0.7853982
        %vm6150 = vcmp.lt.s32.totalorder %v4688, 0
        %v6151 = vand.u32 %v4688, 2139095040
        %v6152 = vshrl.u32 %v6151, 23
        %v6153 = vsub.s32 %v6152, 127
        %v6154 = vand.u32 2147483647, %v4688
        %v6155 = vand.u32 %v6154, 8388607
        %v6156 = vor.u32 %v6155, 8388608
        %v6157 = vsub.s32 0, %v6156
        %v6158 = vadd.s32 %v6153, 1
        %vm6159 = vcmp.gt.s32.totalorder %v6158, 0
        %v6160 = vsel %vm6159, %v6158, 0
        %v6161 = vshrl.u32 %v6160, 5
        %v6162 = vand.u32 %v6160, 31
        %v6163 = vsub.s32 32, %v6162
        %v6164 = vshrl.u32 683565275, %v6163
        %v6165 = vshll.u32 683565275, %v6162
        %v6166 = vshrl.u32 2475754826, %v6163
        %v6167 = vor.u32 %v6165, %v6166
        %v6168 = vshll.u32 2475754826, %v6162
        %v6169 = vshrl.u32 2131351028, %v6163
        %v6170 = vor.u32 %v6168, %v6169
        %v6171 = vshll.u32 2131351028, %v6162
        %v6172 = vshrl.u32 2102212464, %v6163
        %v6173 = vor.u32 %v6171, %v6172
        %v6174 = vshll.u32 2102212464, %v6162
        %v6175 = vshrl.u32 920167782, %v6163
        %v6176 = vor.u32 %v6174, %v6175
        %v6177 = vshll.u32 920167782, %v6162
        %v6178 = vshrl.u32 1326507024, %v6163
        %v6179 = vor.u32 %v6177, %v6178
        %vm6180 = vcmp.lt.s32.totalorder %v6161, 1
        %vm6181 = vcmp.lt.s32.totalorder %v6161, 2
        %vm6182 = vcmp.lt.s32.totalorder %v6161, 3
        %vm6183 = vcmp.lt.s32.totalorder %v6161, 4
        %v6184 = vsel %vm6180, %v6164, %v6167
        %v6185 = vsel %vm6183, %v6173, 2102212464
        %v6186 = vsel %vm6182, %v6170, %v6185
        %v6187 = vsel %vm6181, %v6184, %v6186
        %v6188 = vsel %vm6180, %v6167, %v6170
        %v6189 = vsel %vm6183, %v6176, 920167782
        %v6190 = vsel %vm6182, %v6173, %v6189
        %v6191 = vsel %vm6181, %v6188, %v6190
        %v6192 = vsel %vm6180, %v6170, %v6173
        %v6193 = vsel %vm6183, %v6179, 1326507024
        %v6194 = vsel %vm6182, %v6176, %v6193
        %v6195 = vsel %vm6181, %v6192, %v6194
        %v6196 = vshll.u32 %v6156, 8
        %v6197 = vmul.u32.u64.compose %v6196, %v6195
        %v6198 = vextract.low.u32 %v6197
        %v6199 = vextract.high.u32 %v6197
        %v6200 = vmul.u32.u64.compose %v6196, %v6191
        %v6201 = vextract.low.u32 %v6200
        %v6202 = vextract.high.u32 %v6200
        %v6203 = vmul.u32 %v6196, %v6187
        %v6204 = vadd.s32 %v6199, %v6201
        %vm6205 = vc.u32 %v6199, %v6201
        %v6206 = vadd.s32 %v6202, 1
        %v6207 = vsel %vm6205, %v6206, %v6202
        %v6208 = vadd.s32 %v6203, %v6207
        %v6209 = vadd.s32 %v6208, 536870912
        %v6210 = vshrl.u32 %v6209, 30
        %v6211 = vshll.u32 %v6210, 30
        %v6212 = vsub.s32 %v6208, %v6211
        %vm6213 = vcmp.lt.s32.totalorder %v6212, 0
        %v6214 = vsub.s32 0, %v6212
        %v6215 = vsel %vm6213, %v6214, %v6212
        %v6216 = vclz %v6215
        %v6217 = vsub.s32 %v6216, 2
        %vm6218 = vcmp.gt.s32.totalorder 0, %v6217
        %v6219 = vsel %vm6218, 0, %v6217
        %v6220 = vsub.s32 32, %v6219
        %v6221 = vshll.u32 %v6212, %v6219
        %v6222 = vshrl.u32 %v6204, %v6220
        %v6223 = vor.u32 %v6221, %v6222
        %v6224 = vsub.s32 4294967266, %v6219
        %v6225 = vadd.s32 %v6224, 127
        %v6226 = vshll.u32 %v6225, 23
        %v6227 = vor.u32 4788187, %v6226
        %v6228 = vand.u32 2147483647, %v6227
        %v6230 = vcvt.s32.f32 %v6223
        %v6231 = vmul.f32 %v6230, %v6228
        %v6232 = vxor.u32 %v6231, 2147483648
        %v6233 = vsel %vm6150, %v6232, %v6231
        %v6234 = vsub.s32 4, %v6210
        %v6235 = vsel %vm6150, %v6234, %v6210
        %v6236 = vsel %vm6149, %v4688, %v6233
        %v6237 = vsel %vm6149, 0, %v6235
        %v6238 = vcosq.f32.pop %v6236
        %v6239 = vsinq.f32.pop %v6236
        %vm6240 = vweird.f32 %v4688
        %v6241 = vadd.s32 %v6237, 3
        %v6242 = vand.u32 %v6241, 3
        %vm6243 = vcmp.lt.s32.totalorder %v6242, 2
        %vm6244 = vcmp.eq.s32.totalorder %v6242, 0
        %v6245 = vxor.u32 %v6239, 2147483648
        %v6246 = vsel %vm6244, %v6238, %v6245
        %vm6247 = vcmp.eq.s32.totalorder %v6242, 2
        %v6248 = vxor.u32 %v6238, 2147483648
        %v6249 = vsel %vm6247, %v6248, %v6239
        %v6250 = vsel %vm6243, %v6246, %v6249
        %v6251 = vsel %vm6240, nan, %v6250
        %v6252 = vand.u32 2147483647, %v4690
        %vm6253 = vcmp.le.f32.partialorder %v6252, 0.7853982
        %vm6254 = vcmp.lt.s32.totalorder %v4690, 0
        %v6255 = vand.u32 %v4690, 2139095040
        %v6256 = vshrl.u32 %v6255, 23
        %v6257 = vsub.s32 %v6256, 127
        %v6258 = vand.u32 2147483647, %v4690
        %v6259 = vand.u32 %v6258, 8388607
        %v6260 = vor.u32 %v6259, 8388608
        %v6261 = vsub.s32 0, %v6260
        %v6262 = vadd.s32 %v6257, 1
        %vm6263 = vcmp.gt.s32.totalorder %v6262, 0
        %v6264 = vsel %vm6263, %v6262, 0
        %v6265 = vshrl.u32 %v6264, 5
        %v6266 = vand.u32 %v6264, 31
        %v6267 = vsub.s32 32, %v6266
        %v6268 = vshrl.u32 683565275, %v6267
        %v6269 = vshll.u32 683565275, %v6266
        %v6270 = vshrl.u32 2475754826, %v6267
        %v6271 = vor.u32 %v6269, %v6270
        %v6272 = vshll.u32 2475754826, %v6266
        %v6273 = vshrl.u32 2131351028, %v6267
        %v6274 = vor.u32 %v6272, %v6273
        %v6275 = vshll.u32 2131351028, %v6266
        %v6276 = vshrl.u32 2102212464, %v6267
        %v6277 = vor.u32 %v6275, %v6276
        %v6278 = vshll.u32 2102212464, %v6266
        %v6279 = vshrl.u32 920167782, %v6267
        %v6280 = vor.u32 %v6278, %v6279
        %v6281 = vshll.u32 920167782, %v6266
        %v6282 = vshrl.u32 1326507024, %v6267
        %v6283 = vor.u32 %v6281, %v6282
        %vm6284 = vcmp.lt.s32.totalorder %v6265, 1
        %vm6285 = vcmp.lt.s32.totalorder %v6265, 2
        %vm6286 = vcmp.lt.s32.totalorder %v6265, 3
        %vm6287 = vcmp.lt.s32.totalorder %v6265, 4
        %v6288 = vsel %vm6284, %v6268, %v6271
        %v6289 = vsel %vm6287, %v6277, 2102212464
        %v6290 = vsel %vm6286, %v6274, %v6289
        %v6291 = vsel %vm6285, %v6288, %v6290
        %v6292 = vsel %vm6284, %v6271, %v6274
        %v6293 = vsel %vm6287, %v6280, 920167782
        %v6294 = vsel %vm6286, %v6277, %v6293
        %v6295 = vsel %vm6285, %v6292, %v6294
        %v6296 = vsel %vm6284, %v6274, %v6277
        %v6297 = vsel %vm6287, %v6283, 1326507024
        %v6298 = vsel %vm6286, %v6280, %v6297
        %v6299 = vsel %vm6285, %v6296, %v6298
        %v6300 = vshll.u32 %v6260, 8
        %v6301 = vmul.u32.u64.compose %v6300, %v6299
        %v6302 = vextract.low.u32 %v6301
        %v6303 = vextract.high.u32 %v6301
        %v6304 = vmul.u32.u64.compose %v6300, %v6295
        %v6305 = vextract.low.u32 %v6304
        %v6306 = vextract.high.u32 %v6304
        %v6307 = vmul.u32 %v6300, %v6291
        %v6308 = vadd.s32 %v6303, %v6305
        %vm6309 = vc.u32 %v6303, %v6305
        %v6310 = vadd.s32 %v6306, 1
        %v6311 = vsel %vm6309, %v6310, %v6306
        %v6312 = vadd.s32 %v6307, %v6311
        %v6313 = vadd.s32 %v6312, 536870912
        %v6314 = vshrl.u32 %v6313, 30
        %v6315 = vshll.u32 %v6314, 30
        %v6316 = vsub.s32 %v6312, %v6315
        %vm6317 = vcmp.lt.s32.totalorder %v6316, 0
        %v6318 = vsub.s32 0, %v6316
        %v6319 = vsel %vm6317, %v6318, %v6316
        %v6320 = vclz %v6319
        %v6321 = vsub.s32 %v6320, 2
        %vm6322 = vcmp.gt.s32.totalorder 0, %v6321
        %v6323 = vsel %vm6322, 0, %v6321
        %v6324 = vsub.s32 32, %v6323
        %v6325 = vshll.u32 %v6316, %v6323
        %v6326 = vshrl.u32 %v6308, %v6324
        %v6327 = vor.u32 %v6325, %v6326
        %v6328 = vsub.s32 4294967266, %v6323
        %v6329 = vadd.s32 %v6328, 127
        %v6330 = vshll.u32 %v6329, 23
        %v6331 = vor.u32 4788187, %v6330
        %v6332 = vand.u32 2147483647, %v6331
        %v6334 = vcvt.s32.f32 %v6327
        %v6335 = vmul.f32 %v6334, %v6332
        %v6336 = vxor.u32 %v6335, 2147483648
        %v6337 = vsel %vm6254, %v6336, %v6335
        %v6338 = vsub.s32 4, %v6314
        %v6339 = vsel %vm6254, %v6338, %v6314
        %v6340 = vsel %vm6253, %v4690, %v6337
        %v6341 = vsel %vm6253, 0, %v6339
        %v6342 = vcosq.f32.pop %v6340
        %v6343 = vsinq.f32.pop %v6340
        %vm6344 = vweird.f32 %v4690
        %v6345 = vadd.s32 %v6341, 3
        %v6346 = vand.u32 %v6345, 3
        %vm6347 = vcmp.lt.s32.totalorder %v6346, 2
        %vm6348 = vcmp.eq.s32.totalorder %v6346, 0
        %v6349 = vxor.u32 %v6343, 2147483648
        %v6350 = vsel %vm6348, %v6342, %v6349
        %vm6351 = vcmp.eq.s32.totalorder %v6346, 2
        %v6352 = vxor.u32 %v6342, 2147483648
        %v6353 = vsel %vm6351, %v6352, %v6343
        %v6354 = vsel %vm6347, %v6350, %v6353
        %v6355 = vsel %vm6344, nan, %v6354
        %s6356 = scalar_lea.vmem %s3, 32
        %v6357 = vld [vmem:[%s6356] sm:$0xff]
        %v6358 = vld [vmem:[%s6356 + $0x8] sm:$0xff]
        %v6359 = vld [vmem:[%s6356 + $0x10] sm:$0xff]
        %v6360 = vld [vmem:[%s6356 + $0x18] sm:$0xff]
        %s6361 = scalar_lea.vmem %s4, 32
        %v6362 = vld [vmem:[%s6361] sm:$0xff]
        %v6363 = vld [vmem:[%s6361 + $0x8] sm:$0xff]
        %v6364 = vld [vmem:[%s6361 + $0x10] sm:$0xff]
        %v6365 = vld [vmem:[%s6361 + $0x18] sm:$0xff]
        %6367 = vset.pattern.permute.xlu0 0
        %6368 = vperm.xlu0 %6367, %v6362
        %v6369 = vpop.permute.xlu0 %6368
        %6372 = vset.pattern.permute.xlu0 0
        %6373 = vperm.xlu0 %6372, %v6363
        %v6374 = vpop.permute.xlu0 %6373
        %6377 = vset.pattern.permute.xlu0 0
        %6378 = vperm.xlu0 %6377, %v6364
        %v6379 = vpop.permute.xlu0 %6378
        %6382 = vset.pattern.permute.xlu0 0
        %6383 = vperm.xlu0 %6382, %v6365
        %v6384 = vpop.permute.xlu0 %6383
        %v6387 = vsel %vm4103, %v6357, 0
        %v6390 = vsel %vm4103, %v6358, 0
        %v6393 = vsel %vm4103, %v6359, 0
        %v6396 = vsel %vm4103, %v6360, 0
        %6398 = vmatprep.subr.mxu0 %v4295
        %6399 = vmatpush1.msra.mxu0 %v4294
        %6400 = vmatprep.subr.mxu0 %v4299
        %6401 = vmatpush1.msra.mxu0 %v4298
        %6402 = vmatprep.subr.mxu0 %v4303
        %6403 = vmatpush1.msra.mxu0 %v4302
        %6404 = vmatprep.subr.mxu0 %v4307
        %6405 = vmatpush1.msra.mxu0 %v4306
        %6406 = vmatprep.subr.mxu0 0.0
        %6407 = vmatpush1.msra.mxu0 0.0
        %6408 = vmatprep.subr.mxu0 0.0
        %6409 = vmatpush1.msra.mxu0 0.0
        %6410 = vmatprep.subr.mxu0 0.0
        %6411 = vmatpush1.msra.mxu0 0.0
        %6412 = vmatprep.subr.mxu0 0.0
        %6413 = vmatpush1.msra.mxu0 0.0
        %6414 = vmatprep.subr.mxu0 0.0
        %6415 = vmatpush1.msra.mxu0 0.0
        %6416 = vmatprep.subr.mxu0 0.0
        %6417 = vmatpush1.msra.mxu0 0.0
        %6418 = vmatprep.subr.mxu0 0.0
        %6419 = vmatpush1.msra.mxu0 0.0
        %6420 = vmatprep.subr.mxu0 0.0
        %6421 = vmatpush1.msra.mxu0 0.0
        %6422 = vmatprep.subr.mxu0 0.0
        %6423 = vmatpush1.msra.mxu0 0.0
        %6424 = vmatprep.subr.mxu0 0.0
        %6425 = vmatpush1.msra.mxu0 0.0
        %6426 = vmatprep.subr.mxu0 0.0
        %6427 = vmatpush1.msra.mxu0 0.0
        %6428 = vmatprep.subr.mxu0 0.0
        %6429 = vmatpush1.msra.mxu0 0.0
        %6430 = vmatprep.subr.mxu0 0.0
        %6431 = vmatpush1.msra.mxu0 0.0
        %6432 = vmatprep.subr.mxu0 0.0
        %6433 = vmatpush1.msra.mxu0 0.0
        %6434 = vmatprep.subr.mxu0 0.0
        %6435 = vmatpush1.msra.mxu0 0.0
        %6436 = vmatprep.subr.mxu0 0.0
        %6437 = vmatpush1.msra.mxu0 0.0
        %6438 = vmatprep.subr.mxu0 0.0
        %6439 = vmatpush1.msra.mxu0 0.0
        %6440 = vmatprep.subr.mxu0 0.0
        %6441 = vmatpush1.msra.mxu0 0.0
        %6442 = vmatprep.subr.mxu0 0.0
        %6443 = vmatpush1.msra.mxu0 0.0
        %6444 = vmatprep.subr.mxu0 0.0
        %6445 = vmatpush1.msra.mxu0 0.0
        %6446 = vmatprep.subr.mxu0 0.0
        %6447 = vmatpush1.msra.mxu0 0.0
        %6448 = vmatprep.subr.mxu0 0.0
        %6449 = vmatpush1.msra.mxu0 0.0
        %6450 = vmatprep.subr.mxu0 0.0
        %6451 = vmatpush1.msra.mxu0 0.0
        %6452 = vmatprep.subr.mxu0 0.0
        %6453 = vmatpush1.msra.mxu0 0.0
        %6454 = vmatprep.subr.mxu0 0.0
        %6455 = vmatpush1.msra.mxu0 0.0
        %6456 = vmatprep.subr.mxu0 0.0
        %6457 = vmatpush1.msra.mxu0 0.0
        %6458 = vmatprep.subr.mxu0 0.0
        %6459 = vmatpush1.msra.mxu0 0.0
        %6460 = vmatprep.subr.mxu0 0.0
        %6461 = vmatpush1.msra.mxu0 0.0
        %6462 = vmatprep.mubr.f32.mxu0 0.0
        %6463 = vmatmul.mubr.f32.gmra.mrb[0].mxu0 %v6387
        %v6464 = vpop.f32.mrb[0].mxu0
        %v6465 = vadd.f32 %v6369, %v6464
        %v6466 = vpop.f32.mrb[0].mxu0
        %v6467 = vadd.f32 %v6369, %v6466
        %6468 = vmatprep.mubr.f32.mxu0 0.0
        %6469 = vmatmul.mubr.f32.gmra.mrb[0].mxu0 %v6390
        %v6470 = vpop.f32.mrb[0].mxu0
        %v6471 = vadd.f32 %v6374, %v6470
        %v6472 = vpop.f32.mrb[0].mxu0
        %v6473 = vadd.f32 %v6374, %v6472
        %6474 = vmatprep.mubr.f32.mxu0 0.0
        %6475 = vmatmul.mubr.f32.gmra.mrb[0].mxu0 %v6393
        %v6476 = vpop.f32.mrb[0].mxu0
        %v6477 = vadd.f32 %v6379, %v6476
        %v6478 = vpop.f32.mrb[0].mxu0
        %v6479 = vadd.f32 %v6379, %v6478
        %6480 = vmatprep.mubr.f32.mxu0 0.0
        %6481 = vmatmul.mubr.f32.gmra.mrb[0].mxu0 %v6396
        %v6482 = vpop.f32.mrb[0].mxu0
        %v6483 = vadd.f32 %v6384, %v6482
        %v6484 = vpop.f32.mrb[0].mxu0
        %v6485 = vadd.f32 %v6384, %v6484
        %6486 = vdwg.mxu0
        %6487 = vmatprep.subr.mxu0 %v4297
        %6488 = vmatpush1.msra.mxu0 %v4296
        %6489 = vmatprep.subr.mxu0 %v4301
        %6490 = vmatpush1.msra.mxu0 %v4300
        %6491 = vmatprep.subr.mxu0 %v4305
        %6492 = vmatpush1.msra.mxu0 %v4304
        %6493 = vmatprep.subr.mxu0 %v4309
        %6494 = vmatpush1.msra.mxu0 %v4308
        %6495 = vmatprep.subr.mxu0 0.0
        %6496 = vmatpush1.msra.mxu0 0.0
        %6497 = vmatprep.subr.mxu0 0.0
        %6498 = vmatpush1.msra.mxu0 0.0
        %6499 = vmatprep.subr.mxu0 0.0
        %6500 = vmatpush1.msra.mxu0 0.0
        %6501 = vmatprep.subr.mxu0 0.0
        %6502 = vmatpush1.msra.mxu0 0.0
        %6503 = vmatprep.subr.mxu0 0.0
        %6504 = vmatpush1.msra.mxu0 0.0
        %6505 = vmatprep.subr.mxu0 0.0
        %6506 = vmatpush1.msra.mxu0 0.0
        %6507 = vmatprep.subr.mxu0 0.0
        %6508 = vmatpush1.msra.mxu0 0.0
        %6509 = vmatprep.subr.mxu0 0.0
        %6510 = vmatpush1.msra.mxu0 0.0
        %6511 = vmatprep.subr.mxu0 0.0
        %6512 = vmatpush1.msra.mxu0 0.0
        %6513 = vmatprep.subr.mxu0 0.0
        %6514 = vmatpush1.msra.mxu0 0.0
        %6515 = vmatprep.subr.mxu0 0.0
        %6516 = vmatpush1.msra.mxu0 0.0
        %6517 = vmatprep.subr.mxu0 0.0
        %6518 = vmatpush1.msra.mxu0 0.0
        %6519 = vmatprep.subr.mxu0 0.0
        %6520 = vmatpush1.msra.mxu0 0.0
        %6521 = vmatprep.subr.mxu0 0.0
        %6522 = vmatpush1.msra.mxu0 0.0
        %6523 = vmatprep.subr.mxu0 0.0
        %6524 = vmatpush1.msra.mxu0 0.0
        %6525 = vmatprep.subr.mxu0 0.0
        %6526 = vmatpush1.msra.mxu0 0.0
        %6527 = vmatprep.subr.mxu0 0.0
        %6528 = vmatpush1.msra.mxu0 0.0
        %6529 = vmatprep.subr.mxu0 0.0
        %6530 = vmatpush1.msra.mxu0 0.0
        %6531 = vmatprep.subr.mxu0 0.0
        %6532 = vmatpush1.msra.mxu0 0.0
        %6533 = vmatprep.subr.mxu0 0.0
        %6534 = vmatpush1.msra.mxu0 0.0
        %6535 = vmatprep.subr.mxu0 0.0
        %6536 = vmatpush1.msra.mxu0 0.0
        %6537 = vmatprep.subr.mxu0 0.0
        %6538 = vmatpush1.msra.mxu0 0.0
        %6539 = vmatprep.subr.mxu0 0.0
        %6540 = vmatpush1.msra.mxu0 0.0
        %6541 = vmatprep.subr.mxu0 0.0
        %6542 = vmatpush1.msra.mxu0 0.0
        %6543 = vmatprep.subr.mxu0 0.0
        %6544 = vmatpush1.msra.mxu0 0.0
        %6545 = vmatprep.subr.mxu0 0.0
        %6546 = vmatpush1.msra.mxu0 0.0
        %6547 = vmatprep.subr.mxu0 0.0
        %6548 = vmatpush1.msra.mxu0 0.0
        %6549 = vmatprep.subr.mxu0 0.0
        %6550 = vmatpush1.msra.mxu0 0.0
        %6551 = vmatprep.mubr.f32.mxu0 0.0
        %6552 = vmatmul.mubr.f32.gmra.mrb[0].mxu0 %v6387
        %v6553 = vpop.f32.mrb[0].mxu0
        %v6554 = vadd.f32 %v6369, %v6553
        %v6555 = vpop.f32.mrb[0].mxu0
        %v6556 = vadd.f32 %v6369, %v6555
        %6557 = vmatprep.mubr.f32.mxu0 0.0
        %6558 = vmatmul.mubr.f32.gmra.mrb[0].mxu0 %v6390
        %v6559 = vpop.f32.mrb[0].mxu0
        %v6560 = vadd.f32 %v6374, %v6559
        %v6561 = vpop.f32.mrb[0].mxu0
        %v6562 = vadd.f32 %v6374, %v6561
        %6563 = vmatprep.mubr.f32.mxu0 0.0
        %6564 = vmatmul.mubr.f32.gmra.mrb[0].mxu0 %v6393
        %v6565 = vpop.f32.mrb[0].mxu0
        %v6566 = vadd.f32 %v6379, %v6565
        %v6567 = vpop.f32.mrb[0].mxu0
        %v6568 = vadd.f32 %v6379, %v6567
        %6569 = vmatprep.mubr.f32.mxu0 0.0
        %6570 = vmatmul.mubr.f32.gmra.mrb[0].mxu0 %v6396
        %v6571 = vpop.f32.mrb[0].mxu0
        %v6572 = vadd.f32 %v6384, %v6571
        %v6573 = vpop.f32.mrb[0].mxu0
        %v6574 = vadd.f32 %v6384, %v6573
        %6575 = vdwg.mxu0
        %v6576 = vmul.f32 %v4795, %v6465
        %v6577 = vmul.f32 %v4899, %v6467
        %v6578 = vmul.f32 %v5003, %v6554
        %v6579 = vmul.f32 %v5107, %v6556
        %v6580 = vmul.f32 %v5211, %v6471
        %v6581 = vmul.f32 %v5315, %v6473
        %v6582 = vmul.f32 %v5419, %v6560
        %v6583 = vmul.f32 %v5523, %v6562
        %v6584 = vmul.f32 %v5627, %v6477
        %v6585 = vmul.f32 %v5731, %v6479
        %v6586 = vmul.f32 %v5835, %v6566
        %v6587 = vmul.f32 %v5939, %v6568
        %v6588 = vmul.f32 %v6043, %v6483
        %v6589 = vmul.f32 %v6147, %v6485
        %v6590 = vmul.f32 %v6251, %v6572
        %v6591 = vmul.f32 %v6355, %v6574
        %s6592 = scalar_lea.vmem %s5, 4
        %v6593 = vld [vmem:[%s6592] sm:$0x7]
        %s6594 = scalar_lea.vmem %s6, 4
        %v6595 = vld [vmem:[%s6594] sm:$0x7]
        %6597 = vset.pattern.permute.xlu0 0
        %6598 = vperm.xlu0 %6597, %v6595
        %v6599 = vpop.permute.xlu0 %6598
        %v6602 = vsel %vm4103, %v6593, 0
        %6604 = vmatprep.subr.mxu0 %v6577
        %6605 = vmatpush1.msra.mxu0 %v6576
        %6606 = vmatprep.subr.mxu0 %v6581
        %6607 = vmatpush1.msra.mxu0 %v6580
        %6608 = vmatprep.subr.mxu0 %v6585
        %6609 = vmatpush1.msra.mxu0 %v6584
        %6610 = vmatprep.subr.mxu0 %v6589
        %6611 = vmatpush1.msra.mxu0 %v6588
        %6612 = vmatprep.subr.mxu0 0.0
        %6613 = vmatpush1.msra.mxu0 0.0
        %6614 = vmatprep.subr.mxu0 0.0
        %6615 = vmatpush1.msra.mxu0 0.0
        %6616 = vmatprep.subr.mxu0 0.0
        %6617 = vmatpush1.msra.mxu0 0.0
        %6618 = vmatprep.subr.mxu0 0.0
        %6619 = vmatpush1.msra.mxu0 0.0
        %6620 = vmatprep.subr.mxu0 0.0
        %6621 = vmatpush1.msra.mxu0 0.0
        %6622 = vmatprep.subr.mxu0 0.0
        %6623 = vmatpush1.msra.mxu0 0.0
        %6624 = vmatprep.subr.mxu0 0.0
        %6625 = vmatpush1.msra.mxu0 0.0
        %6626 = vmatprep.subr.mxu0 0.0
        %6627 = vmatpush1.msra.mxu0 0.0
        %6628 = vmatprep.subr.mxu0 0.0
        %6629 = vmatpush1.msra.mxu0 0.0
        %6630 = vmatprep.subr.mxu0 0.0
        %6631 = vmatpush1.msra.mxu0 0.0
        %6632 = vmatprep.subr.mxu0 0.0
        %6633 = vmatpush1.msra.mxu0 0.0
        %6634 = vmatprep.subr.mxu0 0.0
        %6635 = vmatpush1.msra.mxu0 0.0
        %6636 = vmatprep.subr.mxu0 0.0
        %6637 = vmatpush1.msra.mxu0 0.0
        %6638 = vmatprep.subr.mxu0 0.0
        %6639 = vmatpush1.msra.mxu0 0.0
        %6640 = vmatprep.subr.mxu0 0.0
        %6641 = vmatpush1.msra.mxu0 0.0
        %6642 = vmatprep.subr.mxu0 0.0
        %6643 = vmatpush1.msra.mxu0 0.0
        %6644 = vmatprep.subr.mxu0 0.0
        %6645 = vmatpush1.msra.mxu0 0.0
        %6646 = vmatprep.subr.mxu0 0.0
        %6647 = vmatpush1.msra.mxu0 0.0
        %6648 = vmatprep.subr.mxu0 0.0
        %6649 = vmatpush1.msra.mxu0 0.0
        %6650 = vmatprep.subr.mxu0 0.0
        %6651 = vmatpush1.msra.mxu0 0.0
        %6652 = vmatprep.subr.mxu0 0.0
        %6653 = vmatpush1.msra.mxu0 0.0
        %6654 = vmatprep.subr.mxu0 0.0
        %6655 = vmatpush1.msra.mxu0 0.0
        %6656 = vmatprep.subr.mxu0 0.0
        %6657 = vmatpush1.msra.mxu0 0.0
        %6658 = vmatprep.subr.mxu0 0.0
        %6659 = vmatpush1.msra.mxu0 0.0
        %6660 = vmatprep.subr.mxu0 0.0
        %6661 = vmatpush1.msra.mxu0 0.0
        %6662 = vmatprep.subr.mxu0 0.0
        %6663 = vmatpush1.msra.mxu0 0.0
        %6664 = vmatprep.subr.mxu0 0.0
        %6665 = vmatpush1.msra.mxu0 0.0
        %6666 = vmatprep.subr.mxu0 0.0
        %6667 = vmatpush1.msra.mxu0 0.0
        %6668 = vmatprep.mubr.f32.mxu0 0.0
        %6669 = vmatmul.mubr.f32.gmra.mrb[0].mxu0 %v6602
        %v6670 = vpop.f32.mrb[0].mxu0
        %v6671 = vadd.f32 %v6599, %v6670
        %v6672 = vpop.f32.mrb[0].mxu0
        %v6673 = vadd.f32 %v6599, %v6672
        %6674 = vdwg.mxu0
        %6675 = vmatprep.subr.mxu0 %v6579
        %6676 = vmatpush1.msra.mxu0 %v6578
        %6677 = vmatprep.subr.mxu0 %v6583
        %6678 = vmatpush1.msra.mxu0 %v6582
        %6679 = vmatprep.subr.mxu0 %v6587
        %6680 = vmatpush1.msra.mxu0 %v6586
        %6681 = vmatprep.subr.mxu0 %v6591
        %6682 = vmatpush1.msra.mxu0 %v6590
        %6683 = vmatprep.subr.mxu0 0.0
        %6684 = vmatpush1.msra.mxu0 0.0
        %6685 = vmatprep.subr.mxu0 0.0
        %6686 = vmatpush1.msra.mxu0 0.0
        %6687 = vmatprep.subr.mxu0 0.0
        %6688 = vmatpush1.msra.mxu0 0.0
        %6689 = vmatprep.subr.mxu0 0.0
        %6690 = vmatpush1.msra.mxu0 0.0
        %6691 = vmatprep.subr.mxu0 0.0
        %6692 = vmatpush1.msra.mxu0 0.0
        %6693 = vmatprep.subr.mxu0 0.0
        %6694 = vmatpush1.msra.mxu0 0.0
        %6695 = vmatprep.subr.mxu0 0.0
        %6696 = vmatpush1.msra.mxu0 0.0
        %6697 = vmatprep.subr.mxu0 0.0
        %6698 = vmatpush1.msra.mxu0 0.0
        %6699 = vmatprep.subr.mxu0 0.0
        %6700 = vmatpush1.msra.mxu0 0.0
        %6701 = vmatprep.subr.mxu0 0.0
        %6702 = vmatpush1.msra.mxu0 0.0
        %6703 = vmatprep.subr.mxu0 0.0
        %6704 = vmatpush1.msra.mxu0 0.0
        %6705 = vmatprep.subr.mxu0 0.0
        %6706 = vmatpush1.msra.mxu0 0.0
        %6707 = vmatprep.subr.mxu0 0.0
        %6708 = vmatpush1.msra.mxu0 0.0
        %6709 = vmatprep.subr.mxu0 0.0
        %6710 = vmatpush1.msra.mxu0 0.0
        %6711 = vmatprep.subr.mxu0 0.0
        %6712 = vmatpush1.msra.mxu0 0.0
        %6713 = vmatprep.subr.mxu0 0.0
        %6714 = vmatpush1.msra.mxu0 0.0
        %6715 = vmatprep.subr.mxu0 0.0
        %6716 = vmatpush1.msra.mxu0 0.0
        %6717 = vmatprep.subr.mxu0 0.0
        %6718 = vmatpush1.msra.mxu0 0.0
        %6719 = vmatprep.subr.mxu0 0.0
        %6720 = vmatpush1.msra.mxu0 0.0
        %6721 = vmatprep.subr.mxu0 0.0
        %6722 = vmatpush1.msra.mxu0 0.0
        %6723 = vmatprep.subr.mxu0 0.0
        %6724 = vmatpush1.msra.mxu0 0.0
        %6725 = vmatprep.subr.mxu0 0.0
        %6726 = vmatpush1.msra.mxu0 0.0
        %6727 = vmatprep.subr.mxu0 0.0
        %6728 = vmatpush1.msra.mxu0 0.0
        %6729 = vmatprep.subr.mxu0 0.0
        %6730 = vmatpush1.msra.mxu0 0.0
        %6731 = vmatprep.subr.mxu0 0.0
        %6732 = vmatpush1.msra.mxu0 0.0
        %6733 = vmatprep.subr.mxu0 0.0
        %6734 = vmatpush1.msra.mxu0 0.0
        %6735 = vmatprep.subr.mxu0 0.0
        %6736 = vmatpush1.msra.mxu0 0.0
        %6737 = vmatprep.subr.mxu0 0.0
        %6738 = vmatpush1.msra.mxu0 0.0
        %6739 = vmatprep.mubr.f32.mxu0 0.0
        %6740 = vmatmul.mubr.f32.gmra.mrb[0].mxu0 %v6602
        %v6741 = vpop.f32.mrb[0].mxu0
        %v6742 = vadd.f32 %v6599, %v6741
        %v6743 = vpop.f32.mrb[0].mxu0
        %v6744 = vadd.f32 %v6599, %v6743
        %6745 = vdwg.mxu0
        %v6750 = vcombine.low %v6671, %v6673
        %v6751 = vcombine.low %v6742, %v6744
        %s6754 = scalar_lea.vmem %s272, 16 [#allocation2]
        %6755 = vst [vmem:[%s6754] sm:$0x77] %v6750
        %6756 = vst [vmem:[%s6754 + $0x8] sm:$0x77] %v6751
        %s6757 = scalar_lea.vmem %s1, 96
        %v6758 = vld [vmem:[%s6757] sm:$0xff]
        %v6759 = vld [vmem:[%s6757 + $0x8] sm:$0xff]
        %v6760 = vld [vmem:[%s6757 + $0x10] sm:$0xff]
        %v6761 = vld [vmem:[%s6757 + $0x18] sm:$0xff]
        %s6762 = scalar_lea.vmem %s2, 96
        %v6763 = vld [vmem:[%s6762] sm:$0xff]
        %v6764 = vld [vmem:[%s6762 + $0x8] sm:$0xff]
        %v6765 = vld [vmem:[%s6762 + $0x10] sm:$0xff]
        %v6766 = vld [vmem:[%s6762 + $0x18] sm:$0xff]
        %6768 = vset.pattern.permute.xlu0 0
        %6769 = vperm.xlu0 %6768, %v6763
        %v6770 = vpop.permute.xlu0 %6769
        %6773 = vset.pattern.permute.xlu0 0
        %6774 = vperm.xlu0 %6773, %v6764
        %v6775 = vpop.permute.xlu0 %6774
        %6778 = vset.pattern.permute.xlu0 0
        %6779 = vperm.xlu0 %6778, %v6765
        %v6780 = vpop.permute.xlu0 %6779
        %6783 = vset.pattern.permute.xlu0 0
        %6784 = vperm.xlu0 %6783, %v6766
        %v6785 = vpop.permute.xlu0 %6784
        %v6788 = vsel %vm327, %v6758, 0
        %v6791 = vsel %vm327, %v6759, 0
        %v6794 = vsel %vm327, %v6760, 0
        %v6797 = vsel %vm327, %v6761, 0
        %6799 = vmatprep.subr.mxu0 %v343
        %6800 = vmatpush1.msra.mxu0 %v341
        %6801 = vmatprep.subr.mxu0 0.0
        %6802 = vmatpush1.msra.mxu0 0.0
        %6803 = vmatprep.subr.mxu0 0.0
        %6804 = vmatpush1.msra.mxu0 0.0
        %6805 = vmatprep.subr.mxu0 0.0
        %6806 = vmatpush1.msra.mxu0 0.0
        %6807 = vmatprep.subr.mxu0 0.0
        %6808 = vmatpush1.msra.mxu0 0.0
        %6809 = vmatprep.subr.mxu0 0.0
        %6810 = vmatpush1.msra.mxu0 0.0
        %6811 = vmatprep.subr.mxu0 0.0
        %6812 = vmatpush1.msra.mxu0 0.0
        %6813 = vmatprep.subr.mxu0 0.0
        %6814 = vmatpush1.msra.mxu0 0.0
        %6815 = vmatprep.subr.mxu0 0.0
        %6816 = vmatpush1.msra.mxu0 0.0
        %6817 = vmatprep.subr.mxu0 0.0
        %6818 = vmatpush1.msra.mxu0 0.0
        %6819 = vmatprep.subr.mxu0 0.0
        %6820 = vmatpush1.msra.mxu0 0.0
        %6821 = vmatprep.subr.mxu0 0.0
        %6822 = vmatpush1.msra.mxu0 0.0
        %6823 = vmatprep.subr.mxu0 0.0
        %6824 = vmatpush1.msra.mxu0 0.0
        %6825 = vmatprep.subr.mxu0 0.0
        %6826 = vmatpush1.msra.mxu0 0.0
        %6827 = vmatprep.subr.mxu0 0.0
        %6828 = vmatpush1.msra.mxu0 0.0
        %6829 = vmatprep.subr.mxu0 0.0
        %6830 = vmatpush1.msra.mxu0 0.0
        %6831 = vmatprep.subr.mxu0 0.0
        %6832 = vmatpush1.msra.mxu0 0.0
        %6833 = vmatprep.subr.mxu0 0.0
        %6834 = vmatpush1.msra.mxu0 0.0
        %6835 = vmatprep.subr.mxu0 0.0
        %6836 = vmatpush1.msra.mxu0 0.0
        %6837 = vmatprep.subr.mxu0 0.0
        %6838 = vmatpush1.msra.mxu0 0.0
        %6839 = vmatprep.subr.mxu0 0.0
        %6840 = vmatpush1.msra.mxu0 0.0
        %6841 = vmatprep.subr.mxu0 0.0
        %6842 = vmatpush1.msra.mxu0 0.0
        %6843 = vmatprep.subr.mxu0 0.0
        %6844 = vmatpush1.msra.mxu0 0.0
        %6845 = vmatprep.subr.mxu0 0.0
        %6846 = vmatpush1.msra.mxu0 0.0
        %6847 = vmatprep.subr.mxu0 0.0
        %6848 = vmatpush1.msra.mxu0 0.0
        %6849 = vmatprep.subr.mxu0 0.0
        %6850 = vmatpush1.msra.mxu0 0.0
        %6851 = vmatprep.subr.mxu0 0.0
        %6852 = vmatpush1.msra.mxu0 0.0
        %6853 = vmatprep.subr.mxu0 0.0
        %6854 = vmatpush1.msra.mxu0 0.0
        %6855 = vmatprep.subr.mxu0 0.0
        %6856 = vmatpush1.msra.mxu0 0.0
        %6857 = vmatprep.subr.mxu0 0.0
        %6858 = vmatpush1.msra.mxu0 0.0
        %6859 = vmatprep.subr.mxu0 0.0
        %6860 = vmatpush1.msra.mxu0 0.0
        %6861 = vmatprep.subr.mxu0 0.0
        %6862 = vmatpush1.msra.mxu0 0.0
        %6863 = vmatprep.mubr.f32.mxu0 0.0
        %6864 = vmatmul.mubr.f32.gmra.mrb[0].mxu0 %v6788
        %v6865 = vpop.f32.mrb[0].mxu0
        %v6866 = vadd.f32 %v6770, %v6865
        %v6867 = vpop.f32.mrb[0].mxu0
        %v6868 = vadd.f32 %v6770, %v6867
        %6869 = vmatprep.mubr.f32.mxu0 0.0
        %6870 = vmatmul.mubr.f32.gmra.mrb[0].mxu0 %v6791
        %v6871 = vpop.f32.mrb[0].mxu0
        %v6872 = vadd.f32 %v6775, %v6871
        %v6873 = vpop.f32.mrb[0].mxu0
        %v6874 = vadd.f32 %v6775, %v6873
        %6875 = vmatprep.mubr.f32.mxu0 0.0
        %6876 = vmatmul.mubr.f32.gmra.mrb[0].mxu0 %v6794
        %v6877 = vpop.f32.mrb[0].mxu0
        %v6878 = vadd.f32 %v6780, %v6877
        %v6879 = vpop.f32.mrb[0].mxu0
        %v6880 = vadd.f32 %v6780, %v6879
        %6881 = vmatprep.mubr.f32.mxu0 0.0
        %6882 = vmatmul.mubr.f32.gmra.mrb[0].mxu0 %v6797
        %v6883 = vpop.f32.mrb[0].mxu0
        %v6884 = vadd.f32 %v6785, %v6883
        %v6885 = vpop.f32.mrb[0].mxu0
        %v6886 = vadd.f32 %v6785, %v6885
        %6887 = vdwg.mxu0
        %6888 = vmatprep.subr.mxu0 %v347
        %6889 = vmatpush1.msra.mxu0 %v345
        %6890 = vmatprep.subr.mxu0 0.0
        %6891 = vmatpush1.msra.mxu0 0.0
        %6892 = vmatprep.subr.mxu0 0.0
        %6893 = vmatpush1.msra.mxu0 0.0
        %6894 = vmatprep.subr.mxu0 0.0
        %6895 = vmatpush1.msra.mxu0 0.0
        %6896 = vmatprep.subr.mxu0 0.0
        %6897 = vmatpush1.msra.mxu0 0.0
        %6898 = vmatprep.subr.mxu0 0.0
        %6899 = vmatpush1.msra.mxu0 0.0
        %6900 = vmatprep.subr.mxu0 0.0
        %6901 = vmatpush1.msra.mxu0 0.0
        %6902 = vmatprep.subr.mxu0 0.0
        %6903 = vmatpush1.msra.mxu0 0.0
        %6904 = vmatprep.subr.mxu0 0.0
        %6905 = vmatpush1.msra.mxu0 0.0
        %6906 = vmatprep.subr.mxu0 0.0
        %6907 = vmatpush1.msra.mxu0 0.0
        %6908 = vmatprep.subr.mxu0 0.0
        %6909 = vmatpush1.msra.mxu0 0.0
        %6910 = vmatprep.subr.mxu0 0.0
        %6911 = vmatpush1.msra.mxu0 0.0
        %6912 = vmatprep.subr.mxu0 0.0
        %6913 = vmatpush1.msra.mxu0 0.0
        %6914 = vmatprep.subr.mxu0 0.0
        %6915 = vmatpush1.msra.mxu0 0.0
        %6916 = vmatprep.subr.mxu0 0.0
        %6917 = vmatpush1.msra.mxu0 0.0
        %6918 = vmatprep.subr.mxu0 0.0
        %6919 = vmatpush1.msra.mxu0 0.0
        %6920 = vmatprep.subr.mxu0 0.0
        %6921 = vmatpush1.msra.mxu0 0.0
        %6922 = vmatprep.subr.mxu0 0.0
        %6923 = vmatpush1.msra.mxu0 0.0
        %6924 = vmatprep.subr.mxu0 0.0
        %6925 = vmatpush1.msra.mxu0 0.0
        %6926 = vmatprep.subr.mxu0 0.0
        %6927 = vmatpush1.msra.mxu0 0.0
        %6928 = vmatprep.subr.mxu0 0.0
        %6929 = vmatpush1.msra.mxu0 0.0
        %6930 = vmatprep.subr.mxu0 0.0
        %6931 = vmatpush1.msra.mxu0 0.0
        %6932 = vmatprep.subr.mxu0 0.0
        %6933 = vmatpush1.msra.mxu0 0.0
        %6934 = vmatprep.subr.mxu0 0.0
        %6935 = vmatpush1.msra.mxu0 0.0
        %6936 = vmatprep.subr.mxu0 0.0
        %6937 = vmatpush1.msra.mxu0 0.0
        %6938 = vmatprep.subr.mxu0 0.0
        %6939 = vmatpush1.msra.mxu0 0.0
        %6940 = vmatprep.subr.mxu0 0.0
        %6941 = vmatpush1.msra.mxu0 0.0
        %6942 = vmatprep.subr.mxu0 0.0
        %6943 = vmatpush1.msra.mxu0 0.0
        %6944 = vmatprep.subr.mxu0 0.0
        %6945 = vmatpush1.msra.mxu0 0.0
        %6946 = vmatprep.subr.mxu0 0.0
        %6947 = vmatpush1.msra.mxu0 0.0
        %6948 = vmatprep.subr.mxu0 0.0
        %6949 = vmatpush1.msra.mxu0 0.0
        %6950 = vmatprep.subr.mxu0 0.0
        %6951 = vmatpush1.msra.mxu0 0.0
        %6952 = vmatprep.mubr.f32.mxu0 0.0
        %6953 = vmatmul.mubr.f32.gmra.mrb[0].mxu0 %v6788
        %v6954 = vpop.f32.mrb[0].mxu0
        %v6955 = vadd.f32 %v6770, %v6954
        %v6956 = vpop.f32.mrb[0].mxu0
        %v6957 = vadd.f32 %v6770, %v6956
        %6958 = vmatprep.mubr.f32.mxu0 0.0
        %6959 = vmatmul.mubr.f32.gmra.mrb[0].mxu0 %v6791
        %v6960 = vpop.f32.mrb[0].mxu0
        %v6961 = vadd.f32 %v6775, %v6960
        %v6962 = vpop.f32.mrb[0].mxu0
        %v6963 = vadd.f32 %v6775, %v6962
        %6964 = vmatprep.mubr.f32.mxu0 0.0
        %6965 = vmatmul.mubr.f32.gmra.mrb[0].mxu0 %v6794
        %v6966 = vpop.f32.mrb[0].mxu0
        %v6967 = vadd.f32 %v6780, %v6966
        %v6968 = vpop.f32.mrb[0].mxu0
        %v6969 = vadd.f32 %v6780, %v6968
        %6970 = vmatprep.mubr.f32.mxu0 0.0
        %6971 = vmatmul.mubr.f32.gmra.mrb[0].mxu0 %v6797
        %v6972 = vpop.f32.mrb[0].mxu0
        %v6973 = vadd.f32 %v6785, %v6972
        %v6974 = vpop.f32.mrb[0].mxu0
        %v6975 = vadd.f32 %v6785, %v6974
        %6976 = vdwg.mxu0
        %v6977 = vand.u32 2147483647, %v6866
        %vm6978 = vcmp.le.f32.partialorder %v6977, 0.7853982
        %vm6979 = vcmp.lt.s32.totalorder %v6866, 0
        %v6980 = vand.u32 %v6866, 2139095040
        %v6981 = vshrl.u32 %v6980, 23
        %v6982 = vsub.s32 %v6981, 127
        %v6983 = vand.u32 2147483647, %v6866
        %v6984 = vand.u32 %v6983, 8388607
        %v6985 = vor.u32 %v6984, 8388608
        %v6986 = vsub.s32 0, %v6985
        %v6987 = vadd.s32 %v6982, 1
        %vm6988 = vcmp.gt.s32.totalorder %v6987, 0
        %v6989 = vsel %vm6988, %v6987, 0
        %v6990 = vshrl.u32 %v6989, 5
        %v6991 = vand.u32 %v6989, 31
        %v6992 = vsub.s32 32, %v6991
        %v6993 = vshrl.u32 683565275, %v6992
        %v6994 = vshll.u32 683565275, %v6991
        %v6995 = vshrl.u32 2475754826, %v6992
        %v6996 = vor.u32 %v6994, %v6995
        %v6997 = vshll.u32 2475754826, %v6991
        %v6998 = vshrl.u32 2131351028, %v6992
        %v6999 = vor.u32 %v6997, %v6998
        %v7000 = vshll.u32 2131351028, %v6991
        %v7001 = vshrl.u32 2102212464, %v6992
        %v7002 = vor.u32 %v7000, %v7001
        %v7003 = vshll.u32 2102212464, %v6991
        %v7004 = vshrl.u32 920167782, %v6992
        %v7005 = vor.u32 %v7003, %v7004
        %v7006 = vshll.u32 920167782, %v6991
        %v7007 = vshrl.u32 1326507024, %v6992
        %v7008 = vor.u32 %v7006, %v7007
        %vm7009 = vcmp.lt.s32.totalorder %v6990, 1
        %vm7010 = vcmp.lt.s32.totalorder %v6990, 2
        %vm7011 = vcmp.lt.s32.totalorder %v6990, 3
        %vm7012 = vcmp.lt.s32.totalorder %v6990, 4
        %v7013 = vsel %vm7009, %v6993, %v6996
        %v7014 = vsel %vm7012, %v7002, 2102212464
        %v7015 = vsel %vm7011, %v6999, %v7014
        %v7016 = vsel %vm7010, %v7013, %v7015
        %v7017 = vsel %vm7009, %v6996, %v6999
        %v7018 = vsel %vm7012, %v7005, 920167782
        %v7019 = vsel %vm7011, %v7002, %v7018
        %v7020 = vsel %vm7010, %v7017, %v7019
        %v7021 = vsel %vm7009, %v6999, %v7002
        %v7022 = vsel %vm7012, %v7008, 1326507024
        %v7023 = vsel %vm7011, %v7005, %v7022
        %v7024 = vsel %vm7010, %v7021, %v7023
        %v7025 = vshll.u32 %v6985, 8
        %v7026 = vmul.u32.u64.compose %v7025, %v7024
        %v7027 = vextract.low.u32 %v7026
        %v7028 = vextract.high.u32 %v7026
        %v7029 = vmul.u32.u64.compose %v7025, %v7020
        %v7030 = vextract.low.u32 %v7029
        %v7031 = vextract.high.u32 %v7029
        %v7032 = vmul.u32 %v7025, %v7016
        %v7033 = vadd.s32 %v7028, %v7030
        %vm7034 = vc.u32 %v7028, %v7030
        %v7035 = vadd.s32 %v7031, 1
        %v7036 = vsel %vm7034, %v7035, %v7031
        %v7037 = vadd.s32 %v7032, %v7036
        %v7038 = vadd.s32 %v7037, 536870912
        %v7039 = vshrl.u32 %v7038, 30
        %v7040 = vshll.u32 %v7039, 30
        %v7041 = vsub.s32 %v7037, %v7040
        %vm7042 = vcmp.lt.s32.totalorder %v7041, 0
        %v7043 = vsub.s32 0, %v7041
        %v7044 = vsel %vm7042, %v7043, %v7041
        %v7045 = vclz %v7044
        %v7046 = vsub.s32 %v7045, 2
        %vm7047 = vcmp.gt.s32.totalorder 0, %v7046
        %v7048 = vsel %vm7047, 0, %v7046
        %v7049 = vsub.s32 32, %v7048
        %v7050 = vshll.u32 %v7041, %v7048
        %v7051 = vshrl.u32 %v7033, %v7049
        %v7052 = vor.u32 %v7050, %v7051
        %v7053 = vsub.s32 4294967266, %v7048
        %v7054 = vadd.s32 %v7053, 127
        %v7055 = vshll.u32 %v7054, 23
        %v7056 = vor.u32 4788187, %v7055
        %v7057 = vand.u32 2147483647, %v7056
        %v7059 = vcvt.s32.f32 %v7052
        %v7060 = vmul.f32 %v7059, %v7057
        %v7061 = vxor.u32 %v7060, 2147483648
        %v7062 = vsel %vm6979, %v7061, %v7060
        %v7063 = vsub.s32 4, %v7039
        %v7064 = vsel %vm6979, %v7063, %v7039
        %v7065 = vsel %vm6978, %v6866, %v7062
        %v7066 = vsel %vm6978, 0, %v7064
        %v7067 = vcosq.f32.pop %v7065
        %v7068 = vsinq.f32.pop %v7065
        %vm7069 = vweird.f32 %v6866
        %v7070 = vadd.s32 %v7066, 3
        %v7071 = vand.u32 %v7070, 3
        %vm7072 = vcmp.lt.s32.totalorder %v7071, 2
        %vm7073 = vcmp.eq.s32.totalorder %v7071, 0
        %v7074 = vxor.u32 %v7068, 2147483648
        %v7075 = vsel %vm7073, %v7067, %v7074
        %vm7076 = vcmp.eq.s32.totalorder %v7071, 2
        %v7077 = vxor.u32 %v7067, 2147483648
        %v7078 = vsel %vm7076, %v7077, %v7068
        %v7079 = vsel %vm7072, %v7075, %v7078
        %v7080 = vsel %vm7069, nan, %v7079
        %v7081 = vand.u32 2147483647, %v6868
        %vm7082 = vcmp.le.f32.partialorder %v7081, 0.7853982
        %vm7083 = vcmp.lt.s32.totalorder %v6868, 0
        %v7084 = vand.u32 %v6868, 2139095040
        %v7085 = vshrl.u32 %v7084, 23
        %v7086 = vsub.s32 %v7085, 127
        %v7087 = vand.u32 2147483647, %v6868
        %v7088 = vand.u32 %v7087, 8388607
        %v7089 = vor.u32 %v7088, 8388608
        %v7090 = vsub.s32 0, %v7089
        %v7091 = vadd.s32 %v7086, 1
        %vm7092 = vcmp.gt.s32.totalorder %v7091, 0
        %v7093 = vsel %vm7092, %v7091, 0
        %v7094 = vshrl.u32 %v7093, 5
        %v7095 = vand.u32 %v7093, 31
        %v7096 = vsub.s32 32, %v7095
        %v7097 = vshrl.u32 683565275, %v7096
        %v7098 = vshll.u32 683565275, %v7095
        %v7099 = vshrl.u32 2475754826, %v7096
        %v7100 = vor.u32 %v7098, %v7099
        %v7101 = vshll.u32 2475754826, %v7095
        %v7102 = vshrl.u32 2131351028, %v7096
        %v7103 = vor.u32 %v7101, %v7102
        %v7104 = vshll.u32 2131351028, %v7095
        %v7105 = vshrl.u32 2102212464, %v7096
        %v7106 = vor.u32 %v7104, %v7105
        %v7107 = vshll.u32 2102212464, %v7095
        %v7108 = vshrl.u32 920167782, %v7096
        %v7109 = vor.u32 %v7107, %v7108
        %v7110 = vshll.u32 920167782, %v7095
        %v7111 = vshrl.u32 1326507024, %v7096
        %v7112 = vor.u32 %v7110, %v7111
        %vm7113 = vcmp.lt.s32.totalorder %v7094, 1
        %vm7114 = vcmp.lt.s32.totalorder %v7094, 2
        %vm7115 = vcmp.lt.s32.totalorder %v7094, 3
        %vm7116 = vcmp.lt.s32.totalorder %v7094, 4
        %v7117 = vsel %vm7113, %v7097, %v7100
        %v7118 = vsel %vm7116, %v7106, 2102212464
        %v7119 = vsel %vm7115, %v7103, %v7118
        %v7120 = vsel %vm7114, %v7117, %v7119
        %v7121 = vsel %vm7113, %v7100, %v7103
        %v7122 = vsel %vm7116, %v7109, 920167782
        %v7123 = vsel %vm7115, %v7106, %v7122
        %v7124 = vsel %vm7114, %v7121, %v7123
        %v7125 = vsel %vm7113, %v7103, %v7106
        %v7126 = vsel %vm7116, %v7112, 1326507024
        %v7127 = vsel %vm7115, %v7109, %v7126
        %v7128 = vsel %vm7114, %v7125, %v7127
        %v7129 = vshll.u32 %v7089, 8
        %v7130 = vmul.u32.u64.compose %v7129, %v7128
        %v7131 = vextract.low.u32 %v7130
        %v7132 = vextract.high.u32 %v7130
        %v7133 = vmul.u32.u64.compose %v7129, %v7124
        %v7134 = vextract.low.u32 %v7133
        %v7135 = vextract.high.u32 %v7133
        %v7136 = vmul.u32 %v7129, %v7120
        %v7137 = vadd.s32 %v7132, %v7134
        %vm7138 = vc.u32 %v7132, %v7134
        %v7139 = vadd.s32 %v7135, 1
        %v7140 = vsel %vm7138, %v7139, %v7135
        %v7141 = vadd.s32 %v7136, %v7140
        %v7142 = vadd.s32 %v7141, 536870912
        %v7143 = vshrl.u32 %v7142, 30
        %v7144 = vshll.u32 %v7143, 30
        %v7145 = vsub.s32 %v7141, %v7144
        %vm7146 = vcmp.lt.s32.totalorder %v7145, 0
        %v7147 = vsub.s32 0, %v7145
        %v7148 = vsel %vm7146, %v7147, %v7145
        %v7149 = vclz %v7148
        %v7150 = vsub.s32 %v7149, 2
        %vm7151 = vcmp.gt.s32.totalorder 0, %v7150
        %v7152 = vsel %vm7151, 0, %v7150
        %v7153 = vsub.s32 32, %v7152
        %v7154 = vshll.u32 %v7145, %v7152
        %v7155 = vshrl.u32 %v7137, %v7153
        %v7156 = vor.u32 %v7154, %v7155
        %v7157 = vsub.s32 4294967266, %v7152
        %v7158 = vadd.s32 %v7157, 127
        %v7159 = vshll.u32 %v7158, 23
        %v7160 = vor.u32 4788187, %v7159
        %v7161 = vand.u32 2147483647, %v7160
        %v7163 = vcvt.s32.f32 %v7156
        %v7164 = vmul.f32 %v7163, %v7161
        %v7165 = vxor.u32 %v7164, 2147483648
        %v7166 = vsel %vm7083, %v7165, %v7164
        %v7167 = vsub.s32 4, %v7143
        %v7168 = vsel %vm7083, %v7167, %v7143
        %v7169 = vsel %vm7082, %v6868, %v7166
        %v7170 = vsel %vm7082, 0, %v7168
        %v7171 = vcosq.f32.pop %v7169
        %v7172 = vsinq.f32.pop %v7169
        %vm7173 = vweird.f32 %v6868
        %v7174 = vadd.s32 %v7170, 3
        %v7175 = vand.u32 %v7174, 3
        %vm7176 = vcmp.lt.s32.totalorder %v7175, 2
        %vm7177 = vcmp.eq.s32.totalorder %v7175, 0
        %v7178 = vxor.u32 %v7172, 2147483648
        %v7179 = vsel %vm7177, %v7171, %v7178
        %vm7180 = vcmp.eq.s32.totalorder %v7175, 2
        %v7181 = vxor.u32 %v7171, 2147483648
        %v7182 = vsel %vm7180, %v7181, %v7172
        %v7183 = vsel %vm7176, %v7179, %v7182
        %v7184 = vsel %vm7173, nan, %v7183
        %v7185 = vand.u32 2147483647, %v6955
        %vm7186 = vcmp.le.f32.partialorder %v7185, 0.7853982
        %vm7187 = vcmp.lt.s32.totalorder %v6955, 0
        %v7188 = vand.u32 %v6955, 2139095040
        %v7189 = vshrl.u32 %v7188, 23
        %v7190 = vsub.s32 %v7189, 127
        %v7191 = vand.u32 2147483647, %v6955
        %v7192 = vand.u32 %v7191, 8388607
        %v7193 = vor.u32 %v7192, 8388608
        %v7194 = vsub.s32 0, %v7193
        %v7195 = vadd.s32 %v7190, 1
        %vm7196 = vcmp.gt.s32.totalorder %v7195, 0
        %v7197 = vsel %vm7196, %v7195, 0
        %v7198 = vshrl.u32 %v7197, 5
        %v7199 = vand.u32 %v7197, 31
        %v7200 = vsub.s32 32, %v7199
        %v7201 = vshrl.u32 683565275, %v7200
        %v7202 = vshll.u32 683565275, %v7199
        %v7203 = vshrl.u32 2475754826, %v7200
        %v7204 = vor.u32 %v7202, %v7203
        %v7205 = vshll.u32 2475754826, %v7199
        %v7206 = vshrl.u32 2131351028, %v7200
        %v7207 = vor.u32 %v7205, %v7206
        %v7208 = vshll.u32 2131351028, %v7199
        %v7209 = vshrl.u32 2102212464, %v7200
        %v7210 = vor.u32 %v7208, %v7209
        %v7211 = vshll.u32 2102212464, %v7199
        %v7212 = vshrl.u32 920167782, %v7200
        %v7213 = vor.u32 %v7211, %v7212
        %v7214 = vshll.u32 920167782, %v7199
        %v7215 = vshrl.u32 1326507024, %v7200
        %v7216 = vor.u32 %v7214, %v7215
        %vm7217 = vcmp.lt.s32.totalorder %v7198, 1
        %vm7218 = vcmp.lt.s32.totalorder %v7198, 2
        %vm7219 = vcmp.lt.s32.totalorder %v7198, 3
        %vm7220 = vcmp.lt.s32.totalorder %v7198, 4
        %v7221 = vsel %vm7217, %v7201, %v7204
        %v7222 = vsel %vm7220, %v7210, 2102212464
        %v7223 = vsel %vm7219, %v7207, %v7222
        %v7224 = vsel %vm7218, %v7221, %v7223
        %v7225 = vsel %vm7217, %v7204, %v7207
        %v7226 = vsel %vm7220, %v7213, 920167782
        %v7227 = vsel %vm7219, %v7210, %v7226
        %v7228 = vsel %vm7218, %v7225, %v7227
        %v7229 = vsel %vm7217, %v7207, %v7210
        %v7230 = vsel %vm7220, %v7216, 1326507024
        %v7231 = vsel %vm7219, %v7213, %v7230
        %v7232 = vsel %vm7218, %v7229, %v7231
        %v7233 = vshll.u32 %v7193, 8
        %v7234 = vmul.u32.u64.compose %v7233, %v7232
        %v7235 = vextract.low.u32 %v7234
        %v7236 = vextract.high.u32 %v7234
        %v7237 = vmul.u32.u64.compose %v7233, %v7228
        %v7238 = vextract.low.u32 %v7237
        %v7239 = vextract.high.u32 %v7237
        %v7240 = vmul.u32 %v7233, %v7224
        %v7241 = vadd.s32 %v7236, %v7238
        %vm7242 = vc.u32 %v7236, %v7238
        %v7243 = vadd.s32 %v7239, 1
        %v7244 = vsel %vm7242, %v7243, %v7239
        %v7245 = vadd.s32 %v7240, %v7244
        %v7246 = vadd.s32 %v7245, 536870912
        %v7247 = vshrl.u32 %v7246, 30
        %v7248 = vshll.u32 %v7247, 30
        %v7249 = vsub.s32 %v7245, %v7248
        %vm7250 = vcmp.lt.s32.totalorder %v7249, 0
        %v7251 = vsub.s32 0, %v7249
        %v7252 = vsel %vm7250, %v7251, %v7249
        %v7253 = vclz %v7252
        %v7254 = vsub.s32 %v7253, 2
        %vm7255 = vcmp.gt.s32.totalorder 0, %v7254
        %v7256 = vsel %vm7255, 0, %v7254
        %v7257 = vsub.s32 32, %v7256
        %v7258 = vshll.u32 %v7249, %v7256
        %v7259 = vshrl.u32 %v7241, %v7257
        %v7260 = vor.u32 %v7258, %v7259
        %v7261 = vsub.s32 4294967266, %v7256
        %v7262 = vadd.s32 %v7261, 127
        %v7263 = vshll.u32 %v7262, 23
        %v7264 = vor.u32 4788187, %v7263
        %v7265 = vand.u32 2147483647, %v7264
        %v7267 = vcvt.s32.f32 %v7260
        %v7268 = vmul.f32 %v7267, %v7265
        %v7269 = vxor.u32 %v7268, 2147483648
        %v7270 = vsel %vm7187, %v7269, %v7268
        %v7271 = vsub.s32 4, %v7247
        %v7272 = vsel %vm7187, %v7271, %v7247
        %v7273 = vsel %vm7186, %v6955, %v7270
        %v7274 = vsel %vm7186, 0, %v7272
        %v7275 = vcosq.f32.pop %v7273
        %v7276 = vsinq.f32.pop %v7273
        %vm7277 = vweird.f32 %v6955
        %v7278 = vadd.s32 %v7274, 3
        %v7279 = vand.u32 %v7278, 3
        %vm7280 = vcmp.lt.s32.totalorder %v7279, 2
        %vm7281 = vcmp.eq.s32.totalorder %v7279, 0
        %v7282 = vxor.u32 %v7276, 2147483648
        %v7283 = vsel %vm7281, %v7275, %v7282
        %vm7284 = vcmp.eq.s32.totalorder %v7279, 2
        %v7285 = vxor.u32 %v7275, 2147483648
        %v7286 = vsel %vm7284, %v7285, %v7276
        %v7287 = vsel %vm7280, %v7283, %v7286
        %v7288 = vsel %vm7277, nan, %v7287
        %v7289 = vand.u32 2147483647, %v6957
        %vm7290 = vcmp.le.f32.partialorder %v7289, 0.7853982
        %vm7291 = vcmp.lt.s32.totalorder %v6957, 0
        %v7292 = vand.u32 %v6957, 2139095040
        %v7293 = vshrl.u32 %v7292, 23
        %v7294 = vsub.s32 %v7293, 127
        %v7295 = vand.u32 2147483647, %v6957
        %v7296 = vand.u32 %v7295, 8388607
        %v7297 = vor.u32 %v7296, 8388608
        %v7298 = vsub.s32 0, %v7297
        %v7299 = vadd.s32 %v7294, 1
        %vm7300 = vcmp.gt.s32.totalorder %v7299, 0
        %v7301 = vsel %vm7300, %v7299, 0
        %v7302 = vshrl.u32 %v7301, 5
        %v7303 = vand.u32 %v7301, 31
        %v7304 = vsub.s32 32, %v7303
        %v7305 = vshrl.u32 683565275, %v7304
        %v7306 = vshll.u32 683565275, %v7303
        %v7307 = vshrl.u32 2475754826, %v7304
        %v7308 = vor.u32 %v7306, %v7307
        %v7309 = vshll.u32 2475754826, %v7303
        %v7310 = vshrl.u32 2131351028, %v7304
        %v7311 = vor.u32 %v7309, %v7310
        %v7312 = vshll.u32 2131351028, %v7303
        %v7313 = vshrl.u32 2102212464, %v7304
        %v7314 = vor.u32 %v7312, %v7313
        %v7315 = vshll.u32 2102212464, %v7303
        %v7316 = vshrl.u32 920167782, %v7304
        %v7317 = vor.u32 %v7315, %v7316
        %v7318 = vshll.u32 920167782, %v7303
        %v7319 = vshrl.u32 1326507024, %v7304
        %v7320 = vor.u32 %v7318, %v7319
        %vm7321 = vcmp.lt.s32.totalorder %v7302, 1
        %vm7322 = vcmp.lt.s32.totalorder %v7302, 2
        %vm7323 = vcmp.lt.s32.totalorder %v7302, 3
        %vm7324 = vcmp.lt.s32.totalorder %v7302, 4
        %v7325 = vsel %vm7321, %v7305, %v7308
        %v7326 = vsel %vm7324, %v7314, 2102212464
        %v7327 = vsel %vm7323, %v7311, %v7326
        %v7328 = vsel %vm7322, %v7325, %v7327
        %v7329 = vsel %vm7321, %v7308, %v7311
        %v7330 = vsel %vm7324, %v7317, 920167782
        %v7331 = vsel %vm7323, %v7314, %v7330
        %v7332 = vsel %vm7322, %v7329, %v7331
        %v7333 = vsel %vm7321, %v7311, %v7314
        %v7334 = vsel %vm7324, %v7320, 1326507024
        %v7335 = vsel %vm7323, %v7317, %v7334
        %v7336 = vsel %vm7322, %v7333, %v7335
        %v7337 = vshll.u32 %v7297, 8
        %v7338 = vmul.u32.u64.compose %v7337, %v7336
        %v7339 = vextract.low.u32 %v7338
        %v7340 = vextract.high.u32 %v7338
        %v7341 = vmul.u32.u64.compose %v7337, %v7332
        %v7342 = vextract.low.u32 %v7341
        %v7343 = vextract.high.u32 %v7341
        %v7344 = vmul.u32 %v7337, %v7328
        %v7345 = vadd.s32 %v7340, %v7342
        %vm7346 = vc.u32 %v7340, %v7342
        %v7347 = vadd.s32 %v7343, 1
        %v7348 = vsel %vm7346, %v7347, %v7343
        %v7349 = vadd.s32 %v7344, %v7348
        %v7350 = vadd.s32 %v7349, 536870912
        %v7351 = vshrl.u32 %v7350, 30
        %v7352 = vshll.u32 %v7351, 30
        %v7353 = vsub.s32 %v7349, %v7352
        %vm7354 = vcmp.lt.s32.totalorder %v7353, 0
        %v7355 = vsub.s32 0, %v7353
        %v7356 = vsel %vm7354, %v7355, %v7353
        %v7357 = vclz %v7356
        %v7358 = vsub.s32 %v7357, 2
        %vm7359 = vcmp.gt.s32.totalorder 0, %v7358
        %v7360 = vsel %vm7359, 0, %v7358
        %v7361 = vsub.s32 32, %v7360
        %v7362 = vshll.u32 %v7353, %v7360
        %v7363 = vshrl.u32 %v7345, %v7361
        %v7364 = vor.u32 %v7362, %v7363
        %v7365 = vsub.s32 4294967266, %v7360
        %v7366 = vadd.s32 %v7365, 127
        %v7367 = vshll.u32 %v7366, 23
        %v7368 = vor.u32 4788187, %v7367
        %v7369 = vand.u32 2147483647, %v7368
        %v7371 = vcvt.s32.f32 %v7364
        %v7372 = vmul.f32 %v7371, %v7369
        %v7373 = vxor.u32 %v7372, 2147483648
        %v7374 = vsel %vm7291, %v7373, %v7372
        %v7375 = vsub.s32 4, %v7351
        %v7376 = vsel %vm7291, %v7375, %v7351
        %v7377 = vsel %vm7290, %v6957, %v7374
        %v7378 = vsel %vm7290, 0, %v7376
        %v7379 = vcosq.f32.pop %v7377
        %v7380 = vsinq.f32.pop %v7377
        %vm7381 = vweird.f32 %v6957
        %v7382 = vadd.s32 %v7378, 3
        %v7383 = vand.u32 %v7382, 3
        %vm7384 = vcmp.lt.s32.totalorder %v7383, 2
        %vm7385 = vcmp.eq.s32.totalorder %v7383, 0
        %v7386 = vxor.u32 %v7380, 2147483648
        %v7387 = vsel %vm7385, %v7379, %v7386
        %vm7388 = vcmp.eq.s32.totalorder %v7383, 2
        %v7389 = vxor.u32 %v7379, 2147483648
        %v7390 = vsel %vm7388, %v7389, %v7380
        %v7391 = vsel %vm7384, %v7387, %v7390
        %v7392 = vsel %vm7381, nan, %v7391
        %v7393 = vand.u32 2147483647, %v6872
        %vm7394 = vcmp.le.f32.partialorder %v7393, 0.7853982
        %vm7395 = vcmp.lt.s32.totalorder %v6872, 0
        %v7396 = vand.u32 %v6872, 2139095040
        %v7397 = vshrl.u32 %v7396, 23
        %v7398 = vsub.s32 %v7397, 127
        %v7399 = vand.u32 2147483647, %v6872
        %v7400 = vand.u32 %v7399, 8388607
        %v7401 = vor.u32 %v7400, 8388608
        %v7402 = vsub.s32 0, %v7401
        %v7403 = vadd.s32 %v7398, 1
        %vm7404 = vcmp.gt.s32.totalorder %v7403, 0
        %v7405 = vsel %vm7404, %v7403, 0
        %v7406 = vshrl.u32 %v7405, 5
        %v7407 = vand.u32 %v7405, 31
        %v7408 = vsub.s32 32, %v7407
        %v7409 = vshrl.u32 683565275, %v7408
        %v7410 = vshll.u32 683565275, %v7407
        %v7411 = vshrl.u32 2475754826, %v7408
        %v7412 = vor.u32 %v7410, %v7411
        %v7413 = vshll.u32 2475754826, %v7407
        %v7414 = vshrl.u32 2131351028, %v7408
        %v7415 = vor.u32 %v7413, %v7414
        %v7416 = vshll.u32 2131351028, %v7407
        %v7417 = vshrl.u32 2102212464, %v7408
        %v7418 = vor.u32 %v7416, %v7417
        %v7419 = vshll.u32 2102212464, %v7407
        %v7420 = vshrl.u32 920167782, %v7408
        %v7421 = vor.u32 %v7419, %v7420
        %v7422 = vshll.u32 920167782, %v7407
        %v7423 = vshrl.u32 1326507024, %v7408
        %v7424 = vor.u32 %v7422, %v7423
        %vm7425 = vcmp.lt.s32.totalorder %v7406, 1
        %vm7426 = vcmp.lt.s32.totalorder %v7406, 2
        %vm7427 = vcmp.lt.s32.totalorder %v7406, 3
        %vm7428 = vcmp.lt.s32.totalorder %v7406, 4
        %v7429 = vsel %vm7425, %v7409, %v7412
        %v7430 = vsel %vm7428, %v7418, 2102212464
        %v7431 = vsel %vm7427, %v7415, %v7430
        %v7432 = vsel %vm7426, %v7429, %v7431
        %v7433 = vsel %vm7425, %v7412, %v7415
        %v7434 = vsel %vm7428, %v7421, 920167782
        %v7435 = vsel %vm7427, %v7418, %v7434
        %v7436 = vsel %vm7426, %v7433, %v7435
        %v7437 = vsel %vm7425, %v7415, %v7418
        %v7438 = vsel %vm7428, %v7424, 1326507024
        %v7439 = vsel %vm7427, %v7421, %v7438
        %v7440 = vsel %vm7426, %v7437, %v7439
        %v7441 = vshll.u32 %v7401, 8
        %v7442 = vmul.u32.u64.compose %v7441, %v7440
        %v7443 = vextract.low.u32 %v7442
        %v7444 = vextract.high.u32 %v7442
        %v7445 = vmul.u32.u64.compose %v7441, %v7436
        %v7446 = vextract.low.u32 %v7445
        %v7447 = vextract.high.u32 %v7445
        %v7448 = vmul.u32 %v7441, %v7432
        %v7449 = vadd.s32 %v7444, %v7446
        %vm7450 = vc.u32 %v7444, %v7446
        %v7451 = vadd.s32 %v7447, 1
        %v7452 = vsel %vm7450, %v7451, %v7447
        %v7453 = vadd.s32 %v7448, %v7452
        %v7454 = vadd.s32 %v7453, 536870912
        %v7455 = vshrl.u32 %v7454, 30
        %v7456 = vshll.u32 %v7455, 30
        %v7457 = vsub.s32 %v7453, %v7456
        %vm7458 = vcmp.lt.s32.totalorder %v7457, 0
        %v7459 = vsub.s32 0, %v7457
        %v7460 = vsel %vm7458, %v7459, %v7457
        %v7461 = vclz %v7460
        %v7462 = vsub.s32 %v7461, 2
        %vm7463 = vcmp.gt.s32.totalorder 0, %v7462
        %v7464 = vsel %vm7463, 0, %v7462
        %v7465 = vsub.s32 32, %v7464
        %v7466 = vshll.u32 %v7457, %v7464
        %v7467 = vshrl.u32 %v7449, %v7465
        %v7468 = vor.u32 %v7466, %v7467
        %v7469 = vsub.s32 4294967266, %v7464
        %v7470 = vadd.s32 %v7469, 127
        %v7471 = vshll.u32 %v7470, 23
        %v7472 = vor.u32 4788187, %v7471
        %v7473 = vand.u32 2147483647, %v7472
        %v7475 = vcvt.s32.f32 %v7468
        %v7476 = vmul.f32 %v7475, %v7473
        %v7477 = vxor.u32 %v7476, 2147483648
        %v7478 = vsel %vm7395, %v7477, %v7476
        %v7479 = vsub.s32 4, %v7455
        %v7480 = vsel %vm7395, %v7479, %v7455
        %v7481 = vsel %vm7394, %v6872, %v7478
        %v7482 = vsel %vm7394, 0, %v7480
        %v7483 = vcosq.f32.pop %v7481
        %v7484 = vsinq.f32.pop %v7481
        %vm7485 = vweird.f32 %v6872
        %v7486 = vadd.s32 %v7482, 3
        %v7487 = vand.u32 %v7486, 3
        %vm7488 = vcmp.lt.s32.totalorder %v7487, 2
        %vm7489 = vcmp.eq.s32.totalorder %v7487, 0
        %v7490 = vxor.u32 %v7484, 2147483648
        %v7491 = vsel %vm7489, %v7483, %v7490
        %vm7492 = vcmp.eq.s32.totalorder %v7487, 2
        %v7493 = vxor.u32 %v7483, 2147483648
        %v7494 = vsel %vm7492, %v7493, %v7484
        %v7495 = vsel %vm7488, %v7491, %v7494
        %v7496 = vsel %vm7485, nan, %v7495
        %v7497 = vand.u32 2147483647, %v6874
        %vm7498 = vcmp.le.f32.partialorder %v7497, 0.7853982
        %vm7499 = vcmp.lt.s32.totalorder %v6874, 0
        %v7500 = vand.u32 %v6874, 2139095040
        %v7501 = vshrl.u32 %v7500, 23
        %v7502 = vsub.s32 %v7501, 127
        %v7503 = vand.u32 2147483647, %v6874
        %v7504 = vand.u32 %v7503, 8388607
        %v7505 = vor.u32 %v7504, 8388608
        %v7506 = vsub.s32 0, %v7505
        %v7507 = vadd.s32 %v7502, 1
        %vm7508 = vcmp.gt.s32.totalorder %v7507, 0
        %v7509 = vsel %vm7508, %v7507, 0
        %v7510 = vshrl.u32 %v7509, 5
        %v7511 = vand.u32 %v7509, 31
        %v7512 = vsub.s32 32, %v7511
        %v7513 = vshrl.u32 683565275, %v7512
        %v7514 = vshll.u32 683565275, %v7511
        %v7515 = vshrl.u32 2475754826, %v7512
        %v7516 = vor.u32 %v7514, %v7515
        %v7517 = vshll.u32 2475754826, %v7511
        %v7518 = vshrl.u32 2131351028, %v7512
        %v7519 = vor.u32 %v7517, %v7518
        %v7520 = vshll.u32 2131351028, %v7511
        %v7521 = vshrl.u32 2102212464, %v7512
        %v7522 = vor.u32 %v7520, %v7521
        %v7523 = vshll.u32 2102212464, %v7511
        %v7524 = vshrl.u32 920167782, %v7512
        %v7525 = vor.u32 %v7523, %v7524
        %v7526 = vshll.u32 920167782, %v7511
        %v7527 = vshrl.u32 1326507024, %v7512
        %v7528 = vor.u32 %v7526, %v7527
        %vm7529 = vcmp.lt.s32.totalorder %v7510, 1
        %vm7530 = vcmp.lt.s32.totalorder %v7510, 2
        %vm7531 = vcmp.lt.s32.totalorder %v7510, 3
        %vm7532 = vcmp.lt.s32.totalorder %v7510, 4
        %v7533 = vsel %vm7529, %v7513, %v7516
        %v7534 = vsel %vm7532, %v7522, 2102212464
        %v7535 = vsel %vm7531, %v7519, %v7534
        %v7536 = vsel %vm7530, %v7533, %v7535
        %v7537 = vsel %vm7529, %v7516, %v7519
        %v7538 = vsel %vm7532, %v7525, 920167782
        %v7539 = vsel %vm7531, %v7522, %v7538
        %v7540 = vsel %vm7530, %v7537, %v7539
        %v7541 = vsel %vm7529, %v7519, %v7522
        %v7542 = vsel %vm7532, %v7528, 1326507024
        %v7543 = vsel %vm7531, %v7525, %v7542
        %v7544 = vsel %vm7530, %v7541, %v7543
        %v7545 = vshll.u32 %v7505, 8
        %v7546 = vmul.u32.u64.compose %v7545, %v7544
        %v7547 = vextract.low.u32 %v7546
        %v7548 = vextract.high.u32 %v7546
        %v7549 = vmul.u32.u64.compose %v7545, %v7540
        %v7550 = vextract.low.u32 %v7549
        %v7551 = vextract.high.u32 %v7549
        %v7552 = vmul.u32 %v7545, %v7536
        %v7553 = vadd.s32 %v7548, %v7550
        %vm7554 = vc.u32 %v7548, %v7550
        %v7555 = vadd.s32 %v7551, 1
        %v7556 = vsel %vm7554, %v7555, %v7551
        %v7557 = vadd.s32 %v7552, %v7556
        %v7558 = vadd.s32 %v7557, 536870912
        %v7559 = vshrl.u32 %v7558, 30
        %v7560 = vshll.u32 %v7559, 30
        %v7561 = vsub.s32 %v7557, %v7560
        %vm7562 = vcmp.lt.s32.totalorder %v7561, 0
        %v7563 = vsub.s32 0, %v7561
        %v7564 = vsel %vm7562, %v7563, %v7561
        %v7565 = vclz %v7564
        %v7566 = vsub.s32 %v7565, 2
        %vm7567 = vcmp.gt.s32.totalorder 0, %v7566
        %v7568 = vsel %vm7567, 0, %v7566
        %v7569 = vsub.s32 32, %v7568
        %v7570 = vshll.u32 %v7561, %v7568
        %v7571 = vshrl.u32 %v7553, %v7569
        %v7572 = vor.u32 %v7570, %v7571
        %v7573 = vsub.s32 4294967266, %v7568
        %v7574 = vadd.s32 %v7573, 127
        %v7575 = vshll.u32 %v7574, 23
        %v7576 = vor.u32 4788187, %v7575
        %v7577 = vand.u32 2147483647, %v7576
        %v7579 = vcvt.s32.f32 %v7572
        %v7580 = vmul.f32 %v7579, %v7577
        %v7581 = vxor.u32 %v7580, 2147483648
        %v7582 = vsel %vm7499, %v7581, %v7580
        %v7583 = vsub.s32 4, %v7559
        %v7584 = vsel %vm7499, %v7583, %v7559
        %v7585 = vsel %vm7498, %v6874, %v7582
        %v7586 = vsel %vm7498, 0, %v7584
        %v7587 = vcosq.f32.pop %v7585
        %v7588 = vsinq.f32.pop %v7585
        %vm7589 = vweird.f32 %v6874
        %v7590 = vadd.s32 %v7586, 3
        %v7591 = vand.u32 %v7590, 3
        %vm7592 = vcmp.lt.s32.totalorder %v7591, 2
        %vm7593 = vcmp.eq.s32.totalorder %v7591, 0
        %v7594 = vxor.u32 %v7588, 2147483648
        %v7595 = vsel %vm7593, %v7587, %v7594
        %vm7596 = vcmp.eq.s32.totalorder %v7591, 2
        %v7597 = vxor.u32 %v7587, 2147483648
        %v7598 = vsel %vm7596, %v7597, %v7588
        %v7599 = vsel %vm7592, %v7595, %v7598
        %v7600 = vsel %vm7589, nan, %v7599
        %v7601 = vand.u32 2147483647, %v6961
        %vm7602 = vcmp.le.f32.partialorder %v7601, 0.7853982
        %vm7603 = vcmp.lt.s32.totalorder %v6961, 0
        %v7604 = vand.u32 %v6961, 2139095040
        %v7605 = vshrl.u32 %v7604, 23
        %v7606 = vsub.s32 %v7605, 127
        %v7607 = vand.u32 2147483647, %v6961
        %v7608 = vand.u32 %v7607, 8388607
        %v7609 = vor.u32 %v7608, 8388608
        %v7610 = vsub.s32 0, %v7609
        %v7611 = vadd.s32 %v7606, 1
        %vm7612 = vcmp.gt.s32.totalorder %v7611, 0
        %v7613 = vsel %vm7612, %v7611, 0
        %v7614 = vshrl.u32 %v7613, 5
        %v7615 = vand.u32 %v7613, 31
        %v7616 = vsub.s32 32, %v7615
        %v7617 = vshrl.u32 683565275, %v7616
        %v7618 = vshll.u32 683565275, %v7615
        %v7619 = vshrl.u32 2475754826, %v7616
        %v7620 = vor.u32 %v7618, %v7619
        %v7621 = vshll.u32 2475754826, %v7615
        %v7622 = vshrl.u32 2131351028, %v7616
        %v7623 = vor.u32 %v7621, %v7622
        %v7624 = vshll.u32 2131351028, %v7615
        %v7625 = vshrl.u32 2102212464, %v7616
        %v7626 = vor.u32 %v7624, %v7625
        %v7627 = vshll.u32 2102212464, %v7615
        %v7628 = vshrl.u32 920167782, %v7616
        %v7629 = vor.u32 %v7627, %v7628
        %v7630 = vshll.u32 920167782, %v7615
        %v7631 = vshrl.u32 1326507024, %v7616
        %v7632 = vor.u32 %v7630, %v7631
        %vm7633 = vcmp.lt.s32.totalorder %v7614, 1
        %vm7634 = vcmp.lt.s32.totalorder %v7614, 2
        %vm7635 = vcmp.lt.s32.totalorder %v7614, 3
        %vm7636 = vcmp.lt.s32.totalorder %v7614, 4
        %v7637 = vsel %vm7633, %v7617, %v7620
        %v7638 = vsel %vm7636, %v7626, 2102212464
        %v7639 = vsel %vm7635, %v7623, %v7638
        %v7640 = vsel %vm7634, %v7637, %v7639
        %v7641 = vsel %vm7633, %v7620, %v7623
        %v7642 = vsel %vm7636, %v7629, 920167782
        %v7643 = vsel %vm7635, %v7626, %v7642
        %v7644 = vsel %vm7634, %v7641, %v7643
        %v7645 = vsel %vm7633, %v7623, %v7626
        %v7646 = vsel %vm7636, %v7632, 1326507024
        %v7647 = vsel %vm7635, %v7629, %v7646
        %v7648 = vsel %vm7634, %v7645, %v7647
        %v7649 = vshll.u32 %v7609, 8
        %v7650 = vmul.u32.u64.compose %v7649, %v7648
        %v7651 = vextract.low.u32 %v7650
        %v7652 = vextract.high.u32 %v7650
        %v7653 = vmul.u32.u64.compose %v7649, %v7644
        %v7654 = vextract.low.u32 %v7653
        %v7655 = vextract.high.u32 %v7653
        %v7656 = vmul.u32 %v7649, %v7640
        %v7657 = vadd.s32 %v7652, %v7654
        %vm7658 = vc.u32 %v7652, %v7654
        %v7659 = vadd.s32 %v7655, 1
        %v7660 = vsel %vm7658, %v7659, %v7655
        %v7661 = vadd.s32 %v7656, %v7660
        %v7662 = vadd.s32 %v7661, 536870912
        %v7663 = vshrl.u32 %v7662, 30
        %v7664 = vshll.u32 %v7663, 30
        %v7665 = vsub.s32 %v7661, %v7664
        %vm7666 = vcmp.lt.s32.totalorder %v7665, 0
        %v7667 = vsub.s32 0, %v7665
        %v7668 = vsel %vm7666, %v7667, %v7665
        %v7669 = vclz %v7668
        %v7670 = vsub.s32 %v7669, 2
        %vm7671 = vcmp.gt.s32.totalorder 0, %v7670
        %v7672 = vsel %vm7671, 0, %v7670
        %v7673 = vsub.s32 32, %v7672
        %v7674 = vshll.u32 %v7665, %v7672
        %v7675 = vshrl.u32 %v7657, %v7673
        %v7676 = vor.u32 %v7674, %v7675
        %v7677 = vsub.s32 4294967266, %v7672
        %v7678 = vadd.s32 %v7677, 127
        %v7679 = vshll.u32 %v7678, 23
        %v7680 = vor.u32 4788187, %v7679
        %v7681 = vand.u32 2147483647, %v7680
        %v7683 = vcvt.s32.f32 %v7676
        %v7684 = vmul.f32 %v7683, %v7681
        %v7685 = vxor.u32 %v7684, 2147483648
        %v7686 = vsel %vm7603, %v7685, %v7684
        %v7687 = vsub.s32 4, %v7663
        %v7688 = vsel %vm7603, %v7687, %v7663
        %v7689 = vsel %vm7602, %v6961, %v7686
        %v7690 = vsel %vm7602, 0, %v7688
        %v7691 = vcosq.f32.pop %v7689
        %v7692 = vsinq.f32.pop %v7689
        %vm7693 = vweird.f32 %v6961
        %v7694 = vadd.s32 %v7690, 3
        %v7695 = vand.u32 %v7694, 3
        %vm7696 = vcmp.lt.s32.totalorder %v7695, 2
        %vm7697 = vcmp.eq.s32.totalorder %v7695, 0
        %v7698 = vxor.u32 %v7692, 2147483648
        %v7699 = vsel %vm7697, %v7691, %v7698
        %vm7700 = vcmp.eq.s32.totalorder %v7695, 2
        %v7701 = vxor.u32 %v7691, 2147483648
        %v7702 = vsel %vm7700, %v7701, %v7692
        %v7703 = vsel %vm7696, %v7699, %v7702
        %v7704 = vsel %vm7693, nan, %v7703
        %v7705 = vand.u32 2147483647, %v6963
        %vm7706 = vcmp.le.f32.partialorder %v7705, 0.7853982
        %vm7707 = vcmp.lt.s32.totalorder %v6963, 0
        %v7708 = vand.u32 %v6963, 2139095040
        %v7709 = vshrl.u32 %v7708, 23
        %v7710 = vsub.s32 %v7709, 127
        %v7711 = vand.u32 2147483647, %v6963
        %v7712 = vand.u32 %v7711, 8388607
        %v7713 = vor.u32 %v7712, 8388608
        %v7714 = vsub.s32 0, %v7713
        %v7715 = vadd.s32 %v7710, 1
        %vm7716 = vcmp.gt.s32.totalorder %v7715, 0
        %v7717 = vsel %vm7716, %v7715, 0
        %v7718 = vshrl.u32 %v7717, 5
        %v7719 = vand.u32 %v7717, 31
        %v7720 = vsub.s32 32, %v7719
        %v7721 = vshrl.u32 683565275, %v7720
        %v7722 = vshll.u32 683565275, %v7719
        %v7723 = vshrl.u32 2475754826, %v7720
        %v7724 = vor.u32 %v7722, %v7723
        %v7725 = vshll.u32 2475754826, %v7719
        %v7726 = vshrl.u32 2131351028, %v7720
        %v7727 = vor.u32 %v7725, %v7726
        %v7728 = vshll.u32 2131351028, %v7719
        %v7729 = vshrl.u32 2102212464, %v7720
        %v7730 = vor.u32 %v7728, %v7729
        %v7731 = vshll.u32 2102212464, %v7719
        %v7732 = vshrl.u32 920167782, %v7720
        %v7733 = vor.u32 %v7731, %v7732
        %v7734 = vshll.u32 920167782, %v7719
        %v7735 = vshrl.u32 1326507024, %v7720
        %v7736 = vor.u32 %v7734, %v7735
        %vm7737 = vcmp.lt.s32.totalorder %v7718, 1
        %vm7738 = vcmp.lt.s32.totalorder %v7718, 2
        %vm7739 = vcmp.lt.s32.totalorder %v7718, 3
        %vm7740 = vcmp.lt.s32.totalorder %v7718, 4
        %v7741 = vsel %vm7737, %v7721, %v7724
        %v7742 = vsel %vm7740, %v7730, 2102212464
        %v7743 = vsel %vm7739, %v7727, %v7742
        %v7744 = vsel %vm7738, %v7741, %v7743
        %v7745 = vsel %vm7737, %v7724, %v7727
        %v7746 = vsel %vm7740, %v7733, 920167782
        %v7747 = vsel %vm7739, %v7730, %v7746
        %v7748 = vsel %vm7738, %v7745, %v7747
        %v7749 = vsel %vm7737, %v7727, %v7730
        %v7750 = vsel %vm7740, %v7736, 1326507024
        %v7751 = vsel %vm7739, %v7733, %v7750
        %v7752 = vsel %vm7738, %v7749, %v7751
        %v7753 = vshll.u32 %v7713, 8
        %v7754 = vmul.u32.u64.compose %v7753, %v7752
        %v7755 = vextract.low.u32 %v7754
        %v7756 = vextract.high.u32 %v7754
        %v7757 = vmul.u32.u64.compose %v7753, %v7748
        %v7758 = vextract.low.u32 %v7757
        %v7759 = vextract.high.u32 %v7757
        %v7760 = vmul.u32 %v7753, %v7744
        %v7761 = vadd.s32 %v7756, %v7758
        %vm7762 = vc.u32 %v7756, %v7758
        %v7763 = vadd.s32 %v7759, 1
        %v7764 = vsel %vm7762, %v7763, %v7759
        %v7765 = vadd.s32 %v7760, %v7764
        %v7766 = vadd.s32 %v7765, 536870912
        %v7767 = vshrl.u32 %v7766, 30
        %v7768 = vshll.u32 %v7767, 30
        %v7769 = vsub.s32 %v7765, %v7768
        %vm7770 = vcmp.lt.s32.totalorder %v7769, 0
        %v7771 = vsub.s32 0, %v7769
        %v7772 = vsel %vm7770, %v7771, %v7769
        %v7773 = vclz %v7772
        %v7774 = vsub.s32 %v7773, 2
        %vm7775 = vcmp.gt.s32.totalorder 0, %v7774
        %v7776 = vsel %vm7775, 0, %v7774
        %v7777 = vsub.s32 32, %v7776
        %v7778 = vshll.u32 %v7769, %v7776
        %v7779 = vshrl.u32 %v7761, %v7777
        %v7780 = vor.u32 %v7778, %v7779
        %v7781 = vsub.s32 4294967266, %v7776
        %v7782 = vadd.s32 %v7781, 127
        %v7783 = vshll.u32 %v7782, 23
        %v7784 = vor.u32 4788187, %v7783
        %v7785 = vand.u32 2147483647, %v7784
        %v7787 = vcvt.s32.f32 %v7780
        %v7788 = vmul.f32 %v7787, %v7785
        %v7789 = vxor.u32 %v7788, 2147483648
        %v7790 = vsel %vm7707, %v7789, %v7788
        %v7791 = vsub.s32 4, %v7767
        %v7792 = vsel %vm7707, %v7791, %v7767
        %v7793 = vsel %vm7706, %v6963, %v7790
        %v7794 = vsel %vm7706, 0, %v7792
        %v7795 = vcosq.f32.pop %v7793
        %v7796 = vsinq.f32.pop %v7793
        %vm7797 = vweird.f32 %v6963
        %v7798 = vadd.s32 %v7794, 3
        %v7799 = vand.u32 %v7798, 3
        %vm7800 = vcmp.lt.s32.totalorder %v7799, 2
        %vm7801 = vcmp.eq.s32.totalorder %v7799, 0
        %v7802 = vxor.u32 %v7796, 2147483648
        %v7803 = vsel %vm7801, %v7795, %v7802
        %vm7804 = vcmp.eq.s32.totalorder %v7799, 2
        %v7805 = vxor.u32 %v7795, 2147483648
        %v7806 = vsel %vm7804, %v7805, %v7796
        %v7807 = vsel %vm7800, %v7803, %v7806
        %v7808 = vsel %vm7797, nan, %v7807
        %v7809 = vand.u32 2147483647, %v6878
        %vm7810 = vcmp.le.f32.partialorder %v7809, 0.7853982
        %vm7811 = vcmp.lt.s32.totalorder %v6878, 0
        %v7812 = vand.u32 %v6878, 2139095040
        %v7813 = vshrl.u32 %v7812, 23
        %v7814 = vsub.s32 %v7813, 127
        %v7815 = vand.u32 2147483647, %v6878
        %v7816 = vand.u32 %v7815, 8388607
        %v7817 = vor.u32 %v7816, 8388608
        %v7818 = vsub.s32 0, %v7817
        %v7819 = vadd.s32 %v7814, 1
        %vm7820 = vcmp.gt.s32.totalorder %v7819, 0
        %v7821 = vsel %vm7820, %v7819, 0
        %v7822 = vshrl.u32 %v7821, 5
        %v7823 = vand.u32 %v7821, 31
        %v7824 = vsub.s32 32, %v7823
        %v7825 = vshrl.u32 683565275, %v7824
        %v7826 = vshll.u32 683565275, %v7823
        %v7827 = vshrl.u32 2475754826, %v7824
        %v7828 = vor.u32 %v7826, %v7827
        %v7829 = vshll.u32 2475754826, %v7823
        %v7830 = vshrl.u32 2131351028, %v7824
        %v7831 = vor.u32 %v7829, %v7830
        %v7832 = vshll.u32 2131351028, %v7823
        %v7833 = vshrl.u32 2102212464, %v7824
        %v7834 = vor.u32 %v7832, %v7833
        %v7835 = vshll.u32 2102212464, %v7823
        %v7836 = vshrl.u32 920167782, %v7824
        %v7837 = vor.u32 %v7835, %v7836
        %v7838 = vshll.u32 920167782, %v7823
        %v7839 = vshrl.u32 1326507024, %v7824
        %v7840 = vor.u32 %v7838, %v7839
        %vm7841 = vcmp.lt.s32.totalorder %v7822, 1
        %vm7842 = vcmp.lt.s32.totalorder %v7822, 2
        %vm7843 = vcmp.lt.s32.totalorder %v7822, 3
        %vm7844 = vcmp.lt.s32.totalorder %v7822, 4
        %v7845 = vsel %vm7841, %v7825, %v7828
        %v7846 = vsel %vm7844, %v7834, 2102212464
        %v7847 = vsel %vm7843, %v7831, %v7846
        %v7848 = vsel %vm7842, %v7845, %v7847
        %v7849 = vsel %vm7841, %v7828, %v7831
        %v7850 = vsel %vm7844, %v7837, 920167782
        %v7851 = vsel %vm7843, %v7834, %v7850
        %v7852 = vsel %vm7842, %v7849, %v7851
        %v7853 = vsel %vm7841, %v7831, %v7834
        %v7854 = vsel %vm7844, %v7840, 1326507024
        %v7855 = vsel %vm7843, %v7837, %v7854
        %v7856 = vsel %vm7842, %v7853, %v7855
        %v7857 = vshll.u32 %v7817, 8
        %v7858 = vmul.u32.u64.compose %v7857, %v7856
        %v7859 = vextract.low.u32 %v7858
        %v7860 = vextract.high.u32 %v7858
        %v7861 = vmul.u32.u64.compose %v7857, %v7852
        %v7862 = vextract.low.u32 %v7861
        %v7863 = vextract.high.u32 %v7861
        %v7864 = vmul.u32 %v7857, %v7848
        %v7865 = vadd.s32 %v7860, %v7862
        %vm7866 = vc.u32 %v7860, %v7862
        %v7867 = vadd.s32 %v7863, 1
        %v7868 = vsel %vm7866, %v7867, %v7863
        %v7869 = vadd.s32 %v7864, %v7868
        %v7870 = vadd.s32 %v7869, 536870912
        %v7871 = vshrl.u32 %v7870, 30
        %v7872 = vshll.u32 %v7871, 30
        %v7873 = vsub.s32 %v7869, %v7872
        %vm7874 = vcmp.lt.s32.totalorder %v7873, 0
        %v7875 = vsub.s32 0, %v7873
        %v7876 = vsel %vm7874, %v7875, %v7873
        %v7877 = vclz %v7876
        %v7878 = vsub.s32 %v7877, 2
        %vm7879 = vcmp.gt.s32.totalorder 0, %v7878
        %v7880 = vsel %vm7879, 0, %v7878
        %v7881 = vsub.s32 32, %v7880
        %v7882 = vshll.u32 %v7873, %v7880
        %v7883 = vshrl.u32 %v7865, %v7881
        %v7884 = vor.u32 %v7882, %v7883
        %v7885 = vsub.s32 4294967266, %v7880
        %v7886 = vadd.s32 %v7885, 127
        %v7887 = vshll.u32 %v7886, 23
        %v7888 = vor.u32 4788187, %v7887
        %v7889 = vand.u32 2147483647, %v7888
        %v7891 = vcvt.s32.f32 %v7884
        %v7892 = vmul.f32 %v7891, %v7889
        %v7893 = vxor.u32 %v7892, 2147483648
        %v7894 = vsel %vm7811, %v7893, %v7892
        %v7895 = vsub.s32 4, %v7871
        %v7896 = vsel %vm7811, %v7895, %v7871
        %v7897 = vsel %vm7810, %v6878, %v7894
        %v7898 = vsel %vm7810, 0, %v7896
        %v7899 = vcosq.f32.pop %v7897
        %v7900 = vsinq.f32.pop %v7897
        %vm7901 = vweird.f32 %v6878
        %v7902 = vadd.s32 %v7898, 3
        %v7903 = vand.u32 %v7902, 3
        %vm7904 = vcmp.lt.s32.totalorder %v7903, 2
        %vm7905 = vcmp.eq.s32.totalorder %v7903, 0
        %v7906 = vxor.u32 %v7900, 2147483648
        %v7907 = vsel %vm7905, %v7899, %v7906
        %vm7908 = vcmp.eq.s32.totalorder %v7903, 2
        %v7909 = vxor.u32 %v7899, 2147483648
        %v7910 = vsel %vm7908, %v7909, %v7900
        %v7911 = vsel %vm7904, %v7907, %v7910
        %v7912 = vsel %vm7901, nan, %v7911
        %v7913 = vand.u32 2147483647, %v6880
        %vm7914 = vcmp.le.f32.partialorder %v7913, 0.7853982
        %vm7915 = vcmp.lt.s32.totalorder %v6880, 0
        %v7916 = vand.u32 %v6880, 2139095040
        %v7917 = vshrl.u32 %v7916, 23
        %v7918 = vsub.s32 %v7917, 127
        %v7919 = vand.u32 2147483647, %v6880
        %v7920 = vand.u32 %v7919, 8388607
        %v7921 = vor.u32 %v7920, 8388608
        %v7922 = vsub.s32 0, %v7921
        %v7923 = vadd.s32 %v7918, 1
        %vm7924 = vcmp.gt.s32.totalorder %v7923, 0
        %v7925 = vsel %vm7924, %v7923, 0
        %v7926 = vshrl.u32 %v7925, 5
        %v7927 = vand.u32 %v7925, 31
        %v7928 = vsub.s32 32, %v7927
        %v7929 = vshrl.u32 683565275, %v7928
        %v7930 = vshll.u32 683565275, %v7927
        %v7931 = vshrl.u32 2475754826, %v7928
        %v7932 = vor.u32 %v7930, %v7931
        %v7933 = vshll.u32 2475754826, %v7927
        %v7934 = vshrl.u32 2131351028, %v7928
        %v7935 = vor.u32 %v7933, %v7934
        %v7936 = vshll.u32 2131351028, %v7927
        %v7937 = vshrl.u32 2102212464, %v7928
        %v7938 = vor.u32 %v7936, %v7937
        %v7939 = vshll.u32 2102212464, %v7927
        %v7940 = vshrl.u32 920167782, %v7928
        %v7941 = vor.u32 %v7939, %v7940
        %v7942 = vshll.u32 920167782, %v7927
        %v7943 = vshrl.u32 1326507024, %v7928
        %v7944 = vor.u32 %v7942, %v7943
        %vm7945 = vcmp.lt.s32.totalorder %v7926, 1
        %vm7946 = vcmp.lt.s32.totalorder %v7926, 2
        %vm7947 = vcmp.lt.s32.totalorder %v7926, 3
        %vm7948 = vcmp.lt.s32.totalorder %v7926, 4
        %v7949 = vsel %vm7945, %v7929, %v7932
        %v7950 = vsel %vm7948, %v7938, 2102212464
        %v7951 = vsel %vm7947, %v7935, %v7950
        %v7952 = vsel %vm7946, %v7949, %v7951
        %v7953 = vsel %vm7945, %v7932, %v7935
        %v7954 = vsel %vm7948, %v7941, 920167782
        %v7955 = vsel %vm7947, %v7938, %v7954
        %v7956 = vsel %vm7946, %v7953, %v7955
        %v7957 = vsel %vm7945, %v7935, %v7938
        %v7958 = vsel %vm7948, %v7944, 1326507024
        %v7959 = vsel %vm7947, %v7941, %v7958
        %v7960 = vsel %vm7946, %v7957, %v7959
        %v7961 = vshll.u32 %v7921, 8
        %v7962 = vmul.u32.u64.compose %v7961, %v7960
        %v7963 = vextract.low.u32 %v7962
        %v7964 = vextract.high.u32 %v7962
        %v7965 = vmul.u32.u64.compose %v7961, %v7956
        %v7966 = vextract.low.u32 %v7965
        %v7967 = vextract.high.u32 %v7965
        %v7968 = vmul.u32 %v7961, %v7952
        %v7969 = vadd.s32 %v7964, %v7966
        %vm7970 = vc.u32 %v7964, %v7966
        %v7971 = vadd.s32 %v7967, 1
        %v7972 = vsel %vm7970, %v7971, %v7967
        %v7973 = vadd.s32 %v7968, %v7972
        %v7974 = vadd.s32 %v7973, 536870912
        %v7975 = vshrl.u32 %v7974, 30
        %v7976 = vshll.u32 %v7975, 30
        %v7977 = vsub.s32 %v7973, %v7976
        %vm7978 = vcmp.lt.s32.totalorder %v7977, 0
        %v7979 = vsub.s32 0, %v7977
        %v7980 = vsel %vm7978, %v7979, %v7977
        %v7981 = vclz %v7980
        %v7982 = vsub.s32 %v7981, 2
        %vm7983 = vcmp.gt.s32.totalorder 0, %v7982
        %v7984 = vsel %vm7983, 0, %v7982
        %v7985 = vsub.s32 32, %v7984
        %v7986 = vshll.u32 %v7977, %v7984
        %v7987 = vshrl.u32 %v7969, %v7985
        %v7988 = vor.u32 %v7986, %v7987
        %v7989 = vsub.s32 4294967266, %v7984
        %v7990 = vadd.s32 %v7989, 127
        %v7991 = vshll.u32 %v7990, 23
        %v7992 = vor.u32 4788187, %v7991
        %v7993 = vand.u32 2147483647, %v7992
        %v7995 = vcvt.s32.f32 %v7988
        %v7996 = vmul.f32 %v7995, %v7993
        %v7997 = vxor.u32 %v7996, 2147483648
        %v7998 = vsel %vm7915, %v7997, %v7996
        %v7999 = vsub.s32 4, %v7975
        %v8000 = vsel %vm7915, %v7999, %v7975
        %v8001 = vsel %vm7914, %v6880, %v7998
        %v8002 = vsel %vm7914, 0, %v8000
        %v8003 = vcosq.f32.pop %v8001
        %v8004 = vsinq.f32.pop %v8001
        %vm8005 = vweird.f32 %v6880
        %v8006 = vadd.s32 %v8002, 3
        %v8007 = vand.u32 %v8006, 3
        %vm8008 = vcmp.lt.s32.totalorder %v8007, 2
        %vm8009 = vcmp.eq.s32.totalorder %v8007, 0
        %v8010 = vxor.u32 %v8004, 2147483648
        %v8011 = vsel %vm8009, %v8003, %v8010
        %vm8012 = vcmp.eq.s32.totalorder %v8007, 2
        %v8013 = vxor.u32 %v8003, 2147483648
        %v8014 = vsel %vm8012, %v8013, %v8004
        %v8015 = vsel %vm8008, %v8011, %v8014
        %v8016 = vsel %vm8005, nan, %v8015
        %v8017 = vand.u32 2147483647, %v6967
        %vm8018 = vcmp.le.f32.partialorder %v8017, 0.7853982
        %vm8019 = vcmp.lt.s32.totalorder %v6967, 0
        %v8020 = vand.u32 %v6967, 2139095040
        %v8021 = vshrl.u32 %v8020, 23
        %v8022 = vsub.s32 %v8021, 127
        %v8023 = vand.u32 2147483647, %v6967
        %v8024 = vand.u32 %v8023, 8388607
        %v8025 = vor.u32 %v8024, 8388608
        %v8026 = vsub.s32 0, %v8025
        %v8027 = vadd.s32 %v8022, 1
        %vm8028 = vcmp.gt.s32.totalorder %v8027, 0
        %v8029 = vsel %vm8028, %v8027, 0
        %v8030 = vshrl.u32 %v8029, 5
        %v8031 = vand.u32 %v8029, 31
        %v8032 = vsub.s32 32, %v8031
        %v8033 = vshrl.u32 683565275, %v8032
        %v8034 = vshll.u32 683565275, %v8031
        %v8035 = vshrl.u32 2475754826, %v8032
        %v8036 = vor.u32 %v8034, %v8035
        %v8037 = vshll.u32 2475754826, %v8031
        %v8038 = vshrl.u32 2131351028, %v8032
        %v8039 = vor.u32 %v8037, %v8038
        %v8040 = vshll.u32 2131351028, %v8031
        %v8041 = vshrl.u32 2102212464, %v8032
        %v8042 = vor.u32 %v8040, %v8041
        %v8043 = vshll.u32 2102212464, %v8031
        %v8044 = vshrl.u32 920167782, %v8032
        %v8045 = vor.u32 %v8043, %v8044
        %v8046 = vshll.u32 920167782, %v8031
        %v8047 = vshrl.u32 1326507024, %v8032
        %v8048 = vor.u32 %v8046, %v8047
        %vm8049 = vcmp.lt.s32.totalorder %v8030, 1
        %vm8050 = vcmp.lt.s32.totalorder %v8030, 2
        %vm8051 = vcmp.lt.s32.totalorder %v8030, 3
        %vm8052 = vcmp.lt.s32.totalorder %v8030, 4
        %v8053 = vsel %vm8049, %v8033, %v8036
        %v8054 = vsel %vm8052, %v8042, 2102212464
        %v8055 = vsel %vm8051, %v8039, %v8054
        %v8056 = vsel %vm8050, %v8053, %v8055
        %v8057 = vsel %vm8049, %v8036, %v8039
        %v8058 = vsel %vm8052, %v8045, 920167782
        %v8059 = vsel %vm8051, %v8042, %v8058
        %v8060 = vsel %vm8050, %v8057, %v8059
        %v8061 = vsel %vm8049, %v8039, %v8042
        %v8062 = vsel %vm8052, %v8048, 1326507024
        %v8063 = vsel %vm8051, %v8045, %v8062
        %v8064 = vsel %vm8050, %v8061, %v8063
        %v8065 = vshll.u32 %v8025, 8
        %v8066 = vmul.u32.u64.compose %v8065, %v8064
        %v8067 = vextract.low.u32 %v8066
        %v8068 = vextract.high.u32 %v8066
        %v8069 = vmul.u32.u64.compose %v8065, %v8060
        %v8070 = vextract.low.u32 %v8069
        %v8071 = vextract.high.u32 %v8069
        %v8072 = vmul.u32 %v8065, %v8056
        %v8073 = vadd.s32 %v8068, %v8070
        %vm8074 = vc.u32 %v8068, %v8070
        %v8075 = vadd.s32 %v8071, 1
        %v8076 = vsel %vm8074, %v8075, %v8071
        %v8077 = vadd.s32 %v8072, %v8076
        %v8078 = vadd.s32 %v8077, 536870912
        %v8079 = vshrl.u32 %v8078, 30
        %v8080 = vshll.u32 %v8079, 30
        %v8081 = vsub.s32 %v8077, %v8080
        %vm8082 = vcmp.lt.s32.totalorder %v8081, 0
        %v8083 = vsub.s32 0, %v8081
        %v8084 = vsel %vm8082, %v8083, %v8081
        %v8085 = vclz %v8084
        %v8086 = vsub.s32 %v8085, 2
        %vm8087 = vcmp.gt.s32.totalorder 0, %v8086
        %v8088 = vsel %vm8087, 0, %v8086
        %v8089 = vsub.s32 32, %v8088
        %v8090 = vshll.u32 %v8081, %v8088
        %v8091 = vshrl.u32 %v8073, %v8089
        %v8092 = vor.u32 %v8090, %v8091
        %v8093 = vsub.s32 4294967266, %v8088
        %v8094 = vadd.s32 %v8093, 127
        %v8095 = vshll.u32 %v8094, 23
        %v8096 = vor.u32 4788187, %v8095
        %v8097 = vand.u32 2147483647, %v8096
        %v8099 = vcvt.s32.f32 %v8092
        %v8100 = vmul.f32 %v8099, %v8097
        %v8101 = vxor.u32 %v8100, 2147483648
        %v8102 = vsel %vm8019, %v8101, %v8100
        %v8103 = vsub.s32 4, %v8079
        %v8104 = vsel %vm8019, %v8103, %v8079
        %v8105 = vsel %vm8018, %v6967, %v8102
        %v8106 = vsel %vm8018, 0, %v8104
        %v8107 = vcosq.f32.pop %v8105
        %v8108 = vsinq.f32.pop %v8105
        %vm8109 = vweird.f32 %v6967
        %v8110 = vadd.s32 %v8106, 3
        %v8111 = vand.u32 %v8110, 3
        %vm8112 = vcmp.lt.s32.totalorder %v8111, 2
        %vm8113 = vcmp.eq.s32.totalorder %v8111, 0
        %v8114 = vxor.u32 %v8108, 2147483648
        %v8115 = vsel %vm8113, %v8107, %v8114
        %vm8116 = vcmp.eq.s32.totalorder %v8111, 2
        %v8117 = vxor.u32 %v8107, 2147483648
        %v8118 = vsel %vm8116, %v8117, %v8108
        %v8119 = vsel %vm8112, %v8115, %v8118
        %v8120 = vsel %vm8109, nan, %v8119
        %v8121 = vand.u32 2147483647, %v6969
        %vm8122 = vcmp.le.f32.partialorder %v8121, 0.7853982
        %vm8123 = vcmp.lt.s32.totalorder %v6969, 0
        %v8124 = vand.u32 %v6969, 2139095040
        %v8125 = vshrl.u32 %v8124, 23
        %v8126 = vsub.s32 %v8125, 127
        %v8127 = vand.u32 2147483647, %v6969
        %v8128 = vand.u32 %v8127, 8388607
        %v8129 = vor.u32 %v8128, 8388608
        %v8130 = vsub.s32 0, %v8129
        %v8131 = vadd.s32 %v8126, 1
        %vm8132 = vcmp.gt.s32.totalorder %v8131, 0
        %v8133 = vsel %vm8132, %v8131, 0
        %v8134 = vshrl.u32 %v8133, 5
        %v8135 = vand.u32 %v8133, 31
        %v8136 = vsub.s32 32, %v8135
        %v8137 = vshrl.u32 683565275, %v8136
        %v8138 = vshll.u32 683565275, %v8135
        %v8139 = vshrl.u32 2475754826, %v8136
        %v8140 = vor.u32 %v8138, %v8139
        %v8141 = vshll.u32 2475754826, %v8135
        %v8142 = vshrl.u32 2131351028, %v8136
        %v8143 = vor.u32 %v8141, %v8142
        %v8144 = vshll.u32 2131351028, %v8135
        %v8145 = vshrl.u32 2102212464, %v8136
        %v8146 = vor.u32 %v8144, %v8145
        %v8147 = vshll.u32 2102212464, %v8135
        %v8148 = vshrl.u32 920167782, %v8136
        %v8149 = vor.u32 %v8147, %v8148
        %v8150 = vshll.u32 920167782, %v8135
        %v8151 = vshrl.u32 1326507024, %v8136
        %v8152 = vor.u32 %v8150, %v8151
        %vm8153 = vcmp.lt.s32.totalorder %v8134, 1
        %vm8154 = vcmp.lt.s32.totalorder %v8134, 2
        %vm8155 = vcmp.lt.s32.totalorder %v8134, 3
        %vm8156 = vcmp.lt.s32.totalorder %v8134, 4
        %v8157 = vsel %vm8153, %v8137, %v8140
        %v8158 = vsel %vm8156, %v8146, 2102212464
        %v8159 = vsel %vm8155, %v8143, %v8158
        %v8160 = vsel %vm8154, %v8157, %v8159
        %v8161 = vsel %vm8153, %v8140, %v8143
        %v8162 = vsel %vm8156, %v8149, 920167782
        %v8163 = vsel %vm8155, %v8146, %v8162
        %v8164 = vsel %vm8154, %v8161, %v8163
        %v8165 = vsel %vm8153, %v8143, %v8146
        %v8166 = vsel %vm8156, %v8152, 1326507024
        %v8167 = vsel %vm8155, %v8149, %v8166
        %v8168 = vsel %vm8154, %v8165, %v8167
        %v8169 = vshll.u32 %v8129, 8
        %v8170 = vmul.u32.u64.compose %v8169, %v8168
        %v8171 = vextract.low.u32 %v8170
        %v8172 = vextract.high.u32 %v8170
        %v8173 = vmul.u32.u64.compose %v8169, %v8164
        %v8174 = vextract.low.u32 %v8173
        %v8175 = vextract.high.u32 %v8173
        %v8176 = vmul.u32 %v8169, %v8160
        %v8177 = vadd.s32 %v8172, %v8174
        %vm8178 = vc.u32 %v8172, %v8174
        %v8179 = vadd.s32 %v8175, 1
        %v8180 = vsel %vm8178, %v8179, %v8175
        %v8181 = vadd.s32 %v8176, %v8180
        %v8182 = vadd.s32 %v8181, 536870912
        %v8183 = vshrl.u32 %v8182, 30
        %v8184 = vshll.u32 %v8183, 30
        %v8185 = vsub.s32 %v8181, %v8184
        %vm8186 = vcmp.lt.s32.totalorder %v8185, 0
        %v8187 = vsub.s32 0, %v8185
        %v8188 = vsel %vm8186, %v8187, %v8185
        %v8189 = vclz %v8188
        %v8190 = vsub.s32 %v8189, 2
        %vm8191 = vcmp.gt.s32.totalorder 0, %v8190
        %v8192 = vsel %vm8191, 0, %v8190
        %v8193 = vsub.s32 32, %v8192
        %v8194 = vshll.u32 %v8185, %v8192
        %v8195 = vshrl.u32 %v8177, %v8193
        %v8196 = vor.u32 %v8194, %v8195
        %v8197 = vsub.s32 4294967266, %v8192
        %v8198 = vadd.s32 %v8197, 127
        %v8199 = vshll.u32 %v8198, 23
        %v8200 = vor.u32 4788187, %v8199
        %v8201 = vand.u32 2147483647, %v8200
        %v8203 = vcvt.s32.f32 %v8196
        %v8204 = vmul.f32 %v8203, %v8201
        %v8205 = vxor.u32 %v8204, 2147483648
        %v8206 = vsel %vm8123, %v8205, %v8204
        %v8207 = vsub.s32 4, %v8183
        %v8208 = vsel %vm8123, %v8207, %v8183
        %v8209 = vsel %vm8122, %v6969, %v8206
        %v8210 = vsel %vm8122, 0, %v8208
        %v8211 = vcosq.f32.pop %v8209
        %v8212 = vsinq.f32.pop %v8209
        %vm8213 = vweird.f32 %v6969
        %v8214 = vadd.s32 %v8210, 3
        %v8215 = vand.u32 %v8214, 3
        %vm8216 = vcmp.lt.s32.totalorder %v8215, 2
        %vm8217 = vcmp.eq.s32.totalorder %v8215, 0
        %v8218 = vxor.u32 %v8212, 2147483648
        %v8219 = vsel %vm8217, %v8211, %v8218
        %vm8220 = vcmp.eq.s32.totalorder %v8215, 2
        %v8221 = vxor.u32 %v8211, 2147483648
        %v8222 = vsel %vm8220, %v8221, %v8212
        %v8223 = vsel %vm8216, %v8219, %v8222
        %v8224 = vsel %vm8213, nan, %v8223
        %v8225 = vand.u32 2147483647, %v6884
        %vm8226 = vcmp.le.f32.partialorder %v8225, 0.7853982
        %vm8227 = vcmp.lt.s32.totalorder %v6884, 0
        %v8228 = vand.u32 %v6884, 2139095040
        %v8229 = vshrl.u32 %v8228, 23
        %v8230 = vsub.s32 %v8229, 127
        %v8231 = vand.u32 2147483647, %v6884
        %v8232 = vand.u32 %v8231, 8388607
        %v8233 = vor.u32 %v8232, 8388608
        %v8234 = vsub.s32 0, %v8233
        %v8235 = vadd.s32 %v8230, 1
        %vm8236 = vcmp.gt.s32.totalorder %v8235, 0
        %v8237 = vsel %vm8236, %v8235, 0
        %v8238 = vshrl.u32 %v8237, 5
        %v8239 = vand.u32 %v8237, 31
        %v8240 = vsub.s32 32, %v8239
        %v8241 = vshrl.u32 683565275, %v8240
        %v8242 = vshll.u32 683565275, %v8239
        %v8243 = vshrl.u32 2475754826, %v8240
        %v8244 = vor.u32 %v8242, %v8243
        %v8245 = vshll.u32 2475754826, %v8239
        %v8246 = vshrl.u32 2131351028, %v8240
        %v8247 = vor.u32 %v8245, %v8246
        %v8248 = vshll.u32 2131351028, %v8239
        %v8249 = vshrl.u32 2102212464, %v8240
        %v8250 = vor.u32 %v8248, %v8249
        %v8251 = vshll.u32 2102212464, %v8239
        %v8252 = vshrl.u32 920167782, %v8240
        %v8253 = vor.u32 %v8251, %v8252
        %v8254 = vshll.u32 920167782, %v8239
        %v8255 = vshrl.u32 1326507024, %v8240
        %v8256 = vor.u32 %v8254, %v8255
        %vm8257 = vcmp.lt.s32.totalorder %v8238, 1
        %vm8258 = vcmp.lt.s32.totalorder %v8238, 2
        %vm8259 = vcmp.lt.s32.totalorder %v8238, 3
        %vm8260 = vcmp.lt.s32.totalorder %v8238, 4
        %v8261 = vsel %vm8257, %v8241, %v8244
        %v8262 = vsel %vm8260, %v8250, 2102212464
        %v8263 = vsel %vm8259, %v8247, %v8262
        %v8264 = vsel %vm8258, %v8261, %v8263
        %v8265 = vsel %vm8257, %v8244, %v8247
        %v8266 = vsel %vm8260, %v8253, 920167782
        %v8267 = vsel %vm8259, %v8250, %v8266
        %v8268 = vsel %vm8258, %v8265, %v8267
        %v8269 = vsel %vm8257, %v8247, %v8250
        %v8270 = vsel %vm8260, %v8256, 1326507024
        %v8271 = vsel %vm8259, %v8253, %v8270
        %v8272 = vsel %vm8258, %v8269, %v8271
        %v8273 = vshll.u32 %v8233, 8
        %v8274 = vmul.u32.u64.compose %v8273, %v8272
        %v8275 = vextract.low.u32 %v8274
        %v8276 = vextract.high.u32 %v8274
        %v8277 = vmul.u32.u64.compose %v8273, %v8268
        %v8278 = vextract.low.u32 %v8277
        %v8279 = vextract.high.u32 %v8277
        %v8280 = vmul.u32 %v8273, %v8264
        %v8281 = vadd.s32 %v8276, %v8278
        %vm8282 = vc.u32 %v8276, %v8278
        %v8283 = vadd.s32 %v8279, 1
        %v8284 = vsel %vm8282, %v8283, %v8279
        %v8285 = vadd.s32 %v8280, %v8284
        %v8286 = vadd.s32 %v8285, 536870912
        %v8287 = vshrl.u32 %v8286, 30
        %v8288 = vshll.u32 %v8287, 30
        %v8289 = vsub.s32 %v8285, %v8288
        %vm8290 = vcmp.lt.s32.totalorder %v8289, 0
        %v8291 = vsub.s32 0, %v8289
        %v8292 = vsel %vm8290, %v8291, %v8289
        %v8293 = vclz %v8292
        %v8294 = vsub.s32 %v8293, 2
        %vm8295 = vcmp.gt.s32.totalorder 0, %v8294
        %v8296 = vsel %vm8295, 0, %v8294
        %v8297 = vsub.s32 32, %v8296
        %v8298 = vshll.u32 %v8289, %v8296
        %v8299 = vshrl.u32 %v8281, %v8297
        %v8300 = vor.u32 %v8298, %v8299
        %v8301 = vsub.s32 4294967266, %v8296
        %v8302 = vadd.s32 %v8301, 127
        %v8303 = vshll.u32 %v8302, 23
        %v8304 = vor.u32 4788187, %v8303
        %v8305 = vand.u32 2147483647, %v8304
        %v8307 = vcvt.s32.f32 %v8300
        %v8308 = vmul.f32 %v8307, %v8305
        %v8309 = vxor.u32 %v8308, 2147483648
        %v8310 = vsel %vm8227, %v8309, %v8308
        %v8311 = vsub.s32 4, %v8287
        %v8312 = vsel %vm8227, %v8311, %v8287
        %v8313 = vsel %vm8226, %v6884, %v8310
        %v8314 = vsel %vm8226, 0, %v8312
        %v8315 = vcosq.f32.pop %v8313
        %v8316 = vsinq.f32.pop %v8313
        %vm8317 = vweird.f32 %v6884
        %v8318 = vadd.s32 %v8314, 3
        %v8319 = vand.u32 %v8318, 3
        %vm8320 = vcmp.lt.s32.totalorder %v8319, 2
        %vm8321 = vcmp.eq.s32.totalorder %v8319, 0
        %v8322 = vxor.u32 %v8316, 2147483648
        %v8323 = vsel %vm8321, %v8315, %v8322
        %vm8324 = vcmp.eq.s32.totalorder %v8319, 2
        %v8325 = vxor.u32 %v8315, 2147483648
        %v8326 = vsel %vm8324, %v8325, %v8316
        %v8327 = vsel %vm8320, %v8323, %v8326
        %v8328 = vsel %vm8317, nan, %v8327
        %v8329 = vand.u32 2147483647, %v6886
        %vm8330 = vcmp.le.f32.partialorder %v8329, 0.7853982
        %vm8331 = vcmp.lt.s32.totalorder %v6886, 0
        %v8332 = vand.u32 %v6886, 2139095040
        %v8333 = vshrl.u32 %v8332, 23
        %v8334 = vsub.s32 %v8333, 127
        %v8335 = vand.u32 2147483647, %v6886
        %v8336 = vand.u32 %v8335, 8388607
        %v8337 = vor.u32 %v8336, 8388608
        %v8338 = vsub.s32 0, %v8337
        %v8339 = vadd.s32 %v8334, 1
        %vm8340 = vcmp.gt.s32.totalorder %v8339, 0
        %v8341 = vsel %vm8340, %v8339, 0
        %v8342 = vshrl.u32 %v8341, 5
        %v8343 = vand.u32 %v8341, 31
        %v8344 = vsub.s32 32, %v8343
        %v8345 = vshrl.u32 683565275, %v8344
        %v8346 = vshll.u32 683565275, %v8343
        %v8347 = vshrl.u32 2475754826, %v8344
        %v8348 = vor.u32 %v8346, %v8347
        %v8349 = vshll.u32 2475754826, %v8343
        %v8350 = vshrl.u32 2131351028, %v8344
        %v8351 = vor.u32 %v8349, %v8350
        %v8352 = vshll.u32 2131351028, %v8343
        %v8353 = vshrl.u32 2102212464, %v8344
        %v8354 = vor.u32 %v8352, %v8353
        %v8355 = vshll.u32 2102212464, %v8343
        %v8356 = vshrl.u32 920167782, %v8344
        %v8357 = vor.u32 %v8355, %v8356
        %v8358 = vshll.u32 920167782, %v8343
        %v8359 = vshrl.u32 1326507024, %v8344
        %v8360 = vor.u32 %v8358, %v8359
        %vm8361 = vcmp.lt.s32.totalorder %v8342, 1
        %vm8362 = vcmp.lt.s32.totalorder %v8342, 2
        %vm8363 = vcmp.lt.s32.totalorder %v8342, 3
        %vm8364 = vcmp.lt.s32.totalorder %v8342, 4
        %v8365 = vsel %vm8361, %v8345, %v8348
        %v8366 = vsel %vm8364, %v8354, 2102212464
        %v8367 = vsel %vm8363, %v8351, %v8366
        %v8368 = vsel %vm8362, %v8365, %v8367
        %v8369 = vsel %vm8361, %v8348, %v8351
        %v8370 = vsel %vm8364, %v8357, 920167782
        %v8371 = vsel %vm8363, %v8354, %v8370
        %v8372 = vsel %vm8362, %v8369, %v8371
        %v8373 = vsel %vm8361, %v8351, %v8354
        %v8374 = vsel %vm8364, %v8360, 1326507024
        %v8375 = vsel %vm8363, %v8357, %v8374
        %v8376 = vsel %vm8362, %v8373, %v8375
        %v8377 = vshll.u32 %v8337, 8
        %v8378 = vmul.u32.u64.compose %v8377, %v8376
        %v8379 = vextract.low.u32 %v8378
        %v8380 = vextract.high.u32 %v8378
        %v8381 = vmul.u32.u64.compose %v8377, %v8372
        %v8382 = vextract.low.u32 %v8381
        %v8383 = vextract.high.u32 %v8381
        %v8384 = vmul.u32 %v8377, %v8368
        %v8385 = vadd.s32 %v8380, %v8382
        %vm8386 = vc.u32 %v8380, %v8382
        %v8387 = vadd.s32 %v8383, 1
        %v8388 = vsel %vm8386, %v8387, %v8383
        %v8389 = vadd.s32 %v8384, %v8388
        %v8390 = vadd.s32 %v8389, 536870912
        %v8391 = vshrl.u32 %v8390, 30
        %v8392 = vshll.u32 %v8391, 30
        %v8393 = vsub.s32 %v8389, %v8392
        %vm8394 = vcmp.lt.s32.totalorder %v8393, 0
        %v8395 = vsub.s32 0, %v8393
        %v8396 = vsel %vm8394, %v8395, %v8393
        %v8397 = vclz %v8396
        %v8398 = vsub.s32 %v8397, 2
        %vm8399 = vcmp.gt.s32.totalorder 0, %v8398
        %v8400 = vsel %vm8399, 0, %v8398
        %v8401 = vsub.s32 32, %v8400
        %v8402 = vshll.u32 %v8393, %v8400
        %v8403 = vshrl.u32 %v8385, %v8401
        %v8404 = vor.u32 %v8402, %v8403
        %v8405 = vsub.s32 4294967266, %v8400
        %v8406 = vadd.s32 %v8405, 127
        %v8407 = vshll.u32 %v8406, 23
        %v8408 = vor.u32 4788187, %v8407
        %v8409 = vand.u32 2147483647, %v8408
        %v8411 = vcvt.s32.f32 %v8404
        %v8412 = vmul.f32 %v8411, %v8409
        %v8413 = vxor.u32 %v8412, 2147483648
        %v8414 = vsel %vm8331, %v8413, %v8412
        %v8415 = vsub.s32 4, %v8391
        %v8416 = vsel %vm8331, %v8415, %v8391
        %v8417 = vsel %vm8330, %v6886, %v8414
        %v8418 = vsel %vm8330, 0, %v8416
        %v8419 = vcosq.f32.pop %v8417
        %v8420 = vsinq.f32.pop %v8417
        %vm8421 = vweird.f32 %v6886
        %v8422 = vadd.s32 %v8418, 3
        %v8423 = vand.u32 %v8422, 3
        %vm8424 = vcmp.lt.s32.totalorder %v8423, 2
        %vm8425 = vcmp.eq.s32.totalorder %v8423, 0
        %v8426 = vxor.u32 %v8420, 2147483648
        %v8427 = vsel %vm8425, %v8419, %v8426
        %vm8428 = vcmp.eq.s32.totalorder %v8423, 2
        %v8429 = vxor.u32 %v8419, 2147483648
        %v8430 = vsel %vm8428, %v8429, %v8420
        %v8431 = vsel %vm8424, %v8427, %v8430
        %v8432 = vsel %vm8421, nan, %v8431
        %v8433 = vand.u32 2147483647, %v6973
        %vm8434 = vcmp.le.f32.partialorder %v8433, 0.7853982
        %vm8435 = vcmp.lt.s32.totalorder %v6973, 0
        %v8436 = vand.u32 %v6973, 2139095040
        %v8437 = vshrl.u32 %v8436, 23
        %v8438 = vsub.s32 %v8437, 127
        %v8439 = vand.u32 2147483647, %v6973
        %v8440 = vand.u32 %v8439, 8388607
        %v8441 = vor.u32 %v8440, 8388608
        %v8442 = vsub.s32 0, %v8441
        %v8443 = vadd.s32 %v8438, 1
        %vm8444 = vcmp.gt.s32.totalorder %v8443, 0
        %v8445 = vsel %vm8444, %v8443, 0
        %v8446 = vshrl.u32 %v8445, 5
        %v8447 = vand.u32 %v8445, 31
        %v8448 = vsub.s32 32, %v8447
        %v8449 = vshrl.u32 683565275, %v8448
        %v8450 = vshll.u32 683565275, %v8447
        %v8451 = vshrl.u32 2475754826, %v8448
        %v8452 = vor.u32 %v8450, %v8451
        %v8453 = vshll.u32 2475754826, %v8447
        %v8454 = vshrl.u32 2131351028, %v8448
        %v8455 = vor.u32 %v8453, %v8454
        %v8456 = vshll.u32 2131351028, %v8447
        %v8457 = vshrl.u32 2102212464, %v8448
        %v8458 = vor.u32 %v8456, %v8457
        %v8459 = vshll.u32 2102212464, %v8447
        %v8460 = vshrl.u32 920167782, %v8448
        %v8461 = vor.u32 %v8459, %v8460
        %v8462 = vshll.u32 920167782, %v8447
        %v8463 = vshrl.u32 1326507024, %v8448
        %v8464 = vor.u32 %v8462, %v8463
        %vm8465 = vcmp.lt.s32.totalorder %v8446, 1
        %vm8466 = vcmp.lt.s32.totalorder %v8446, 2
        %vm8467 = vcmp.lt.s32.totalorder %v8446, 3
        %vm8468 = vcmp.lt.s32.totalorder %v8446, 4
        %v8469 = vsel %vm8465, %v8449, %v8452
        %v8470 = vsel %vm8468, %v8458, 2102212464
        %v8471 = vsel %vm8467, %v8455, %v8470
        %v8472 = vsel %vm8466, %v8469, %v8471
        %v8473 = vsel %vm8465, %v8452, %v8455
        %v8474 = vsel %vm8468, %v8461, 920167782
        %v8475 = vsel %vm8467, %v8458, %v8474
        %v8476 = vsel %vm8466, %v8473, %v8475
        %v8477 = vsel %vm8465, %v8455, %v8458
        %v8478 = vsel %vm8468, %v8464, 1326507024
        %v8479 = vsel %vm8467, %v8461, %v8478
        %v8480 = vsel %vm8466, %v8477, %v8479
        %v8481 = vshll.u32 %v8441, 8
        %v8482 = vmul.u32.u64.compose %v8481, %v8480
        %v8483 = vextract.low.u32 %v8482
        %v8484 = vextract.high.u32 %v8482
        %v8485 = vmul.u32.u64.compose %v8481, %v8476
        %v8486 = vextract.low.u32 %v8485
        %v8487 = vextract.high.u32 %v8485
        %v8488 = vmul.u32 %v8481, %v8472
        %v8489 = vadd.s32 %v8484, %v8486
        %vm8490 = vc.u32 %v8484, %v8486
        %v8491 = vadd.s32 %v8487, 1
        %v8492 = vsel %vm8490, %v8491, %v8487
        %v8493 = vadd.s32 %v8488, %v8492
        %v8494 = vadd.s32 %v8493, 536870912
        %v8495 = vshrl.u32 %v8494, 30
        %v8496 = vshll.u32 %v8495, 30
        %v8497 = vsub.s32 %v8493, %v8496
        %vm8498 = vcmp.lt.s32.totalorder %v8497, 0
        %v8499 = vsub.s32 0, %v8497
        %v8500 = vsel %vm8498, %v8499, %v8497
        %v8501 = vclz %v8500
        %v8502 = vsub.s32 %v8501, 2
        %vm8503 = vcmp.gt.s32.totalorder 0, %v8502
        %v8504 = vsel %vm8503, 0, %v8502
        %v8505 = vsub.s32 32, %v8504
        %v8506 = vshll.u32 %v8497, %v8504
        %v8507 = vshrl.u32 %v8489, %v8505
        %v8508 = vor.u32 %v8506, %v8507
        %v8509 = vsub.s32 4294967266, %v8504
        %v8510 = vadd.s32 %v8509, 127
        %v8511 = vshll.u32 %v8510, 23
        %v8512 = vor.u32 4788187, %v8511
        %v8513 = vand.u32 2147483647, %v8512
        %v8515 = vcvt.s32.f32 %v8508
        %v8516 = vmul.f32 %v8515, %v8513
        %v8517 = vxor.u32 %v8516, 2147483648
        %v8518 = vsel %vm8435, %v8517, %v8516
        %v8519 = vsub.s32 4, %v8495
        %v8520 = vsel %vm8435, %v8519, %v8495
        %v8521 = vsel %vm8434, %v6973, %v8518
        %v8522 = vsel %vm8434, 0, %v8520
        %v8523 = vcosq.f32.pop %v8521
        %v8524 = vsinq.f32.pop %v8521
        %vm8525 = vweird.f32 %v6973
        %v8526 = vadd.s32 %v8522, 3
        %v8527 = vand.u32 %v8526, 3
        %vm8528 = vcmp.lt.s32.totalorder %v8527, 2
        %vm8529 = vcmp.eq.s32.totalorder %v8527, 0
        %v8530 = vxor.u32 %v8524, 2147483648
        %v8531 = vsel %vm8529, %v8523, %v8530
        %vm8532 = vcmp.eq.s32.totalorder %v8527, 2
        %v8533 = vxor.u32 %v8523, 2147483648
        %v8534 = vsel %vm8532, %v8533, %v8524
        %v8535 = vsel %vm8528, %v8531, %v8534
        %v8536 = vsel %vm8525, nan, %v8535
        %v8537 = vand.u32 2147483647, %v6975
        %vm8538 = vcmp.le.f32.partialorder %v8537, 0.7853982
        %vm8539 = vcmp.lt.s32.totalorder %v6975, 0
        %v8540 = vand.u32 %v6975, 2139095040
        %v8541 = vshrl.u32 %v8540, 23
        %v8542 = vsub.s32 %v8541, 127
        %v8543 = vand.u32 2147483647, %v6975
        %v8544 = vand.u32 %v8543, 8388607
        %v8545 = vor.u32 %v8544, 8388608
        %v8546 = vsub.s32 0, %v8545
        %v8547 = vadd.s32 %v8542, 1
        %vm8548 = vcmp.gt.s32.totalorder %v8547, 0
        %v8549 = vsel %vm8548, %v8547, 0
        %v8550 = vshrl.u32 %v8549, 5
        %v8551 = vand.u32 %v8549, 31
        %v8552 = vsub.s32 32, %v8551
        %v8553 = vshrl.u32 683565275, %v8552
        %v8554 = vshll.u32 683565275, %v8551
        %v8555 = vshrl.u32 2475754826, %v8552
        %v8556 = vor.u32 %v8554, %v8555
        %v8557 = vshll.u32 2475754826, %v8551
        %v8558 = vshrl.u32 2131351028, %v8552
        %v8559 = vor.u32 %v8557, %v8558
        %v8560 = vshll.u32 2131351028, %v8551
        %v8561 = vshrl.u32 2102212464, %v8552
        %v8562 = vor.u32 %v8560, %v8561
        %v8563 = vshll.u32 2102212464, %v8551
        %v8564 = vshrl.u32 920167782, %v8552
        %v8565 = vor.u32 %v8563, %v8564
        %v8566 = vshll.u32 920167782, %v8551
        %v8567 = vshrl.u32 1326507024, %v8552
        %v8568 = vor.u32 %v8566, %v8567
        %vm8569 = vcmp.lt.s32.totalorder %v8550, 1
        %vm8570 = vcmp.lt.s32.totalorder %v8550, 2
        %vm8571 = vcmp.lt.s32.totalorder %v8550, 3
        %vm8572 = vcmp.lt.s32.totalorder %v8550, 4
        %v8573 = vsel %vm8569, %v8553, %v8556
        %v8574 = vsel %vm8572, %v8562, 2102212464
        %v8575 = vsel %vm8571, %v8559, %v8574
        %v8576 = vsel %vm8570, %v8573, %v8575
        %v8577 = vsel %vm8569, %v8556, %v8559
        %v8578 = vsel %vm8572, %v8565, 920167782
        %v8579 = vsel %vm8571, %v8562, %v8578
        %v8580 = vsel %vm8570, %v8577, %v8579
        %v8581 = vsel %vm8569, %v8559, %v8562
        %v8582 = vsel %vm8572, %v8568, 1326507024
        %v8583 = vsel %vm8571, %v8565, %v8582
        %v8584 = vsel %vm8570, %v8581, %v8583
        %v8585 = vshll.u32 %v8545, 8
        %v8586 = vmul.u32.u64.compose %v8585, %v8584
        %v8587 = vextract.low.u32 %v8586
        %v8588 = vextract.high.u32 %v8586
        %v8589 = vmul.u32.u64.compose %v8585, %v8580
        %v8590 = vextract.low.u32 %v8589
        %v8591 = vextract.high.u32 %v8589
        %v8592 = vmul.u32 %v8585, %v8576
        %v8593 = vadd.s32 %v8588, %v8590
        %vm8594 = vc.u32 %v8588, %v8590
        %v8595 = vadd.s32 %v8591, 1
        %v8596 = vsel %vm8594, %v8595, %v8591
        %v8597 = vadd.s32 %v8592, %v8596
        %v8598 = vadd.s32 %v8597, 536870912
        %v8599 = vshrl.u32 %v8598, 30
        %v8600 = vshll.u32 %v8599, 30
        %v8601 = vsub.s32 %v8597, %v8600
        %vm8602 = vcmp.lt.s32.totalorder %v8601, 0
        %v8603 = vsub.s32 0, %v8601
        %v8604 = vsel %vm8602, %v8603, %v8601
        %v8605 = vclz %v8604
        %v8606 = vsub.s32 %v8605, 2
        %vm8607 = vcmp.gt.s32.totalorder 0, %v8606
        %v8608 = vsel %vm8607, 0, %v8606
        %v8609 = vsub.s32 32, %v8608
        %v8610 = vshll.u32 %v8601, %v8608
        %v8611 = vshrl.u32 %v8593, %v8609
        %v8612 = vor.u32 %v8610, %v8611
        %v8613 = vsub.s32 4294967266, %v8608
        %v8614 = vadd.s32 %v8613, 127
        %v8615 = vshll.u32 %v8614, 23
        %v8616 = vor.u32 4788187, %v8615
        %v8617 = vand.u32 2147483647, %v8616
        %v8619 = vcvt.s32.f32 %v8612
        %v8620 = vmul.f32 %v8619, %v8617
        %v8621 = vxor.u32 %v8620, 2147483648
        %v8622 = vsel %vm8539, %v8621, %v8620
        %v8623 = vsub.s32 4, %v8599
        %v8624 = vsel %vm8539, %v8623, %v8599
        %v8625 = vsel %vm8538, %v6975, %v8622
        %v8626 = vsel %vm8538, 0, %v8624
        %v8627 = vcosq.f32.pop %v8625
        %v8628 = vsinq.f32.pop %v8625
        %vm8629 = vweird.f32 %v6975
        %v8630 = vadd.s32 %v8626, 3
        %v8631 = vand.u32 %v8630, 3
        %vm8632 = vcmp.lt.s32.totalorder %v8631, 2
        %vm8633 = vcmp.eq.s32.totalorder %v8631, 0
        %v8634 = vxor.u32 %v8628, 2147483648
        %v8635 = vsel %vm8633, %v8627, %v8634
        %vm8636 = vcmp.eq.s32.totalorder %v8631, 2
        %v8637 = vxor.u32 %v8627, 2147483648
        %v8638 = vsel %vm8636, %v8637, %v8628
        %v8639 = vsel %vm8632, %v8635, %v8638
        %v8640 = vsel %vm8629, nan, %v8639
        %s8641 = scalar_lea.vmem %s3, 64
        %v8642 = vld [vmem:[%s8641] sm:$0xff]
        %v8643 = vld [vmem:[%s8641 + $0x8] sm:$0xff]
        %v8644 = vld [vmem:[%s8641 + $0x10] sm:$0xff]
        %v8645 = vld [vmem:[%s8641 + $0x18] sm:$0xff]
        %s8646 = scalar_lea.vmem %s4, 64
        %v8647 = vld [vmem:[%s8646] sm:$0xff]
        %v8648 = vld [vmem:[%s8646 + $0x8] sm:$0xff]
        %v8649 = vld [vmem:[%s8646 + $0x10] sm:$0xff]
        %v8650 = vld [vmem:[%s8646 + $0x18] sm:$0xff]
        %8652 = vset.pattern.permute.xlu0 0
        %8653 = vperm.xlu0 %8652, %v8647
        %v8654 = vpop.permute.xlu0 %8653
        %8657 = vset.pattern.permute.xlu0 0
        %8658 = vperm.xlu0 %8657, %v8648
        %v8659 = vpop.permute.xlu0 %8658
        %8662 = vset.pattern.permute.xlu0 0
        %8663 = vperm.xlu0 %8662, %v8649
        %v8664 = vpop.permute.xlu0 %8663
        %8667 = vset.pattern.permute.xlu0 0
        %8668 = vperm.xlu0 %8667, %v8650
        %v8669 = vpop.permute.xlu0 %8668
        %v8672 = vsel %vm4103, %v8642, 0
        %v8675 = vsel %vm4103, %v8643, 0
        %v8678 = vsel %vm4103, %v8644, 0
        %v8681 = vsel %vm4103, %v8645, 0
        %8683 = vmatprep.subr.mxu0 %v6577
        %8684 = vmatpush1.msra.mxu0 %v6576
        %8685 = vmatprep.subr.mxu0 %v6581
        %8686 = vmatpush1.msra.mxu0 %v6580
        %8687 = vmatprep.subr.mxu0 %v6585
        %8688 = vmatpush1.msra.mxu0 %v6584
        %8689 = vmatprep.subr.mxu0 %v6589
        %8690 = vmatpush1.msra.mxu0 %v6588
        %8691 = vmatprep.subr.mxu0 0.0
        %8692 = vmatpush1.msra.mxu0 0.0
        %8693 = vmatprep.subr.mxu0 0.0
        %8694 = vmatpush1.msra.mxu0 0.0
        %8695 = vmatprep.subr.mxu0 0.0
        %8696 = vmatpush1.msra.mxu0 0.0
        %8697 = vmatprep.subr.mxu0 0.0
        %8698 = vmatpush1.msra.mxu0 0.0
        %8699 = vmatprep.subr.mxu0 0.0
        %8700 = vmatpush1.msra.mxu0 0.0
        %8701 = vmatprep.subr.mxu0 0.0
        %8702 = vmatpush1.msra.mxu0 0.0
        %8703 = vmatprep.subr.mxu0 0.0
        %8704 = vmatpush1.msra.mxu0 0.0
        %8705 = vmatprep.subr.mxu0 0.0
        %8706 = vmatpush1.msra.mxu0 0.0
        %8707 = vmatprep.subr.mxu0 0.0
        %8708 = vmatpush1.msra.mxu0 0.0
        %8709 = vmatprep.subr.mxu0 0.0
        %8710 = vmatpush1.msra.mxu0 0.0
        %8711 = vmatprep.subr.mxu0 0.0
        %8712 = vmatpush1.msra.mxu0 0.0
        %8713 = vmatprep.subr.mxu0 0.0
        %8714 = vmatpush1.msra.mxu0 0.0
        %8715 = vmatprep.subr.mxu0 0.0
        %8716 = vmatpush1.msra.mxu0 0.0
        %8717 = vmatprep.subr.mxu0 0.0
        %8718 = vmatpush1.msra.mxu0 0.0
        %8719 = vmatprep.subr.mxu0 0.0
        %8720 = vmatpush1.msra.mxu0 0.0
        %8721 = vmatprep.subr.mxu0 0.0
        %8722 = vmatpush1.msra.mxu0 0.0
        %8723 = vmatprep.subr.mxu0 0.0
        %8724 = vmatpush1.msra.mxu0 0.0
        %8725 = vmatprep.subr.mxu0 0.0
        %8726 = vmatpush1.msra.mxu0 0.0
        %8727 = vmatprep.subr.mxu0 0.0
        %8728 = vmatpush1.msra.mxu0 0.0
        %8729 = vmatprep.subr.mxu0 0.0
        %8730 = vmatpush1.msra.mxu0 0.0
        %8731 = vmatprep.subr.mxu0 0.0
        %8732 = vmatpush1.msra.mxu0 0.0
        %8733 = vmatprep.subr.mxu0 0.0
        %8734 = vmatpush1.msra.mxu0 0.0
        %8735 = vmatprep.subr.mxu0 0.0
        %8736 = vmatpush1.msra.mxu0 0.0
        %8737 = vmatprep.subr.mxu0 0.0
        %8738 = vmatpush1.msra.mxu0 0.0
        %8739 = vmatprep.subr.mxu0 0.0
        %8740 = vmatpush1.msra.mxu0 0.0
        %8741 = vmatprep.subr.mxu0 0.0
        %8742 = vmatpush1.msra.mxu0 0.0
        %8743 = vmatprep.subr.mxu0 0.0
        %8744 = vmatpush1.msra.mxu0 0.0
        %8745 = vmatprep.subr.mxu0 0.0
        %8746 = vmatpush1.msra.mxu0 0.0
        %8747 = vmatprep.mubr.f32.mxu0 0.0
        %8748 = vmatmul.mubr.f32.gmra.mrb[0].mxu0 %v8672
        %v8749 = vpop.f32.mrb[0].mxu0
        %v8750 = vadd.f32 %v8654, %v8749
        %v8751 = vpop.f32.mrb[0].mxu0
        %v8752 = vadd.f32 %v8654, %v8751
        %8753 = vmatprep.mubr.f32.mxu0 0.0
        %8754 = vmatmul.mubr.f32.gmra.mrb[0].mxu0 %v8675
        %v8755 = vpop.f32.mrb[0].mxu0
        %v8756 = vadd.f32 %v8659, %v8755
        %v8757 = vpop.f32.mrb[0].mxu0
        %v8758 = vadd.f32 %v8659, %v8757
        %8759 = vmatprep.mubr.f32.mxu0 0.0
        %8760 = vmatmul.mubr.f32.gmra.mrb[0].mxu0 %v8678
        %v8761 = vpop.f32.mrb[0].mxu0
        %v8762 = vadd.f32 %v8664, %v8761
        %v8763 = vpop.f32.mrb[0].mxu0
        %v8764 = vadd.f32 %v8664, %v8763
        %8765 = vmatprep.mubr.f32.mxu0 0.0
        %8766 = vmatmul.mubr.f32.gmra.mrb[0].mxu0 %v8681
        %v8767 = vpop.f32.mrb[0].mxu0
        %v8768 = vadd.f32 %v8669, %v8767
        %v8769 = vpop.f32.mrb[0].mxu0
        %v8770 = vadd.f32 %v8669, %v8769
        %8771 = vdwg.mxu0
        %8772 = vmatprep.subr.mxu0 %v6579
        %8773 = vmatpush1.msra.mxu0 %v6578
        %8774 = vmatprep.subr.mxu0 %v6583
        %8775 = vmatpush1.msra.mxu0 %v6582
        %8776 = vmatprep.subr.mxu0 %v6587
        %8777 = vmatpush1.msra.mxu0 %v6586
        %8778 = vmatprep.subr.mxu0 %v6591
        %8779 = vmatpush1.msra.mxu0 %v6590
        %8780 = vmatprep.subr.mxu0 0.0
        %8781 = vmatpush1.msra.mxu0 0.0
        %8782 = vmatprep.subr.mxu0 0.0
        %8783 = vmatpush1.msra.mxu0 0.0
        %8784 = vmatprep.subr.mxu0 0.0
        %8785 = vmatpush1.msra.mxu0 0.0
        %8786 = vmatprep.subr.mxu0 0.0
        %8787 = vmatpush1.msra.mxu0 0.0
        %8788 = vmatprep.subr.mxu0 0.0
        %8789 = vmatpush1.msra.mxu0 0.0
        %8790 = vmatprep.subr.mxu0 0.0
        %8791 = vmatpush1.msra.mxu0 0.0
        %8792 = vmatprep.subr.mxu0 0.0
        %8793 = vmatpush1.msra.mxu0 0.0
        %8794 = vmatprep.subr.mxu0 0.0
        %8795 = vmatpush1.msra.mxu0 0.0
        %8796 = vmatprep.subr.mxu0 0.0
        %8797 = vmatpush1.msra.mxu0 0.0
        %8798 = vmatprep.subr.mxu0 0.0
        %8799 = vmatpush1.msra.mxu0 0.0
        %8800 = vmatprep.subr.mxu0 0.0
        %8801 = vmatpush1.msra.mxu0 0.0
        %8802 = vmatprep.subr.mxu0 0.0
        %8803 = vmatpush1.msra.mxu0 0.0
        %8804 = vmatprep.subr.mxu0 0.0
        %8805 = vmatpush1.msra.mxu0 0.0
        %8806 = vmatprep.subr.mxu0 0.0
        %8807 = vmatpush1.msra.mxu0 0.0
        %8808 = vmatprep.subr.mxu0 0.0
        %8809 = vmatpush1.msra.mxu0 0.0
        %8810 = vmatprep.subr.mxu0 0.0
        %8811 = vmatpush1.msra.mxu0 0.0
        %8812 = vmatprep.subr.mxu0 0.0
        %8813 = vmatpush1.msra.mxu0 0.0
        %8814 = vmatprep.subr.mxu0 0.0
        %8815 = vmatpush1.msra.mxu0 0.0
        %8816 = vmatprep.subr.mxu0 0.0
        %8817 = vmatpush1.msra.mxu0 0.0
        %8818 = vmatprep.subr.mxu0 0.0
        %8819 = vmatpush1.msra.mxu0 0.0
        %8820 = vmatprep.subr.mxu0 0.0
        %8821 = vmatpush1.msra.mxu0 0.0
        %8822 = vmatprep.subr.mxu0 0.0
        %8823 = vmatpush1.msra.mxu0 0.0
        %8824 = vmatprep.subr.mxu0 0.0
        %8825 = vmatpush1.msra.mxu0 0.0
        %8826 = vmatprep.subr.mxu0 0.0
        %8827 = vmatpush1.msra.mxu0 0.0
        %8828 = vmatprep.subr.mxu0 0.0
        %8829 = vmatpush1.msra.mxu0 0.0
        %8830 = vmatprep.subr.mxu0 0.0
        %8831 = vmatpush1.msra.mxu0 0.0
        %8832 = vmatprep.subr.mxu0 0.0
        %8833 = vmatpush1.msra.mxu0 0.0
        %8834 = vmatprep.subr.mxu0 0.0
        %8835 = vmatpush1.msra.mxu0 0.0
        %8836 = vmatprep.mubr.f32.mxu0 0.0
        %8837 = vmatmul.mubr.f32.gmra.mrb[0].mxu0 %v8672
        %v8838 = vpop.f32.mrb[0].mxu0
        %v8839 = vadd.f32 %v8654, %v8838
        %v8840 = vpop.f32.mrb[0].mxu0
        %v8841 = vadd.f32 %v8654, %v8840
        %8842 = vmatprep.mubr.f32.mxu0 0.0
        %8843 = vmatmul.mubr.f32.gmra.mrb[0].mxu0 %v8675
        %v8844 = vpop.f32.mrb[0].mxu0
        %v8845 = vadd.f32 %v8659, %v8844
        %v8846 = vpop.f32.mrb[0].mxu0
        %v8847 = vadd.f32 %v8659, %v8846
        %8848 = vmatprep.mubr.f32.mxu0 0.0
        %8849 = vmatmul.mubr.f32.gmra.mrb[0].mxu0 %v8678
        %v8850 = vpop.f32.mrb[0].mxu0
        %v8851 = vadd.f32 %v8664, %v8850
        %v8852 = vpop.f32.mrb[0].mxu0
        %v8853 = vadd.f32 %v8664, %v8852
        %8854 = vmatprep.mubr.f32.mxu0 0.0
        %8855 = vmatmul.mubr.f32.gmra.mrb[0].mxu0 %v8681
        %v8856 = vpop.f32.mrb[0].mxu0
        %v8857 = vadd.f32 %v8669, %v8856
        %v8858 = vpop.f32.mrb[0].mxu0
        %v8859 = vadd.f32 %v8669, %v8858
        %8860 = vdwg.mxu0
        %v8861 = vmul.f32 %v7080, %v8750
        %v8862 = vmul.f32 %v7184, %v8752
        %v8863 = vmul.f32 %v7288, %v8839
        %v8864 = vmul.f32 %v7392, %v8841
        %v8865 = vmul.f32 %v7496, %v8756
        %v8866 = vmul.f32 %v7600, %v8758
        %v8867 = vmul.f32 %v7704, %v8845
        %v8868 = vmul.f32 %v7808, %v8847
        %v8869 = vmul.f32 %v7912, %v8762
        %v8870 = vmul.f32 %v8016, %v8764
        %v8871 = vmul.f32 %v8120, %v8851
        %v8872 = vmul.f32 %v8224, %v8853
        %v8873 = vmul.f32 %v8328, %v8768
        %v8874 = vmul.f32 %v8432, %v8770
        %v8875 = vmul.f32 %v8536, %v8857
        %v8876 = vmul.f32 %v8640, %v8859
        %s8877 = scalar_lea.vmem %s5, 8
        %v8878 = vld [vmem:[%s8877] sm:$0x7]
        %s8879 = scalar_lea.vmem %s6, 8
        %v8880 = vld [vmem:[%s8879] sm:$0x7]
        %8882 = vset.pattern.permute.xlu0 0
        %8883 = vperm.xlu0 %8882, %v8880
        %v8884 = vpop.permute.xlu0 %8883
        %v8887 = vsel %vm4103, %v8878, 0
        %8889 = vmatprep.subr.mxu0 %v8862
        %8890 = vmatpush1.msra.mxu0 %v8861
        %8891 = vmatprep.subr.mxu0 %v8866
        %8892 = vmatpush1.msra.mxu0 %v8865
        %8893 = vmatprep.subr.mxu0 %v8870
        %8894 = vmatpush1.msra.mxu0 %v8869
        %8895 = vmatprep.subr.mxu0 %v8874
        %8896 = vmatpush1.msra.mxu0 %v8873
        %8897 = vmatprep.subr.mxu0 0.0
        %8898 = vmatpush1.msra.mxu0 0.0
        %8899 = vmatprep.subr.mxu0 0.0
        %8900 = vmatpush1.msra.mxu0 0.0
        %8901 = vmatprep.subr.mxu0 0.0
        %8902 = vmatpush1.msra.mxu0 0.0
        %8903 = vmatprep.subr.mxu0 0.0
        %8904 = vmatpush1.msra.mxu0 0.0
        %8905 = vmatprep.subr.mxu0 0.0
        %8906 = vmatpush1.msra.mxu0 0.0
        %8907 = vmatprep.subr.mxu0 0.0
        %8908 = vmatpush1.msra.mxu0 0.0
        %8909 = vmatprep.subr.mxu0 0.0
        %8910 = vmatpush1.msra.mxu0 0.0
        %8911 = vmatprep.subr.mxu0 0.0
        %8912 = vmatpush1.msra.mxu0 0.0
        %8913 = vmatprep.subr.mxu0 0.0
        %8914 = vmatpush1.msra.mxu0 0.0
        %8915 = vmatprep.subr.mxu0 0.0
        %8916 = vmatpush1.msra.mxu0 0.0
        %8917 = vmatprep.subr.mxu0 0.0
        %8918 = vmatpush1.msra.mxu0 0.0
        %8919 = vmatprep.subr.mxu0 0.0
        %8920 = vmatpush1.msra.mxu0 0.0
        %8921 = vmatprep.subr.mxu0 0.0
        %8922 = vmatpush1.msra.mxu0 0.0
        %8923 = vmatprep.subr.mxu0 0.0
        %8924 = vmatpush1.msra.mxu0 0.0
        %8925 = vmatprep.subr.mxu0 0.0
        %8926 = vmatpush1.msra.mxu0 0.0
        %8927 = vmatprep.subr.mxu0 0.0
        %8928 = vmatpush1.msra.mxu0 0.0
        %8929 = vmatprep.subr.mxu0 0.0
        %8930 = vmatpush1.msra.mxu0 0.0
        %8931 = vmatprep.subr.mxu0 0.0
        %8932 = vmatpush1.msra.mxu0 0.0
        %8933 = vmatprep.subr.mxu0 0.0
        %8934 = vmatpush1.msra.mxu0 0.0
        %8935 = vmatprep.subr.mxu0 0.0
        %8936 = vmatpush1.msra.mxu0 0.0
        %8937 = vmatprep.subr.mxu0 0.0
        %8938 = vmatpush1.msra.mxu0 0.0
        %8939 = vmatprep.subr.mxu0 0.0
        %8940 = vmatpush1.msra.mxu0 0.0
        %8941 = vmatprep.subr.mxu0 0.0
        %8942 = vmatpush1.msra.mxu0 0.0
        %8943 = vmatprep.subr.mxu0 0.0
        %8944 = vmatpush1.msra.mxu0 0.0
        %8945 = vmatprep.subr.mxu0 0.0
        %8946 = vmatpush1.msra.mxu0 0.0
        %8947 = vmatprep.subr.mxu0 0.0
        %8948 = vmatpush1.msra.mxu0 0.0
        %8949 = vmatprep.subr.mxu0 0.0
        %8950 = vmatpush1.msra.mxu0 0.0
        %8951 = vmatprep.subr.mxu0 0.0
        %8952 = vmatpush1.msra.mxu0 0.0
        %8953 = vmatprep.mubr.f32.mxu0 0.0
        %8954 = vmatmul.mubr.f32.gmra.mrb[0].mxu0 %v8887
        %v8955 = vpop.f32.mrb[0].mxu0
        %v8956 = vadd.f32 %v8884, %v8955
        %v8957 = vpop.f32.mrb[0].mxu0
        %v8958 = vadd.f32 %v8884, %v8957
        %8959 = vdwg.mxu0
        %8960 = vmatprep.subr.mxu0 %v8864
        %8961 = vmatpush1.msra.mxu0 %v8863
        %8962 = vmatprep.subr.mxu0 %v8868
        %8963 = vmatpush1.msra.mxu0 %v8867
        %8964 = vmatprep.subr.mxu0 %v8872
        %8965 = vmatpush1.msra.mxu0 %v8871
        %8966 = vmatprep.subr.mxu0 %v8876
        %8967 = vmatpush1.msra.mxu0 %v8875
        %8968 = vmatprep.subr.mxu0 0.0
        %8969 = vmatpush1.msra.mxu0 0.0
        %8970 = vmatprep.subr.mxu0 0.0
        %8971 = vmatpush1.msra.mxu0 0.0
        %8972 = vmatprep.subr.mxu0 0.0
        %8973 = vmatpush1.msra.mxu0 0.0
        %8974 = vmatprep.subr.mxu0 0.0
        %8975 = vmatpush1.msra.mxu0 0.0
        %8976 = vmatprep.subr.mxu0 0.0
        %8977 = vmatpush1.msra.mxu0 0.0
        %8978 = vmatprep.subr.mxu0 0.0
        %8979 = vmatpush1.msra.mxu0 0.0
        %8980 = vmatprep.subr.mxu0 0.0
        %8981 = vmatpush1.msra.mxu0 0.0
        %8982 = vmatprep.subr.mxu0 0.0
        %8983 = vmatpush1.msra.mxu0 0.0
        %8984 = vmatprep.subr.mxu0 0.0
        %8985 = vmatpush1.msra.mxu0 0.0
        %8986 = vmatprep.subr.mxu0 0.0
        %8987 = vmatpush1.msra.mxu0 0.0
        %8988 = vmatprep.subr.mxu0 0.0
        %8989 = vmatpush1.msra.mxu0 0.0
        %8990 = vmatprep.subr.mxu0 0.0
        %8991 = vmatpush1.msra.mxu0 0.0
        %8992 = vmatprep.subr.mxu0 0.0
        %8993 = vmatpush1.msra.mxu0 0.0
        %8994 = vmatprep.subr.mxu0 0.0
        %8995 = vmatpush1.msra.mxu0 0.0
        %8996 = vmatprep.subr.mxu0 0.0
        %8997 = vmatpush1.msra.mxu0 0.0
        %8998 = vmatprep.subr.mxu0 0.0
        %8999 = vmatpush1.msra.mxu0 0.0
        %9000 = vmatprep.subr.mxu0 0.0
        %9001 = vmatpush1.msra.mxu0 0.0
        %9002 = vmatprep.subr.mxu0 0.0
        %9003 = vmatpush1.msra.mxu0 0.0
        %9004 = vmatprep.subr.mxu0 0.0
        %9005 = vmatpush1.msra.mxu0 0.0
        %9006 = vmatprep.subr.mxu0 0.0
        %9007 = vmatpush1.msra.mxu0 0.0
        %9008 = vmatprep.subr.mxu0 0.0
        %9009 = vmatpush1.msra.mxu0 0.0
        %9010 = vmatprep.subr.mxu0 0.0
        %9011 = vmatpush1.msra.mxu0 0.0
        %9012 = vmatprep.subr.mxu0 0.0
        %9013 = vmatpush1.msra.mxu0 0.0
        %9014 = vmatprep.subr.mxu0 0.0
        %9015 = vmatpush1.msra.mxu0 0.0
        %9016 = vmatprep.subr.mxu0 0.0
        %9017 = vmatpush1.msra.mxu0 0.0
        %9018 = vmatprep.subr.mxu0 0.0
        %9019 = vmatpush1.msra.mxu0 0.0
        %9020 = vmatprep.subr.mxu0 0.0
        %9021 = vmatpush1.msra.mxu0 0.0
        %9022 = vmatprep.subr.mxu0 0.0
        %9023 = vmatpush1.msra.mxu0 0.0
        %9024 = vmatprep.mubr.f32.mxu0 0.0
        %9025 = vmatmul.mubr.f32.gmra.mrb[0].mxu0 %v8887
        %v9026 = vpop.f32.mrb[0].mxu0
        %v9027 = vadd.f32 %v8884, %v9026
        %v9028 = vpop.f32.mrb[0].mxu0
        %v9029 = vadd.f32 %v8884, %v9028
        %9030 = vdwg.mxu0
        %v9035 = vcombine.low %v8956, %v8958
        %v9036 = vcombine.low %v9027, %v9029
        %s9039 = scalar_lea.vmem %s272, 32 [#allocation2]
        %9040 = vst [vmem:[%s9039] sm:$0x77] %v9035
        %9041 = vst [vmem:[%s9039 + $0x8] sm:$0x77] %v9036
        %s9042 = sand.u32 %s181, 1
        %s9043 = scalar_lea.sflag [#allocation3], %s9042
        %s9044 = sand.u32 %s181, 1
        %s9045 = smul.addr %s9044, 48
        %s9046 = scalar_lea.vmem [#allocation2], %s9045
        // Predicated region
        $region49: #{tpu_custom_call.1} parent=47 // pred_check
          %p9047 = pneg %p191
        $region50: #{tpu_custom_call.1} parent=47 // pred_check_branch
          %9049 = sbr.rel (%p9047) target = $region52
        $region51: #{tpu_custom_call.1} parent=47 // pred_region
          %s9050 = smul.u32 4, %s21
          %s9052 = ssub.s32 768, 768
          %9053 = vsyncadd %s9043, %s9052
          %s9054 = smul.addr %s9050, 64
          %s9055 = scalar_lea.hbm %s7, %s9054
          %s9056 = sshll.u32 %s9046, 4
          %s9057 = int_to_ptr.vmem [resolvable:$true] %s9056
          %9062 = dma.vmem_to_hbm [thread:$0]  %s9057, 768, %s9055, %s9043, 256, 512, 16
        $region52: #{tpu_custom_call.1} parent=47 // pred_fallthru
          _
      $region48: #{tpu_custom_call.1} parent=5 // pred_fallthru
        _
      %p9063 = scmp.le.s32.totalorder 2, %s16
      // Predicated region
      $region53: #{tpu_custom_call.1} parent=5 // pred_check
        %p9064 = pneg %p9063
      $region54: #{tpu_custom_call.1} parent=5 // pred_check_branch
        %9066 = sbr.rel (%p9064) target = $region56
      $region55: #{tpu_custom_call.1} parent=5 // pred_region
        %s9067 = ssub.s32 %s16, 2
        // Predicated region
        $region57: #{tpu_custom_call.1} parent=55 // pred_check
          %p9068 = pneg %p197
        $region58: #{tpu_custom_call.1} parent=55 // pred_check_branch
          %9070 = sbr.rel (%p9068) target = $region60
        $region59: #{tpu_custom_call.1} parent=55 // pred_region
          %s9071 = sand.u32 %s182, 1
          %s9072 = scalar_lea.sflag [#allocation3], %s9071
          %s9073 = sand.u32 %s182, 1
          %s9074 = smul.addr %s9073, 48
          %s9075 = scalar_lea.vmem [#allocation2], %s9074
          %9076 = dma.done %s9072, 768
        $region60: #{tpu_custom_call.1} parent=55 // pred_fallthru
          _
      $region56: #{tpu_custom_call.1} parent=5 // pred_fallthru
        _
    $region6: #{tpu_custom_call.1} parent=1 // loop_footer
      %s20 = sadd.s32 1, %s16
    $region7: #{tpu_custom_call.1} parent=1 // loop_footer_branch
      %15 = sbr.rel target = $region3
    $region8: #{tpu_custom_call.1} parent=1 // loop_exit
      _
    %9077 = vsyncpa [#allocation3], 1
    %s9078 = scalar_lea.sflag [#allocation3], 1
    %9079 = vsyncpa %s9078, 1

</llo_original>
